<compile_context>
chip_gen: v5e
topology: v5e:2x2
jax: 0.10.0
libtpu: 0.0.40
codegen_flags: <defaults>
</compile_context>

<pallas_src>
import jax
import jax.numpy as jnp
from jax import lax
from jax.experimental import pallas as pl
from jax.experimental.pallas import tpu as pltpu


# ----------------------------------------------------------------------------
# Fused kernel: (folded-normalize) conv3x3 + ReLU + conv3x3 + ReLU
# ----------------------------------------------------------------------------
def _fused_backbone_kernel(x_ref, w1_ref, b1_ref, w2_ref, b2_ref, mean_ref,
                           o_ref, xpad, y1pad, p1, p2):
    # x_ref   : (1, Cin, H, W)   raw image (full), staged once per batch element
    # w1_ref  : (C1, 9*Cin) bf16 normalization-folded conv1 weights, K=(kh,kw,ci)
    # b1_ref  : (C1, 1)  f32     normalization-folded conv1 bias
    # w2_ref  : (C2, 9*C1) bf16
    # b2_ref  : (C2, 1)  f32
    # mean_ref: (Cin,1,1) f32    halo fill (== zero after the folded normalize)
    # o_ref   : (1, C2, tile_h*W)  NCHW output rows of this tile (lane-dense)
    # xpad    : (Cin, H+4, W+2)  full image in VMEM, mean-filled halo
    # y1pad   : (C1, tile_h+2, W+2) conv1 intermediate (+ zero halo) for this tile
    # p1      : (9*Cin, (tile_h+2)*W) im2col for conv1
    # p2      : (9*C1,  tile_h*W)     im2col for conv2
    r = pl.program_id(1)
    num_r = pl.num_programs(1)

    cin, hp4, wp2 = xpad.shape
    H, W = hp4 - 4, wp2 - 2
    c1, th2, _ = y1pad.shape
    tile_h = th2 - 2

    # Stage the raw image once per batch element. Halo = per-channel mean, so
    # with the folded weights the halo contributes exactly zero — identical to
    # PyTorch zero-padding the *normalized* image.
    @pl.when(r == 0)
    def _():
        xpad[...] = jnp.broadcast_to(mean_ref[...], xpad.shape)
        xpad[:, 2:H + 2, 1:W + 1] = x_ref[0]

    row0 = pl.multiple_of(r * tile_h, tile_h)

    # ---- conv1: build im2col patches once (K = 9*Cin) covering the tile rows
    #      plus a 1-row intermediate halo, then ONE MXU dot.
    for kh in range(3):
        for kw in range(3):
            t = kh * 3 + kw
            xs = xpad[:, pl.ds(row0 + kh, tile_h + 2), kw:kw + W]
            p1[t * cin:(t + 1) * cin, :] = xs.reshape(cin, (tile_h + 2) * W)

    h1 = jnp.dot(w1_ref[...], p1[...].astype(jnp.bfloat16),
                 preferred_element_type=jnp.float32)           # (C1,(tile_h+2)*W)
    h1 = jnp.maximum(h1 + b1_ref[...], 0.0)

    # ---- stage intermediate with zero halo (conv2 zero-pads its input)
    y1pad[...] = jnp.zeros(y1pad.shape, y1pad.dtype)
    y1pad[:, :, 1:W + 1] = h1.reshape(c1, tile_h + 2, W)

    @pl.when(r == 0)                 # intermediate row -1 is zero padding
    def _():
        y1pad[:, 0:1, :] = jnp.zeros((c1, 1, W + 2), y1pad.dtype)

    @pl.when(r == num_r - 1)         # intermediate row H is zero padding
    def _():
        y1pad[:, tile_h + 1:tile_h + 2, :] = jnp.zeros((c1, 1, W + 2), y1pad.dtype)

    # ---- conv2: im2col (K = 9*C1) + ONE MXU dot, lane-dense (C2, tile_h*W)
    for kh in range(3):
        for kw in range(3):
            t = kh * 3 + kw
            ys = y1pad[:, kh:kh + tile_h, kw:kw + W]
            p2[t * c1:(t + 1) * c1, :] = ys.reshape(c1, tile_h * W)

    h2 = jnp.dot(w2_ref[...], p2[...].astype(jnp.bfloat16),
                 preferred_element_type=jnp.float32)           # (C2, tile_h*W)
    h2 = jnp.maximum(h2 + b2_ref[...], 0.0)
    o_ref[0] = h2.astype(o_ref.dtype)


def _choose_tile_h(h, w):
    # smallest row tile that divides H and keeps the output block lane-dense
    for th in (8, 16, 32):
        if h % th == 0 and (th * w) % 128 == 0:
            return th
    return h


def fused_backbone_nchw(img, params):
    """img: (N, Cin, H, W) f32  ->  (N, C2, H, W) f32  ==  net(transforms(img))."""
    n, cin, h, w = img.shape
    w1k, b1k = params["w1k"], params["b1k"]
    w2k, b2k = params["w2k"], params["b2k"]
    mean = params["mean"]
    c1, c2 = w1k.shape[0], w2k.shape[0]

    tile_h = _choose_tile_h(h, w)
    n_rt = h // tile_h

    out_flat = pl.pallas_call(
        _fused_backbone_kernel,
        out_shape=jax.ShapeDtypeStruct((n, c2, h * w), jnp.float32),
        grid_spec=pltpu.PrefetchScalarGridSpec(
            num_scalar_prefetch=0,
            grid=(n, n_rt),
            in_specs=[
                # full image per batch element; constant block index along r
                # => DMA'd from HBM only once per batch element.
                pl.BlockSpec((1, cin, h, w), lambda i, r: (i, 0, 0, 0)),
                pl.BlockSpec((c1, 9 * cin), lambda i, r: (0, 0)),
                pl.BlockSpec((c1, 1), lambda i, r: (0, 0)),
                pl.BlockSpec((c2, 9 * c1), lambda i, r: (0, 0)),
                pl.BlockSpec((c2, 1), lambda i, r: (0, 0)),
                pl.BlockSpec((cin, 1, 1), lambda i, r: (0, 0, 0)),
            ],
            out_specs=pl.BlockSpec((1, c2, tile_h * w), lambda i, r: (i, 0, r)),
            scratch_shapes=[
                pltpu.VMEM((cin, h + 4, w + 2), jnp.float32),        # xpad
                pltpu.VMEM((c1, tile_h + 2, w + 2), jnp.float32),    # y1pad
                pltpu.VMEM((9 * cin, (tile_h + 2) * w), jnp.float32),  # im2col 1
                pltpu.VMEM((9 * c1, tile_h * w), jnp.float32),         # im2col 2
            ],
        ),
        compiler_params=pltpu.CompilerParams(
            dimension_semantics=("parallel", "arbitrary"),
            vmem_limit_bytes=32 * 1024 * 1024,
        ),
    )(img, w1k, b1k, w2k, b2k, mean)
    # (N, C2, H*W) is already NCHW-contiguous; reshape is free.
    return out_flat.reshape(n, c2, h, w)


@jax.jit
def backbone_forward(img_batch, params):
    return fused_backbone_nchw(img_batch, params)


# ----------------------------------------------------------------------------
# Parameters: synthetic PyTorch-layout weights + torchvision normalization,
# then folded/reshaped once for the kernel.
# ----------------------------------------------------------------------------
def make_backbone_params(in_ch=3, out_ch=32, seed=0):
    key = jax.random.PRNGKey(seed)
    k1, k2, k3, k4 = jax.random.split(key, 4)
    w1 = jax.random.normal(k1, (out_ch, in_ch, 3, 3), jnp.float32) * (2.0 / (9 * in_ch)) ** 0.5
    b1 = jax.random.normal(k2, (out_ch,), jnp.float32) * 0.01
    w2 = jax.random.normal(k3, (out_ch, out_ch, 3, 3), jnp.float32) * (2.0 / (9 * out_ch)) ** 0.5
    b2 = jax.random.normal(k4, (out_ch,), jnp.float32) * 0.01
    mean = jnp.array([0.485, 0.456, 0.406], jnp.float32)
    std = jnp.array([0.229, 0.224, 0.225], jnp.float32)
    return dict(w1=w1, b1=b1, w2=w2, b2=b2, mean=mean, std=std)


def prepare_kernel_params(raw):
    """Fold the normalize transform into conv1 and reshape weights for the kernel."""
    w1, b1, w2, b2 = raw["w1"], raw["b1"], raw["w2"], raw["b2"]
    mean, std = raw["mean"], raw["std"]
    inv_std = 1.0 / std
    c1, cin = w1.shape[0], w1.shape[1]
    c2 = w2.shape[0]
    # conv1((x - mean)/std) == conv1'(x) with w1' = w1/std and
    # b1' = b1 - sum_{ci,kh,kw} w1*mean/std, provided the raw-image halo is
    # padded with `mean` (done inside the kernel).
    w1f = w1 * inv_std[None, :, None, None]
    b1f = b1 - jnp.einsum("oikl,i->o", w1, mean * inv_std)
    # K ordering matches the kernel's im2col stacking: (kh, kw, ci).
    w1k = jnp.transpose(w1f, (0, 2, 3, 1)).reshape(c1, 9 * cin).astype(jnp.bfloat16)
    w2k = jnp.transpose(w2, (0, 2, 3, 1)).reshape(c2, 9 * c1).astype(jnp.bfloat16)
    return dict(w1k=w1k, b1k=b1f.reshape(c1, 1),
                w2k=w2k, b2k=b2.reshape(c2, 1),
                mean=mean.reshape(cin, 1, 1))


def reference_forward(img, raw):
    """Dense f32 reference: normalize -> conv -> relu -> conv -> relu (NCHW)."""
    x = (img - raw["mean"][None, :, None, None]) / raw["std"][None, :, None, None]
    dn = ("NCHW", "OIHW", "NCHW")
    y = lax.conv_general_dilated(x, raw["w1"], (1, 1), "SAME", dimension_numbers=dn)
    y = jnp.maximum(y + raw["b1"][None, :, None, None], 0.0)
    y = lax.conv_general_dilated(y, raw["w2"], (1, 1), "SAME", dimension_numbers=dn)
    y = jnp.maximum(y + raw["b2"][None, :, None, None], 0.0)
    return y


if __name__ == "__main__":
    key = jax.random.PRNGKey(0)
    # small shapes: batch=2, channels=3 (RGB), spatial 16x16
    img = jax.random.uniform(key, (2, 3, 16, 16), jnp.float32)
    raw = make_backbone_params(in_ch=3, out_ch=32, seed=0)
    params = prepare_kernel_params(raw)

    out = backbone_forward(img, params)
    out = jax.block_until_ready(out)

    assert out.shape == (2, 32, 16, 16), out.shape
    assert out.dtype == jnp.float32
    assert bool(jnp.all(jnp.isfinite(out)))

    # parity vs dense f32 reference (loose tolerance: MXU inputs are bf16)
    ref = reference_forward(img, raw)
    max_err = float(jnp.max(jnp.abs(out - ref)))
    tol = 5e-2 + 5e-2 * float(jnp.max(jnp.abs(ref)))
    assert max_err < tol, (max_err, tol)

    print("KERNEL_OK")
</pallas_src>

<mosaic_0001>
module attributes {stable_mosaic.version = 11 : i64} {
  func.func @_fused_backbone_kernel(%arg0: i32, %arg1: i32, %arg2: memref<1x3x16x16xf32, #tpu.memory_space<vmem>>, %arg3: memref<32x27xbf16, #tpu.memory_space<vmem>>, %arg4: memref<32x1xf32, #tpu.memory_space<vmem>>, %arg5: memref<32x288xbf16, #tpu.memory_space<vmem>>, %arg6: memref<32x1xf32, #tpu.memory_space<vmem>>, %arg7: memref<3x1x1xf32, #tpu.memory_space<vmem>>, %arg8: memref<1x32x128xf32, #tpu.memory_space<vmem>>, %arg9: memref<3x20x18xf32, #tpu.memory_space<vmem>>, %arg10: memref<32x10x18xf32, #tpu.memory_space<vmem>>, %arg11: memref<27x160xf32, #tpu.memory_space<vmem>>, %arg12: memref<288x128xf32, #tpu.memory_space<vmem>>) attributes {dimension_semantics = [#tpu.dimension_semantics<parallel>, #tpu.dimension_semantics<arbitrary>], iteration_bounds = array<i64: 2, 2>, scalar_prefetch = 0 : i64, scratch_operands = 4 : i64, tpu.core_type = #tpu.core_type<tc>, window_params = [{transform_indices = @transform_0, window_bounds = array<i64: 1, 3, 16, 16>}, {pipeline_mode = #tpu.pipeline_mode<synchronous>, transform_indices = @transform_1, window_bounds = array<i64: 32, 27>}, {pipeline_mode = #tpu.pipeline_mode<synchronous>, transform_indices = @transform_2, window_bounds = array<i64: 32, 1>}, {pipeline_mode = #tpu.pipeline_mode<synchronous>, transform_indices = @transform_3, window_bounds = array<i64: 32, 288>}, {pipeline_mode = #tpu.pipeline_mode<synchronous>, transform_indices = @transform_4, window_bounds = array<i64: 32, 1>}, {pipeline_mode = #tpu.pipeline_mode<synchronous>, transform_indices = @transform_5, window_bounds = array<i64: 3, 1, 1>}, {transform_indices = @transform_6, window_bounds = array<i64: 1, 32, 128>}]} {
    %c0_i32 = arith.constant 0 : i32
    %0 = arith.cmpi eq, %arg1, %c0_i32 : i32
    %1 = arith.extui %0 : i1 to i32
    %c0_i32_0 = arith.constant 0 : i32
    %2 = arith.cmpi ne, %1, %c0_i32_0 : i32
    scf.if %2 {
      %c0_99 = arith.constant 0 : index
      %c0_100 = arith.constant 0 : index
      %c0_101 = arith.constant 0 : index
      %108 = vector.load %arg7[%c0_99, %c0_100, %c0_101] : memref<3x1x1xf32, #tpu.memory_space<vmem>>, vector<3x1x1xf32>
      %109 = vector.shape_cast %108 : vector<3x1x1xf32> to vector<3x1x1xf32>
      %110 = vector.broadcast %109 : vector<3x1x1xf32> to vector<3x20x18xf32>
      %c0_102 = arith.constant 0 : index
      %c0_103 = arith.constant 0 : index
      %c0_104 = arith.constant 0 : index
      %111 = vector.load %arg9[%c0_102, %c0_103, %c0_104] : memref<3x20x18xf32, #tpu.memory_space<vmem>>, vector<3x20x18xf32>
      tpu.vector_store %arg9[%c0_102, %c0_103, %c0_104], %110 {strides = array<i32>} : memref<3x20x18xf32, #tpu.memory_space<vmem>>, vector<3x20x18xf32>,
      %c0_105 = arith.constant 0 : index
      %c0_106 = arith.constant 0 : index
      %c0_107 = arith.constant 0 : index
      %c0_108 = arith.constant 0 : index
      %112 = vector.load %arg2[%c0_105, %c0_106, %c0_107, %c0_108] : memref<1x3x16x16xf32, #tpu.memory_space<vmem>>, vector<1x3x16x16xf32>
      %113 = vector.shape_cast %112 : vector<1x3x16x16xf32> to vector<3x16x16xf32>
      %c0_109 = arith.constant 0 : index
      %c2_110 = arith.constant 2 : index
      %c1_111 = arith.constant 1 : index
      %114 = vector.load %arg9[%c0_109, %c2_110, %c1_111] : memref<3x20x18xf32, #tpu.memory_space<vmem>>, vector<3x16x16xf32>
      tpu.vector_store %arg9[%c0_109, %c2_110, %c1_111], %113 {strides = array<i32>} : memref<3x20x18xf32, #tpu.memory_space<vmem>>, vector<3x16x16xf32>,
    } else {
    }
    %c8_i32 = arith.constant 8 : i32
    %3 = arith.muli %arg1, %c8_i32 : i32
    %4 = tpu.assume_multiple %3, 8 : i32
    %c0_i32_1 = arith.constant 0 : i32
    %5 = arith.addi %4, %c0_i32_1 : i32
    %c0 = arith.constant 0 : index
    %6 = arith.index_cast %5 : i32 to index
    %c0_2 = arith.constant 0 : index
    %7 = vector.load %arg9[%c0, %6, %c0_2] : memref<3x20x18xf32, #tpu.memory_space<vmem>>, vector<3x10x16xf32>
    %8 = vector.shape_cast %7 : vector<3x10x16xf32> to vector<3x160xf32>
    %c0_3 = arith.constant 0 : index
    %c0_4 = arith.constant 0 : index
    %9 = vector.load %arg11[%c0_3, %c0_4] : memref<27x160xf32, #tpu.memory_space<vmem>>, vector<3x160xf32>
    tpu.vector_store %arg11[%c0_3, %c0_4], %8 {strides = array<i32>} : memref<27x160xf32, #tpu.memory_space<vmem>>, vector<3x160xf32>,
    %c0_i32_5 = arith.constant 0 : i32
    %10 = arith.addi %4, %c0_i32_5 : i32
    %c0_6 = arith.constant 0 : index
    %11 = arith.index_cast %10 : i32 to index
    %c1 = arith.constant 1 : index
    %12 = vector.load %arg9[%c0_6, %11, %c1] : memref<3x20x18xf32, #tpu.memory_space<vmem>>, vector<3x10x16xf32>
    %13 = vector.shape_cast %12 : vector<3x10x16xf32> to vector<3x160xf32>
    %c3 = arith.constant 3 : index
    %c0_7 = arith.constant 0 : index
    %14 = vector.load %arg11[%c3, %c0_7] : memref<27x160xf32, #tpu.memory_space<vmem>>, vector<3x160xf32>
    tpu.vector_store %arg11[%c3, %c0_7], %13 {strides = array<i32>} : memref<27x160xf32, #tpu.memory_space<vmem>>, vector<3x160xf32>,
    %c0_i32_8 = arith.constant 0 : i32
    %15 = arith.addi %4, %c0_i32_8 : i32
    %c0_9 = arith.constant 0 : index
    %16 = arith.index_cast %15 : i32 to index
    %c2 = arith.constant 2 : index
    %17 = vector.load %arg9[%c0_9, %16, %c2] : memref<3x20x18xf32, #tpu.memory_space<vmem>>, vector<3x10x16xf32>
    %18 = vector.shape_cast %17 : vector<3x10x16xf32> to vector<3x160xf32>
    %c6 = arith.constant 6 : index
    %c0_10 = arith.constant 0 : index
    %19 = vector.load %arg11[%c6, %c0_10] : memref<27x160xf32, #tpu.memory_space<vmem>>, vector<3x160xf32>
    tpu.vector_store %arg11[%c6, %c0_10], %18 {strides = array<i32>} : memref<27x160xf32, #tpu.memory_space<vmem>>, vector<3x160xf32>,
    %c1_i32 = arith.constant 1 : i32
    %20 = arith.addi %4, %c1_i32 : i32
    %c0_11 = arith.constant 0 : index
    %21 = arith.index_cast %20 : i32 to index
    %c0_12 = arith.constant 0 : index
    %22 = vector.load %arg9[%c0_11, %21, %c0_12] : memref<3x20x18xf32, #tpu.memory_space<vmem>>, vector<3x10x16xf32>
    %23 = vector.shape_cast %22 : vector<3x10x16xf32> to vector<3x160xf32>
    %c9 = arith.constant 9 : index
    %c0_13 = arith.constant 0 : index
    %24 = vector.load %arg11[%c9, %c0_13] : memref<27x160xf32, #tpu.memory_space<vmem>>, vector<3x160xf32>
    tpu.vector_store %arg11[%c9, %c0_13], %23 {strides = array<i32>} : memref<27x160xf32, #tpu.memory_space<vmem>>, vector<3x160xf32>,
    %c1_i32_14 = arith.constant 1 : i32
    %25 = arith.addi %4, %c1_i32_14 : i32
    %c0_15 = arith.constant 0 : index
    %26 = arith.index_cast %25 : i32 to index
    %c1_16 = arith.constant 1 : index
    %27 = vector.load %arg9[%c0_15, %26, %c1_16] : memref<3x20x18xf32, #tpu.memory_space<vmem>>, vector<3x10x16xf32>
    %28 = vector.shape_cast %27 : vector<3x10x16xf32> to vector<3x160xf32>
    %c12 = arith.constant 12 : index
    %c0_17 = arith.constant 0 : index
    %29 = vector.load %arg11[%c12, %c0_17] : memref<27x160xf32, #tpu.memory_space<vmem>>, vector<3x160xf32>
    tpu.vector_store %arg11[%c12, %c0_17], %28 {strides = array<i32>} : memref<27x160xf32, #tpu.memory_space<vmem>>, vector<3x160xf32>,
    %c1_i32_18 = arith.constant 1 : i32
    %30 = arith.addi %4, %c1_i32_18 : i32
    %c0_19 = arith.constant 0 : index
    %31 = arith.index_cast %30 : i32 to index
    %c2_20 = arith.constant 2 : index
    %32 = vector.load %arg9[%c0_19, %31, %c2_20] : memref<3x20x18xf32, #tpu.memory_space<vmem>>, vector<3x10x16xf32>
    %33 = vector.shape_cast %32 : vector<3x10x16xf32> to vector<3x160xf32>
    %c15 = arith.constant 15 : index
    %c0_21 = arith.constant 0 : index
    %34 = vector.load %arg11[%c15, %c0_21] : memref<27x160xf32, #tpu.memory_space<vmem>>, vector<3x160xf32>
    tpu.vector_store %arg11[%c15, %c0_21], %33 {strides = array<i32>} : memref<27x160xf32, #tpu.memory_space<vmem>>, vector<3x160xf32>,
    %c2_i32 = arith.constant 2 : i32
    %35 = arith.addi %4, %c2_i32 : i32
    %c0_22 = arith.constant 0 : index
    %36 = arith.index_cast %35 : i32 to index
    %c0_23 = arith.constant 0 : index
    %37 = vector.load %arg9[%c0_22, %36, %c0_23] : memref<3x20x18xf32, #tpu.memory_space<vmem>>, vector<3x10x16xf32>
    %38 = vector.shape_cast %37 : vector<3x10x16xf32> to vector<3x160xf32>
    %c18 = arith.constant 18 : index
    %c0_24 = arith.constant 0 : index
    %39 = vector.load %arg11[%c18, %c0_24] : memref<27x160xf32, #tpu.memory_space<vmem>>, vector<3x160xf32>
    tpu.vector_store %arg11[%c18, %c0_24], %38 {strides = array<i32>} : memref<27x160xf32, #tpu.memory_space<vmem>>, vector<3x160xf32>,
    %c2_i32_25 = arith.constant 2 : i32
    %40 = arith.addi %4, %c2_i32_25 : i32
    %c0_26 = arith.constant 0 : index
    %41 = arith.index_cast %40 : i32 to index
    %c1_27 = arith.constant 1 : index
    %42 = vector.load %arg9[%c0_26, %41, %c1_27] : memref<3x20x18xf32, #tpu.memory_space<vmem>>, vector<3x10x16xf32>
    %43 = vector.shape_cast %42 : vector<3x10x16xf32> to vector<3x160xf32>
    %c21 = arith.constant 21 : index
    %c0_28 = arith.constant 0 : index
    %44 = vector.load %arg11[%c21, %c0_28] : memref<27x160xf32, #tpu.memory_space<vmem>>, vector<3x160xf32>
    tpu.vector_store %arg11[%c21, %c0_28], %43 {strides = array<i32>} : memref<27x160xf32, #tpu.memory_space<vmem>>, vector<3x160xf32>,
    %c2_i32_29 = arith.constant 2 : i32
    %45 = arith.addi %4, %c2_i32_29 : i32
    %c0_30 = arith.constant 0 : index
    %46 = arith.index_cast %45 : i32 to index
    %c2_31 = arith.constant 2 : index
    %47 = vector.load %arg9[%c0_30, %46, %c2_31] : memref<3x20x18xf32, #tpu.memory_space<vmem>>, vector<3x10x16xf32>
    %48 = vector.shape_cast %47 : vector<3x10x16xf32> to vector<3x160xf32>
    %c24 = arith.constant 24 : index
    %c0_32 = arith.constant 0 : index
    %49 = vector.load %arg11[%c24, %c0_32] : memref<27x160xf32, #tpu.memory_space<vmem>>, vector<3x160xf32>
    tpu.vector_store %arg11[%c24, %c0_32], %48 {strides = array<i32>} : memref<27x160xf32, #tpu.memory_space<vmem>>, vector<3x160xf32>,
    %c0_33 = arith.constant 0 : index
    %c0_34 = arith.constant 0 : index
    %50 = vector.load %arg3[%c0_33, %c0_34] : memref<32x27xbf16, #tpu.memory_space<vmem>>, vector<32x27xbf16>
    %c0_35 = arith.constant 0 : index
    %c0_36 = arith.constant 0 : index
    %51 = vector.load %arg11[%c0_35, %c0_36] : memref<27x160xf32, #tpu.memory_space<vmem>>, vector<27x160xf32>
    %52 = arith.truncf %51 : vector<27x160xf32> to vector<27x160xbf16>
    %cst = arith.constant dense<0.000000e+00> : vector<32x160xf32>
    %53 = tpu.matmul %50, %52, %cst {dimension_numbers = #tpu.dot_dimension_numbers<[1], [0], [0], [1], [0, 0, 1, 1], [], []>} : vector<32x27xbf16>, vector<27x160xbf16>, vector<32x160xf32> -> vector<32x160xf32>
    %c0_37 = arith.constant 0 : index
    %c0_38 = arith.constant 0 : index
    %54 = vector.load %arg4[%c0_37, %c0_38] : memref<32x1xf32, #tpu.memory_space<vmem>>, vector<32x1xf32>
    %55 = vector.broadcast %54 : vector<32x1xf32> to vector<32x160xf32>
    %56 = arith.addf %53, %55 : vector<32x160xf32>
    %cst_39 = arith.constant 0.000000e+00 : f32
    %57 = vector.broadcast %cst_39 : f32 to vector<32x160xf32>
    %58 = arith.maximumf %56, %57 : vector<32x160xf32>
    %cst_40 = arith.constant 0.000000e+00 : f32
    %59 = vector.broadcast %cst_40 : f32 to vector<32x10x18xf32>
    %c0_41 = arith.constant 0 : index
    %c0_42 = arith.constant 0 : index
    %c0_43 = arith.constant 0 : index
    %60 = vector.load %arg10[%c0_41, %c0_42, %c0_43] : memref<32x10x18xf32, #tpu.memory_space<vmem>>, vector<32x10x18xf32>
    tpu.vector_store %arg10[%c0_41, %c0_42, %c0_43], %59 {strides = array<i32>} : memref<32x10x18xf32, #tpu.memory_space<vmem>>, vector<32x10x18xf32>,
    %61 = vector.shape_cast %58 : vector<32x160xf32> to vector<32x10x16xf32>
    %c0_44 = arith.constant 0 : index
    %c0_45 = arith.constant 0 : index
    %c1_46 = arith.constant 1 : index
    %62 = vector.load %arg10[%c0_44, %c0_45, %c1_46] : memref<32x10x18xf32, #tpu.memory_space<vmem>>, vector<32x10x16xf32>
    tpu.vector_store %arg10[%c0_44, %c0_45, %c1_46], %61 {strides = array<i32>} : memref<32x10x18xf32, #tpu.memory_space<vmem>>, vector<32x10x16xf32>,
    %c0_i32_47 = arith.constant 0 : i32
    %63 = arith.cmpi eq, %arg1, %c0_i32_47 : i32
    %64 = arith.extui %63 : i1 to i32
    %c0_i32_48 = arith.constant 0 : i32
    %65 = arith.cmpi ne, %64, %c0_i32_48 : i32
    scf.if %65 {
      %cst_99 = arith.constant 0.000000e+00 : f32
      %108 = vector.broadcast %cst_99 : f32 to vector<32x1x18xf32>
      %c0_100 = arith.constant 0 : index
      %c0_101 = arith.constant 0 : index
      %c0_102 = arith.constant 0 : index
      %109 = vector.load %arg10[%c0_100, %c0_101, %c0_102] : memref<32x10x18xf32, #tpu.memory_space<vmem>>, vector<32x1x18xf32>
      tpu.vector_store %arg10[%c0_100, %c0_101, %c0_102], %108 {strides = array<i32>} : memref<32x10x18xf32, #tpu.memory_space<vmem>>, vector<32x1x18xf32>,
    } else {
    }
    %c1_i32_49 = arith.constant 1 : i32
    %66 = arith.cmpi eq, %arg1, %c1_i32_49 : i32
    %67 = arith.extui %66 : i1 to i32
    %c0_i32_50 = arith.constant 0 : i32
    %68 = arith.cmpi ne, %67, %c0_i32_50 : i32
    scf.if %68 {
      %cst_99 = arith.constant 0.000000e+00 : f32
      %108 = vector.broadcast %cst_99 : f32 to vector<32x1x18xf32>
      %c0_100 = arith.constant 0 : index
      %c9_101 = arith.constant 9 : index
      %c0_102 = arith.constant 0 : index
      %109 = vector.load %arg10[%c0_100, %c9_101, %c0_102] : memref<32x10x18xf32, #tpu.memory_space<vmem>>, vector<32x1x18xf32>
      tpu.vector_store %arg10[%c0_100, %c9_101, %c0_102], %108 {strides = array<i32>} : memref<32x10x18xf32, #tpu.memory_space<vmem>>, vector<32x1x18xf32>,
    } else {
    }
    %c0_51 = arith.constant 0 : index
    %c0_52 = arith.constant 0 : index
    %c0_53 = arith.constant 0 : index
    %69 = vector.load %arg10[%c0_51, %c0_52, %c0_53] : memref<32x10x18xf32, #tpu.memory_space<vmem>>, vector<32x8x16xf32>
    %70 = vector.shape_cast %69 : vector<32x8x16xf32> to vector<32x128xf32>
    %c0_54 = arith.constant 0 : index
    %c0_55 = arith.constant 0 : index
    %71 = vector.load %arg12[%c0_54, %c0_55] : memref<288x128xf32, #tpu.memory_space<vmem>>, vector<32x128xf32>
    tpu.vector_store %arg12[%c0_54, %c0_55], %70 {strides = array<i32>} : memref<288x128xf32, #tpu.memory_space<vmem>>, vector<32x128xf32>,
    %c0_56 = arith.constant 0 : index
    %c0_57 = arith.constant 0 : index
    %c1_58 = arith.constant 1 : index
    %72 = vector.load %arg10[%c0_56, %c0_57, %c1_58] : memref<32x10x18xf32, #tpu.memory_space<vmem>>, vector<32x8x16xf32>
    %73 = vector.shape_cast %72 : vector<32x8x16xf32> to vector<32x128xf32>
    %c32 = arith.constant 32 : index
    %c0_59 = arith.constant 0 : index
    %74 = vector.load %arg12[%c32, %c0_59] : memref<288x128xf32, #tpu.memory_space<vmem>>, vector<32x128xf32>
    tpu.vector_store %arg12[%c32, %c0_59], %73 {strides = array<i32>} : memref<288x128xf32, #tpu.memory_space<vmem>>, vector<32x128xf32>,
    %c0_60 = arith.constant 0 : index
    %c0_61 = arith.constant 0 : index
    %c2_62 = arith.constant 2 : index
    %75 = vector.load %arg10[%c0_60, %c0_61, %c2_62] : memref<32x10x18xf32, #tpu.memory_space<vmem>>, vector<32x8x16xf32>
    %76 = vector.shape_cast %75 : vector<32x8x16xf32> to vector<32x128xf32>
    %c64 = arith.constant 64 : index
    %c0_63 = arith.constant 0 : index
    %77 = vector.load %arg12[%c64, %c0_63] : memref<288x128xf32, #tpu.memory_space<vmem>>, vector<32x128xf32>
    tpu.vector_store %arg12[%c64, %c0_63], %76 {strides = array<i32>} : memref<288x128xf32, #tpu.memory_space<vmem>>, vector<32x128xf32>,
    %c0_64 = arith.constant 0 : index
    %c1_65 = arith.constant 1 : index
    %c0_66 = arith.constant 0 : index
    %78 = vector.load %arg10[%c0_64, %c1_65, %c0_66] : memref<32x10x18xf32, #tpu.memory_space<vmem>>, vector<32x8x16xf32>
    %79 = vector.shape_cast %78 : vector<32x8x16xf32> to vector<32x128xf32>
    %c96 = arith.constant 96 : index
    %c0_67 = arith.constant 0 : index
    %80 = vector.load %arg12[%c96, %c0_67] : memref<288x128xf32, #tpu.memory_space<vmem>>, vector<32x128xf32>
    tpu.vector_store %arg12[%c96, %c0_67], %79 {strides = array<i32>} : memref<288x128xf32, #tpu.memory_space<vmem>>, vector<32x128xf32>,
    %c0_68 = arith.constant 0 : index
    %c1_69 = arith.constant 1 : index
    %c1_70 = arith.constant 1 : index
    %81 = vector.load %arg10[%c0_68, %c1_69, %c1_70] : memref<32x10x18xf32, #tpu.memory_space<vmem>>, vector<32x8x16xf32>
    %82 = vector.shape_cast %81 : vector<32x8x16xf32> to vector<32x128xf32>
    %c128 = arith.constant 128 : index
    %c0_71 = arith.constant 0 : index
    %83 = vector.load %arg12[%c128, %c0_71] : memref<288x128xf32, #tpu.memory_space<vmem>>, vector<32x128xf32>
    tpu.vector_store %arg12[%c128, %c0_71], %82 {strides = array<i32>} : memref<288x128xf32, #tpu.memory_space<vmem>>, vector<32x128xf32>,
    %c0_72 = arith.constant 0 : index
    %c1_73 = arith.constant 1 : index
    %c2_74 = arith.constant 2 : index
    %84 = vector.load %arg10[%c0_72, %c1_73, %c2_74] : memref<32x10x18xf32, #tpu.memory_space<vmem>>, vector<32x8x16xf32>
    %85 = vector.shape_cast %84 : vector<32x8x16xf32> to vector<32x128xf32>
    %c160 = arith.constant 160 : index
    %c0_75 = arith.constant 0 : index
    %86 = vector.load %arg12[%c160, %c0_75] : memref<288x128xf32, #tpu.memory_space<vmem>>, vector<32x128xf32>
    tpu.vector_store %arg12[%c160, %c0_75], %85 {strides = array<i32>} : memref<288x128xf32, #tpu.memory_space<vmem>>, vector<32x128xf32>,
    %c0_76 = arith.constant 0 : index
    %c2_77 = arith.constant 2 : index
    %c0_78 = arith.constant 0 : index
    %87 = vector.load %arg10[%c0_76, %c2_77, %c0_78] : memref<32x10x18xf32, #tpu.memory_space<vmem>>, vector<32x8x16xf32>
    %88 = vector.shape_cast %87 : vector<32x8x16xf32> to vector<32x128xf32>
    %c192 = arith.constant 192 : index
    %c0_79 = arith.constant 0 : index
    %89 = vector.load %arg12[%c192, %c0_79] : memref<288x128xf32, #tpu.memory_space<vmem>>, vector<32x128xf32>
    tpu.vector_store %arg12[%c192, %c0_79], %88 {strides = array<i32>} : memref<288x128xf32, #tpu.memory_space<vmem>>, vector<32x128xf32>,
    %c0_80 = arith.constant 0 : index
    %c2_81 = arith.constant 2 : index
    %c1_82 = arith.constant 1 : index
    %90 = vector.load %arg10[%c0_80, %c2_81, %c1_82] : memref<32x10x18xf32, #tpu.memory_space<vmem>>, vector<32x8x16xf32>
    %91 = vector.shape_cast %90 : vector<32x8x16xf32> to vector<32x128xf32>
    %c224 = arith.constant 224 : index
    %c0_83 = arith.constant 0 : index
    %92 = vector.load %arg12[%c224, %c0_83] : memref<288x128xf32, #tpu.memory_space<vmem>>, vector<32x128xf32>
    tpu.vector_store %arg12[%c224, %c0_83], %91 {strides = array<i32>} : memref<288x128xf32, #tpu.memory_space<vmem>>, vector<32x128xf32>,
    %c0_84 = arith.constant 0 : index
    %c2_85 = arith.constant 2 : index
    %c2_86 = arith.constant 2 : index
    %93 = vector.load %arg10[%c0_84, %c2_85, %c2_86] : memref<32x10x18xf32, #tpu.memory_space<vmem>>, vector<32x8x16xf32>
    %94 = vector.shape_cast %93 : vector<32x8x16xf32> to vector<32x128xf32>
    %c256 = arith.constant 256 : index
    %c0_87 = arith.constant 0 : index
    %95 = vector.load %arg12[%c256, %c0_87] : memref<288x128xf32, #tpu.memory_space<vmem>>, vector<32x128xf32>
    tpu.vector_store %arg12[%c256, %c0_87], %94 {strides = array<i32>} : memref<288x128xf32, #tpu.memory_space<vmem>>, vector<32x128xf32>,
    %c0_88 = arith.constant 0 : index
    %c0_89 = arith.constant 0 : index
    %96 = vector.load %arg5[%c0_88, %c0_89] : memref<32x288xbf16, #tpu.memory_space<vmem>>, vector<32x288xbf16>
    %c0_90 = arith.constant 0 : index
    %c0_91 = arith.constant 0 : index
    %97 = vector.load %arg12[%c0_90, %c0_91] : memref<288x128xf32, #tpu.memory_space<vmem>>, vector<288x128xf32>
    %98 = arith.truncf %97 : vector<288x128xf32> to vector<288x128xbf16>
    %cst_92 = arith.constant dense<0.000000e+00> : vector<32x128xf32>
    %99 = tpu.matmul %96, %98, %cst_92 {dimension_numbers = #tpu.dot_dimension_numbers<[1], [0], [0], [1], [0, 0, 1, 1], [], []>} : vector<32x288xbf16>, vector<288x128xbf16>, vector<32x128xf32> -> vector<32x128xf32>
    %c0_93 = arith.constant 0 : index
    %c0_94 = arith.constant 0 : index
    %100 = vector.load %arg6[%c0_93, %c0_94] : memref<32x1xf32, #tpu.memory_space<vmem>>, vector<32x1xf32>
    %101 = vector.broadcast %100 : vector<32x1xf32> to vector<32x128xf32>
    %102 = arith.addf %99, %101 : vector<32x128xf32>
    %cst_95 = arith.constant 0.000000e+00 : f32
    %103 = vector.broadcast %cst_95 : f32 to vector<32x128xf32>
    %104 = arith.maximumf %102, %103 : vector<32x128xf32>
    %c0_96 = arith.constant 0 : index
    %c0_97 = arith.constant 0 : index
    %c0_98 = arith.constant 0 : index
    %105 = vector.load %arg8[%c0_96, %c0_97, %c0_98] : memref<1x32x128xf32, #tpu.memory_space<vmem>>, vector<1x32x128xf32>
    %106 = vector.shape_cast %105 : vector<1x32x128xf32> to vector<32x128xf32>
    %107 = vector.shape_cast %104 : vector<32x128xf32> to vector<1x32x128xf32>
    tpu.vector_store %arg8[%c0_96, %c0_97, %c0_98], %107 {strides = array<i32>} : memref<1x32x128xf32, #tpu.memory_space<vmem>>, vector<1x32x128xf32>,
    return
  }
  func.func @transform_0(%arg0: i32, %arg1: i32) -> (i32, i32, i32, i32) {
    %c0_i32 = arith.constant 0 : i32
    %c0_i32_0 = arith.constant 0 : i32
    %c0_i32_1 = arith.constant 0 : i32
    %c0_i32_2 = arith.constant 0 : i32
    return %arg0, %c0_i32, %c0_i32_0, %c0_i32_1 : i32, i32, i32, i32
  }
  func.func @transform_1(%arg0: i32, %arg1: i32) -> (i32, i32) {
    %c0_i32 = arith.constant 0 : i32
    %c0_i32_0 = arith.constant 0 : i32
    %c0_i32_1 = arith.constant 0 : i32
    return %c0_i32, %c0_i32_0 : i32, i32
  }
  func.func @transform_2(%arg0: i32, %arg1: i32) -> (i32, i32) {
    %c0_i32 = arith.constant 0 : i32
    %c0_i32_0 = arith.constant 0 : i32
    %c0_i32_1 = arith.constant 0 : i32
    return %c0_i32, %c0_i32_0 : i32, i32
  }
  func.func @transform_3(%arg0: i32, %arg1: i32) -> (i32, i32) {
    %c0_i32 = arith.constant 0 : i32
    %c0_i32_0 = arith.constant 0 : i32
    %c0_i32_1 = arith.constant 0 : i32
    return %c0_i32, %c0_i32_0 : i32, i32
  }
  func.func @transform_4(%arg0: i32, %arg1: i32) -> (i32, i32) {
    %c0_i32 = arith.constant 0 : i32
    %c0_i32_0 = arith.constant 0 : i32
    %c0_i32_1 = arith.constant 0 : i32
    return %c0_i32, %c0_i32_0 : i32, i32
  }
  func.func @transform_5(%arg0: i32, %arg1: i32) -> (i32, i32, i32) {
    %c0_i32 = arith.constant 0 : i32
    %c0_i32_0 = arith.constant 0 : i32
    %c0_i32_1 = arith.constant 0 : i32
    %c0_i32_2 = arith.constant 0 : i32
    return %c0_i32, %c0_i32_0, %c0_i32_1 : i32, i32, i32
  }
  func.func @transform_6(%arg0: i32, %arg1: i32) -> (i32, i32, i32) {
    %c0_i32 = arith.constant 0 : i32
    %c0_i32_0 = arith.constant 0 : i32
    return %arg0, %c0_i32, %arg1 : i32, i32, i32
  }
}

</mosaic_0001>

<llo_original>
// kernel: backbone_forward.1
$region0: #{backbone_forward.1}
  #allocation0 [shape = 'u32[]', space=smem, size = 0x4, offset = 0x4, fixed_abs, tag = 'smem constant byte address 0x4 - core index']
  #allocation1 [shape = 'u32[72,128]{1,0:T(1,128)}', space=vmem, size = 0x9000, scoped, tag = 'internal scratch']
  #allocation2 [shape = 'f32[3,20,18]{2,1,0:T(8,128)}', space=vmem, size = 0x9000, scoped, tag = 'scratch operand']
  #allocation3 [shape = 'f32[32,10,18]{2,1,0:T(8,128)}', space=vmem, size = 0x40000, scoped, tag = 'scratch operand']
  #allocation4 [shape = 'f32[27,160]{1,0:T(8,128)}', space=vmem, size = 0x8000, scoped, tag = 'scratch operand']
  #allocation5 [shape = 'f32[288,128]{1,0:T(8,128)}', space=vmem, size = 0x24000, scoped, tag = 'scratch operand']
  %s0 = inlined_call_operand.hbm [shape: f32[2,3,16,16], index: 0, kind: input, shape index: {}]
  %s1 = inlined_call_operand.vmem [shape: bf16[32,27], index: 1, kind: input, shape index: {}]
  %s2 = inlined_call_operand.vmem [shape: f32[32,1], index: 2, kind: input, shape index: {}]
  %s3 = inlined_call_operand.vmem [shape: bf16[32,288], index: 3, kind: input, shape index: {}]
  %s4 = inlined_call_operand.vmem [shape: f32[32,1], index: 4, kind: input, shape index: {}]
  %s5 = inlined_call_operand.vmem [shape: f32[3,1,1], index: 5, kind: input, shape index: {}]
  %s6 = inlined_call_operand.vmem [shape: f32[2,32,256], index: 6, kind: output, shape index: {}]
  %s7 = sld [smem:[#allocation0]]
  $region107: #{backbone_forward.1} parent=0
    _
  %s9 = ssub.s32 1, %s7
  %s10 = scalar_select 0, %s9, %s7
  $region1: #{backbone_forward.1} parent=0
    #allocation6 [shape = 'u8[49152]{0}', space=vmem, size = 0xc000, scoped, tag = 'input window, operand 0']
    #allocation7 [shape = 's32[2]{0}', space=sflag, size = 0x8, scoped, tag = 'scoped memory for backbone_forward.1']
    #allocation8 [shape = 'u8[32768]{0}', space=vmem, size = 0x8000, scoped, tag = 'output window, operand 0']
    %11 = vsyncpa [#allocation7], 0
    %s12 = scalar_lea.sflag [#allocation7], 1
    %13 = vsyncpa %s12, 0
    loop: start=0, step=1, limit=6
    $region2: #{backbone_forward.1} parent=1 // loop_pre_header
      _
    $region3: #{backbone_forward.1} parent=1 // loop_header
      %s15 = sphi 0, %s19
      %p16 = scmp.ge.s32.totalorder %s15, 6
      %s22 = sphi 0, %s34
      %s23 = sphi 0, %s30
      %s24 = sphi 0, %s22
      %s25 = sphi 0, %s23
      %s26 = sphi 0, %s24
      %s27 = sphi 0, %s25
      %s37 = sphi 0, %s39
      %s40 = sphi 0, %s37
      %s41 = sphi 0, %s40
      %s57 = sphi 0, %s41
      %s61 = sphi 0, %s61
      %s63 = sphi 0, %s61
      %s64 = sphi 0, %s63
      %s78 = sphi 0, %s64
      %s82 = sphi 0, %s82
      %s84 = sphi 0, %s82
      %s85 = sphi 0, %s84
      %s99 = sphi 0, %s85
      %s103 = sphi 0, %s103
      %s105 = sphi 0, %s103
      %s106 = sphi 0, %s105
      %s120 = sphi 0, %s106
      %s124 = sphi 0, %s124
      %s126 = sphi 0, %s124
      %s127 = sphi 0, %s126
      %s141 = sphi 0, %s127
      %s145 = sphi 0, %s145
      %s147 = sphi 0, %s145
      %s148 = sphi 0, %s147
      %s162 = sphi 0, %s148
      %s170 = sphi 0, %s172
      %s173 = sphi 0, %s170
      %s174 = sphi 0, %s173
      %s190 = sphi 0, %s174
    $region4: #{backbone_forward.1} parent=1 // loop_header_branch
      %18 = sbr.rel (%p16) target = $region8
    $region5: #{backbone_forward.1} parent=1 // loop_body
      %s20 = ssub.s32 %s15, 1
      %s21 = ssub.s32 %s15, 2
      %s28 = sadd.s32 1, %s23
      %p29 = scmp.ge.s32.totalorder %s28, 2
      %s30 = scalar_select %p29, 0, %s28
      %s31 = sadd.s32 1, %s22
      %s32 = scalar_select %p29, %s31, %s22
      %p33 = scmp.ge.s32.totalorder %s32, 2
      %s34 = scalar_select %p33, 0, %s32
      %s35 = ssub.s32 %s22, %s34
      %p36 = scmp.eq.s32.totalorder %s35, 0
      %s38 = sadd.s32 %s37, 1
      %s39 = scalar_select %p36, %s37, %s38
      %p42 = pneg %p36
      %p43 = scmp.eq.s32.totalorder %s15, 3
      %p44 = por %p42, %p43
      %p45 = scmp.ne.s32.totalorder %s37, %s40
      %p46 = scmp.eq.s32.totalorder %s15, 0
      %p47 = por %p45, %p46
      %p48 = scmp.ne.s32.totalorder %s37, %s40
      %p49 = scmp.eq.s32.totalorder %s20, 3
      %p50 = por %p48, %p49
      %p51 = scmp.ne.s32.totalorder %s40, %s41
      %p52 = scmp.eq.s32.totalorder %s20, 0
      %p53 = por %p51, %p52
      %p54 = scmp.ne.s32.totalorder %s40, %s41
      %p55 = scmp.eq.s32.totalorder %s21, 3
      %p56 = por %p54, %p55
      %p58 = scmp.ne.s32.totalorder %s41, %s57
      %p59 = scmp.eq.s32.totalorder %s21, 0
      %p60 = por %p58, %p59
      %s62 = sadd.s32 %s61, 1
      %p65 = scmp.eq.s32.totalorder %s15, 3
      %p66 = scmp.ne.s32.totalorder %s61, %s63
      %p67 = scmp.eq.s32.totalorder %s15, 0
      %p68 = por %p66, %p67
      %p69 = scmp.ne.s32.totalorder %s61, %s63
      %p70 = scmp.eq.s32.totalorder %s20, 3
      %p71 = por %p69, %p70
      %p72 = scmp.ne.s32.totalorder %s63, %s64
      %p73 = scmp.eq.s32.totalorder %s20, 0
      %p74 = por %p72, %p73
      %p75 = scmp.ne.s32.totalorder %s63, %s64
      %p76 = scmp.eq.s32.totalorder %s21, 3
      %p77 = por %p75, %p76
      %p79 = scmp.ne.s32.totalorder %s64, %s78
      %p80 = scmp.eq.s32.totalorder %s21, 0
      %p81 = por %p79, %p80
      %s83 = sadd.s32 %s82, 1
      %p86 = scmp.eq.s32.totalorder %s15, 3
      %p87 = scmp.ne.s32.totalorder %s82, %s84
      %p88 = scmp.eq.s32.totalorder %s15, 0
      %p89 = por %p87, %p88
      %p90 = scmp.ne.s32.totalorder %s82, %s84
      %p91 = scmp.eq.s32.totalorder %s20, 3
      %p92 = por %p90, %p91
      %p93 = scmp.ne.s32.totalorder %s84, %s85
      %p94 = scmp.eq.s32.totalorder %s20, 0
      %p95 = por %p93, %p94
      %p96 = scmp.ne.s32.totalorder %s84, %s85
      %p97 = scmp.eq.s32.totalorder %s21, 3
      %p98 = por %p96, %p97
      %p100 = scmp.ne.s32.totalorder %s85, %s99
      %p101 = scmp.eq.s32.totalorder %s21, 0
      %p102 = por %p100, %p101
      %s104 = sadd.s32 %s103, 1
      %p107 = scmp.eq.s32.totalorder %s15, 3
      %p108 = scmp.ne.s32.totalorder %s103, %s105
      %p109 = scmp.eq.s32.totalorder %s15, 0
      %p110 = por %p108, %p109
      %p111 = scmp.ne.s32.totalorder %s103, %s105
      %p112 = scmp.eq.s32.totalorder %s20, 3
      %p113 = por %p111, %p112
      %p114 = scmp.ne.s32.totalorder %s105, %s106
      %p115 = scmp.eq.s32.totalorder %s20, 0
      %p116 = por %p114, %p115
      %p117 = scmp.ne.s32.totalorder %s105, %s106
      %p118 = scmp.eq.s32.totalorder %s21, 3
      %p119 = por %p117, %p118
      %p121 = scmp.ne.s32.totalorder %s106, %s120
      %p122 = scmp.eq.s32.totalorder %s21, 0
      %p123 = por %p121, %p122
      %s125 = sadd.s32 %s124, 1
      %p128 = scmp.eq.s32.totalorder %s15, 3
      %p129 = scmp.ne.s32.totalorder %s124, %s126
      %p130 = scmp.eq.s32.totalorder %s15, 0
      %p131 = por %p129, %p130
      %p132 = scmp.ne.s32.totalorder %s124, %s126
      %p133 = scmp.eq.s32.totalorder %s20, 3
      %p134 = por %p132, %p133
      %p135 = scmp.ne.s32.totalorder %s126, %s127
      %p136 = scmp.eq.s32.totalorder %s20, 0
      %p137 = por %p135, %p136
      %p138 = scmp.ne.s32.totalorder %s126, %s127
      %p139 = scmp.eq.s32.totalorder %s21, 3
      %p140 = por %p138, %p139
      %p142 = scmp.ne.s32.totalorder %s127, %s141
      %p143 = scmp.eq.s32.totalorder %s21, 0
      %p144 = por %p142, %p143
      %s146 = sadd.s32 %s145, 1
      %p149 = scmp.eq.s32.totalorder %s15, 3
      %p150 = scmp.ne.s32.totalorder %s145, %s147
      %p151 = scmp.eq.s32.totalorder %s15, 0
      %p152 = por %p150, %p151
      %p153 = scmp.ne.s32.totalorder %s145, %s147
      %p154 = scmp.eq.s32.totalorder %s20, 3
      %p155 = por %p153, %p154
      %p156 = scmp.ne.s32.totalorder %s147, %s148
      %p157 = scmp.eq.s32.totalorder %s20, 0
      %p158 = por %p156, %p157
      %p159 = scmp.ne.s32.totalorder %s147, %s148
      %p160 = scmp.eq.s32.totalorder %s21, 3
      %p161 = por %p159, %p160
      %p163 = scmp.ne.s32.totalorder %s148, %s162
      %p164 = scmp.eq.s32.totalorder %s21, 0
      %p165 = por %p163, %p164
      %s166 = ssub.s32 %s22, %s34
      %s167 = ssub.s32 %s23, %s30
      %s168 = sor.u32 %s166, %s167
      %p169 = scmp.eq.s32.totalorder %s168, 0
      %s171 = sadd.s32 %s170, 1
      %s172 = scalar_select %p169, %s170, %s171
      %p175 = pneg %p169
      %p176 = scmp.eq.s32.totalorder %s15, 3
      %p177 = por %p175, %p176
      %p178 = scmp.ne.s32.totalorder %s170, %s173
      %p179 = scmp.eq.s32.totalorder %s15, 0
      %p180 = por %p178, %p179
      %p181 = scmp.ne.s32.totalorder %s170, %s173
      %p182 = scmp.eq.s32.totalorder %s20, 3
      %p183 = por %p181, %p182
      %p184 = scmp.ne.s32.totalorder %s173, %s174
      %p185 = scmp.eq.s32.totalorder %s20, 0
      %p186 = por %p184, %p185
      %p187 = scmp.ne.s32.totalorder %s173, %s174
      %p188 = scmp.eq.s32.totalorder %s21, 3
      %p189 = por %p187, %p188
      %p191 = scmp.ne.s32.totalorder %s174, %s190
      %p192 = scmp.eq.s32.totalorder %s21, 0
      %p193 = por %p191, %p192
      %p194 = scmp.le.s32.totalorder 1, %s15
      %p195 = scmp.lt.s32.totalorder %s15, 5
      %p196 = pnand %p194, %p195
      %p197 = pneg %p196
      // Predicated region
      $region9: #{backbone_forward.1} parent=5 // pred_check
        _
      $region10: #{backbone_forward.1} parent=5 // pred_check_branch
        %199 = sbr.rel (%p196) target = $region12
      $region11: #{backbone_forward.1} parent=5 // pred_region
        %s200 = ssub.s32 %s15, 1
        // Predicated region
        $region13: #{backbone_forward.1} parent=11 // pred_check
          %p201 = pneg %p74
        $region14: #{backbone_forward.1} parent=11 // pred_check_branch
          %203 = sbr.rel (%p201) target = $region16
        $region15: #{backbone_forward.1} parent=11 // pred_region
          _
        $region16: #{backbone_forward.1} parent=11 // pred_fallthru
          _
        // Predicated region
        $region17: #{backbone_forward.1} parent=11 // pred_check
          %p204 = pneg %p95
        $region18: #{backbone_forward.1} parent=11 // pred_check_branch
          %206 = sbr.rel (%p204) target = $region20
        $region19: #{backbone_forward.1} parent=11 // pred_region
          _
        $region20: #{backbone_forward.1} parent=11 // pred_fallthru
          _
        // Predicated region
        $region21: #{backbone_forward.1} parent=11 // pred_check
          %p207 = pneg %p116
        $region22: #{backbone_forward.1} parent=11 // pred_check_branch
          %209 = sbr.rel (%p207) target = $region24
        $region23: #{backbone_forward.1} parent=11 // pred_region
          _
        $region24: #{backbone_forward.1} parent=11 // pred_fallthru
          _
        // Predicated region
        $region25: #{backbone_forward.1} parent=11 // pred_check
          %p210 = pneg %p137
        $region26: #{backbone_forward.1} parent=11 // pred_check_branch
          %212 = sbr.rel (%p210) target = $region28
        $region27: #{backbone_forward.1} parent=11 // pred_region
          _
        $region28: #{backbone_forward.1} parent=11 // pred_fallthru
          _
        // Predicated region
        $region29: #{backbone_forward.1} parent=11 // pred_check
          %p213 = pneg %p158
        $region30: #{backbone_forward.1} parent=11 // pred_check_branch
          %215 = sbr.rel (%p213) target = $region32
        $region31: #{backbone_forward.1} parent=11 // pred_region
          _
        $region32: #{backbone_forward.1} parent=11 // pred_fallthru
          _
      $region12: #{backbone_forward.1} parent=5 // pred_fallthru
        _
      %p216 = scmp.lt.s32.totalorder %s15, 4
      // Predicated region
      $region33: #{backbone_forward.1} parent=5 // pred_check
        %p217 = pneg %p216
      $region34: #{backbone_forward.1} parent=5 // pred_check_branch
        %219 = sbr.rel (%p217) target = $region36
      $region35: #{backbone_forward.1} parent=5 // pred_region
        // Predicated region
        $region37: #{backbone_forward.1} parent=35 // pred_check
          %p220 = pneg %p47
        $region38: #{backbone_forward.1} parent=35 // pred_check_branch
          %222 = sbr.rel (%p220) target = $region40
        $region39: #{backbone_forward.1} parent=35 // pred_region
          %s223 = sand.u32 %s37, 1
          %s224 = scalar_lea.sflag [#allocation7], %s223
          %s225 = sand.u32 %s37, 1
          %s226 = smul.addr %s225, 48
          %s227 = scalar_lea.vmem [#allocation6], %s226
          %229 = vsyncadd %s224, 0
          %s230 = smul.addr %s22, 6
          %s231 = smul.addr %s230, 8
          %s232 = scalar_lea.hbm %s0, %s231
          %s233 = sshll.u32 %s232, 4
          %s234 = int_to_ptr.hbm [resolvable:$true] %s233
          %s235 = sshll.u32 %s227, 4
          %s236 = int_to_ptr.vmem [resolvable:$true] %s235
          %241 = dma.hbm_to_vmem [thread:$0]  %s234, 768, %s236, %s224, 128, 128, 8
        $region40: #{backbone_forward.1} parent=35 // pred_fallthru
          _
      $region36: #{backbone_forward.1} parent=5 // pred_fallthru
        _
      %p242 = scmp.le.s32.totalorder 1, %s15
      %p243 = scmp.lt.s32.totalorder %s15, 5
      %p244 = pnand %p242, %p243
      %p245 = pneg %p244
      // Predicated region
      $region41: #{backbone_forward.1} parent=5 // pred_check
        _
      $region42: #{backbone_forward.1} parent=5 // pred_check_branch
        %247 = sbr.rel (%p244) target = $region44
      $region43: #{backbone_forward.1} parent=5 // pred_region
        %s248 = ssub.s32 %s15, 1
        %s249 = sand.u32 %s40, 1
        %s250 = scalar_lea.sflag [#allocation7], %s249
        %s251 = sand.u32 %s40, 1
        %s252 = smul.addr %s251, 48
        %s253 = scalar_lea.vmem [#allocation6], %s252
        // Predicated region
        $region45: #{backbone_forward.1} parent=43 // pred_check
          %p254 = pneg %p53
        $region46: #{backbone_forward.1} parent=43 // pred_check_branch
          %256 = sbr.rel (%p254) target = $region48
        $region47: #{backbone_forward.1} parent=43 // pred_region
          %258 = dma.done %s250, 768
        $region48: #{backbone_forward.1} parent=43 // pred_fallthru
          _
        %s259 = sand.u32 %s40, 1
        %s260 = scalar_lea.sflag [#allocation7], %s259
        %s261 = sand.u32 %s40, 1
        %s262 = smul.addr %s261, 48
        %s263 = scalar_lea.vmem [#allocation6], %s262
        %p264 = pneg %p53
        %p265 = pneg %p50
        %p266 = pneg %p74
        %p267 = pneg %p71
        %p268 = pneg %p95
        %p269 = pneg %p92
        %p270 = pneg %p116
        %p271 = pneg %p113
        %p272 = pneg %p137
        %p273 = pneg %p134
        %p274 = pneg %p158
        %p275 = pneg %p155
        %p276 = pneg %p186
        %p277 = pneg %p183
        %s278 = sand.u32 %s173, 1
        %s279 = sand.u32 %s173, 1
        %s280 = smul.addr %s279, 32
        %s281 = scalar_lea.vmem [#allocation8], %s280
        %p283 = scmp.eq.s32.totalorder %s25, 0
        // Predicated region
        $region49: #{backbone_forward.1} parent=43 // pred_check
          %p284 = pneg %p283
        $region50: #{backbone_forward.1} parent=43 // pred_check_branch
          %286 = sbr.rel (%p284) target = $region52
        $region51: #{backbone_forward.1} parent=43 // pred_region
          %v287 = vld [vmem:[%s5] sm:$0x1]
          %v288 = vld [vmem:[%s5 + $0x1] sm:$0x1]
          %v289 = vld [vmem:[%s5 + $0x2] sm:$0x1]
          %v293 = vperm.slane %v287, 0
          %v294 = vperm.slane %v288, 0
          %v295 = vperm.slane %v289, 0
          %296 = vset.pattern.permute.xlu0 0
          %297 = vperm.xlu0 %296, %v293
          %v298 = vpop.permute.xlu0 %297
          %300 = vset.pattern.permute.xlu0 0
          %301 = vperm.xlu0 %300, %v294
          %v302 = vpop.permute.xlu0 %301
          %304 = vset.pattern.permute.xlu0 0
          %305 = vperm.xlu0 %304, %v295
          %v306 = vpop.permute.xlu0 %305
          %vm308 = vcmask 146432
          %309 = vst.msk [vmem:[#allocation2] sm:$0xff] %vm308, %v298
          %310 = vst.msk [vmem:[#allocation2 + $0x8] sm:$0xff] %vm308, %v298
          %vm311 = vcmask 142336
          %312 = vst.msk [vmem:[#allocation2 + $0x10] sm:$0xf] %vm311, %v298
          %313 = vst.msk [vmem:[#allocation2 + $0x18] sm:$0xff] %vm308, %v302
          %314 = vst.msk [vmem:[#allocation2 + $0x20] sm:$0xff] %vm308, %v302
          %315 = vst.msk [vmem:[#allocation2 + $0x28] sm:$0xf] %vm311, %v302
          %316 = vst.msk [vmem:[#allocation2 + $0x30] sm:$0xff] %vm308, %v306
          %317 = vst.msk [vmem:[#allocation2 + $0x38] sm:$0xff] %vm308, %v306
          %318 = vst.msk [vmem:[#allocation2 + $0x40] sm:$0xf] %vm311, %v306
          %v319 = vld [vmem:[%s253] sm:$0xff]
          %v320 = vld [vmem:[%s253 + $0x8] sm:$0xff]
          %v321 = vld [vmem:[%s253 + $0x10] sm:$0xff]
          %v322 = vld [vmem:[%s253 + $0x18] sm:$0xff]
          %v323 = vld [vmem:[%s253 + $0x20] sm:$0xff]
          %v324 = vld [vmem:[%s253 + $0x28] sm:$0xff]
          %331 = vrot.lane.b32.xlu0 %v319, 1
          %v332 = vpop.permute.xlu0 %331
          %333 = vrot.lane.b32.xlu0 %v320, 1
          %v334 = vpop.permute.xlu0 %333
          %335 = vrot.lane.b32.xlu0 %v321, 1
          %v336 = vpop.permute.xlu0 %335
          %337 = vrot.lane.b32.xlu0 %v322, 1
          %v338 = vpop.permute.xlu0 %337
          %339 = vrot.lane.b32.xlu0 %v323, 1
          %v340 = vpop.permute.xlu0 %339
          %341 = vrot.lane.b32.xlu0 %v324, 1
          %v342 = vpop.permute.xlu0 %341
          %vm349 = vcmask 138248
          %350 = vst.msk [vmem:[#allocation2 + $0x2] sm:$0xff] %vm349, %v332
          %351 = vst.msk [vmem:[#allocation2 + $0xa] sm:$0xff] %vm349, %v334
          %352 = vst.msk [vmem:[#allocation2 + $0x1a] sm:$0xff] %vm349, %v336
          %353 = vst.msk [vmem:[#allocation2 + $0x22] sm:$0xff] %vm349, %v338
          %354 = vst.msk [vmem:[#allocation2 + $0x32] sm:$0xff] %vm349, %v340
          %355 = vst.msk [vmem:[#allocation2 + $0x3a] sm:$0xff] %vm349, %v342
        $region52: #{backbone_forward.1} parent=43 // pred_fallthru
          _
        %s356 = smul.u32 %s25, 8
        %s357 = scalar_lea.vmem [#allocation2], %s356
        %v358 = vld [vmem:[%s357] sm:$0xff]
        %v359 = vld [vmem:[%s357 + $0x8] sm:$0x3]
        %v360 = vld [vmem:[%s357 + $0x18] sm:$0xff]
        %v361 = vld [vmem:[%s357 + $0x30] sm:$0xff]
        %v362 = vld [vmem:[%s357 + $0x38] sm:$0x3]
        %v363 = vrot.slane %v361, 4
        %vm364 = vcmask 1047556
        %v365 = vsel %vm364, %v363, %v358
        %v366 = vrot.slane %v358, 4
        %v367 = vsel %vm364, %v361, %v366
        %v369 = vunpack.c.l.s4 1983009808
        %v370 = vunpack.c.0.s8 %v369
        %v371 = vperm.slane %v365, %v370
        %v373 = vunpack.c.l.s4 1983009808
        %v374 = vunpack.c.0.s8 %v373
        %v375 = vperm.slane %v367, %v374
        %v376 = vrot.slane %v360, 4
        %v377 = vsel %vm364, 0.0, %v376
        %v379 = vunpack.c.l.s4 1983009808
        %v380 = vunpack.c.0.s8 %v379
        %v381 = vperm.slane %v360, %v380
        %v383 = vunpack.c.l.s4 1983009808
        %v384 = vunpack.c.0.s8 %v383
        %v385 = vperm.slane %v377, %v384
        %v386 = vrot.slane %v381, 4
        %v387 = vsel %vm364, %v386, %v371
        %v388 = vrot.slane %v371, 4
        %v389 = vsel %vm364, %v381, %v388
        %v391 = vunpack.c.l.s4 1934713408
        %v392 = vunpack.c.0.s8 %v391
        %v393 = vperm.slane %v387, %v392
        %v395 = vunpack.c.l.s4 1934713408
        %v396 = vunpack.c.0.s8 %v395
        %v397 = vperm.slane %v389, %v396
        %v398 = vrot.slane %v385, 4
        %v399 = vsel %vm364, %v398, %v375
        %v400 = vrot.slane %v375, 4
        %v401 = vsel %vm364, %v385, %v400
        %v403 = vunpack.c.l.s4 1934713408
        %v404 = vunpack.c.0.s8 %v403
        %v405 = vperm.slane %v399, %v404
        %v407 = vunpack.c.l.s4 1934713408
        %v408 = vunpack.c.0.s8 %v407
        %v409 = vperm.slane %v401, %v408
        %v410 = vrot.slane %v393, 4
        %v411 = vsel %vm364, 0.0, %v410
        %v412 = vrot.slane %v397, 4
        %v413 = vsel %vm364, 0.0, %v412
        %v414 = vrot.slane %v405, 4
        %v415 = vsel %vm364, 0.0, %v414
        %v416 = vrot.slane %v409, 4
        %v417 = vsel %vm364, 0.0, %v416
        %v418 = vrot.slane %v362, 4
        %v419 = vsel %vm364, %v418, %v359
        %v421 = vunpack.c.l.s4 1983009808
        %v422 = vunpack.c.0.s8 %v421
        %v423 = vperm.slane %v419, %v422
        %v424 = vld [vmem:[%s357 + $0x20] sm:$0x3]
        %v425 = vrot.slane %v424, 4
        %v426 = vsel %vm364, %v425, %v423
        %v428 = vunpack.c.l.s4 1934713408
        %v429 = vunpack.c.0.s8 %v428
        %v430 = vperm.slane %v426, %v429
        %v431 = vrot.slane %v430, 4
        %v432 = vsel %vm364, 0.0, %v431
        %434 = vrot.lane.b32.xlu0 %v411, 16
        %v435 = vpop.permute.xlu0 %434
        %438 = vrot.lane.b32.xlu0 %v397, 32
        %v439 = vpop.permute.xlu0 %438
        %442 = vrot.lane.b32.xlu0 %v413, 48
        %v443 = vpop.permute.xlu0 %442
        %446 = vrot.lane.b32.xlu0 %v405, 64
        %v447 = vpop.permute.xlu0 %446
        %450 = vrot.lane.b32.xlu0 %v415, 80
        %v451 = vpop.permute.xlu0 %450
        %454 = vrot.lane.b32.xlu0 %v409, 96
        %v455 = vpop.permute.xlu0 %454
        %458 = vrot.lane.b32.xlu0 %v417, 112
        %v459 = vpop.permute.xlu0 %458
        %462 = vrot.lane.b32.xlu0 %v432, 16
        %v463 = vpop.permute.xlu0 %462
        %vm465 = vcmask 130048
        %v466 = vsel %vm465, %v393, %v435
        %vm467 = vcmask 261120
        %v468 = vsel %vm467, %v466, %v439
        %vm469 = vcmask 392192
        %v470 = vsel %vm469, %v468, %v443
        %vm471 = vcmask 523264
        %v472 = vsel %vm471, %v470, %v447
        %vm473 = vcmask 654336
        %v474 = vsel %vm473, %v472, %v451
        %vm475 = vcmask 785408
        %v476 = vsel %vm475, %v474, %v455
        %vm477 = vcmask 916480
        %v478 = vsel %vm477, %v476, %v459
        %v479 = vsel %vm465, %v430, %v463
        %480 = vst [vmem:[#allocation4] sm:$0x7] %v478
        %vm481 = vcmask 256000
        %482 = vst.msk [vmem:[#allocation4 + $0x8] sm:$0x7] %vm481, %v479
        %v483 = vld [vmem:[%s357] sm:$0xff]
        %v484 = vld [vmem:[%s357 + $0x8] sm:$0x3]
        %v485 = vld [vmem:[%s357 + $0x18] sm:$0xff]
        %v486 = vld [vmem:[%s357 + $0x20] sm:$0x3]
        %v487 = vld [vmem:[%s357 + $0x30] sm:$0xff]
        %v488 = vld [vmem:[%s357 + $0x38] sm:$0x3]
        %495 = vrot.lane.b32.xlu0 %v483, 127
        %v496 = vpop.permute.xlu0 %495
        %497 = vrot.lane.b32.xlu0 %v484, 127
        %v498 = vpop.permute.xlu0 %497
        %499 = vrot.lane.b32.xlu0 %v485, 127
        %v500 = vpop.permute.xlu0 %499
        %501 = vrot.lane.b32.xlu0 %v486, 127
        %v502 = vpop.permute.xlu0 %501
        %503 = vrot.lane.b32.xlu0 %v487, 127
        %v504 = vpop.permute.xlu0 %503
        %505 = vrot.lane.b32.xlu0 %v488, 127
        %v506 = vpop.permute.xlu0 %505
        %v512 = vrot.slane %v504, 4
        %v513 = vsel %vm364, %v512, %v496
        %v514 = vrot.slane %v496, 4
        %v515 = vsel %vm364, %v504, %v514
        %v517 = vunpack.c.l.s4 1983009808
        %v518 = vunpack.c.0.s8 %v517
        %v519 = vperm.slane %v513, %v518
        %v521 = vunpack.c.l.s4 1983009808
        %v522 = vunpack.c.0.s8 %v521
        %v523 = vperm.slane %v515, %v522
        %v524 = vrot.slane %v500, 4
        %v525 = vsel %vm364, 0.0, %v524
        %v527 = vunpack.c.l.s4 1983009808
        %v528 = vunpack.c.0.s8 %v527
        %v529 = vperm.slane %v500, %v528
        %v531 = vunpack.c.l.s4 1983009808
        %v532 = vunpack.c.0.s8 %v531
        %v533 = vperm.slane %v525, %v532
        %v534 = vrot.slane %v529, 4
        %v535 = vsel %vm364, %v534, %v519
        %v536 = vrot.slane %v519, 4
        %v537 = vsel %vm364, %v529, %v536
        %v539 = vunpack.c.l.s4 1934713408
        %v540 = vunpack.c.0.s8 %v539
        %v541 = vperm.slane %v535, %v540
        %v543 = vunpack.c.l.s4 1934713408
        %v544 = vunpack.c.0.s8 %v543
        %v545 = vperm.slane %v537, %v544
        %v546 = vrot.slane %v533, 4
        %v547 = vsel %vm364, %v546, %v523
        %v548 = vrot.slane %v523, 4
        %v549 = vsel %vm364, %v533, %v548
        %v551 = vunpack.c.l.s4 1934713408
        %v552 = vunpack.c.0.s8 %v551
        %v553 = vperm.slane %v547, %v552
        %v555 = vunpack.c.l.s4 1934713408
        %v556 = vunpack.c.0.s8 %v555
        %v557 = vperm.slane %v549, %v556
        %v558 = vrot.slane %v541, 4
        %v559 = vsel %vm364, 0.0, %v558
        %v560 = vrot.slane %v545, 4
        %v561 = vsel %vm364, 0.0, %v560
        %v562 = vrot.slane %v553, 4
        %v563 = vsel %vm364, 0.0, %v562
        %v564 = vrot.slane %v557, 4
        %v565 = vsel %vm364, 0.0, %v564
        %v566 = vrot.slane %v506, 4
        %v567 = vsel %vm364, %v566, %v498
        %v569 = vunpack.c.l.s4 1983009808
        %v570 = vunpack.c.0.s8 %v569
        %v571 = vperm.slane %v567, %v570
        %v573 = vrot.slane %v502, 4
        %v574 = vsel %vm364, %v573, %v571
        %v576 = vunpack.c.l.s4 1934713408
        %v577 = vunpack.c.0.s8 %v576
        %v578 = vperm.slane %v574, %v577
        %v579 = vrot.slane %v578, 4
        %v580 = vsel %vm364, 0.0, %v579
        %582 = vrot.lane.b32.xlu0 %v559, 16
        %v583 = vpop.permute.xlu0 %582
        %586 = vrot.lane.b32.xlu0 %v545, 32
        %v587 = vpop.permute.xlu0 %586
        %590 = vrot.lane.b32.xlu0 %v561, 48
        %v591 = vpop.permute.xlu0 %590
        %594 = vrot.lane.b32.xlu0 %v553, 64
        %v595 = vpop.permute.xlu0 %594
        %598 = vrot.lane.b32.xlu0 %v563, 80
        %v599 = vpop.permute.xlu0 %598
        %602 = vrot.lane.b32.xlu0 %v557, 96
        %v603 = vpop.permute.xlu0 %602
        %606 = vrot.lane.b32.xlu0 %v565, 112
        %v607 = vpop.permute.xlu0 %606
        %610 = vrot.lane.b32.xlu0 %v580, 16
        %v611 = vpop.permute.xlu0 %610
        %v613 = vsel %vm465, %v541, %v583
        %v614 = vsel %vm467, %v613, %v587
        %v615 = vsel %vm469, %v614, %v591
        %v616 = vsel %vm471, %v615, %v595
        %v617 = vsel %vm473, %v616, %v599
        %v618 = vsel %vm475, %v617, %v603
        %v619 = vsel %vm477, %v618, %v607
        %v620 = vsel %vm465, %v578, %v611
        %v623 = vrot.slane %v619, 5
        %v624 = vrot.slane %v620, 5
        %627 = vst [vmem:[#allocation4] sm:$0x38] %v623
        %vm628 = vcmask 259075
        %629 = vst.msk [vmem:[#allocation4 + $0x8] sm:$0x38] %vm628, %v624
        %v630 = vld [vmem:[%s357] sm:$0xff]
        %v631 = vld [vmem:[%s357 + $0x8] sm:$0x3]
        %v632 = vld [vmem:[%s357 + $0x18] sm:$0xff]
        %v633 = vld [vmem:[%s357 + $0x20] sm:$0x3]
        %v634 = vld [vmem:[%s357 + $0x30] sm:$0xff]
        %v635 = vld [vmem:[%s357 + $0x38] sm:$0x3]
        %642 = vrot.lane.b32.xlu0 %v630, 126
        %v643 = vpop.permute.xlu0 %642
        %644 = vrot.lane.b32.xlu0 %v631, 126
        %v645 = vpop.permute.xlu0 %644
        %646 = vrot.lane.b32.xlu0 %v632, 126
        %v647 = vpop.permute.xlu0 %646
        %648 = vrot.lane.b32.xlu0 %v633, 126
        %v649 = vpop.permute.xlu0 %648
        %650 = vrot.lane.b32.xlu0 %v634, 126
        %v651 = vpop.permute.xlu0 %650
        %652 = vrot.lane.b32.xlu0 %v635, 126
        %v653 = vpop.permute.xlu0 %652
        %v659 = vrot.slane %v651, 4
        %v660 = vsel %vm364, %v659, %v643
        %v661 = vrot.slane %v643, 4
        %v662 = vsel %vm364, %v651, %v661
        %v664 = vunpack.c.l.s4 1983009808
        %v665 = vunpack.c.0.s8 %v664
        %v666 = vperm.slane %v660, %v665
        %v668 = vunpack.c.l.s4 1983009808
        %v669 = vunpack.c.0.s8 %v668
        %v670 = vperm.slane %v662, %v669
        %v671 = vrot.slane %v647, 4
        %v672 = vsel %vm364, 0.0, %v671
        %v674 = vunpack.c.l.s4 1983009808
        %v675 = vunpack.c.0.s8 %v674
        %v676 = vperm.slane %v647, %v675
        %v678 = vunpack.c.l.s4 1983009808
        %v679 = vunpack.c.0.s8 %v678
        %v680 = vperm.slane %v672, %v679
        %v681 = vrot.slane %v676, 4
        %v682 = vsel %vm364, %v681, %v666
        %v683 = vrot.slane %v666, 4
        %v684 = vsel %vm364, %v676, %v683
        %v686 = vunpack.c.l.s4 1934713408
        %v687 = vunpack.c.0.s8 %v686
        %v688 = vperm.slane %v682, %v687
        %v690 = vunpack.c.l.s4 1934713408
        %v691 = vunpack.c.0.s8 %v690
        %v692 = vperm.slane %v684, %v691
        %v693 = vrot.slane %v680, 4
        %v694 = vsel %vm364, %v693, %v670
        %v695 = vrot.slane %v670, 4
        %v696 = vsel %vm364, %v680, %v695
        %v698 = vunpack.c.l.s4 1934713408
        %v699 = vunpack.c.0.s8 %v698
        %v700 = vperm.slane %v694, %v699
        %v702 = vunpack.c.l.s4 1934713408
        %v703 = vunpack.c.0.s8 %v702
        %v704 = vperm.slane %v696, %v703
        %v705 = vrot.slane %v688, 4
        %v706 = vsel %vm364, 0.0, %v705
        %v707 = vrot.slane %v692, 4
        %v708 = vsel %vm364, 0.0, %v707
        %v709 = vrot.slane %v700, 4
        %v710 = vsel %vm364, 0.0, %v709
        %v711 = vrot.slane %v704, 4
        %v712 = vsel %vm364, 0.0, %v711
        %v713 = vrot.slane %v653, 4
        %v714 = vsel %vm364, %v713, %v645
        %v716 = vunpack.c.l.s4 1983009808
        %v717 = vunpack.c.0.s8 %v716
        %v718 = vperm.slane %v714, %v717
        %v720 = vrot.slane %v649, 4
        %v721 = vsel %vm364, %v720, %v718
        %v723 = vunpack.c.l.s4 1934713408
        %v724 = vunpack.c.0.s8 %v723
        %v725 = vperm.slane %v721, %v724
        %v726 = vrot.slane %v725, 4
        %v727 = vsel %vm364, 0.0, %v726
        %729 = vrot.lane.b32.xlu0 %v706, 16
        %v730 = vpop.permute.xlu0 %729
        %733 = vrot.lane.b32.xlu0 %v692, 32
        %v734 = vpop.permute.xlu0 %733
        %737 = vrot.lane.b32.xlu0 %v708, 48
        %v738 = vpop.permute.xlu0 %737
        %741 = vrot.lane.b32.xlu0 %v700, 64
        %v742 = vpop.permute.xlu0 %741
        %745 = vrot.lane.b32.xlu0 %v710, 80
        %v746 = vpop.permute.xlu0 %745
        %749 = vrot.lane.b32.xlu0 %v704, 96
        %v750 = vpop.permute.xlu0 %749
        %753 = vrot.lane.b32.xlu0 %v712, 112
        %v754 = vpop.permute.xlu0 %753
        %757 = vrot.lane.b32.xlu0 %v727, 16
        %v758 = vpop.permute.xlu0 %757
        %v760 = vsel %vm465, %v688, %v730
        %v761 = vsel %vm467, %v760, %v734
        %v762 = vsel %vm469, %v761, %v738
        %v763 = vsel %vm471, %v762, %v742
        %v764 = vsel %vm473, %v763, %v746
        %v765 = vsel %vm475, %v764, %v750
        %v766 = vsel %vm477, %v765, %v754
        %v767 = vsel %vm465, %v725, %v758
        %v770 = vrot.slane %v766, 2
        %v771 = vrot.slane %v767, 2
        %774 = vst [vmem:[#allocation4] sm:$0xc0] %v770
        %vm775 = vcmask 261126
        %776 = vst.msk [vmem:[#allocation4 + $0x8] sm:$0xc0] %vm775, %v771
        %777 = vst [vmem:[#allocation4 + $0x10] sm:$0x1] %v770
        %vm778 = vcmask 253952
        %779 = vst.msk [vmem:[#allocation4 + $0x18] sm:$0x1] %vm778, %v771
        %s780 = sadd.s32 %s356, 1
        %s781 = scalar_lea.vmem [#allocation2], %s780
        %v782 = vld [vmem:[%s781] sm:$0xff]
        %v783 = vld [vmem:[%s781 + $0x8] sm:$0x3]
        %v784 = vld [vmem:[%s781 + $0x18] sm:$0xff]
        %v785 = vld [vmem:[%s781 + $0x30] sm:$0xff]
        %v786 = vld [vmem:[%s781 + $0x38] sm:$0x3]
        %v787 = vrot.slane %v785, 4
        %v788 = vsel %vm364, %v787, %v782
        %v789 = vrot.slane %v782, 4
        %v790 = vsel %vm364, %v785, %v789
        %v792 = vunpack.c.l.s4 1983009808
        %v793 = vunpack.c.0.s8 %v792
        %v794 = vperm.slane %v788, %v793
        %v796 = vunpack.c.l.s4 1983009808
        %v797 = vunpack.c.0.s8 %v796
        %v798 = vperm.slane %v790, %v797
        %v799 = vrot.slane %v784, 4
        %v800 = vsel %vm364, 0.0, %v799
        %v802 = vunpack.c.l.s4 1983009808
        %v803 = vunpack.c.0.s8 %v802
        %v804 = vperm.slane %v784, %v803
        %v806 = vunpack.c.l.s4 1983009808
        %v807 = vunpack.c.0.s8 %v806
        %v808 = vperm.slane %v800, %v807
        %v809 = vrot.slane %v804, 4
        %v810 = vsel %vm364, %v809, %v794
        %v811 = vrot.slane %v794, 4
        %v812 = vsel %vm364, %v804, %v811
        %v814 = vunpack.c.l.s4 1934713408
        %v815 = vunpack.c.0.s8 %v814
        %v816 = vperm.slane %v810, %v815
        %v818 = vunpack.c.l.s4 1934713408
        %v819 = vunpack.c.0.s8 %v818
        %v820 = vperm.slane %v812, %v819
        %v821 = vrot.slane %v808, 4
        %v822 = vsel %vm364, %v821, %v798
        %v823 = vrot.slane %v798, 4
        %v824 = vsel %vm364, %v808, %v823
        %v826 = vunpack.c.l.s4 1934713408
        %v827 = vunpack.c.0.s8 %v826
        %v828 = vperm.slane %v822, %v827
        %v830 = vunpack.c.l.s4 1934713408
        %v831 = vunpack.c.0.s8 %v830
        %v832 = vperm.slane %v824, %v831
        %v833 = vrot.slane %v816, 4
        %v834 = vsel %vm364, 0.0, %v833
        %v835 = vrot.slane %v820, 4
        %v836 = vsel %vm364, 0.0, %v835
        %v837 = vrot.slane %v828, 4
        %v838 = vsel %vm364, 0.0, %v837
        %v839 = vrot.slane %v832, 4
        %v840 = vsel %vm364, 0.0, %v839
        %v841 = vrot.slane %v786, 4
        %v842 = vsel %vm364, %v841, %v783
        %v844 = vunpack.c.l.s4 1983009808
        %v845 = vunpack.c.0.s8 %v844
        %v846 = vperm.slane %v842, %v845
        %v847 = vld [vmem:[%s781 + $0x20] sm:$0x3]
        %v848 = vrot.slane %v847, 4
        %v849 = vsel %vm364, %v848, %v846
        %v851 = vunpack.c.l.s4 1934713408
        %v852 = vunpack.c.0.s8 %v851
        %v853 = vperm.slane %v849, %v852
        %v854 = vrot.slane %v853, 4
        %v855 = vsel %vm364, 0.0, %v854
        %857 = vrot.lane.b32.xlu0 %v834, 16
        %v858 = vpop.permute.xlu0 %857
        %861 = vrot.lane.b32.xlu0 %v820, 32
        %v862 = vpop.permute.xlu0 %861
        %865 = vrot.lane.b32.xlu0 %v836, 48
        %v866 = vpop.permute.xlu0 %865
        %869 = vrot.lane.b32.xlu0 %v828, 64
        %v870 = vpop.permute.xlu0 %869
        %873 = vrot.lane.b32.xlu0 %v838, 80
        %v874 = vpop.permute.xlu0 %873
        %877 = vrot.lane.b32.xlu0 %v832, 96
        %v878 = vpop.permute.xlu0 %877
        %881 = vrot.lane.b32.xlu0 %v840, 112
        %v882 = vpop.permute.xlu0 %881
        %885 = vrot.lane.b32.xlu0 %v855, 16
        %v886 = vpop.permute.xlu0 %885
        %v888 = vsel %vm465, %v816, %v858
        %v889 = vsel %vm467, %v888, %v862
        %v890 = vsel %vm469, %v889, %v866
        %v891 = vsel %vm471, %v890, %v870
        %v892 = vsel %vm473, %v891, %v874
        %v893 = vsel %vm475, %v892, %v878
        %v894 = vsel %vm477, %v893, %v882
        %v895 = vsel %vm465, %v853, %v886
        %v898 = vrot.slane %v894, 7
        %v899 = vrot.slane %v895, 7
        %902 = vst [vmem:[#allocation4 + $0x10] sm:$0xe] %v898
        %vm903 = vcmask 257025
        %904 = vst.msk [vmem:[#allocation4 + $0x18] sm:$0xe] %vm903, %v899
        %v905 = vld [vmem:[%s781] sm:$0xff]
        %v906 = vld [vmem:[%s781 + $0x8] sm:$0x3]
        %v907 = vld [vmem:[%s781 + $0x18] sm:$0xff]
        %v908 = vld [vmem:[%s781 + $0x20] sm:$0x3]
        %v909 = vld [vmem:[%s781 + $0x30] sm:$0xff]
        %v910 = vld [vmem:[%s781 + $0x38] sm:$0x3]
        %917 = vrot.lane.b32.xlu0 %v905, 127
        %v918 = vpop.permute.xlu0 %917
        %919 = vrot.lane.b32.xlu0 %v906, 127
        %v920 = vpop.permute.xlu0 %919
        %921 = vrot.lane.b32.xlu0 %v907, 127
        %v922 = vpop.permute.xlu0 %921
        %923 = vrot.lane.b32.xlu0 %v908, 127
        %v924 = vpop.permute.xlu0 %923
        %925 = vrot.lane.b32.xlu0 %v909, 127
        %v926 = vpop.permute.xlu0 %925
        %927 = vrot.lane.b32.xlu0 %v910, 127
        %v928 = vpop.permute.xlu0 %927
        %v934 = vrot.slane %v926, 4
        %v935 = vsel %vm364, %v934, %v918
        %v936 = vrot.slane %v918, 4
        %v937 = vsel %vm364, %v926, %v936
        %v939 = vunpack.c.l.s4 1983009808
        %v940 = vunpack.c.0.s8 %v939
        %v941 = vperm.slane %v935, %v940
        %v943 = vunpack.c.l.s4 1983009808
        %v944 = vunpack.c.0.s8 %v943
        %v945 = vperm.slane %v937, %v944
        %v946 = vrot.slane %v922, 4
        %v947 = vsel %vm364, 0.0, %v946
        %v949 = vunpack.c.l.s4 1983009808
        %v950 = vunpack.c.0.s8 %v949
        %v951 = vperm.slane %v922, %v950
        %v953 = vunpack.c.l.s4 1983009808
        %v954 = vunpack.c.0.s8 %v953
        %v955 = vperm.slane %v947, %v954
        %v956 = vrot.slane %v951, 4
        %v957 = vsel %vm364, %v956, %v941
        %v958 = vrot.slane %v941, 4
        %v959 = vsel %vm364, %v951, %v958
        %v961 = vunpack.c.l.s4 1934713408
        %v962 = vunpack.c.0.s8 %v961
        %v963 = vperm.slane %v957, %v962
        %v965 = vunpack.c.l.s4 1934713408
        %v966 = vunpack.c.0.s8 %v965
        %v967 = vperm.slane %v959, %v966
        %v968 = vrot.slane %v955, 4
        %v969 = vsel %vm364, %v968, %v945
        %v970 = vrot.slane %v945, 4
        %v971 = vsel %vm364, %v955, %v970
        %v973 = vunpack.c.l.s4 1934713408
        %v974 = vunpack.c.0.s8 %v973
        %v975 = vperm.slane %v969, %v974
        %v977 = vunpack.c.l.s4 1934713408
        %v978 = vunpack.c.0.s8 %v977
        %v979 = vperm.slane %v971, %v978
        %v980 = vrot.slane %v963, 4
        %v981 = vsel %vm364, 0.0, %v980
        %v982 = vrot.slane %v967, 4
        %v983 = vsel %vm364, 0.0, %v982
        %v984 = vrot.slane %v975, 4
        %v985 = vsel %vm364, 0.0, %v984
        %v986 = vrot.slane %v979, 4
        %v987 = vsel %vm364, 0.0, %v986
        %v988 = vrot.slane %v928, 4
        %v989 = vsel %vm364, %v988, %v920
        %v991 = vunpack.c.l.s4 1983009808
        %v992 = vunpack.c.0.s8 %v991
        %v993 = vperm.slane %v989, %v992
        %v995 = vrot.slane %v924, 4
        %v996 = vsel %vm364, %v995, %v993
        %v998 = vunpack.c.l.s4 1934713408
        %v999 = vunpack.c.0.s8 %v998
        %v1000 = vperm.slane %v996, %v999
        %v1001 = vrot.slane %v1000, 4
        %v1002 = vsel %vm364, 0.0, %v1001
        %1004 = vrot.lane.b32.xlu0 %v981, 16
        %v1005 = vpop.permute.xlu0 %1004
        %1008 = vrot.lane.b32.xlu0 %v967, 32
        %v1009 = vpop.permute.xlu0 %1008
        %1012 = vrot.lane.b32.xlu0 %v983, 48
        %v1013 = vpop.permute.xlu0 %1012
        %1016 = vrot.lane.b32.xlu0 %v975, 64
        %v1017 = vpop.permute.xlu0 %1016
        %1020 = vrot.lane.b32.xlu0 %v985, 80
        %v1021 = vpop.permute.xlu0 %1020
        %1024 = vrot.lane.b32.xlu0 %v979, 96
        %v1025 = vpop.permute.xlu0 %1024
        %1028 = vrot.lane.b32.xlu0 %v987, 112
        %v1029 = vpop.permute.xlu0 %1028
        %1032 = vrot.lane.b32.xlu0 %v1002, 16
        %v1033 = vpop.permute.xlu0 %1032
        %v1035 = vsel %vm465, %v963, %v1005
        %v1036 = vsel %vm467, %v1035, %v1009
        %v1037 = vsel %vm469, %v1036, %v1013
        %v1038 = vsel %vm471, %v1037, %v1017
        %v1039 = vsel %vm473, %v1038, %v1021
        %v1040 = vsel %vm475, %v1039, %v1025
        %v1041 = vsel %vm477, %v1040, %v1029
        %v1042 = vsel %vm465, %v1000, %v1033
        %v1045 = vrot.slane %v1041, 4
        %v1046 = vrot.slane %v1042, 4
        %1049 = vst [vmem:[#allocation4 + $0x10] sm:$0x70] %v1045
        %vm1050 = vcmask 260100
        %1051 = vst.msk [vmem:[#allocation4 + $0x18] sm:$0x70] %vm1050, %v1046
        %v1052 = vld [vmem:[%s781] sm:$0xff]
        %v1053 = vld [vmem:[%s781 + $0x8] sm:$0x3]
        %v1054 = vld [vmem:[%s781 + $0x18] sm:$0xff]
        %v1055 = vld [vmem:[%s781 + $0x20] sm:$0x3]
        %v1056 = vld [vmem:[%s781 + $0x30] sm:$0xff]
        %v1057 = vld [vmem:[%s781 + $0x38] sm:$0x3]
        %1064 = vrot.lane.b32.xlu0 %v1052, 126
        %v1065 = vpop.permute.xlu0 %1064
        %1066 = vrot.lane.b32.xlu0 %v1053, 126
        %v1067 = vpop.permute.xlu0 %1066
        %1068 = vrot.lane.b32.xlu0 %v1054, 126
        %v1069 = vpop.permute.xlu0 %1068
        %1070 = vrot.lane.b32.xlu0 %v1055, 126
        %v1071 = vpop.permute.xlu0 %1070
        %1072 = vrot.lane.b32.xlu0 %v1056, 126
        %v1073 = vpop.permute.xlu0 %1072
        %1074 = vrot.lane.b32.xlu0 %v1057, 126
        %v1075 = vpop.permute.xlu0 %1074
        %v1081 = vrot.slane %v1073, 4
        %v1082 = vsel %vm364, %v1081, %v1065
        %v1083 = vrot.slane %v1065, 4
        %v1084 = vsel %vm364, %v1073, %v1083
        %v1086 = vunpack.c.l.s4 1983009808
        %v1087 = vunpack.c.0.s8 %v1086
        %v1088 = vperm.slane %v1082, %v1087
        %v1090 = vunpack.c.l.s4 1983009808
        %v1091 = vunpack.c.0.s8 %v1090
        %v1092 = vperm.slane %v1084, %v1091
        %v1093 = vrot.slane %v1069, 4
        %v1094 = vsel %vm364, 0.0, %v1093
        %v1096 = vunpack.c.l.s4 1983009808
        %v1097 = vunpack.c.0.s8 %v1096
        %v1098 = vperm.slane %v1069, %v1097
        %v1100 = vunpack.c.l.s4 1983009808
        %v1101 = vunpack.c.0.s8 %v1100
        %v1102 = vperm.slane %v1094, %v1101
        %v1103 = vrot.slane %v1098, 4
        %v1104 = vsel %vm364, %v1103, %v1088
        %v1105 = vrot.slane %v1088, 4
        %v1106 = vsel %vm364, %v1098, %v1105
        %v1108 = vunpack.c.l.s4 1934713408
        %v1109 = vunpack.c.0.s8 %v1108
        %v1110 = vperm.slane %v1104, %v1109
        %v1112 = vunpack.c.l.s4 1934713408
        %v1113 = vunpack.c.0.s8 %v1112
        %v1114 = vperm.slane %v1106, %v1113
        %v1115 = vrot.slane %v1102, 4
        %v1116 = vsel %vm364, %v1115, %v1092
        %v1117 = vrot.slane %v1092, 4
        %v1118 = vsel %vm364, %v1102, %v1117
        %v1120 = vunpack.c.l.s4 1934713408
        %v1121 = vunpack.c.0.s8 %v1120
        %v1122 = vperm.slane %v1116, %v1121
        %v1124 = vunpack.c.l.s4 1934713408
        %v1125 = vunpack.c.0.s8 %v1124
        %v1126 = vperm.slane %v1118, %v1125
        %v1127 = vrot.slane %v1110, 4
        %v1128 = vsel %vm364, 0.0, %v1127
        %v1129 = vrot.slane %v1114, 4
        %v1130 = vsel %vm364, 0.0, %v1129
        %v1131 = vrot.slane %v1122, 4
        %v1132 = vsel %vm364, 0.0, %v1131
        %v1133 = vrot.slane %v1126, 4
        %v1134 = vsel %vm364, 0.0, %v1133
        %v1135 = vrot.slane %v1075, 4
        %v1136 = vsel %vm364, %v1135, %v1067
        %v1138 = vunpack.c.l.s4 1983009808
        %v1139 = vunpack.c.0.s8 %v1138
        %v1140 = vperm.slane %v1136, %v1139
        %v1142 = vrot.slane %v1071, 4
        %v1143 = vsel %vm364, %v1142, %v1140
        %v1145 = vunpack.c.l.s4 1934713408
        %v1146 = vunpack.c.0.s8 %v1145
        %v1147 = vperm.slane %v1143, %v1146
        %v1148 = vrot.slane %v1147, 4
        %v1149 = vsel %vm364, 0.0, %v1148
        %1151 = vrot.lane.b32.xlu0 %v1128, 16
        %v1152 = vpop.permute.xlu0 %1151
        %1155 = vrot.lane.b32.xlu0 %v1114, 32
        %v1156 = vpop.permute.xlu0 %1155
        %1159 = vrot.lane.b32.xlu0 %v1130, 48
        %v1160 = vpop.permute.xlu0 %1159
        %1163 = vrot.lane.b32.xlu0 %v1122, 64
        %v1164 = vpop.permute.xlu0 %1163
        %1167 = vrot.lane.b32.xlu0 %v1132, 80
        %v1168 = vpop.permute.xlu0 %1167
        %1171 = vrot.lane.b32.xlu0 %v1126, 96
        %v1172 = vpop.permute.xlu0 %1171
        %1175 = vrot.lane.b32.xlu0 %v1134, 112
        %v1176 = vpop.permute.xlu0 %1175
        %1179 = vrot.lane.b32.xlu0 %v1149, 16
        %v1180 = vpop.permute.xlu0 %1179
        %v1182 = vsel %vm465, %v1110, %v1152
        %v1183 = vsel %vm467, %v1182, %v1156
        %v1184 = vsel %vm469, %v1183, %v1160
        %v1185 = vsel %vm471, %v1184, %v1164
        %v1186 = vsel %vm473, %v1185, %v1168
        %v1187 = vsel %vm475, %v1186, %v1172
        %v1188 = vsel %vm477, %v1187, %v1176
        %v1189 = vsel %vm465, %v1147, %v1180
        %v1192 = vrot.slane %v1188, 1
        %v1193 = vrot.slane %v1189, 1
        %1196 = vst [vmem:[#allocation4 + $0x10] sm:$0x80] %v1192
        %vm1197 = vcmask 261127
        %1198 = vst.msk [vmem:[#allocation4 + $0x18] sm:$0x80] %vm1197, %v1193
        %1199 = vst [vmem:[#allocation4 + $0x20] sm:$0x3] %v1192
        %vm1200 = vcmask 254976
        %1201 = vst.msk [vmem:[#allocation4 + $0x28] sm:$0x3] %vm1200, %v1193
        %s1202 = sadd.s32 %s356, 2
        %s1203 = scalar_lea.vmem [#allocation2], %s1202
        %v1204 = vld [vmem:[%s1203] sm:$0xff]
        %v1205 = vld [vmem:[%s1203 + $0x8] sm:$0x3]
        %v1206 = vld [vmem:[%s1203 + $0x18] sm:$0xff]
        %v1207 = vld [vmem:[%s1203 + $0x30] sm:$0xff]
        %v1208 = vld [vmem:[%s1203 + $0x38] sm:$0x3]
        %v1209 = vrot.slane %v1207, 4
        %v1210 = vsel %vm364, %v1209, %v1204
        %v1211 = vrot.slane %v1204, 4
        %v1212 = vsel %vm364, %v1207, %v1211
        %v1214 = vunpack.c.l.s4 1983009808
        %v1215 = vunpack.c.0.s8 %v1214
        %v1216 = vperm.slane %v1210, %v1215
        %v1218 = vunpack.c.l.s4 1983009808
        %v1219 = vunpack.c.0.s8 %v1218
        %v1220 = vperm.slane %v1212, %v1219
        %v1221 = vrot.slane %v1206, 4
        %v1222 = vsel %vm364, 0.0, %v1221
        %v1224 = vunpack.c.l.s4 1983009808
        %v1225 = vunpack.c.0.s8 %v1224
        %v1226 = vperm.slane %v1206, %v1225
        %v1228 = vunpack.c.l.s4 1983009808
        %v1229 = vunpack.c.0.s8 %v1228
        %v1230 = vperm.slane %v1222, %v1229
        %v1231 = vrot.slane %v1226, 4
        %v1232 = vsel %vm364, %v1231, %v1216
        %v1233 = vrot.slane %v1216, 4
        %v1234 = vsel %vm364, %v1226, %v1233
        %v1236 = vunpack.c.l.s4 1934713408
        %v1237 = vunpack.c.0.s8 %v1236
        %v1238 = vperm.slane %v1232, %v1237
        %v1240 = vunpack.c.l.s4 1934713408
        %v1241 = vunpack.c.0.s8 %v1240
        %v1242 = vperm.slane %v1234, %v1241
        %v1243 = vrot.slane %v1230, 4
        %v1244 = vsel %vm364, %v1243, %v1220
        %v1245 = vrot.slane %v1220, 4
        %v1246 = vsel %vm364, %v1230, %v1245
        %v1248 = vunpack.c.l.s4 1934713408
        %v1249 = vunpack.c.0.s8 %v1248
        %v1250 = vperm.slane %v1244, %v1249
        %v1252 = vunpack.c.l.s4 1934713408
        %v1253 = vunpack.c.0.s8 %v1252
        %v1254 = vperm.slane %v1246, %v1253
        %v1255 = vrot.slane %v1238, 4
        %v1256 = vsel %vm364, 0.0, %v1255
        %v1257 = vrot.slane %v1242, 4
        %v1258 = vsel %vm364, 0.0, %v1257
        %v1259 = vrot.slane %v1250, 4
        %v1260 = vsel %vm364, 0.0, %v1259
        %v1261 = vrot.slane %v1254, 4
        %v1262 = vsel %vm364, 0.0, %v1261
        %v1263 = vrot.slane %v1208, 4
        %v1264 = vsel %vm364, %v1263, %v1205
        %v1266 = vunpack.c.l.s4 1983009808
        %v1267 = vunpack.c.0.s8 %v1266
        %v1268 = vperm.slane %v1264, %v1267
        %v1269 = vld [vmem:[%s1203 + $0x20] sm:$0x3]
        %v1270 = vrot.slane %v1269, 4
        %v1271 = vsel %vm364, %v1270, %v1268
        %v1273 = vunpack.c.l.s4 1934713408
        %v1274 = vunpack.c.0.s8 %v1273
        %v1275 = vperm.slane %v1271, %v1274
        %v1276 = vrot.slane %v1275, 4
        %v1277 = vsel %vm364, 0.0, %v1276
        %1279 = vrot.lane.b32.xlu0 %v1256, 16
        %v1280 = vpop.permute.xlu0 %1279
        %1283 = vrot.lane.b32.xlu0 %v1242, 32
        %v1284 = vpop.permute.xlu0 %1283
        %1287 = vrot.lane.b32.xlu0 %v1258, 48
        %v1288 = vpop.permute.xlu0 %1287
        %1291 = vrot.lane.b32.xlu0 %v1250, 64
        %v1292 = vpop.permute.xlu0 %1291
        %1295 = vrot.lane.b32.xlu0 %v1260, 80
        %v1296 = vpop.permute.xlu0 %1295
        %1299 = vrot.lane.b32.xlu0 %v1254, 96
        %v1300 = vpop.permute.xlu0 %1299
        %1303 = vrot.lane.b32.xlu0 %v1262, 112
        %v1304 = vpop.permute.xlu0 %1303
        %1307 = vrot.lane.b32.xlu0 %v1277, 16
        %v1308 = vpop.permute.xlu0 %1307
        %v1310 = vsel %vm465, %v1238, %v1280
        %v1311 = vsel %vm467, %v1310, %v1284
        %v1312 = vsel %vm469, %v1311, %v1288
        %v1313 = vsel %vm471, %v1312, %v1292
        %v1314 = vsel %vm473, %v1313, %v1296
        %v1315 = vsel %vm475, %v1314, %v1300
        %v1316 = vsel %vm477, %v1315, %v1304
        %v1317 = vsel %vm465, %v1275, %v1308
        %v1320 = vrot.slane %v1316, 6
        %v1321 = vrot.slane %v1317, 6
        %1324 = vst [vmem:[#allocation4 + $0x20] sm:$0x1c] %v1320
        %vm1325 = vcmask 258050
        %1326 = vst.msk [vmem:[#allocation4 + $0x28] sm:$0x1c] %vm1325, %v1321
        %v1327 = vld [vmem:[%s1203] sm:$0xff]
        %v1328 = vld [vmem:[%s1203 + $0x8] sm:$0x3]
        %v1329 = vld [vmem:[%s1203 + $0x18] sm:$0xff]
        %v1330 = vld [vmem:[%s1203 + $0x20] sm:$0x3]
        %v1331 = vld [vmem:[%s1203 + $0x30] sm:$0xff]
        %v1332 = vld [vmem:[%s1203 + $0x38] sm:$0x3]
        %1339 = vrot.lane.b32.xlu0 %v1327, 127
        %v1340 = vpop.permute.xlu0 %1339
        %1341 = vrot.lane.b32.xlu0 %v1328, 127
        %v1342 = vpop.permute.xlu0 %1341
        %1343 = vrot.lane.b32.xlu0 %v1329, 127
        %v1344 = vpop.permute.xlu0 %1343
        %1345 = vrot.lane.b32.xlu0 %v1330, 127
        %v1346 = vpop.permute.xlu0 %1345
        %1347 = vrot.lane.b32.xlu0 %v1331, 127
        %v1348 = vpop.permute.xlu0 %1347
        %1349 = vrot.lane.b32.xlu0 %v1332, 127
        %v1350 = vpop.permute.xlu0 %1349
        %v1356 = vrot.slane %v1348, 4
        %v1357 = vsel %vm364, %v1356, %v1340
        %v1358 = vrot.slane %v1340, 4
        %v1359 = vsel %vm364, %v1348, %v1358
        %v1361 = vunpack.c.l.s4 1983009808
        %v1362 = vunpack.c.0.s8 %v1361
        %v1363 = vperm.slane %v1357, %v1362
        %v1365 = vunpack.c.l.s4 1983009808
        %v1366 = vunpack.c.0.s8 %v1365
        %v1367 = vperm.slane %v1359, %v1366
        %v1368 = vrot.slane %v1344, 4
        %v1369 = vsel %vm364, 0.0, %v1368
        %v1371 = vunpack.c.l.s4 1983009808
        %v1372 = vunpack.c.0.s8 %v1371
        %v1373 = vperm.slane %v1344, %v1372
        %v1375 = vunpack.c.l.s4 1983009808
        %v1376 = vunpack.c.0.s8 %v1375
        %v1377 = vperm.slane %v1369, %v1376
        %v1378 = vrot.slane %v1373, 4
        %v1379 = vsel %vm364, %v1378, %v1363
        %v1380 = vrot.slane %v1363, 4
        %v1381 = vsel %vm364, %v1373, %v1380
        %v1383 = vunpack.c.l.s4 1934713408
        %v1384 = vunpack.c.0.s8 %v1383
        %v1385 = vperm.slane %v1379, %v1384
        %v1387 = vunpack.c.l.s4 1934713408
        %v1388 = vunpack.c.0.s8 %v1387
        %v1389 = vperm.slane %v1381, %v1388
        %v1390 = vrot.slane %v1377, 4
        %v1391 = vsel %vm364, %v1390, %v1367
        %v1392 = vrot.slane %v1367, 4
        %v1393 = vsel %vm364, %v1377, %v1392
        %v1395 = vunpack.c.l.s4 1934713408
        %v1396 = vunpack.c.0.s8 %v1395
        %v1397 = vperm.slane %v1391, %v1396
        %v1399 = vunpack.c.l.s4 1934713408
        %v1400 = vunpack.c.0.s8 %v1399
        %v1401 = vperm.slane %v1393, %v1400
        %v1402 = vrot.slane %v1385, 4
        %v1403 = vsel %vm364, 0.0, %v1402
        %v1404 = vrot.slane %v1389, 4
        %v1405 = vsel %vm364, 0.0, %v1404
        %v1406 = vrot.slane %v1397, 4
        %v1407 = vsel %vm364, 0.0, %v1406
        %v1408 = vrot.slane %v1401, 4
        %v1409 = vsel %vm364, 0.0, %v1408
        %v1410 = vrot.slane %v1350, 4
        %v1411 = vsel %vm364, %v1410, %v1342
        %v1413 = vunpack.c.l.s4 1983009808
        %v1414 = vunpack.c.0.s8 %v1413
        %v1415 = vperm.slane %v1411, %v1414
        %v1417 = vrot.slane %v1346, 4
        %v1418 = vsel %vm364, %v1417, %v1415
        %v1420 = vunpack.c.l.s4 1934713408
        %v1421 = vunpack.c.0.s8 %v1420
        %v1422 = vperm.slane %v1418, %v1421
        %v1423 = vrot.slane %v1422, 4
        %v1424 = vsel %vm364, 0.0, %v1423
        %1426 = vrot.lane.b32.xlu0 %v1403, 16
        %v1427 = vpop.permute.xlu0 %1426
        %1430 = vrot.lane.b32.xlu0 %v1389, 32
        %v1431 = vpop.permute.xlu0 %1430
        %1434 = vrot.lane.b32.xlu0 %v1405, 48
        %v1435 = vpop.permute.xlu0 %1434
        %1438 = vrot.lane.b32.xlu0 %v1397, 64
        %v1439 = vpop.permute.xlu0 %1438
        %1442 = vrot.lane.b32.xlu0 %v1407, 80
        %v1443 = vpop.permute.xlu0 %1442
        %1446 = vrot.lane.b32.xlu0 %v1401, 96
        %v1447 = vpop.permute.xlu0 %1446
        %1450 = vrot.lane.b32.xlu0 %v1409, 112
        %v1451 = vpop.permute.xlu0 %1450
        %1454 = vrot.lane.b32.xlu0 %v1424, 16
        %v1455 = vpop.permute.xlu0 %1454
        %v1457 = vsel %vm465, %v1385, %v1427
        %v1458 = vsel %vm467, %v1457, %v1431
        %v1459 = vsel %vm469, %v1458, %v1435
        %v1460 = vsel %vm471, %v1459, %v1439
        %v1461 = vsel %vm473, %v1460, %v1443
        %v1462 = vsel %vm475, %v1461, %v1447
        %v1463 = vsel %vm477, %v1462, %v1451
        %v1464 = vsel %vm465, %v1422, %v1455
        %v1467 = vrot.slane %v1463, 3
        %v1468 = vrot.slane %v1464, 3
        %1471 = vst [vmem:[#allocation4 + $0x20] sm:$0xe0] %v1467
        %vm1472 = vcmask 261125
        %1473 = vst.msk [vmem:[#allocation4 + $0x28] sm:$0xe0] %vm1472, %v1468
        %v1474 = vld [vmem:[%s1203] sm:$0xff]
        %v1475 = vld [vmem:[%s1203 + $0x8] sm:$0x3]
        %v1476 = vld [vmem:[%s1203 + $0x18] sm:$0xff]
        %v1477 = vld [vmem:[%s1203 + $0x20] sm:$0x3]
        %v1478 = vld [vmem:[%s1203 + $0x30] sm:$0xff]
        %v1479 = vld [vmem:[%s1203 + $0x38] sm:$0x3]
        %1486 = vrot.lane.b32.xlu0 %v1474, 126
        %v1487 = vpop.permute.xlu0 %1486
        %1488 = vrot.lane.b32.xlu0 %v1475, 126
        %v1489 = vpop.permute.xlu0 %1488
        %1490 = vrot.lane.b32.xlu0 %v1476, 126
        %v1491 = vpop.permute.xlu0 %1490
        %1492 = vrot.lane.b32.xlu0 %v1477, 126
        %v1493 = vpop.permute.xlu0 %1492
        %1494 = vrot.lane.b32.xlu0 %v1478, 126
        %v1495 = vpop.permute.xlu0 %1494
        %1496 = vrot.lane.b32.xlu0 %v1479, 126
        %v1497 = vpop.permute.xlu0 %1496
        %v1503 = vrot.slane %v1495, 4
        %v1504 = vsel %vm364, %v1503, %v1487
        %v1505 = vrot.slane %v1487, 4
        %v1506 = vsel %vm364, %v1495, %v1505
        %v1508 = vunpack.c.l.s4 1983009808
        %v1509 = vunpack.c.0.s8 %v1508
        %v1510 = vperm.slane %v1504, %v1509
        %v1512 = vunpack.c.l.s4 1983009808
        %v1513 = vunpack.c.0.s8 %v1512
        %v1514 = vperm.slane %v1506, %v1513
        %v1515 = vrot.slane %v1491, 4
        %v1516 = vsel %vm364, 0.0, %v1515
        %v1518 = vunpack.c.l.s4 1983009808
        %v1519 = vunpack.c.0.s8 %v1518
        %v1520 = vperm.slane %v1491, %v1519
        %v1522 = vunpack.c.l.s4 1983009808
        %v1523 = vunpack.c.0.s8 %v1522
        %v1524 = vperm.slane %v1516, %v1523
        %v1525 = vrot.slane %v1520, 4
        %v1526 = vsel %vm364, %v1525, %v1510
        %v1527 = vrot.slane %v1510, 4
        %v1528 = vsel %vm364, %v1520, %v1527
        %v1530 = vunpack.c.l.s4 1934713408
        %v1531 = vunpack.c.0.s8 %v1530
        %v1532 = vperm.slane %v1526, %v1531
        %v1534 = vunpack.c.l.s4 1934713408
        %v1535 = vunpack.c.0.s8 %v1534
        %v1536 = vperm.slane %v1528, %v1535
        %v1537 = vrot.slane %v1524, 4
        %v1538 = vsel %vm364, %v1537, %v1514
        %v1539 = vrot.slane %v1514, 4
        %v1540 = vsel %vm364, %v1524, %v1539
        %v1542 = vunpack.c.l.s4 1934713408
        %v1543 = vunpack.c.0.s8 %v1542
        %v1544 = vperm.slane %v1538, %v1543
        %v1546 = vunpack.c.l.s4 1934713408
        %v1547 = vunpack.c.0.s8 %v1546
        %v1548 = vperm.slane %v1540, %v1547
        %v1549 = vrot.slane %v1532, 4
        %v1550 = vsel %vm364, 0.0, %v1549
        %v1551 = vrot.slane %v1536, 4
        %v1552 = vsel %vm364, 0.0, %v1551
        %v1553 = vrot.slane %v1544, 4
        %v1554 = vsel %vm364, 0.0, %v1553
        %v1555 = vrot.slane %v1548, 4
        %v1556 = vsel %vm364, 0.0, %v1555
        %v1557 = vrot.slane %v1497, 4
        %v1558 = vsel %vm364, %v1557, %v1489
        %v1560 = vunpack.c.l.s4 1983009808
        %v1561 = vunpack.c.0.s8 %v1560
        %v1562 = vperm.slane %v1558, %v1561
        %v1564 = vrot.slane %v1493, 4
        %v1565 = vsel %vm364, %v1564, %v1562
        %v1567 = vunpack.c.l.s4 1934713408
        %v1568 = vunpack.c.0.s8 %v1567
        %v1569 = vperm.slane %v1565, %v1568
        %v1570 = vrot.slane %v1569, 4
        %v1571 = vsel %vm364, 0.0, %v1570
        %1573 = vrot.lane.b32.xlu0 %v1550, 16
        %v1574 = vpop.permute.xlu0 %1573
        %1577 = vrot.lane.b32.xlu0 %v1536, 32
        %v1578 = vpop.permute.xlu0 %1577
        %1581 = vrot.lane.b32.xlu0 %v1552, 48
        %v1582 = vpop.permute.xlu0 %1581
        %1585 = vrot.lane.b32.xlu0 %v1544, 64
        %v1586 = vpop.permute.xlu0 %1585
        %1589 = vrot.lane.b32.xlu0 %v1554, 80
        %v1590 = vpop.permute.xlu0 %1589
        %1593 = vrot.lane.b32.xlu0 %v1548, 96
        %v1594 = vpop.permute.xlu0 %1593
        %1597 = vrot.lane.b32.xlu0 %v1556, 112
        %v1598 = vpop.permute.xlu0 %1597
        %1601 = vrot.lane.b32.xlu0 %v1571, 16
        %v1602 = vpop.permute.xlu0 %1601
        %v1604 = vsel %vm465, %v1532, %v1574
        %v1605 = vsel %vm467, %v1604, %v1578
        %v1606 = vsel %vm469, %v1605, %v1582
        %v1607 = vsel %vm471, %v1606, %v1586
        %v1608 = vsel %vm473, %v1607, %v1590
        %v1609 = vsel %vm475, %v1608, %v1594
        %v1610 = vsel %vm477, %v1609, %v1598
        %v1611 = vsel %vm465, %v1569, %v1602
        %1612 = vst [vmem:[#allocation4 + $0x30] sm:$0x7] %v1610
        %1613 = vst.msk [vmem:[#allocation4 + $0x38] sm:$0x7] %vm481, %v1611
        %v1614 = vld [vmem:[%s1] sm:$0xf]
        %v1615 = vld [vmem:[%s1 + $0x4] sm:$0xf]
        %v1616 = vld [vmem:[%s1 + $0x8] sm:$0xf]
        %v1617 = vld [vmem:[%s1 + $0xc] sm:$0xf]
        %v1618 = vld [vmem:[#allocation4] sm:$0xff]
        %v1619 = vld [vmem:[#allocation4 + $0x8] sm:$0xff]
        %v1620 = vld [vmem:[#allocation4 + $0x10] sm:$0xff]
        %v1621 = vld [vmem:[#allocation4 + $0x18] sm:$0xff]
        %v1622 = vld [vmem:[#allocation4 + $0x20] sm:$0xff]
        %v1623 = vld [vmem:[#allocation4 + $0x28] sm:$0xff]
        %v1624 = vld [vmem:[#allocation4 + $0x30] sm:$0x7]
        %v1625 = vld [vmem:[#allocation4 + $0x38] sm:$0x7]
        %v1626 = vpack.c.bf16 %v1620, %v1618
        %v1627 = vpack.c.bf16 %v1621, %v1619
        %v1628 = vpack.c.bf16 %v1624, %v1622
        %v1629 = vpack.c.bf16 %v1625, %v1623
        %v1630 = vld [vmem:[%s2] sm:$0xff]
        %v1631 = vld [vmem:[%s2 + $0x8] sm:$0xff]
        %v1632 = vld [vmem:[%s2 + $0x10] sm:$0xff]
        %v1633 = vld [vmem:[%s2 + $0x18] sm:$0xff]
        %1635 = vset.pattern.permute.xlu0 0
        %1636 = vperm.xlu0 %1635, %v1630
        %v1637 = vpop.permute.xlu0 %1636
        %1640 = vset.pattern.permute.xlu0 0
        %1641 = vperm.xlu0 %1640, %v1631
        %v1642 = vpop.permute.xlu0 %1641
        %1645 = vset.pattern.permute.xlu0 0
        %1646 = vperm.xlu0 %1645, %v1632
        %v1647 = vpop.permute.xlu0 %1646
        %1650 = vset.pattern.permute.xlu0 0
        %1651 = vperm.xlu0 %1650, %v1633
        %v1652 = vpop.permute.xlu0 %1651
        %v1658 = vunpack.c.l.b16 %v1614
        %v1659 = vunpack.c.l.b16 %v1615
        %v1660 = vunpack.c.l.b16 %v1616
        %v1661 = vunpack.c.l.b16 %v1617
        %v1662 = vpack.c.b16 %v1659, %v1658
        %v1663 = vpack.c.b16 %v1661, %v1660
        %vm1664 = vcmask 220160
        %v1666 = vsel %vm1664, %v1662, 0
        %v1669 = vsel %vm1664, %v1663, 0
        %vm1671 = vcmask 1044480
        %vm1672 = vcmask 1045504
        %v1673 = vsel %vm1671, 4294967295, 65535
        %v1674 = vsel %vm1672, %v1673, 0
        %v1676 = vand.u32 %v1628, %v1674
        %v1679 = vand.u32 %v1629, %v1674
        %1681 = vmatpush.bf16.msra.mxu0 0
        %1682 = vmatpush.bf16.msra.mxu0 0
        %1683 = vmatpush.bf16.msra.mxu0 0
        %1684 = vmatpush.bf16.msra.mxu0 0
        %1685 = vmatpush.bf16.msra.mxu0 0
        %1686 = vmatpush.bf16.msra.mxu0 0
        %1687 = vmatpush.bf16.msra.mxu0 %v1676
        %1688 = vmatpush.bf16.msra.mxu0 %v1626
        %1689 = vmatmul.bf16.gmra.mxu0 %v1666
        %v1690 = vpop.f32.mrf.mxu0
        %v1691 = vadd.f32 %v1637, %v1690
        %v1692 = vpop.f32.mrf.mxu0
        %v1693 = vadd.f32 %v1642, %v1692
        %1694 = vmatmul.bf16.gmra.mxu0 %v1669
        %v1695 = vpop.f32.mrf.mxu0
        %v1696 = vadd.f32 %v1647, %v1695
        %v1697 = vpop.f32.mrf.mxu0
        %v1698 = vadd.f32 %v1652, %v1697
        %1699 = vdwg.mxu0
        %1700 = vmatpush.bf16.msra.mxu0 0
        %1701 = vmatpush.bf16.msra.mxu0 0
        %1702 = vmatpush.bf16.msra.mxu0 0
        %1703 = vmatpush.bf16.msra.mxu0 0
        %1704 = vmatpush.bf16.msra.mxu0 0
        %1705 = vmatpush.bf16.msra.mxu0 0
        %1706 = vmatpush.bf16.msra.mxu0 %v1679
        %1707 = vmatpush.bf16.msra.mxu0 %v1627
        %1708 = vmatmul.bf16.gmra.mxu0 %v1666
        %v1709 = vpop.f32.mrf.mxu0
        %v1710 = vadd.f32 %v1637, %v1709
        %v1711 = vpop.f32.mrf.mxu0
        %v1712 = vadd.f32 %v1642, %v1711
        %1713 = vmatmul.bf16.gmra.mxu0 %v1669
        %v1714 = vpop.f32.mrf.mxu0
        %v1715 = vadd.f32 %v1647, %v1714
        %v1716 = vpop.f32.mrf.mxu0
        %v1717 = vadd.f32 %v1652, %v1716
        %1718 = vdwg.mxu0
        %v1719 = vmax.f32 %v1691, 0.0
        %v1720 = vmax.f32 %v1710, 0.0
        %v1721 = vmax.f32 %v1693, 0.0
        %v1722 = vmax.f32 %v1712, 0.0
        %v1723 = vmax.f32 %v1696, 0.0
        %v1724 = vmax.f32 %v1715, 0.0
        %v1725 = vmax.f32 %v1698, 0.0
        %v1726 = vmax.f32 %v1717, 0.0
        %vm1727 = vcmask 146432
        %1728 = vst.msk [vmem:[#allocation3] sm:$0xff] %vm1727, 0.0
        %vm1729 = vcmask 140288
        %1730 = vst.msk [vmem:[#allocation3 + $0x8] sm:$0x3] %vm1729, 0.0
        %1731 = vst.msk [vmem:[#allocation3 + $0x10] sm:$0xff] %vm1727, 0.0
        %1732 = vst.msk [vmem:[#allocation3 + $0x18] sm:$0x3] %vm1729, 0.0
        %1733 = vst.msk [vmem:[#allocation3 + $0x20] sm:$0xff] %vm1727, 0.0
        %1734 = vst.msk [vmem:[#allocation3 + $0x28] sm:$0x3] %vm1729, 0.0
        %1735 = vst.msk [vmem:[#allocation3 + $0x30] sm:$0xff] %vm1727, 0.0
        %1736 = vst.msk [vmem:[#allocation3 + $0x38] sm:$0x3] %vm1729, 0.0
        %1737 = vst.msk [vmem:[#allocation3 + $0x40] sm:$0xff] %vm1727, 0.0
        %1738 = vst.msk [vmem:[#allocation3 + $0x48] sm:$0x3] %vm1729, 0.0
        %1739 = vst.msk [vmem:[#allocation3 + $0x50] sm:$0xff] %vm1727, 0.0
        %1740 = vst.msk [vmem:[#allocation3 + $0x58] sm:$0x3] %vm1729, 0.0
        %1741 = vst.msk [vmem:[#allocation3 + $0x60] sm:$0xff] %vm1727, 0.0
        %1742 = vst.msk [vmem:[#allocation3 + $0x68] sm:$0x3] %vm1729, 0.0
        %1743 = vst.msk [vmem:[#allocation3 + $0x70] sm:$0xff] %vm1727, 0.0
        %1744 = vst.msk [vmem:[#allocation3 + $0x78] sm:$0x3] %vm1729, 0.0
        %1745 = vst.msk [vmem:[#allocation3 + $0x80] sm:$0xff] %vm1727, 0.0
        %1746 = vst.msk [vmem:[#allocation3 + $0x88] sm:$0x3] %vm1729, 0.0
        %1747 = vst.msk [vmem:[#allocation3 + $0x90] sm:$0xff] %vm1727, 0.0
        %1748 = vst.msk [vmem:[#allocation3 + $0x98] sm:$0x3] %vm1729, 0.0
        %1749 = vst.msk [vmem:[#allocation3 + $0xa0] sm:$0xff] %vm1727, 0.0
        %1750 = vst.msk [vmem:[#allocation3 + $0xa8] sm:$0x3] %vm1729, 0.0
        %1751 = vst.msk [vmem:[#allocation3 + $0xb0] sm:$0xff] %vm1727, 0.0
        %1752 = vst.msk [vmem:[#allocation3 + $0xb8] sm:$0x3] %vm1729, 0.0
        %1753 = vst.msk [vmem:[#allocation3 + $0xc0] sm:$0xff] %vm1727, 0.0
        %1754 = vst.msk [vmem:[#allocation3 + $0xc8] sm:$0x3] %vm1729, 0.0
        %1755 = vst.msk [vmem:[#allocation3 + $0xd0] sm:$0xff] %vm1727, 0.0
        %1756 = vst.msk [vmem:[#allocation3 + $0xd8] sm:$0x3] %vm1729, 0.0
        %1757 = vst.msk [vmem:[#allocation3 + $0xe0] sm:$0xff] %vm1727, 0.0
        %1758 = vst.msk [vmem:[#allocation3 + $0xe8] sm:$0x3] %vm1729, 0.0
        %1759 = vst.msk [vmem:[#allocation3 + $0xf0] sm:$0xff] %vm1727, 0.0
        %1760 = vst.msk [vmem:[#allocation3 + $0xf8] sm:$0x3] %vm1729, 0.0
        %1761 = vst.msk [vmem:[#allocation3 + $0x100] sm:$0xff] %vm1727, 0.0
        %1762 = vst.msk [vmem:[#allocation3 + $0x108] sm:$0x3] %vm1729, 0.0
        %1763 = vst.msk [vmem:[#allocation3 + $0x110] sm:$0xff] %vm1727, 0.0
        %1764 = vst.msk [vmem:[#allocation3 + $0x118] sm:$0x3] %vm1729, 0.0
        %1765 = vst.msk [vmem:[#allocation3 + $0x120] sm:$0xff] %vm1727, 0.0
        %1766 = vst.msk [vmem:[#allocation3 + $0x128] sm:$0x3] %vm1729, 0.0
        %1767 = vst.msk [vmem:[#allocation3 + $0x130] sm:$0xff] %vm1727, 0.0
        %1768 = vst.msk [vmem:[#allocation3 + $0x138] sm:$0x3] %vm1729, 0.0
        %1769 = vst.msk [vmem:[#allocation3 + $0x140] sm:$0xff] %vm1727, 0.0
        %1770 = vst.msk [vmem:[#allocation3 + $0x148] sm:$0x3] %vm1729, 0.0
        %1771 = vst.msk [vmem:[#allocation3 + $0x150] sm:$0xff] %vm1727, 0.0
        %1772 = vst.msk [vmem:[#allocation3 + $0x158] sm:$0x3] %vm1729, 0.0
        %1773 = vst.msk [vmem:[#allocation3 + $0x160] sm:$0xff] %vm1727, 0.0
        %1774 = vst.msk [vmem:[#allocation3 + $0x168] sm:$0x3] %vm1729, 0.0
        %1775 = vst.msk [vmem:[#allocation3 + $0x170] sm:$0xff] %vm1727, 0.0
        %1776 = vst.msk [vmem:[#allocation3 + $0x178] sm:$0x3] %vm1729, 0.0
        %1777 = vst.msk [vmem:[#allocation3 + $0x180] sm:$0xff] %vm1727, 0.0
        %1778 = vst.msk [vmem:[#allocation3 + $0x188] sm:$0x3] %vm1729, 0.0
        %1779 = vst.msk [vmem:[#allocation3 + $0x190] sm:$0xff] %vm1727, 0.0
        %1780 = vst.msk [vmem:[#allocation3 + $0x198] sm:$0x3] %vm1729, 0.0
        %1781 = vst.msk [vmem:[#allocation3 + $0x1a0] sm:$0xff] %vm1727, 0.0
        %1782 = vst.msk [vmem:[#allocation3 + $0x1a8] sm:$0x3] %vm1729, 0.0
        %1783 = vst.msk [vmem:[#allocation3 + $0x1b0] sm:$0xff] %vm1727, 0.0
        %1784 = vst.msk [vmem:[#allocation3 + $0x1b8] sm:$0x3] %vm1729, 0.0
        %1785 = vst.msk [vmem:[#allocation3 + $0x1c0] sm:$0xff] %vm1727, 0.0
        %1786 = vst.msk [vmem:[#allocation3 + $0x1c8] sm:$0x3] %vm1729, 0.0
        %1787 = vst.msk [vmem:[#allocation3 + $0x1d0] sm:$0xff] %vm1727, 0.0
        %1788 = vst.msk [vmem:[#allocation3 + $0x1d8] sm:$0x3] %vm1729, 0.0
        %1789 = vst.msk [vmem:[#allocation3 + $0x1e0] sm:$0xff] %vm1727, 0.0
        %1790 = vst.msk [vmem:[#allocation3 + $0x1e8] sm:$0x3] %vm1729, 0.0
        %1791 = vst.msk [vmem:[#allocation3 + $0x1f0] sm:$0xff] %vm1727, 0.0
        %1792 = vst.msk [vmem:[#allocation3 + $0x1f8] sm:$0x3] %vm1729, 0.0
        %1797 = vrot.lane.b32.xlu0 %v1719, 112
        %v1798 = vpop.permute.xlu0 %1797
        %1799 = vrot.lane.b32.xlu0 %v1721, 112
        %v1800 = vpop.permute.xlu0 %1799
        %1801 = vrot.lane.b32.xlu0 %v1723, 112
        %v1802 = vpop.permute.xlu0 %1801
        %1803 = vrot.lane.b32.xlu0 %v1725, 112
        %v1804 = vpop.permute.xlu0 %1803
        %1809 = vrot.lane.b32.xlu0 %v1719, 96
        %v1810 = vpop.permute.xlu0 %1809
        %1811 = vrot.lane.b32.xlu0 %v1721, 96
        %v1812 = vpop.permute.xlu0 %1811
        %1813 = vrot.lane.b32.xlu0 %v1723, 96
        %v1814 = vpop.permute.xlu0 %1813
        %1815 = vrot.lane.b32.xlu0 %v1725, 96
        %v1816 = vpop.permute.xlu0 %1815
        %1821 = vrot.lane.b32.xlu0 %v1719, 80
        %v1822 = vpop.permute.xlu0 %1821
        %1823 = vrot.lane.b32.xlu0 %v1721, 80
        %v1824 = vpop.permute.xlu0 %1823
        %1825 = vrot.lane.b32.xlu0 %v1723, 80
        %v1826 = vpop.permute.xlu0 %1825
        %1827 = vrot.lane.b32.xlu0 %v1725, 80
        %v1828 = vpop.permute.xlu0 %1827
        %1833 = vrot.lane.b32.xlu0 %v1719, 64
        %v1834 = vpop.permute.xlu0 %1833
        %1835 = vrot.lane.b32.xlu0 %v1721, 64
        %v1836 = vpop.permute.xlu0 %1835
        %1837 = vrot.lane.b32.xlu0 %v1723, 64
        %v1838 = vpop.permute.xlu0 %1837
        %1839 = vrot.lane.b32.xlu0 %v1725, 64
        %v1840 = vpop.permute.xlu0 %1839
        %1845 = vrot.lane.b32.xlu0 %v1719, 48
        %v1846 = vpop.permute.xlu0 %1845
        %1847 = vrot.lane.b32.xlu0 %v1721, 48
        %v1848 = vpop.permute.xlu0 %1847
        %1849 = vrot.lane.b32.xlu0 %v1723, 48
        %v1850 = vpop.permute.xlu0 %1849
        %1851 = vrot.lane.b32.xlu0 %v1725, 48
        %v1852 = vpop.permute.xlu0 %1851
        %1857 = vrot.lane.b32.xlu0 %v1719, 32
        %v1858 = vpop.permute.xlu0 %1857
        %1859 = vrot.lane.b32.xlu0 %v1721, 32
        %v1860 = vpop.permute.xlu0 %1859
        %1861 = vrot.lane.b32.xlu0 %v1723, 32
        %v1862 = vpop.permute.xlu0 %1861
        %1863 = vrot.lane.b32.xlu0 %v1725, 32
        %v1864 = vpop.permute.xlu0 %1863
        %1869 = vrot.lane.b32.xlu0 %v1719, 16
        %v1870 = vpop.permute.xlu0 %1869
        %1871 = vrot.lane.b32.xlu0 %v1721, 16
        %v1872 = vpop.permute.xlu0 %1871
        %1873 = vrot.lane.b32.xlu0 %v1723, 16
        %v1874 = vpop.permute.xlu0 %1873
        %1875 = vrot.lane.b32.xlu0 %v1725, 16
        %v1876 = vpop.permute.xlu0 %1875
        %1885 = vrot.lane.b32.xlu0 %v1720, 112
        %v1886 = vpop.permute.xlu0 %1885
        %1887 = vrot.lane.b32.xlu0 %v1722, 112
        %v1888 = vpop.permute.xlu0 %1887
        %1889 = vrot.lane.b32.xlu0 %v1724, 112
        %v1890 = vpop.permute.xlu0 %1889
        %1891 = vrot.lane.b32.xlu0 %v1726, 112
        %v1892 = vpop.permute.xlu0 %1891
        %v1897 = vrot.slane %v1810, 4
        %v1898 = vsel %vm364, %v1897, %v1719
        %v1899 = vrot.slane %v1719, 4
        %v1900 = vsel %vm364, %v1810, %v1899
        %v1902 = vunpack.c.l.s4 1983009808
        %v1903 = vunpack.c.0.s8 %v1902
        %v1904 = vperm.slane %v1898, %v1903
        %v1906 = vunpack.c.l.s4 1983009808
        %v1907 = vunpack.c.0.s8 %v1906
        %v1908 = vperm.slane %v1900, %v1907
        %v1909 = vrot.slane %v1822, 4
        %v1910 = vsel %vm364, %v1909, %v1798
        %v1911 = vrot.slane %v1798, 4
        %v1912 = vsel %vm364, %v1822, %v1911
        %v1914 = vunpack.c.l.s4 1983009808
        %v1915 = vunpack.c.0.s8 %v1914
        %v1916 = vperm.slane %v1910, %v1915
        %v1918 = vunpack.c.l.s4 1983009808
        %v1919 = vunpack.c.0.s8 %v1918
        %v1920 = vperm.slane %v1912, %v1919
        %v1921 = vrot.slane %v1858, 4
        %v1922 = vsel %vm364, %v1921, %v1834
        %v1923 = vrot.slane %v1834, 4
        %v1924 = vsel %vm364, %v1858, %v1923
        %v1926 = vunpack.c.l.s4 1983009808
        %v1927 = vunpack.c.0.s8 %v1926
        %v1928 = vperm.slane %v1922, %v1927
        %v1930 = vunpack.c.l.s4 1983009808
        %v1931 = vunpack.c.0.s8 %v1930
        %v1932 = vperm.slane %v1924, %v1931
        %v1933 = vrot.slane %v1870, 4
        %v1934 = vsel %vm364, %v1933, %v1846
        %v1935 = vrot.slane %v1846, 4
        %v1936 = vsel %vm364, %v1870, %v1935
        %v1938 = vunpack.c.l.s4 1983009808
        %v1939 = vunpack.c.0.s8 %v1938
        %v1940 = vperm.slane %v1934, %v1939
        %v1942 = vunpack.c.l.s4 1983009808
        %v1943 = vunpack.c.0.s8 %v1942
        %v1944 = vperm.slane %v1936, %v1943
        %v1945 = vrot.slane %v1916, 4
        %v1946 = vsel %vm364, %v1945, %v1904
        %v1947 = vrot.slane %v1904, 4
        %v1948 = vsel %vm364, %v1916, %v1947
        %v1950 = vunpack.c.l.s4 1934713408
        %v1951 = vunpack.c.0.s8 %v1950
        %v1952 = vperm.slane %v1946, %v1951
        %v1954 = vunpack.c.l.s4 1934713408
        %v1955 = vunpack.c.0.s8 %v1954
        %v1956 = vperm.slane %v1948, %v1955
        %v1957 = vrot.slane %v1920, 4
        %v1958 = vsel %vm364, %v1957, %v1908
        %v1959 = vrot.slane %v1908, 4
        %v1960 = vsel %vm364, %v1920, %v1959
        %v1962 = vunpack.c.l.s4 1934713408
        %v1963 = vunpack.c.0.s8 %v1962
        %v1964 = vperm.slane %v1958, %v1963
        %v1966 = vunpack.c.l.s4 1934713408
        %v1967 = vunpack.c.0.s8 %v1966
        %v1968 = vperm.slane %v1960, %v1967
        %v1969 = vrot.slane %v1940, 4
        %v1970 = vsel %vm364, %v1969, %v1928
        %v1971 = vrot.slane %v1928, 4
        %v1972 = vsel %vm364, %v1940, %v1971
        %v1974 = vunpack.c.l.s4 1934713408
        %v1975 = vunpack.c.0.s8 %v1974
        %v1976 = vperm.slane %v1970, %v1975
        %v1978 = vunpack.c.l.s4 1934713408
        %v1979 = vunpack.c.0.s8 %v1978
        %v1980 = vperm.slane %v1972, %v1979
        %v1981 = vrot.slane %v1944, 4
        %v1982 = vsel %vm364, %v1981, %v1932
        %v1983 = vrot.slane %v1932, 4
        %v1984 = vsel %vm364, %v1944, %v1983
        %v1986 = vunpack.c.l.s4 1934713408
        %v1987 = vunpack.c.0.s8 %v1986
        %v1988 = vperm.slane %v1982, %v1987
        %v1990 = vunpack.c.l.s4 1934713408
        %v1991 = vunpack.c.0.s8 %v1990
        %v1992 = vperm.slane %v1984, %v1991
        %v1993 = vrot.slane %v1976, 4
        %v1994 = vsel %vm364, %v1993, %v1952
        %v1995 = vrot.slane %v1952, 4
        %v1996 = vsel %vm364, %v1976, %v1995
        %v1997 = vrot.slane %v1980, 4
        %v1998 = vsel %vm364, %v1997, %v1956
        %v1999 = vrot.slane %v1956, 4
        %v2000 = vsel %vm364, %v1980, %v1999
        %v2001 = vrot.slane %v1988, 4
        %v2002 = vsel %vm364, %v2001, %v1964
        %v2003 = vrot.slane %v1964, 4
        %v2004 = vsel %vm364, %v1988, %v2003
        %v2005 = vrot.slane %v1992, 4
        %v2006 = vsel %vm364, %v2005, %v1968
        %v2007 = vrot.slane %v1968, 4
        %v2008 = vsel %vm364, %v1992, %v2007
        %v2009 = vrot.slane %v1720, 4
        %v2010 = vsel %vm364, 0.0, %v2009
        %v2012 = vunpack.c.l.s4 1983009808
        %v2013 = vunpack.c.0.s8 %v2012
        %v2014 = vperm.slane %v1720, %v2013
        %v2016 = vunpack.c.l.s4 1983009808
        %v2017 = vunpack.c.0.s8 %v2016
        %v2018 = vperm.slane %v2010, %v2017
        %v2019 = vrot.slane %v1886, 4
        %v2020 = vsel %vm364, 0.0, %v2019
        %v2022 = vunpack.c.l.s4 1983009808
        %v2023 = vunpack.c.0.s8 %v2022
        %v2024 = vperm.slane %v1886, %v2023
        %v2026 = vunpack.c.l.s4 1983009808
        %v2027 = vunpack.c.0.s8 %v2026
        %v2028 = vperm.slane %v2020, %v2027
        %v2029 = vrot.slane %v2024, 4
        %v2030 = vsel %vm364, %v2029, %v2014
        %v2031 = vrot.slane %v2014, 4
        %v2032 = vsel %vm364, %v2024, %v2031
        %v2034 = vunpack.c.l.s4 1934713408
        %v2035 = vunpack.c.0.s8 %v2034
        %v2036 = vperm.slane %v2030, %v2035
        %v2038 = vunpack.c.l.s4 1934713408
        %v2039 = vunpack.c.0.s8 %v2038
        %v2040 = vperm.slane %v2032, %v2039
        %v2041 = vrot.slane %v2028, 4
        %v2042 = vsel %vm364, %v2041, %v2018
        %v2043 = vrot.slane %v2018, 4
        %v2044 = vsel %vm364, %v2028, %v2043
        %v2046 = vunpack.c.l.s4 1934713408
        %v2047 = vunpack.c.0.s8 %v2046
        %v2048 = vperm.slane %v2042, %v2047
        %v2050 = vunpack.c.l.s4 1934713408
        %v2051 = vunpack.c.0.s8 %v2050
        %v2052 = vperm.slane %v2044, %v2051
        %v2053 = vrot.slane %v2036, 4
        %v2054 = vsel %vm364, 0.0, %v2053
        %v2055 = vrot.slane %v2040, 4
        %v2056 = vsel %vm364, 0.0, %v2055
        %v2057 = vrot.slane %v2048, 4
        %v2058 = vsel %vm364, 0.0, %v2057
        %v2059 = vrot.slane %v2052, 4
        %v2060 = vsel %vm364, 0.0, %v2059
        %v2061 = vrot.slane %v1812, 4
        %v2062 = vsel %vm364, %v2061, %v1721
        %v2063 = vrot.slane %v1721, 4
        %v2064 = vsel %vm364, %v1812, %v2063
        %v2066 = vunpack.c.l.s4 1983009808
        %v2067 = vunpack.c.0.s8 %v2066
        %v2068 = vperm.slane %v2062, %v2067
        %v2070 = vunpack.c.l.s4 1983009808
        %v2071 = vunpack.c.0.s8 %v2070
        %v2072 = vperm.slane %v2064, %v2071
        %v2073 = vrot.slane %v1824, 4
        %v2074 = vsel %vm364, %v2073, %v1800
        %v2075 = vrot.slane %v1800, 4
        %v2076 = vsel %vm364, %v1824, %v2075
        %v2078 = vunpack.c.l.s4 1983009808
        %v2079 = vunpack.c.0.s8 %v2078
        %v2080 = vperm.slane %v2074, %v2079
        %v2082 = vunpack.c.l.s4 1983009808
        %v2083 = vunpack.c.0.s8 %v2082
        %v2084 = vperm.slane %v2076, %v2083
        %v2085 = vrot.slane %v1860, 4
        %v2086 = vsel %vm364, %v2085, %v1836
        %v2087 = vrot.slane %v1836, 4
        %v2088 = vsel %vm364, %v1860, %v2087
        %v2090 = vunpack.c.l.s4 1983009808
        %v2091 = vunpack.c.0.s8 %v2090
        %v2092 = vperm.slane %v2086, %v2091
        %v2094 = vunpack.c.l.s4 1983009808
        %v2095 = vunpack.c.0.s8 %v2094
        %v2096 = vperm.slane %v2088, %v2095
        %v2097 = vrot.slane %v1872, 4
        %v2098 = vsel %vm364, %v2097, %v1848
        %v2099 = vrot.slane %v1848, 4
        %v2100 = vsel %vm364, %v1872, %v2099
        %v2102 = vunpack.c.l.s4 1983009808
        %v2103 = vunpack.c.0.s8 %v2102
        %v2104 = vperm.slane %v2098, %v2103
        %v2106 = vunpack.c.l.s4 1983009808
        %v2107 = vunpack.c.0.s8 %v2106
        %v2108 = vperm.slane %v2100, %v2107
        %v2109 = vrot.slane %v2080, 4
        %v2110 = vsel %vm364, %v2109, %v2068
        %v2111 = vrot.slane %v2068, 4
        %v2112 = vsel %vm364, %v2080, %v2111
        %v2114 = vunpack.c.l.s4 1934713408
        %v2115 = vunpack.c.0.s8 %v2114
        %v2116 = vperm.slane %v2110, %v2115
        %v2118 = vunpack.c.l.s4 1934713408
        %v2119 = vunpack.c.0.s8 %v2118
        %v2120 = vperm.slane %v2112, %v2119
        %v2121 = vrot.slane %v2084, 4
        %v2122 = vsel %vm364, %v2121, %v2072
        %v2123 = vrot.slane %v2072, 4
        %v2124 = vsel %vm364, %v2084, %v2123
        %v2126 = vunpack.c.l.s4 1934713408
        %v2127 = vunpack.c.0.s8 %v2126
        %v2128 = vperm.slane %v2122, %v2127
        %v2130 = vunpack.c.l.s4 1934713408
        %v2131 = vunpack.c.0.s8 %v2130
        %v2132 = vperm.slane %v2124, %v2131
        %v2133 = vrot.slane %v2104, 4
        %v2134 = vsel %vm364, %v2133, %v2092
        %v2135 = vrot.slane %v2092, 4
        %v2136 = vsel %vm364, %v2104, %v2135
        %v2138 = vunpack.c.l.s4 1934713408
        %v2139 = vunpack.c.0.s8 %v2138
        %v2140 = vperm.slane %v2134, %v2139
        %v2142 = vunpack.c.l.s4 1934713408
        %v2143 = vunpack.c.0.s8 %v2142
        %v2144 = vperm.slane %v2136, %v2143
        %v2145 = vrot.slane %v2108, 4
        %v2146 = vsel %vm364, %v2145, %v2096
        %v2147 = vrot.slane %v2096, 4
        %v2148 = vsel %vm364, %v2108, %v2147
        %v2150 = vunpack.c.l.s4 1934713408
        %v2151 = vunpack.c.0.s8 %v2150
        %v2152 = vperm.slane %v2146, %v2151
        %v2154 = vunpack.c.l.s4 1934713408
        %v2155 = vunpack.c.0.s8 %v2154
        %v2156 = vperm.slane %v2148, %v2155
        %v2157 = vrot.slane %v2140, 4
        %v2158 = vsel %vm364, %v2157, %v2116
        %v2159 = vrot.slane %v2116, 4
        %v2160 = vsel %vm364, %v2140, %v2159
        %v2161 = vrot.slane %v2144, 4
        %v2162 = vsel %vm364, %v2161, %v2120
        %v2163 = vrot.slane %v2120, 4
        %v2164 = vsel %vm364, %v2144, %v2163
        %v2165 = vrot.slane %v2152, 4
        %v2166 = vsel %vm364, %v2165, %v2128
        %v2167 = vrot.slane %v2128, 4
        %v2168 = vsel %vm364, %v2152, %v2167
        %v2169 = vrot.slane %v2156, 4
        %v2170 = vsel %vm364, %v2169, %v2132
        %v2171 = vrot.slane %v2132, 4
        %v2172 = vsel %vm364, %v2156, %v2171
        %v2173 = vrot.slane %v1722, 4
        %v2174 = vsel %vm364, 0.0, %v2173
        %v2176 = vunpack.c.l.s4 1983009808
        %v2177 = vunpack.c.0.s8 %v2176
        %v2178 = vperm.slane %v1722, %v2177
        %v2180 = vunpack.c.l.s4 1983009808
        %v2181 = vunpack.c.0.s8 %v2180
        %v2182 = vperm.slane %v2174, %v2181
        %v2183 = vrot.slane %v1888, 4
        %v2184 = vsel %vm364, 0.0, %v2183
        %v2186 = vunpack.c.l.s4 1983009808
        %v2187 = vunpack.c.0.s8 %v2186
        %v2188 = vperm.slane %v1888, %v2187
        %v2190 = vunpack.c.l.s4 1983009808
        %v2191 = vunpack.c.0.s8 %v2190
        %v2192 = vperm.slane %v2184, %v2191
        %v2193 = vrot.slane %v2188, 4
        %v2194 = vsel %vm364, %v2193, %v2178
        %v2195 = vrot.slane %v2178, 4
        %v2196 = vsel %vm364, %v2188, %v2195
        %v2198 = vunpack.c.l.s4 1934713408
        %v2199 = vunpack.c.0.s8 %v2198
        %v2200 = vperm.slane %v2194, %v2199
        %v2202 = vunpack.c.l.s4 1934713408
        %v2203 = vunpack.c.0.s8 %v2202
        %v2204 = vperm.slane %v2196, %v2203
        %v2205 = vrot.slane %v2192, 4
        %v2206 = vsel %vm364, %v2205, %v2182
        %v2207 = vrot.slane %v2182, 4
        %v2208 = vsel %vm364, %v2192, %v2207
        %v2210 = vunpack.c.l.s4 1934713408
        %v2211 = vunpack.c.0.s8 %v2210
        %v2212 = vperm.slane %v2206, %v2211
        %v2214 = vunpack.c.l.s4 1934713408
        %v2215 = vunpack.c.0.s8 %v2214
        %v2216 = vperm.slane %v2208, %v2215
        %v2217 = vrot.slane %v2200, 4
        %v2218 = vsel %vm364, 0.0, %v2217
        %v2219 = vrot.slane %v2204, 4
        %v2220 = vsel %vm364, 0.0, %v2219
        %v2221 = vrot.slane %v2212, 4
        %v2222 = vsel %vm364, 0.0, %v2221
        %v2223 = vrot.slane %v2216, 4
        %v2224 = vsel %vm364, 0.0, %v2223
        %v2225 = vrot.slane %v1814, 4
        %v2226 = vsel %vm364, %v2225, %v1723
        %v2227 = vrot.slane %v1723, 4
        %v2228 = vsel %vm364, %v1814, %v2227
        %v2230 = vunpack.c.l.s4 1983009808
        %v2231 = vunpack.c.0.s8 %v2230
        %v2232 = vperm.slane %v2226, %v2231
        %v2234 = vunpack.c.l.s4 1983009808
        %v2235 = vunpack.c.0.s8 %v2234
        %v2236 = vperm.slane %v2228, %v2235
        %v2237 = vrot.slane %v1826, 4
        %v2238 = vsel %vm364, %v2237, %v1802
        %v2239 = vrot.slane %v1802, 4
        %v2240 = vsel %vm364, %v1826, %v2239
        %v2242 = vunpack.c.l.s4 1983009808
        %v2243 = vunpack.c.0.s8 %v2242
        %v2244 = vperm.slane %v2238, %v2243
        %v2246 = vunpack.c.l.s4 1983009808
        %v2247 = vunpack.c.0.s8 %v2246
        %v2248 = vperm.slane %v2240, %v2247
        %v2249 = vrot.slane %v1862, 4
        %v2250 = vsel %vm364, %v2249, %v1838
        %v2251 = vrot.slane %v1838, 4
        %v2252 = vsel %vm364, %v1862, %v2251
        %v2254 = vunpack.c.l.s4 1983009808
        %v2255 = vunpack.c.0.s8 %v2254
        %v2256 = vperm.slane %v2250, %v2255
        %v2258 = vunpack.c.l.s4 1983009808
        %v2259 = vunpack.c.0.s8 %v2258
        %v2260 = vperm.slane %v2252, %v2259
        %v2261 = vrot.slane %v1874, 4
        %v2262 = vsel %vm364, %v2261, %v1850
        %v2263 = vrot.slane %v1850, 4
        %v2264 = vsel %vm364, %v1874, %v2263
        %v2266 = vunpack.c.l.s4 1983009808
        %v2267 = vunpack.c.0.s8 %v2266
        %v2268 = vperm.slane %v2262, %v2267
        %v2270 = vunpack.c.l.s4 1983009808
        %v2271 = vunpack.c.0.s8 %v2270
        %v2272 = vperm.slane %v2264, %v2271
        %v2273 = vrot.slane %v2244, 4
        %v2274 = vsel %vm364, %v2273, %v2232
        %v2275 = vrot.slane %v2232, 4
        %v2276 = vsel %vm364, %v2244, %v2275
        %v2278 = vunpack.c.l.s4 1934713408
        %v2279 = vunpack.c.0.s8 %v2278
        %v2280 = vperm.slane %v2274, %v2279
        %v2282 = vunpack.c.l.s4 1934713408
        %v2283 = vunpack.c.0.s8 %v2282
        %v2284 = vperm.slane %v2276, %v2283
        %v2285 = vrot.slane %v2248, 4
        %v2286 = vsel %vm364, %v2285, %v2236
        %v2287 = vrot.slane %v2236, 4
        %v2288 = vsel %vm364, %v2248, %v2287
        %v2290 = vunpack.c.l.s4 1934713408
        %v2291 = vunpack.c.0.s8 %v2290
        %v2292 = vperm.slane %v2286, %v2291
        %v2294 = vunpack.c.l.s4 1934713408
        %v2295 = vunpack.c.0.s8 %v2294
        %v2296 = vperm.slane %v2288, %v2295
        %v2297 = vrot.slane %v2268, 4
        %v2298 = vsel %vm364, %v2297, %v2256
        %v2299 = vrot.slane %v2256, 4
        %v2300 = vsel %vm364, %v2268, %v2299
        %v2302 = vunpack.c.l.s4 1934713408
        %v2303 = vunpack.c.0.s8 %v2302
        %v2304 = vperm.slane %v2298, %v2303
        %v2306 = vunpack.c.l.s4 1934713408
        %v2307 = vunpack.c.0.s8 %v2306
        %v2308 = vperm.slane %v2300, %v2307
        %v2309 = vrot.slane %v2272, 4
        %v2310 = vsel %vm364, %v2309, %v2260
        %v2311 = vrot.slane %v2260, 4
        %v2312 = vsel %vm364, %v2272, %v2311
        %v2314 = vunpack.c.l.s4 1934713408
        %v2315 = vunpack.c.0.s8 %v2314
        %v2316 = vperm.slane %v2310, %v2315
        %v2318 = vunpack.c.l.s4 1934713408
        %v2319 = vunpack.c.0.s8 %v2318
        %v2320 = vperm.slane %v2312, %v2319
        %v2321 = vrot.slane %v2304, 4
        %v2322 = vsel %vm364, %v2321, %v2280
        %v2323 = vrot.slane %v2280, 4
        %v2324 = vsel %vm364, %v2304, %v2323
        %v2325 = vrot.slane %v2308, 4
        %v2326 = vsel %vm364, %v2325, %v2284
        %v2327 = vrot.slane %v2284, 4
        %v2328 = vsel %vm364, %v2308, %v2327
        %v2329 = vrot.slane %v2316, 4
        %v2330 = vsel %vm364, %v2329, %v2292
        %v2331 = vrot.slane %v2292, 4
        %v2332 = vsel %vm364, %v2316, %v2331
        %v2333 = vrot.slane %v2320, 4
        %v2334 = vsel %vm364, %v2333, %v2296
        %v2335 = vrot.slane %v2296, 4
        %v2336 = vsel %vm364, %v2320, %v2335
        %v2337 = vrot.slane %v1724, 4
        %v2338 = vsel %vm364, 0.0, %v2337
        %v2340 = vunpack.c.l.s4 1983009808
        %v2341 = vunpack.c.0.s8 %v2340
        %v2342 = vperm.slane %v1724, %v2341
        %v2344 = vunpack.c.l.s4 1983009808
        %v2345 = vunpack.c.0.s8 %v2344
        %v2346 = vperm.slane %v2338, %v2345
        %v2347 = vrot.slane %v1890, 4
        %v2348 = vsel %vm364, 0.0, %v2347
        %v2350 = vunpack.c.l.s4 1983009808
        %v2351 = vunpack.c.0.s8 %v2350
        %v2352 = vperm.slane %v1890, %v2351
        %v2354 = vunpack.c.l.s4 1983009808
        %v2355 = vunpack.c.0.s8 %v2354
        %v2356 = vperm.slane %v2348, %v2355
        %v2357 = vrot.slane %v2352, 4
        %v2358 = vsel %vm364, %v2357, %v2342
        %v2359 = vrot.slane %v2342, 4
        %v2360 = vsel %vm364, %v2352, %v2359
        %v2362 = vunpack.c.l.s4 1934713408
        %v2363 = vunpack.c.0.s8 %v2362
        %v2364 = vperm.slane %v2358, %v2363
        %v2366 = vunpack.c.l.s4 1934713408
        %v2367 = vunpack.c.0.s8 %v2366
        %v2368 = vperm.slane %v2360, %v2367
        %v2369 = vrot.slane %v2356, 4
        %v2370 = vsel %vm364, %v2369, %v2346
        %v2371 = vrot.slane %v2346, 4
        %v2372 = vsel %vm364, %v2356, %v2371
        %v2374 = vunpack.c.l.s4 1934713408
        %v2375 = vunpack.c.0.s8 %v2374
        %v2376 = vperm.slane %v2370, %v2375
        %v2378 = vunpack.c.l.s4 1934713408
        %v2379 = vunpack.c.0.s8 %v2378
        %v2380 = vperm.slane %v2372, %v2379
        %v2381 = vrot.slane %v2364, 4
        %v2382 = vsel %vm364, 0.0, %v2381
        %v2383 = vrot.slane %v2368, 4
        %v2384 = vsel %vm364, 0.0, %v2383
        %v2385 = vrot.slane %v2376, 4
        %v2386 = vsel %vm364, 0.0, %v2385
        %v2387 = vrot.slane %v2380, 4
        %v2388 = vsel %vm364, 0.0, %v2387
        %v2389 = vrot.slane %v1816, 4
        %v2390 = vsel %vm364, %v2389, %v1725
        %v2391 = vrot.slane %v1725, 4
        %v2392 = vsel %vm364, %v1816, %v2391
        %v2394 = vunpack.c.l.s4 1983009808
        %v2395 = vunpack.c.0.s8 %v2394
        %v2396 = vperm.slane %v2390, %v2395
        %v2398 = vunpack.c.l.s4 1983009808
        %v2399 = vunpack.c.0.s8 %v2398
        %v2400 = vperm.slane %v2392, %v2399
        %v2401 = vrot.slane %v1828, 4
        %v2402 = vsel %vm364, %v2401, %v1804
        %v2403 = vrot.slane %v1804, 4
        %v2404 = vsel %vm364, %v1828, %v2403
        %v2406 = vunpack.c.l.s4 1983009808
        %v2407 = vunpack.c.0.s8 %v2406
        %v2408 = vperm.slane %v2402, %v2407
        %v2410 = vunpack.c.l.s4 1983009808
        %v2411 = vunpack.c.0.s8 %v2410
        %v2412 = vperm.slane %v2404, %v2411
        %v2413 = vrot.slane %v1864, 4
        %v2414 = vsel %vm364, %v2413, %v1840
        %v2415 = vrot.slane %v1840, 4
        %v2416 = vsel %vm364, %v1864, %v2415
        %v2418 = vunpack.c.l.s4 1983009808
        %v2419 = vunpack.c.0.s8 %v2418
        %v2420 = vperm.slane %v2414, %v2419
        %v2422 = vunpack.c.l.s4 1983009808
        %v2423 = vunpack.c.0.s8 %v2422
        %v2424 = vperm.slane %v2416, %v2423
        %v2425 = vrot.slane %v1876, 4
        %v2426 = vsel %vm364, %v2425, %v1852
        %v2427 = vrot.slane %v1852, 4
        %v2428 = vsel %vm364, %v1876, %v2427
        %v2430 = vunpack.c.l.s4 1983009808
        %v2431 = vunpack.c.0.s8 %v2430
        %v2432 = vperm.slane %v2426, %v2431
        %v2434 = vunpack.c.l.s4 1983009808
        %v2435 = vunpack.c.0.s8 %v2434
        %v2436 = vperm.slane %v2428, %v2435
        %v2437 = vrot.slane %v2408, 4
        %v2438 = vsel %vm364, %v2437, %v2396
        %v2439 = vrot.slane %v2396, 4
        %v2440 = vsel %vm364, %v2408, %v2439
        %v2442 = vunpack.c.l.s4 1934713408
        %v2443 = vunpack.c.0.s8 %v2442
        %v2444 = vperm.slane %v2438, %v2443
        %v2446 = vunpack.c.l.s4 1934713408
        %v2447 = vunpack.c.0.s8 %v2446
        %v2448 = vperm.slane %v2440, %v2447
        %v2449 = vrot.slane %v2412, 4
        %v2450 = vsel %vm364, %v2449, %v2400
        %v2451 = vrot.slane %v2400, 4
        %v2452 = vsel %vm364, %v2412, %v2451
        %v2454 = vunpack.c.l.s4 1934713408
        %v2455 = vunpack.c.0.s8 %v2454
        %v2456 = vperm.slane %v2450, %v2455
        %v2458 = vunpack.c.l.s4 1934713408
        %v2459 = vunpack.c.0.s8 %v2458
        %v2460 = vperm.slane %v2452, %v2459
        %v2461 = vrot.slane %v2432, 4
        %v2462 = vsel %vm364, %v2461, %v2420
        %v2463 = vrot.slane %v2420, 4
        %v2464 = vsel %vm364, %v2432, %v2463
        %v2466 = vunpack.c.l.s4 1934713408
        %v2467 = vunpack.c.0.s8 %v2466
        %v2468 = vperm.slane %v2462, %v2467
        %v2470 = vunpack.c.l.s4 1934713408
        %v2471 = vunpack.c.0.s8 %v2470
        %v2472 = vperm.slane %v2464, %v2471
        %v2473 = vrot.slane %v2436, 4
        %v2474 = vsel %vm364, %v2473, %v2424
        %v2475 = vrot.slane %v2424, 4
        %v2476 = vsel %vm364, %v2436, %v2475
        %v2478 = vunpack.c.l.s4 1934713408
        %v2479 = vunpack.c.0.s8 %v2478
        %v2480 = vperm.slane %v2474, %v2479
        %v2482 = vunpack.c.l.s4 1934713408
        %v2483 = vunpack.c.0.s8 %v2482
        %v2484 = vperm.slane %v2476, %v2483
        %v2485 = vrot.slane %v2468, 4
        %v2486 = vsel %vm364, %v2485, %v2444
        %v2487 = vrot.slane %v2444, 4
        %v2488 = vsel %vm364, %v2468, %v2487
        %v2489 = vrot.slane %v2472, 4
        %v2490 = vsel %vm364, %v2489, %v2448
        %v2491 = vrot.slane %v2448, 4
        %v2492 = vsel %vm364, %v2472, %v2491
        %v2493 = vrot.slane %v2480, 4
        %v2494 = vsel %vm364, %v2493, %v2456
        %v2495 = vrot.slane %v2456, 4
        %v2496 = vsel %vm364, %v2480, %v2495
        %v2497 = vrot.slane %v2484, 4
        %v2498 = vsel %vm364, %v2497, %v2460
        %v2499 = vrot.slane %v2460, 4
        %v2500 = vsel %vm364, %v2484, %v2499
        %v2501 = vrot.slane %v1726, 4
        %v2502 = vsel %vm364, 0.0, %v2501
        %v2504 = vunpack.c.l.s4 1983009808
        %v2505 = vunpack.c.0.s8 %v2504
        %v2506 = vperm.slane %v1726, %v2505
        %v2508 = vunpack.c.l.s4 1983009808
        %v2509 = vunpack.c.0.s8 %v2508
        %v2510 = vperm.slane %v2502, %v2509
        %v2511 = vrot.slane %v1892, 4
        %v2512 = vsel %vm364, 0.0, %v2511
        %v2514 = vunpack.c.l.s4 1983009808
        %v2515 = vunpack.c.0.s8 %v2514
        %v2516 = vperm.slane %v1892, %v2515
        %v2518 = vunpack.c.l.s4 1983009808
        %v2519 = vunpack.c.0.s8 %v2518
        %v2520 = vperm.slane %v2512, %v2519
        %v2521 = vrot.slane %v2516, 4
        %v2522 = vsel %vm364, %v2521, %v2506
        %v2523 = vrot.slane %v2506, 4
        %v2524 = vsel %vm364, %v2516, %v2523
        %v2526 = vunpack.c.l.s4 1934713408
        %v2527 = vunpack.c.0.s8 %v2526
        %v2528 = vperm.slane %v2522, %v2527
        %v2530 = vunpack.c.l.s4 1934713408
        %v2531 = vunpack.c.0.s8 %v2530
        %v2532 = vperm.slane %v2524, %v2531
        %v2533 = vrot.slane %v2520, 4
        %v2534 = vsel %vm364, %v2533, %v2510
        %v2535 = vrot.slane %v2510, 4
        %v2536 = vsel %vm364, %v2520, %v2535
        %v2538 = vunpack.c.l.s4 1934713408
        %v2539 = vunpack.c.0.s8 %v2538
        %v2540 = vperm.slane %v2534, %v2539
        %v2542 = vunpack.c.l.s4 1934713408
        %v2543 = vunpack.c.0.s8 %v2542
        %v2544 = vperm.slane %v2536, %v2543
        %v2545 = vrot.slane %v2528, 4
        %v2546 = vsel %vm364, 0.0, %v2545
        %v2547 = vrot.slane %v2532, 4
        %v2548 = vsel %vm364, 0.0, %v2547
        %v2549 = vrot.slane %v2540, 4
        %v2550 = vsel %vm364, 0.0, %v2549
        %v2551 = vrot.slane %v2544, 4
        %v2552 = vsel %vm364, 0.0, %v2551
        %2617 = vrot.lane.b32.xlu0 %v1994, 1
        %v2618 = vpop.permute.xlu0 %2617
        %2619 = vrot.lane.b32.xlu0 %v2036, 1
        %v2620 = vpop.permute.xlu0 %2619
        %2621 = vrot.lane.b32.xlu0 %v1996, 1
        %v2622 = vpop.permute.xlu0 %2621
        %2623 = vrot.lane.b32.xlu0 %v2054, 1
        %v2624 = vpop.permute.xlu0 %2623
        %2625 = vrot.lane.b32.xlu0 %v1998, 1
        %v2626 = vpop.permute.xlu0 %2625
        %2627 = vrot.lane.b32.xlu0 %v2040, 1
        %v2628 = vpop.permute.xlu0 %2627
        %2629 = vrot.lane.b32.xlu0 %v2000, 1
        %v2630 = vpop.permute.xlu0 %2629
        %2631 = vrot.lane.b32.xlu0 %v2056, 1
        %v2632 = vpop.permute.xlu0 %2631
        %2633 = vrot.lane.b32.xlu0 %v2002, 1
        %v2634 = vpop.permute.xlu0 %2633
        %2635 = vrot.lane.b32.xlu0 %v2048, 1
        %v2636 = vpop.permute.xlu0 %2635
        %2637 = vrot.lane.b32.xlu0 %v2004, 1
        %v2638 = vpop.permute.xlu0 %2637
        %2639 = vrot.lane.b32.xlu0 %v2058, 1
        %v2640 = vpop.permute.xlu0 %2639
        %2641 = vrot.lane.b32.xlu0 %v2006, 1
        %v2642 = vpop.permute.xlu0 %2641
        %2643 = vrot.lane.b32.xlu0 %v2052, 1
        %v2644 = vpop.permute.xlu0 %2643
        %2645 = vrot.lane.b32.xlu0 %v2008, 1
        %v2646 = vpop.permute.xlu0 %2645
        %2647 = vrot.lane.b32.xlu0 %v2060, 1
        %v2648 = vpop.permute.xlu0 %2647
        %2649 = vrot.lane.b32.xlu0 %v2158, 1
        %v2650 = vpop.permute.xlu0 %2649
        %2651 = vrot.lane.b32.xlu0 %v2200, 1
        %v2652 = vpop.permute.xlu0 %2651
        %2653 = vrot.lane.b32.xlu0 %v2160, 1
        %v2654 = vpop.permute.xlu0 %2653
        %2655 = vrot.lane.b32.xlu0 %v2218, 1
        %v2656 = vpop.permute.xlu0 %2655
        %2657 = vrot.lane.b32.xlu0 %v2162, 1
        %v2658 = vpop.permute.xlu0 %2657
        %2659 = vrot.lane.b32.xlu0 %v2204, 1
        %v2660 = vpop.permute.xlu0 %2659
        %2661 = vrot.lane.b32.xlu0 %v2164, 1
        %v2662 = vpop.permute.xlu0 %2661
        %2663 = vrot.lane.b32.xlu0 %v2220, 1
        %v2664 = vpop.permute.xlu0 %2663
        %2665 = vrot.lane.b32.xlu0 %v2166, 1
        %v2666 = vpop.permute.xlu0 %2665
        %2667 = vrot.lane.b32.xlu0 %v2212, 1
        %v2668 = vpop.permute.xlu0 %2667
        %2669 = vrot.lane.b32.xlu0 %v2168, 1
        %v2670 = vpop.permute.xlu0 %2669
        %2671 = vrot.lane.b32.xlu0 %v2222, 1
        %v2672 = vpop.permute.xlu0 %2671
        %2673 = vrot.lane.b32.xlu0 %v2170, 1
        %v2674 = vpop.permute.xlu0 %2673
        %2675 = vrot.lane.b32.xlu0 %v2216, 1
        %v2676 = vpop.permute.xlu0 %2675
        %2677 = vrot.lane.b32.xlu0 %v2172, 1
        %v2678 = vpop.permute.xlu0 %2677
        %2679 = vrot.lane.b32.xlu0 %v2224, 1
        %v2680 = vpop.permute.xlu0 %2679
        %2681 = vrot.lane.b32.xlu0 %v2322, 1
        %v2682 = vpop.permute.xlu0 %2681
        %2683 = vrot.lane.b32.xlu0 %v2364, 1
        %v2684 = vpop.permute.xlu0 %2683
        %2685 = vrot.lane.b32.xlu0 %v2324, 1
        %v2686 = vpop.permute.xlu0 %2685
        %2687 = vrot.lane.b32.xlu0 %v2382, 1
        %v2688 = vpop.permute.xlu0 %2687
        %2689 = vrot.lane.b32.xlu0 %v2326, 1
        %v2690 = vpop.permute.xlu0 %2689
        %2691 = vrot.lane.b32.xlu0 %v2368, 1
        %v2692 = vpop.permute.xlu0 %2691
        %2693 = vrot.lane.b32.xlu0 %v2328, 1
        %v2694 = vpop.permute.xlu0 %2693
        %2695 = vrot.lane.b32.xlu0 %v2384, 1
        %v2696 = vpop.permute.xlu0 %2695
        %2697 = vrot.lane.b32.xlu0 %v2330, 1
        %v2698 = vpop.permute.xlu0 %2697
        %2699 = vrot.lane.b32.xlu0 %v2376, 1
        %v2700 = vpop.permute.xlu0 %2699
        %2701 = vrot.lane.b32.xlu0 %v2332, 1
        %v2702 = vpop.permute.xlu0 %2701
        %2703 = vrot.lane.b32.xlu0 %v2386, 1
        %v2704 = vpop.permute.xlu0 %2703
        %2705 = vrot.lane.b32.xlu0 %v2334, 1
        %v2706 = vpop.permute.xlu0 %2705
        %2707 = vrot.lane.b32.xlu0 %v2380, 1
        %v2708 = vpop.permute.xlu0 %2707
        %2709 = vrot.lane.b32.xlu0 %v2336, 1
        %v2710 = vpop.permute.xlu0 %2709
        %2711 = vrot.lane.b32.xlu0 %v2388, 1
        %v2712 = vpop.permute.xlu0 %2711
        %2713 = vrot.lane.b32.xlu0 %v2486, 1
        %v2714 = vpop.permute.xlu0 %2713
        %2715 = vrot.lane.b32.xlu0 %v2528, 1
        %v2716 = vpop.permute.xlu0 %2715
        %2717 = vrot.lane.b32.xlu0 %v2488, 1
        %v2718 = vpop.permute.xlu0 %2717
        %2719 = vrot.lane.b32.xlu0 %v2546, 1
        %v2720 = vpop.permute.xlu0 %2719
        %2721 = vrot.lane.b32.xlu0 %v2490, 1
        %v2722 = vpop.permute.xlu0 %2721
        %2723 = vrot.lane.b32.xlu0 %v2532, 1
        %v2724 = vpop.permute.xlu0 %2723
        %2725 = vrot.lane.b32.xlu0 %v2492, 1
        %v2726 = vpop.permute.xlu0 %2725
        %2727 = vrot.lane.b32.xlu0 %v2548, 1
        %v2728 = vpop.permute.xlu0 %2727
        %2729 = vrot.lane.b32.xlu0 %v2494, 1
        %v2730 = vpop.permute.xlu0 %2729
        %2731 = vrot.lane.b32.xlu0 %v2540, 1
        %v2732 = vpop.permute.xlu0 %2731
        %2733 = vrot.lane.b32.xlu0 %v2496, 1
        %v2734 = vpop.permute.xlu0 %2733
        %2735 = vrot.lane.b32.xlu0 %v2550, 1
        %v2736 = vpop.permute.xlu0 %2735
        %2737 = vrot.lane.b32.xlu0 %v2498, 1
        %v2738 = vpop.permute.xlu0 %2737
        %2739 = vrot.lane.b32.xlu0 %v2544, 1
        %v2740 = vpop.permute.xlu0 %2739
        %2741 = vrot.lane.b32.xlu0 %v2500, 1
        %v2742 = vpop.permute.xlu0 %2741
        %2743 = vrot.lane.b32.xlu0 %v2552, 1
        %v2744 = vpop.permute.xlu0 %2743
        %vm2809 = vcmask 138248
        %2810 = vst.msk [vmem:[#allocation3] sm:$0xff] %vm2809, %v2618
        %vm2811 = vcmask 132104
        %2812 = vst.msk [vmem:[#allocation3 + $0x8] sm:$0x3] %vm2811, %v2620
        %2813 = vst.msk [vmem:[#allocation3 + $0x10] sm:$0xff] %vm2809, %v2622
        %2814 = vst.msk [vmem:[#allocation3 + $0x18] sm:$0x3] %vm2811, %v2624
        %2815 = vst.msk [vmem:[#allocation3 + $0x20] sm:$0xff] %vm2809, %v2626
        %2816 = vst.msk [vmem:[#allocation3 + $0x28] sm:$0x3] %vm2811, %v2628
        %2817 = vst.msk [vmem:[#allocation3 + $0x30] sm:$0xff] %vm2809, %v2630
        %2818 = vst.msk [vmem:[#allocation3 + $0x38] sm:$0x3] %vm2811, %v2632
        %2819 = vst.msk [vmem:[#allocation3 + $0x40] sm:$0xff] %vm2809, %v2634
        %2820 = vst.msk [vmem:[#allocation3 + $0x48] sm:$0x3] %vm2811, %v2636
        %2821 = vst.msk [vmem:[#allocation3 + $0x50] sm:$0xff] %vm2809, %v2638
        %2822 = vst.msk [vmem:[#allocation3 + $0x58] sm:$0x3] %vm2811, %v2640
        %2823 = vst.msk [vmem:[#allocation3 + $0x60] sm:$0xff] %vm2809, %v2642
        %2824 = vst.msk [vmem:[#allocation3 + $0x68] sm:$0x3] %vm2811, %v2644
        %2825 = vst.msk [vmem:[#allocation3 + $0x70] sm:$0xff] %vm2809, %v2646
        %2826 = vst.msk [vmem:[#allocation3 + $0x78] sm:$0x3] %vm2811, %v2648
        %2827 = vst.msk [vmem:[#allocation3 + $0x80] sm:$0xff] %vm2809, %v2650
        %2828 = vst.msk [vmem:[#allocation3 + $0x88] sm:$0x3] %vm2811, %v2652
        %2829 = vst.msk [vmem:[#allocation3 + $0x90] sm:$0xff] %vm2809, %v2654
        %2830 = vst.msk [vmem:[#allocation3 + $0x98] sm:$0x3] %vm2811, %v2656
        %2831 = vst.msk [vmem:[#allocation3 + $0xa0] sm:$0xff] %vm2809, %v2658
        %2832 = vst.msk [vmem:[#allocation3 + $0xa8] sm:$0x3] %vm2811, %v2660
        %2833 = vst.msk [vmem:[#allocation3 + $0xb0] sm:$0xff] %vm2809, %v2662
        %2834 = vst.msk [vmem:[#allocation3 + $0xb8] sm:$0x3] %vm2811, %v2664
        %2835 = vst.msk [vmem:[#allocation3 + $0xc0] sm:$0xff] %vm2809, %v2666
        %2836 = vst.msk [vmem:[#allocation3 + $0xc8] sm:$0x3] %vm2811, %v2668
        %2837 = vst.msk [vmem:[#allocation3 + $0xd0] sm:$0xff] %vm2809, %v2670
        %2838 = vst.msk [vmem:[#allocation3 + $0xd8] sm:$0x3] %vm2811, %v2672
        %2839 = vst.msk [vmem:[#allocation3 + $0xe0] sm:$0xff] %vm2809, %v2674
        %2840 = vst.msk [vmem:[#allocation3 + $0xe8] sm:$0x3] %vm2811, %v2676
        %2841 = vst.msk [vmem:[#allocation3 + $0xf0] sm:$0xff] %vm2809, %v2678
        %2842 = vst.msk [vmem:[#allocation3 + $0xf8] sm:$0x3] %vm2811, %v2680
        %2843 = vst.msk [vmem:[#allocation3 + $0x100] sm:$0xff] %vm2809, %v2682
        %2844 = vst.msk [vmem:[#allocation3 + $0x108] sm:$0x3] %vm2811, %v2684
        %2845 = vst.msk [vmem:[#allocation3 + $0x110] sm:$0xff] %vm2809, %v2686
        %2846 = vst.msk [vmem:[#allocation3 + $0x118] sm:$0x3] %vm2811, %v2688
        %2847 = vst.msk [vmem:[#allocation3 + $0x120] sm:$0xff] %vm2809, %v2690
        %2848 = vst.msk [vmem:[#allocation3 + $0x128] sm:$0x3] %vm2811, %v2692
        %2849 = vst.msk [vmem:[#allocation3 + $0x130] sm:$0xff] %vm2809, %v2694
        %2850 = vst.msk [vmem:[#allocation3 + $0x138] sm:$0x3] %vm2811, %v2696
        %2851 = vst.msk [vmem:[#allocation3 + $0x140] sm:$0xff] %vm2809, %v2698
        %2852 = vst.msk [vmem:[#allocation3 + $0x148] sm:$0x3] %vm2811, %v2700
        %2853 = vst.msk [vmem:[#allocation3 + $0x150] sm:$0xff] %vm2809, %v2702
        %2854 = vst.msk [vmem:[#allocation3 + $0x158] sm:$0x3] %vm2811, %v2704
        %2855 = vst.msk [vmem:[#allocation3 + $0x160] sm:$0xff] %vm2809, %v2706
        %2856 = vst.msk [vmem:[#allocation3 + $0x168] sm:$0x3] %vm2811, %v2708
        %2857 = vst.msk [vmem:[#allocation3 + $0x170] sm:$0xff] %vm2809, %v2710
        %2858 = vst.msk [vmem:[#allocation3 + $0x178] sm:$0x3] %vm2811, %v2712
        %2859 = vst.msk [vmem:[#allocation3 + $0x180] sm:$0xff] %vm2809, %v2714
        %2860 = vst.msk [vmem:[#allocation3 + $0x188] sm:$0x3] %vm2811, %v2716
        %2861 = vst.msk [vmem:[#allocation3 + $0x190] sm:$0xff] %vm2809, %v2718
        %2862 = vst.msk [vmem:[#allocation3 + $0x198] sm:$0x3] %vm2811, %v2720
        %2863 = vst.msk [vmem:[#allocation3 + $0x1a0] sm:$0xff] %vm2809, %v2722
        %2864 = vst.msk [vmem:[#allocation3 + $0x1a8] sm:$0x3] %vm2811, %v2724
        %2865 = vst.msk [vmem:[#allocation3 + $0x1b0] sm:$0xff] %vm2809, %v2726
        %2866 = vst.msk [vmem:[#allocation3 + $0x1b8] sm:$0x3] %vm2811, %v2728
        %2867 = vst.msk [vmem:[#allocation3 + $0x1c0] sm:$0xff] %vm2809, %v2730
        %2868 = vst.msk [vmem:[#allocation3 + $0x1c8] sm:$0x3] %vm2811, %v2732
        %2869 = vst.msk [vmem:[#allocation3 + $0x1d0] sm:$0xff] %vm2809, %v2734
        %2870 = vst.msk [vmem:[#allocation3 + $0x1d8] sm:$0x3] %vm2811, %v2736
        %2871 = vst.msk [vmem:[#allocation3 + $0x1e0] sm:$0xff] %vm2809, %v2738
        %2872 = vst.msk [vmem:[#allocation3 + $0x1e8] sm:$0x3] %vm2811, %v2740
        %2873 = vst.msk [vmem:[#allocation3 + $0x1f0] sm:$0xff] %vm2809, %v2742
        %2874 = vst.msk [vmem:[#allocation3 + $0x1f8] sm:$0x3] %vm2811, %v2744
        // Predicated region
        $region53: #{backbone_forward.1} parent=43 // pred_check
          %p2875 = pneg %p283
        $region54: #{backbone_forward.1} parent=43 // pred_check_branch
          %2877 = sbr.rel (%p2875) target = $region56
        $region55: #{backbone_forward.1} parent=43 // pred_region
          %vm2878 = vcmask 139264
          %2879 = vst.msk [vmem:[#allocation3] sm:$0x1] %vm2878, 0.0
          %2880 = vst.msk [vmem:[#allocation3 + $0x10] sm:$0x1] %vm2878, 0.0
          %2881 = vst.msk [vmem:[#allocation3 + $0x20] sm:$0x1] %vm2878, 0.0
          %2882 = vst.msk [vmem:[#allocation3 + $0x30] sm:$0x1] %vm2878, 0.0
          %2883 = vst.msk [vmem:[#allocation3 + $0x40] sm:$0x1] %vm2878, 0.0
          %2884 = vst.msk [vmem:[#allocation3 + $0x50] sm:$0x1] %vm2878, 0.0
          %2885 = vst.msk [vmem:[#allocation3 + $0x60] sm:$0x1] %vm2878, 0.0
          %2886 = vst.msk [vmem:[#allocation3 + $0x70] sm:$0x1] %vm2878, 0.0
          %2887 = vst.msk [vmem:[#allocation3 + $0x80] sm:$0x1] %vm2878, 0.0
          %2888 = vst.msk [vmem:[#allocation3 + $0x90] sm:$0x1] %vm2878, 0.0
          %2889 = vst.msk [vmem:[#allocation3 + $0xa0] sm:$0x1] %vm2878, 0.0
          %2890 = vst.msk [vmem:[#allocation3 + $0xb0] sm:$0x1] %vm2878, 0.0
          %2891 = vst.msk [vmem:[#allocation3 + $0xc0] sm:$0x1] %vm2878, 0.0
          %2892 = vst.msk [vmem:[#allocation3 + $0xd0] sm:$0x1] %vm2878, 0.0
          %2893 = vst.msk [vmem:[#allocation3 + $0xe0] sm:$0x1] %vm2878, 0.0
          %2894 = vst.msk [vmem:[#allocation3 + $0xf0] sm:$0x1] %vm2878, 0.0
          %2895 = vst.msk [vmem:[#allocation3 + $0x100] sm:$0x1] %vm2878, 0.0
          %2896 = vst.msk [vmem:[#allocation3 + $0x110] sm:$0x1] %vm2878, 0.0
          %2897 = vst.msk [vmem:[#allocation3 + $0x120] sm:$0x1] %vm2878, 0.0
          %2898 = vst.msk [vmem:[#allocation3 + $0x130] sm:$0x1] %vm2878, 0.0
          %2899 = vst.msk [vmem:[#allocation3 + $0x140] sm:$0x1] %vm2878, 0.0
          %2900 = vst.msk [vmem:[#allocation3 + $0x150] sm:$0x1] %vm2878, 0.0
          %2901 = vst.msk [vmem:[#allocation3 + $0x160] sm:$0x1] %vm2878, 0.0
          %2902 = vst.msk [vmem:[#allocation3 + $0x170] sm:$0x1] %vm2878, 0.0
          %2903 = vst.msk [vmem:[#allocation3 + $0x180] sm:$0x1] %vm2878, 0.0
          %2904 = vst.msk [vmem:[#allocation3 + $0x190] sm:$0x1] %vm2878, 0.0
          %2905 = vst.msk [vmem:[#allocation3 + $0x1a0] sm:$0x1] %vm2878, 0.0
          %2906 = vst.msk [vmem:[#allocation3 + $0x1b0] sm:$0x1] %vm2878, 0.0
          %2907 = vst.msk [vmem:[#allocation3 + $0x1c0] sm:$0x1] %vm2878, 0.0
          %2908 = vst.msk [vmem:[#allocation3 + $0x1d0] sm:$0x1] %vm2878, 0.0
          %2909 = vst.msk [vmem:[#allocation3 + $0x1e0] sm:$0x1] %vm2878, 0.0
          %2910 = vst.msk [vmem:[#allocation3 + $0x1f0] sm:$0x1] %vm2878, 0.0
        $region56: #{backbone_forward.1} parent=43 // pred_fallthru
          _
        %p2911 = scmp.eq.s32.totalorder %s25, 1
        // Predicated region
        $region57: #{backbone_forward.1} parent=43 // pred_check
          %p2912 = pneg %p2911
        $region58: #{backbone_forward.1} parent=43 // pred_check_branch
          %2914 = sbr.rel (%p2912) target = $region60
        $region59: #{backbone_forward.1} parent=43 // pred_region
          %vm2915 = vcmask 139264
          %2916 = vst.msk [vmem:[#allocation3 + $0x9] sm:$0x1] %vm2915, 0.0
          %2917 = vst.msk [vmem:[#allocation3 + $0x19] sm:$0x1] %vm2915, 0.0
          %2918 = vst.msk [vmem:[#allocation3 + $0x29] sm:$0x1] %vm2915, 0.0
          %2919 = vst.msk [vmem:[#allocation3 + $0x39] sm:$0x1] %vm2915, 0.0
          %2920 = vst.msk [vmem:[#allocation3 + $0x49] sm:$0x1] %vm2915, 0.0
          %2921 = vst.msk [vmem:[#allocation3 + $0x59] sm:$0x1] %vm2915, 0.0
          %2922 = vst.msk [vmem:[#allocation3 + $0x69] sm:$0x1] %vm2915, 0.0
          %2923 = vst.msk [vmem:[#allocation3 + $0x79] sm:$0x1] %vm2915, 0.0
          %2924 = vst.msk [vmem:[#allocation3 + $0x89] sm:$0x1] %vm2915, 0.0
          %2925 = vst.msk [vmem:[#allocation3 + $0x99] sm:$0x1] %vm2915, 0.0
          %2926 = vst.msk [vmem:[#allocation3 + $0xa9] sm:$0x1] %vm2915, 0.0
          %2927 = vst.msk [vmem:[#allocation3 + $0xb9] sm:$0x1] %vm2915, 0.0
          %2928 = vst.msk [vmem:[#allocation3 + $0xc9] sm:$0x1] %vm2915, 0.0
          %2929 = vst.msk [vmem:[#allocation3 + $0xd9] sm:$0x1] %vm2915, 0.0
          %2930 = vst.msk [vmem:[#allocation3 + $0xe9] sm:$0x1] %vm2915, 0.0
          %2931 = vst.msk [vmem:[#allocation3 + $0xf9] sm:$0x1] %vm2915, 0.0
          %2932 = vst.msk [vmem:[#allocation3 + $0x109] sm:$0x1] %vm2915, 0.0
          %2933 = vst.msk [vmem:[#allocation3 + $0x119] sm:$0x1] %vm2915, 0.0
          %2934 = vst.msk [vmem:[#allocation3 + $0x129] sm:$0x1] %vm2915, 0.0
          %2935 = vst.msk [vmem:[#allocation3 + $0x139] sm:$0x1] %vm2915, 0.0
          %2936 = vst.msk [vmem:[#allocation3 + $0x149] sm:$0x1] %vm2915, 0.0
          %2937 = vst.msk [vmem:[#allocation3 + $0x159] sm:$0x1] %vm2915, 0.0
          %2938 = vst.msk [vmem:[#allocation3 + $0x169] sm:$0x1] %vm2915, 0.0
          %2939 = vst.msk [vmem:[#allocation3 + $0x179] sm:$0x1] %vm2915, 0.0
          %2940 = vst.msk [vmem:[#allocation3 + $0x189] sm:$0x1] %vm2915, 0.0
          %2941 = vst.msk [vmem:[#allocation3 + $0x199] sm:$0x1] %vm2915, 0.0
          %2942 = vst.msk [vmem:[#allocation3 + $0x1a9] sm:$0x1] %vm2915, 0.0
          %2943 = vst.msk [vmem:[#allocation3 + $0x1b9] sm:$0x1] %vm2915, 0.0
          %2944 = vst.msk [vmem:[#allocation3 + $0x1c9] sm:$0x1] %vm2915, 0.0
          %2945 = vst.msk [vmem:[#allocation3 + $0x1d9] sm:$0x1] %vm2915, 0.0
          %2946 = vst.msk [vmem:[#allocation3 + $0x1e9] sm:$0x1] %vm2915, 0.0
          %2947 = vst.msk [vmem:[#allocation3 + $0x1f9] sm:$0x1] %vm2915, 0.0
        $region60: #{backbone_forward.1} parent=43 // pred_fallthru
          _
        %v2948 = vld [vmem:[#allocation3] sm:$0xff]
        %v2949 = vld [vmem:[#allocation3 + $0x10] sm:$0xff]
        %v2950 = vld [vmem:[#allocation3 + $0x20] sm:$0xff]
        %v2951 = vld [vmem:[#allocation3 + $0x30] sm:$0xff]
        %v2952 = vld [vmem:[#allocation3 + $0x40] sm:$0xff]
        %v2953 = vld [vmem:[#allocation3 + $0x50] sm:$0xff]
        %v2954 = vld [vmem:[#allocation3 + $0x60] sm:$0xff]
        %v2955 = vld [vmem:[#allocation3 + $0x70] sm:$0xff]
        %v2956 = vld [vmem:[#allocation3 + $0x80] sm:$0xff]
        %v2957 = vld [vmem:[#allocation3 + $0x90] sm:$0xff]
        %v2958 = vld [vmem:[#allocation3 + $0xa0] sm:$0xff]
        %v2959 = vld [vmem:[#allocation3 + $0xb0] sm:$0xff]
        %v2960 = vld [vmem:[#allocation3 + $0xc0] sm:$0xff]
        %v2961 = vld [vmem:[#allocation3 + $0xd0] sm:$0xff]
        %v2962 = vld [vmem:[#allocation3 + $0xe0] sm:$0xff]
        %v2963 = vld [vmem:[#allocation3 + $0xf0] sm:$0xff]
        %v2964 = vld [vmem:[#allocation3 + $0x100] sm:$0xff]
        %v2965 = vld [vmem:[#allocation3 + $0x110] sm:$0xff]
        %v2966 = vld [vmem:[#allocation3 + $0x120] sm:$0xff]
        %v2967 = vld [vmem:[#allocation3 + $0x130] sm:$0xff]
        %v2968 = vld [vmem:[#allocation3 + $0x140] sm:$0xff]
        %v2969 = vld [vmem:[#allocation3 + $0x150] sm:$0xff]
        %v2970 = vld [vmem:[#allocation3 + $0x160] sm:$0xff]
        %v2971 = vld [vmem:[#allocation3 + $0x170] sm:$0xff]
        %v2972 = vld [vmem:[#allocation3 + $0x180] sm:$0xff]
        %v2973 = vld [vmem:[#allocation3 + $0x190] sm:$0xff]
        %v2974 = vld [vmem:[#allocation3 + $0x1a0] sm:$0xff]
        %v2975 = vld [vmem:[#allocation3 + $0x1b0] sm:$0xff]
        %v2976 = vld [vmem:[#allocation3 + $0x1c0] sm:$0xff]
        %v2977 = vld [vmem:[#allocation3 + $0x1d0] sm:$0xff]
        %v2978 = vld [vmem:[#allocation3 + $0x1e0] sm:$0xff]
        %v2979 = vld [vmem:[#allocation3 + $0x1f0] sm:$0xff]
        %v2980 = vrot.slane %v2950, 4
        %v2981 = vsel %vm364, %v2980, %v2948
        %v2982 = vrot.slane %v2948, 4
        %v2983 = vsel %vm364, %v2950, %v2982
        %v2985 = vunpack.c.l.s4 1983009808
        %v2986 = vunpack.c.0.s8 %v2985
        %v2987 = vperm.slane %v2981, %v2986
        %v2989 = vunpack.c.l.s4 1983009808
        %v2990 = vunpack.c.0.s8 %v2989
        %v2991 = vperm.slane %v2983, %v2990
        %v2992 = vrot.slane %v2951, 4
        %v2993 = vsel %vm364, %v2992, %v2949
        %v2994 = vrot.slane %v2949, 4
        %v2995 = vsel %vm364, %v2951, %v2994
        %v2997 = vunpack.c.l.s4 1983009808
        %v2998 = vunpack.c.0.s8 %v2997
        %v2999 = vperm.slane %v2993, %v2998
        %v3001 = vunpack.c.l.s4 1983009808
        %v3002 = vunpack.c.0.s8 %v3001
        %v3003 = vperm.slane %v2995, %v3002
        %v3004 = vrot.slane %v2954, 4
        %v3005 = vsel %vm364, %v3004, %v2952
        %v3006 = vrot.slane %v2952, 4
        %v3007 = vsel %vm364, %v2954, %v3006
        %v3009 = vunpack.c.l.s4 1983009808
        %v3010 = vunpack.c.0.s8 %v3009
        %v3011 = vperm.slane %v3005, %v3010
        %v3013 = vunpack.c.l.s4 1983009808
        %v3014 = vunpack.c.0.s8 %v3013
        %v3015 = vperm.slane %v3007, %v3014
        %v3016 = vrot.slane %v2955, 4
        %v3017 = vsel %vm364, %v3016, %v2953
        %v3018 = vrot.slane %v2953, 4
        %v3019 = vsel %vm364, %v2955, %v3018
        %v3021 = vunpack.c.l.s4 1983009808
        %v3022 = vunpack.c.0.s8 %v3021
        %v3023 = vperm.slane %v3017, %v3022
        %v3025 = vunpack.c.l.s4 1983009808
        %v3026 = vunpack.c.0.s8 %v3025
        %v3027 = vperm.slane %v3019, %v3026
        %v3028 = vrot.slane %v2999, 4
        %v3029 = vsel %vm364, %v3028, %v2987
        %v3030 = vrot.slane %v2987, 4
        %v3031 = vsel %vm364, %v2999, %v3030
        %v3033 = vunpack.c.l.s4 1934713408
        %v3034 = vunpack.c.0.s8 %v3033
        %v3035 = vperm.slane %v3029, %v3034
        %v3037 = vunpack.c.l.s4 1934713408
        %v3038 = vunpack.c.0.s8 %v3037
        %v3039 = vperm.slane %v3031, %v3038
        %v3040 = vrot.slane %v3003, 4
        %v3041 = vsel %vm364, %v3040, %v2991
        %v3042 = vrot.slane %v2991, 4
        %v3043 = vsel %vm364, %v3003, %v3042
        %v3045 = vunpack.c.l.s4 1934713408
        %v3046 = vunpack.c.0.s8 %v3045
        %v3047 = vperm.slane %v3041, %v3046
        %v3049 = vunpack.c.l.s4 1934713408
        %v3050 = vunpack.c.0.s8 %v3049
        %v3051 = vperm.slane %v3043, %v3050
        %v3052 = vrot.slane %v3023, 4
        %v3053 = vsel %vm364, %v3052, %v3011
        %v3054 = vrot.slane %v3011, 4
        %v3055 = vsel %vm364, %v3023, %v3054
        %v3057 = vunpack.c.l.s4 1934713408
        %v3058 = vunpack.c.0.s8 %v3057
        %v3059 = vperm.slane %v3053, %v3058
        %v3061 = vunpack.c.l.s4 1934713408
        %v3062 = vunpack.c.0.s8 %v3061
        %v3063 = vperm.slane %v3055, %v3062
        %v3064 = vrot.slane %v3027, 4
        %v3065 = vsel %vm364, %v3064, %v3015
        %v3066 = vrot.slane %v3015, 4
        %v3067 = vsel %vm364, %v3027, %v3066
        %v3069 = vunpack.c.l.s4 1934713408
        %v3070 = vunpack.c.0.s8 %v3069
        %v3071 = vperm.slane %v3065, %v3070
        %v3073 = vunpack.c.l.s4 1934713408
        %v3074 = vunpack.c.0.s8 %v3073
        %v3075 = vperm.slane %v3067, %v3074
        %v3076 = vrot.slane %v3059, 4
        %v3077 = vsel %vm364, %v3076, %v3035
        %v3078 = vrot.slane %v3035, 4
        %v3079 = vsel %vm364, %v3059, %v3078
        %v3080 = vrot.slane %v3063, 4
        %v3081 = vsel %vm364, %v3080, %v3039
        %v3082 = vrot.slane %v3039, 4
        %v3083 = vsel %vm364, %v3063, %v3082
        %v3084 = vrot.slane %v3071, 4
        %v3085 = vsel %vm364, %v3084, %v3047
        %v3086 = vrot.slane %v3047, 4
        %v3087 = vsel %vm364, %v3071, %v3086
        %v3088 = vrot.slane %v3075, 4
        %v3089 = vsel %vm364, %v3088, %v3051
        %v3090 = vrot.slane %v3051, 4
        %v3091 = vsel %vm364, %v3075, %v3090
        %v3092 = vrot.slane %v2958, 4
        %v3093 = vsel %vm364, %v3092, %v2956
        %v3094 = vrot.slane %v2956, 4
        %v3095 = vsel %vm364, %v2958, %v3094
        %v3097 = vunpack.c.l.s4 1983009808
        %v3098 = vunpack.c.0.s8 %v3097
        %v3099 = vperm.slane %v3093, %v3098
        %v3101 = vunpack.c.l.s4 1983009808
        %v3102 = vunpack.c.0.s8 %v3101
        %v3103 = vperm.slane %v3095, %v3102
        %v3104 = vrot.slane %v2959, 4
        %v3105 = vsel %vm364, %v3104, %v2957
        %v3106 = vrot.slane %v2957, 4
        %v3107 = vsel %vm364, %v2959, %v3106
        %v3109 = vunpack.c.l.s4 1983009808
        %v3110 = vunpack.c.0.s8 %v3109
        %v3111 = vperm.slane %v3105, %v3110
        %v3113 = vunpack.c.l.s4 1983009808
        %v3114 = vunpack.c.0.s8 %v3113
        %v3115 = vperm.slane %v3107, %v3114
        %v3116 = vrot.slane %v2962, 4
        %v3117 = vsel %vm364, %v3116, %v2960
        %v3118 = vrot.slane %v2960, 4
        %v3119 = vsel %vm364, %v2962, %v3118
        %v3121 = vunpack.c.l.s4 1983009808
        %v3122 = vunpack.c.0.s8 %v3121
        %v3123 = vperm.slane %v3117, %v3122
        %v3125 = vunpack.c.l.s4 1983009808
        %v3126 = vunpack.c.0.s8 %v3125
        %v3127 = vperm.slane %v3119, %v3126
        %v3128 = vrot.slane %v2963, 4
        %v3129 = vsel %vm364, %v3128, %v2961
        %v3130 = vrot.slane %v2961, 4
        %v3131 = vsel %vm364, %v2963, %v3130
        %v3133 = vunpack.c.l.s4 1983009808
        %v3134 = vunpack.c.0.s8 %v3133
        %v3135 = vperm.slane %v3129, %v3134
        %v3137 = vunpack.c.l.s4 1983009808
        %v3138 = vunpack.c.0.s8 %v3137
        %v3139 = vperm.slane %v3131, %v3138
        %v3140 = vrot.slane %v3111, 4
        %v3141 = vsel %vm364, %v3140, %v3099
        %v3142 = vrot.slane %v3099, 4
        %v3143 = vsel %vm364, %v3111, %v3142
        %v3145 = vunpack.c.l.s4 1934713408
        %v3146 = vunpack.c.0.s8 %v3145
        %v3147 = vperm.slane %v3141, %v3146
        %v3149 = vunpack.c.l.s4 1934713408
        %v3150 = vunpack.c.0.s8 %v3149
        %v3151 = vperm.slane %v3143, %v3150
        %v3152 = vrot.slane %v3115, 4
        %v3153 = vsel %vm364, %v3152, %v3103
        %v3154 = vrot.slane %v3103, 4
        %v3155 = vsel %vm364, %v3115, %v3154
        %v3157 = vunpack.c.l.s4 1934713408
        %v3158 = vunpack.c.0.s8 %v3157
        %v3159 = vperm.slane %v3153, %v3158
        %v3161 = vunpack.c.l.s4 1934713408
        %v3162 = vunpack.c.0.s8 %v3161
        %v3163 = vperm.slane %v3155, %v3162
        %v3164 = vrot.slane %v3135, 4
        %v3165 = vsel %vm364, %v3164, %v3123
        %v3166 = vrot.slane %v3123, 4
        %v3167 = vsel %vm364, %v3135, %v3166
        %v3169 = vunpack.c.l.s4 1934713408
        %v3170 = vunpack.c.0.s8 %v3169
        %v3171 = vperm.slane %v3165, %v3170
        %v3173 = vunpack.c.l.s4 1934713408
        %v3174 = vunpack.c.0.s8 %v3173
        %v3175 = vperm.slane %v3167, %v3174
        %v3176 = vrot.slane %v3139, 4
        %v3177 = vsel %vm364, %v3176, %v3127
        %v3178 = vrot.slane %v3127, 4
        %v3179 = vsel %vm364, %v3139, %v3178
        %v3181 = vunpack.c.l.s4 1934713408
        %v3182 = vunpack.c.0.s8 %v3181
        %v3183 = vperm.slane %v3177, %v3182
        %v3185 = vunpack.c.l.s4 1934713408
        %v3186 = vunpack.c.0.s8 %v3185
        %v3187 = vperm.slane %v3179, %v3186
        %v3188 = vrot.slane %v3171, 4
        %v3189 = vsel %vm364, %v3188, %v3147
        %v3190 = vrot.slane %v3147, 4
        %v3191 = vsel %vm364, %v3171, %v3190
        %v3192 = vrot.slane %v3175, 4
        %v3193 = vsel %vm364, %v3192, %v3151
        %v3194 = vrot.slane %v3151, 4
        %v3195 = vsel %vm364, %v3175, %v3194
        %v3196 = vrot.slane %v3183, 4
        %v3197 = vsel %vm364, %v3196, %v3159
        %v3198 = vrot.slane %v3159, 4
        %v3199 = vsel %vm364, %v3183, %v3198
        %v3200 = vrot.slane %v3187, 4
        %v3201 = vsel %vm364, %v3200, %v3163
        %v3202 = vrot.slane %v3163, 4
        %v3203 = vsel %vm364, %v3187, %v3202
        %v3204 = vrot.slane %v2966, 4
        %v3205 = vsel %vm364, %v3204, %v2964
        %v3206 = vrot.slane %v2964, 4
        %v3207 = vsel %vm364, %v2966, %v3206
        %v3209 = vunpack.c.l.s4 1983009808
        %v3210 = vunpack.c.0.s8 %v3209
        %v3211 = vperm.slane %v3205, %v3210
        %v3213 = vunpack.c.l.s4 1983009808
        %v3214 = vunpack.c.0.s8 %v3213
        %v3215 = vperm.slane %v3207, %v3214
        %v3216 = vrot.slane %v2967, 4
        %v3217 = vsel %vm364, %v3216, %v2965
        %v3218 = vrot.slane %v2965, 4
        %v3219 = vsel %vm364, %v2967, %v3218
        %v3221 = vunpack.c.l.s4 1983009808
        %v3222 = vunpack.c.0.s8 %v3221
        %v3223 = vperm.slane %v3217, %v3222
        %v3225 = vunpack.c.l.s4 1983009808
        %v3226 = vunpack.c.0.s8 %v3225
        %v3227 = vperm.slane %v3219, %v3226
        %v3228 = vrot.slane %v2970, 4
        %v3229 = vsel %vm364, %v3228, %v2968
        %v3230 = vrot.slane %v2968, 4
        %v3231 = vsel %vm364, %v2970, %v3230
        %v3233 = vunpack.c.l.s4 1983009808
        %v3234 = vunpack.c.0.s8 %v3233
        %v3235 = vperm.slane %v3229, %v3234
        %v3237 = vunpack.c.l.s4 1983009808
        %v3238 = vunpack.c.0.s8 %v3237
        %v3239 = vperm.slane %v3231, %v3238
        %v3240 = vrot.slane %v2971, 4
        %v3241 = vsel %vm364, %v3240, %v2969
        %v3242 = vrot.slane %v2969, 4
        %v3243 = vsel %vm364, %v2971, %v3242
        %v3245 = vunpack.c.l.s4 1983009808
        %v3246 = vunpack.c.0.s8 %v3245
        %v3247 = vperm.slane %v3241, %v3246
        %v3249 = vunpack.c.l.s4 1983009808
        %v3250 = vunpack.c.0.s8 %v3249
        %v3251 = vperm.slane %v3243, %v3250
        %v3252 = vrot.slane %v3223, 4
        %v3253 = vsel %vm364, %v3252, %v3211
        %v3254 = vrot.slane %v3211, 4
        %v3255 = vsel %vm364, %v3223, %v3254
        %v3257 = vunpack.c.l.s4 1934713408
        %v3258 = vunpack.c.0.s8 %v3257
        %v3259 = vperm.slane %v3253, %v3258
        %v3261 = vunpack.c.l.s4 1934713408
        %v3262 = vunpack.c.0.s8 %v3261
        %v3263 = vperm.slane %v3255, %v3262
        %v3264 = vrot.slane %v3227, 4
        %v3265 = vsel %vm364, %v3264, %v3215
        %v3266 = vrot.slane %v3215, 4
        %v3267 = vsel %vm364, %v3227, %v3266
        %v3269 = vunpack.c.l.s4 1934713408
        %v3270 = vunpack.c.0.s8 %v3269
        %v3271 = vperm.slane %v3265, %v3270
        %v3273 = vunpack.c.l.s4 1934713408
        %v3274 = vunpack.c.0.s8 %v3273
        %v3275 = vperm.slane %v3267, %v3274
        %v3276 = vrot.slane %v3247, 4
        %v3277 = vsel %vm364, %v3276, %v3235
        %v3278 = vrot.slane %v3235, 4
        %v3279 = vsel %vm364, %v3247, %v3278
        %v3281 = vunpack.c.l.s4 1934713408
        %v3282 = vunpack.c.0.s8 %v3281
        %v3283 = vperm.slane %v3277, %v3282
        %v3285 = vunpack.c.l.s4 1934713408
        %v3286 = vunpack.c.0.s8 %v3285
        %v3287 = vperm.slane %v3279, %v3286
        %v3288 = vrot.slane %v3251, 4
        %v3289 = vsel %vm364, %v3288, %v3239
        %v3290 = vrot.slane %v3239, 4
        %v3291 = vsel %vm364, %v3251, %v3290
        %v3293 = vunpack.c.l.s4 1934713408
        %v3294 = vunpack.c.0.s8 %v3293
        %v3295 = vperm.slane %v3289, %v3294
        %v3297 = vunpack.c.l.s4 1934713408
        %v3298 = vunpack.c.0.s8 %v3297
        %v3299 = vperm.slane %v3291, %v3298
        %v3300 = vrot.slane %v3283, 4
        %v3301 = vsel %vm364, %v3300, %v3259
        %v3302 = vrot.slane %v3259, 4
        %v3303 = vsel %vm364, %v3283, %v3302
        %v3304 = vrot.slane %v3287, 4
        %v3305 = vsel %vm364, %v3304, %v3263
        %v3306 = vrot.slane %v3263, 4
        %v3307 = vsel %vm364, %v3287, %v3306
        %v3308 = vrot.slane %v3295, 4
        %v3309 = vsel %vm364, %v3308, %v3271
        %v3310 = vrot.slane %v3271, 4
        %v3311 = vsel %vm364, %v3295, %v3310
        %v3312 = vrot.slane %v3299, 4
        %v3313 = vsel %vm364, %v3312, %v3275
        %v3314 = vrot.slane %v3275, 4
        %v3315 = vsel %vm364, %v3299, %v3314
        %v3316 = vrot.slane %v2974, 4
        %v3317 = vsel %vm364, %v3316, %v2972
        %v3318 = vrot.slane %v2972, 4
        %v3319 = vsel %vm364, %v2974, %v3318
        %v3321 = vunpack.c.l.s4 1983009808
        %v3322 = vunpack.c.0.s8 %v3321
        %v3323 = vperm.slane %v3317, %v3322
        %v3325 = vunpack.c.l.s4 1983009808
        %v3326 = vunpack.c.0.s8 %v3325
        %v3327 = vperm.slane %v3319, %v3326
        %v3328 = vrot.slane %v2975, 4
        %v3329 = vsel %vm364, %v3328, %v2973
        %v3330 = vrot.slane %v2973, 4
        %v3331 = vsel %vm364, %v2975, %v3330
        %v3333 = vunpack.c.l.s4 1983009808
        %v3334 = vunpack.c.0.s8 %v3333
        %v3335 = vperm.slane %v3329, %v3334
        %v3337 = vunpack.c.l.s4 1983009808
        %v3338 = vunpack.c.0.s8 %v3337
        %v3339 = vperm.slane %v3331, %v3338
        %v3340 = vrot.slane %v2978, 4
        %v3341 = vsel %vm364, %v3340, %v2976
        %v3342 = vrot.slane %v2976, 4
        %v3343 = vsel %vm364, %v2978, %v3342
        %v3345 = vunpack.c.l.s4 1983009808
        %v3346 = vunpack.c.0.s8 %v3345
        %v3347 = vperm.slane %v3341, %v3346
        %v3349 = vunpack.c.l.s4 1983009808
        %v3350 = vunpack.c.0.s8 %v3349
        %v3351 = vperm.slane %v3343, %v3350
        %v3352 = vrot.slane %v2979, 4
        %v3353 = vsel %vm364, %v3352, %v2977
        %v3354 = vrot.slane %v2977, 4
        %v3355 = vsel %vm364, %v2979, %v3354
        %v3357 = vunpack.c.l.s4 1983009808
        %v3358 = vunpack.c.0.s8 %v3357
        %v3359 = vperm.slane %v3353, %v3358
        %v3361 = vunpack.c.l.s4 1983009808
        %v3362 = vunpack.c.0.s8 %v3361
        %v3363 = vperm.slane %v3355, %v3362
        %v3364 = vrot.slane %v3335, 4
        %v3365 = vsel %vm364, %v3364, %v3323
        %v3366 = vrot.slane %v3323, 4
        %v3367 = vsel %vm364, %v3335, %v3366
        %v3369 = vunpack.c.l.s4 1934713408
        %v3370 = vunpack.c.0.s8 %v3369
        %v3371 = vperm.slane %v3365, %v3370
        %v3373 = vunpack.c.l.s4 1934713408
        %v3374 = vunpack.c.0.s8 %v3373
        %v3375 = vperm.slane %v3367, %v3374
        %v3376 = vrot.slane %v3339, 4
        %v3377 = vsel %vm364, %v3376, %v3327
        %v3378 = vrot.slane %v3327, 4
        %v3379 = vsel %vm364, %v3339, %v3378
        %v3381 = vunpack.c.l.s4 1934713408
        %v3382 = vunpack.c.0.s8 %v3381
        %v3383 = vperm.slane %v3377, %v3382
        %v3385 = vunpack.c.l.s4 1934713408
        %v3386 = vunpack.c.0.s8 %v3385
        %v3387 = vperm.slane %v3379, %v3386
        %v3388 = vrot.slane %v3359, 4
        %v3389 = vsel %vm364, %v3388, %v3347
        %v3390 = vrot.slane %v3347, 4
        %v3391 = vsel %vm364, %v3359, %v3390
        %v3393 = vunpack.c.l.s4 1934713408
        %v3394 = vunpack.c.0.s8 %v3393
        %v3395 = vperm.slane %v3389, %v3394
        %v3397 = vunpack.c.l.s4 1934713408
        %v3398 = vunpack.c.0.s8 %v3397
        %v3399 = vperm.slane %v3391, %v3398
        %v3400 = vrot.slane %v3363, 4
        %v3401 = vsel %vm364, %v3400, %v3351
        %v3402 = vrot.slane %v3351, 4
        %v3403 = vsel %vm364, %v3363, %v3402
        %v3405 = vunpack.c.l.s4 1934713408
        %v3406 = vunpack.c.0.s8 %v3405
        %v3407 = vperm.slane %v3401, %v3406
        %v3409 = vunpack.c.l.s4 1934713408
        %v3410 = vunpack.c.0.s8 %v3409
        %v3411 = vperm.slane %v3403, %v3410
        %v3412 = vrot.slane %v3395, 4
        %v3413 = vsel %vm364, %v3412, %v3371
        %v3414 = vrot.slane %v3371, 4
        %v3415 = vsel %vm364, %v3395, %v3414
        %v3416 = vrot.slane %v3399, 4
        %v3417 = vsel %vm364, %v3416, %v3375
        %v3418 = vrot.slane %v3375, 4
        %v3419 = vsel %vm364, %v3399, %v3418
        %v3420 = vrot.slane %v3407, 4
        %v3421 = vsel %vm364, %v3420, %v3383
        %v3422 = vrot.slane %v3383, 4
        %v3423 = vsel %vm364, %v3407, %v3422
        %v3424 = vrot.slane %v3411, 4
        %v3425 = vsel %vm364, %v3424, %v3387
        %v3426 = vrot.slane %v3387, 4
        %v3427 = vsel %vm364, %v3411, %v3426
        %3432 = vrot.lane.b32.xlu0 %v3079, 16
        %v3433 = vpop.permute.xlu0 %3432
        %3434 = vrot.lane.b32.xlu0 %v3191, 16
        %v3435 = vpop.permute.xlu0 %3434
        %3436 = vrot.lane.b32.xlu0 %v3303, 16
        %v3437 = vpop.permute.xlu0 %3436
        %3438 = vrot.lane.b32.xlu0 %v3415, 16
        %v3439 = vpop.permute.xlu0 %3438
        %3448 = vrot.lane.b32.xlu0 %v3081, 32
        %v3449 = vpop.permute.xlu0 %3448
        %3450 = vrot.lane.b32.xlu0 %v3193, 32
        %v3451 = vpop.permute.xlu0 %3450
        %3452 = vrot.lane.b32.xlu0 %v3305, 32
        %v3453 = vpop.permute.xlu0 %3452
        %3454 = vrot.lane.b32.xlu0 %v3417, 32
        %v3455 = vpop.permute.xlu0 %3454
        %3464 = vrot.lane.b32.xlu0 %v3083, 48
        %v3465 = vpop.permute.xlu0 %3464
        %3466 = vrot.lane.b32.xlu0 %v3195, 48
        %v3467 = vpop.permute.xlu0 %3466
        %3468 = vrot.lane.b32.xlu0 %v3307, 48
        %v3469 = vpop.permute.xlu0 %3468
        %3470 = vrot.lane.b32.xlu0 %v3419, 48
        %v3471 = vpop.permute.xlu0 %3470
        %3480 = vrot.lane.b32.xlu0 %v3085, 64
        %v3481 = vpop.permute.xlu0 %3480
        %3482 = vrot.lane.b32.xlu0 %v3197, 64
        %v3483 = vpop.permute.xlu0 %3482
        %3484 = vrot.lane.b32.xlu0 %v3309, 64
        %v3485 = vpop.permute.xlu0 %3484
        %3486 = vrot.lane.b32.xlu0 %v3421, 64
        %v3487 = vpop.permute.xlu0 %3486
        %3496 = vrot.lane.b32.xlu0 %v3087, 80
        %v3497 = vpop.permute.xlu0 %3496
        %3498 = vrot.lane.b32.xlu0 %v3199, 80
        %v3499 = vpop.permute.xlu0 %3498
        %3500 = vrot.lane.b32.xlu0 %v3311, 80
        %v3501 = vpop.permute.xlu0 %3500
        %3502 = vrot.lane.b32.xlu0 %v3423, 80
        %v3503 = vpop.permute.xlu0 %3502
        %3512 = vrot.lane.b32.xlu0 %v3089, 96
        %v3513 = vpop.permute.xlu0 %3512
        %3514 = vrot.lane.b32.xlu0 %v3201, 96
        %v3515 = vpop.permute.xlu0 %3514
        %3516 = vrot.lane.b32.xlu0 %v3313, 96
        %v3517 = vpop.permute.xlu0 %3516
        %3518 = vrot.lane.b32.xlu0 %v3425, 96
        %v3519 = vpop.permute.xlu0 %3518
        %3528 = vrot.lane.b32.xlu0 %v3091, 112
        %v3529 = vpop.permute.xlu0 %3528
        %3530 = vrot.lane.b32.xlu0 %v3203, 112
        %v3531 = vpop.permute.xlu0 %3530
        %3532 = vrot.lane.b32.xlu0 %v3315, 112
        %v3533 = vpop.permute.xlu0 %3532
        %3534 = vrot.lane.b32.xlu0 %v3427, 112
        %v3535 = vpop.permute.xlu0 %3534
        %v3540 = vsel %vm465, %v3077, %v3433
        %v3541 = vsel %vm465, %v3189, %v3435
        %v3542 = vsel %vm465, %v3301, %v3437
        %v3543 = vsel %vm465, %v3413, %v3439
        %v3544 = vsel %vm467, %v3540, %v3449
        %v3545 = vsel %vm467, %v3541, %v3451
        %v3546 = vsel %vm467, %v3542, %v3453
        %v3547 = vsel %vm467, %v3543, %v3455
        %v3548 = vsel %vm469, %v3544, %v3465
        %v3549 = vsel %vm469, %v3545, %v3467
        %v3550 = vsel %vm469, %v3546, %v3469
        %v3551 = vsel %vm469, %v3547, %v3471
        %v3552 = vsel %vm471, %v3548, %v3481
        %v3553 = vsel %vm471, %v3549, %v3483
        %v3554 = vsel %vm471, %v3550, %v3485
        %v3555 = vsel %vm471, %v3551, %v3487
        %v3556 = vsel %vm473, %v3552, %v3497
        %v3557 = vsel %vm473, %v3553, %v3499
        %v3558 = vsel %vm473, %v3554, %v3501
        %v3559 = vsel %vm473, %v3555, %v3503
        %v3560 = vsel %vm475, %v3556, %v3513
        %v3561 = vsel %vm475, %v3557, %v3515
        %v3562 = vsel %vm475, %v3558, %v3517
        %v3563 = vsel %vm475, %v3559, %v3519
        %v3564 = vsel %vm477, %v3560, %v3529
        %v3565 = vsel %vm477, %v3561, %v3531
        %v3566 = vsel %vm477, %v3562, %v3533
        %v3567 = vsel %vm477, %v3563, %v3535
        %3568 = vst [vmem:[#allocation5] sm:$0xff] %v3564
        %3569 = vst [vmem:[#allocation5 + $0x8] sm:$0xff] %v3565
        %3570 = vst [vmem:[#allocation5 + $0x10] sm:$0xff] %v3566
        %3571 = vst [vmem:[#allocation5 + $0x18] sm:$0xff] %v3567
        %v3572 = vld [vmem:[#allocation3] sm:$0xff]
        %v3573 = vld [vmem:[#allocation3 + $0x10] sm:$0xff]
        %v3574 = vld [vmem:[#allocation3 + $0x20] sm:$0xff]
        %v3575 = vld [vmem:[#allocation3 + $0x30] sm:$0xff]
        %v3576 = vld [vmem:[#allocation3 + $0x40] sm:$0xff]
        %v3577 = vld [vmem:[#allocation3 + $0x50] sm:$0xff]
        %v3578 = vld [vmem:[#allocation3 + $0x60] sm:$0xff]
        %v3579 = vld [vmem:[#allocation3 + $0x70] sm:$0xff]
        %v3580 = vld [vmem:[#allocation3 + $0x80] sm:$0xff]
        %v3581 = vld [vmem:[#allocation3 + $0x90] sm:$0xff]
        %v3582 = vld [vmem:[#allocation3 + $0xa0] sm:$0xff]
        %v3583 = vld [vmem:[#allocation3 + $0xb0] sm:$0xff]
        %v3584 = vld [vmem:[#allocation3 + $0xc0] sm:$0xff]
        %v3585 = vld [vmem:[#allocation3 + $0xd0] sm:$0xff]
        %v3586 = vld [vmem:[#allocation3 + $0xe0] sm:$0xff]
        %v3587 = vld [vmem:[#allocation3 + $0xf0] sm:$0xff]
        %v3588 = vld [vmem:[#allocation3 + $0x100] sm:$0xff]
        %v3589 = vld [vmem:[#allocation3 + $0x110] sm:$0xff]
        %v3590 = vld [vmem:[#allocation3 + $0x120] sm:$0xff]
        %v3591 = vld [vmem:[#allocation3 + $0x130] sm:$0xff]
        %v3592 = vld [vmem:[#allocation3 + $0x140] sm:$0xff]
        %v3593 = vld [vmem:[#allocation3 + $0x150] sm:$0xff]
        %v3594 = vld [vmem:[#allocation3 + $0x160] sm:$0xff]
        %v3595 = vld [vmem:[#allocation3 + $0x170] sm:$0xff]
        %v3596 = vld [vmem:[#allocation3 + $0x180] sm:$0xff]
        %v3597 = vld [vmem:[#allocation3 + $0x190] sm:$0xff]
        %v3598 = vld [vmem:[#allocation3 + $0x1a0] sm:$0xff]
        %v3599 = vld [vmem:[#allocation3 + $0x1b0] sm:$0xff]
        %v3600 = vld [vmem:[#allocation3 + $0x1c0] sm:$0xff]
        %v3601 = vld [vmem:[#allocation3 + $0x1d0] sm:$0xff]
        %v3602 = vld [vmem:[#allocation3 + $0x1e0] sm:$0xff]
        %v3603 = vld [vmem:[#allocation3 + $0x1f0] sm:$0xff]
        %3636 = vrot.lane.b32.xlu0 %v3572, 127
        %v3637 = vpop.permute.xlu0 %3636
        %3638 = vrot.lane.b32.xlu0 %v3573, 127
        %v3639 = vpop.permute.xlu0 %3638
        %3640 = vrot.lane.b32.xlu0 %v3574, 127
        %v3641 = vpop.permute.xlu0 %3640
        %3642 = vrot.lane.b32.xlu0 %v3575, 127
        %v3643 = vpop.permute.xlu0 %3642
        %3644 = vrot.lane.b32.xlu0 %v3576, 127
        %v3645 = vpop.permute.xlu0 %3644
        %3646 = vrot.lane.b32.xlu0 %v3577, 127
        %v3647 = vpop.permute.xlu0 %3646
        %3648 = vrot.lane.b32.xlu0 %v3578, 127
        %v3649 = vpop.permute.xlu0 %3648
        %3650 = vrot.lane.b32.xlu0 %v3579, 127
        %v3651 = vpop.permute.xlu0 %3650
        %3652 = vrot.lane.b32.xlu0 %v3580, 127
        %v3653 = vpop.permute.xlu0 %3652
        %3654 = vrot.lane.b32.xlu0 %v3581, 127
        %v3655 = vpop.permute.xlu0 %3654
        %3656 = vrot.lane.b32.xlu0 %v3582, 127
        %v3657 = vpop.permute.xlu0 %3656
        %3658 = vrot.lane.b32.xlu0 %v3583, 127
        %v3659 = vpop.permute.xlu0 %3658
        %3660 = vrot.lane.b32.xlu0 %v3584, 127
        %v3661 = vpop.permute.xlu0 %3660
        %3662 = vrot.lane.b32.xlu0 %v3585, 127
        %v3663 = vpop.permute.xlu0 %3662
        %3664 = vrot.lane.b32.xlu0 %v3586, 127
        %v3665 = vpop.permute.xlu0 %3664
        %3666 = vrot.lane.b32.xlu0 %v3587, 127
        %v3667 = vpop.permute.xlu0 %3666
        %3668 = vrot.lane.b32.xlu0 %v3588, 127
        %v3669 = vpop.permute.xlu0 %3668
        %3670 = vrot.lane.b32.xlu0 %v3589, 127
        %v3671 = vpop.permute.xlu0 %3670
        %3672 = vrot.lane.b32.xlu0 %v3590, 127
        %v3673 = vpop.permute.xlu0 %3672
        %3674 = vrot.lane.b32.xlu0 %v3591, 127
        %v3675 = vpop.permute.xlu0 %3674
        %3676 = vrot.lane.b32.xlu0 %v3592, 127
        %v3677 = vpop.permute.xlu0 %3676
        %3678 = vrot.lane.b32.xlu0 %v3593, 127
        %v3679 = vpop.permute.xlu0 %3678
        %3680 = vrot.lane.b32.xlu0 %v3594, 127
        %v3681 = vpop.permute.xlu0 %3680
        %3682 = vrot.lane.b32.xlu0 %v3595, 127
        %v3683 = vpop.permute.xlu0 %3682
        %3684 = vrot.lane.b32.xlu0 %v3596, 127
        %v3685 = vpop.permute.xlu0 %3684
        %3686 = vrot.lane.b32.xlu0 %v3597, 127
        %v3687 = vpop.permute.xlu0 %3686
        %3688 = vrot.lane.b32.xlu0 %v3598, 127
        %v3689 = vpop.permute.xlu0 %3688
        %3690 = vrot.lane.b32.xlu0 %v3599, 127
        %v3691 = vpop.permute.xlu0 %3690
        %3692 = vrot.lane.b32.xlu0 %v3600, 127
        %v3693 = vpop.permute.xlu0 %3692
        %3694 = vrot.lane.b32.xlu0 %v3601, 127
        %v3695 = vpop.permute.xlu0 %3694
        %3696 = vrot.lane.b32.xlu0 %v3602, 127
        %v3697 = vpop.permute.xlu0 %3696
        %3698 = vrot.lane.b32.xlu0 %v3603, 127
        %v3699 = vpop.permute.xlu0 %3698
        %v3732 = vrot.slane %v3641, 4
        %v3733 = vsel %vm364, %v3732, %v3637
        %v3734 = vrot.slane %v3637, 4
        %v3735 = vsel %vm364, %v3641, %v3734
        %v3737 = vunpack.c.l.s4 1983009808
        %v3738 = vunpack.c.0.s8 %v3737
        %v3739 = vperm.slane %v3733, %v3738
        %v3741 = vunpack.c.l.s4 1983009808
        %v3742 = vunpack.c.0.s8 %v3741
        %v3743 = vperm.slane %v3735, %v3742
        %v3744 = vrot.slane %v3643, 4
        %v3745 = vsel %vm364, %v3744, %v3639
        %v3746 = vrot.slane %v3639, 4
        %v3747 = vsel %vm364, %v3643, %v3746
        %v3749 = vunpack.c.l.s4 1983009808
        %v3750 = vunpack.c.0.s8 %v3749
        %v3751 = vperm.slane %v3745, %v3750
        %v3753 = vunpack.c.l.s4 1983009808
        %v3754 = vunpack.c.0.s8 %v3753
        %v3755 = vperm.slane %v3747, %v3754
        %v3756 = vrot.slane %v3649, 4
        %v3757 = vsel %vm364, %v3756, %v3645
        %v3758 = vrot.slane %v3645, 4
        %v3759 = vsel %vm364, %v3649, %v3758
        %v3761 = vunpack.c.l.s4 1983009808
        %v3762 = vunpack.c.0.s8 %v3761
        %v3763 = vperm.slane %v3757, %v3762
        %v3765 = vunpack.c.l.s4 1983009808
        %v3766 = vunpack.c.0.s8 %v3765
        %v3767 = vperm.slane %v3759, %v3766
        %v3768 = vrot.slane %v3651, 4
        %v3769 = vsel %vm364, %v3768, %v3647
        %v3770 = vrot.slane %v3647, 4
        %v3771 = vsel %vm364, %v3651, %v3770
        %v3773 = vunpack.c.l.s4 1983009808
        %v3774 = vunpack.c.0.s8 %v3773
        %v3775 = vperm.slane %v3769, %v3774
        %v3777 = vunpack.c.l.s4 1983009808
        %v3778 = vunpack.c.0.s8 %v3777
        %v3779 = vperm.slane %v3771, %v3778
        %v3780 = vrot.slane %v3751, 4
        %v3781 = vsel %vm364, %v3780, %v3739
        %v3782 = vrot.slane %v3739, 4
        %v3783 = vsel %vm364, %v3751, %v3782
        %v3785 = vunpack.c.l.s4 1934713408
        %v3786 = vunpack.c.0.s8 %v3785
        %v3787 = vperm.slane %v3781, %v3786
        %v3789 = vunpack.c.l.s4 1934713408
        %v3790 = vunpack.c.0.s8 %v3789
        %v3791 = vperm.slane %v3783, %v3790
        %v3792 = vrot.slane %v3755, 4
        %v3793 = vsel %vm364, %v3792, %v3743
        %v3794 = vrot.slane %v3743, 4
        %v3795 = vsel %vm364, %v3755, %v3794
        %v3797 = vunpack.c.l.s4 1934713408
        %v3798 = vunpack.c.0.s8 %v3797
        %v3799 = vperm.slane %v3793, %v3798
        %v3801 = vunpack.c.l.s4 1934713408
        %v3802 = vunpack.c.0.s8 %v3801
        %v3803 = vperm.slane %v3795, %v3802
        %v3804 = vrot.slane %v3775, 4
        %v3805 = vsel %vm364, %v3804, %v3763
        %v3806 = vrot.slane %v3763, 4
        %v3807 = vsel %vm364, %v3775, %v3806
        %v3809 = vunpack.c.l.s4 1934713408
        %v3810 = vunpack.c.0.s8 %v3809
        %v3811 = vperm.slane %v3805, %v3810
        %v3813 = vunpack.c.l.s4 1934713408
        %v3814 = vunpack.c.0.s8 %v3813
        %v3815 = vperm.slane %v3807, %v3814
        %v3816 = vrot.slane %v3779, 4
        %v3817 = vsel %vm364, %v3816, %v3767
        %v3818 = vrot.slane %v3767, 4
        %v3819 = vsel %vm364, %v3779, %v3818
        %v3821 = vunpack.c.l.s4 1934713408
        %v3822 = vunpack.c.0.s8 %v3821
        %v3823 = vperm.slane %v3817, %v3822
        %v3825 = vunpack.c.l.s4 1934713408
        %v3826 = vunpack.c.0.s8 %v3825
        %v3827 = vperm.slane %v3819, %v3826
        %v3828 = vrot.slane %v3811, 4
        %v3829 = vsel %vm364, %v3828, %v3787
        %v3830 = vrot.slane %v3787, 4
        %v3831 = vsel %vm364, %v3811, %v3830
        %v3832 = vrot.slane %v3815, 4
        %v3833 = vsel %vm364, %v3832, %v3791
        %v3834 = vrot.slane %v3791, 4
        %v3835 = vsel %vm364, %v3815, %v3834
        %v3836 = vrot.slane %v3823, 4
        %v3837 = vsel %vm364, %v3836, %v3799
        %v3838 = vrot.slane %v3799, 4
        %v3839 = vsel %vm364, %v3823, %v3838
        %v3840 = vrot.slane %v3827, 4
        %v3841 = vsel %vm364, %v3840, %v3803
        %v3842 = vrot.slane %v3803, 4
        %v3843 = vsel %vm364, %v3827, %v3842
        %v3844 = vrot.slane %v3657, 4
        %v3845 = vsel %vm364, %v3844, %v3653
        %v3846 = vrot.slane %v3653, 4
        %v3847 = vsel %vm364, %v3657, %v3846
        %v3849 = vunpack.c.l.s4 1983009808
        %v3850 = vunpack.c.0.s8 %v3849
        %v3851 = vperm.slane %v3845, %v3850
        %v3853 = vunpack.c.l.s4 1983009808
        %v3854 = vunpack.c.0.s8 %v3853
        %v3855 = vperm.slane %v3847, %v3854
        %v3856 = vrot.slane %v3659, 4
        %v3857 = vsel %vm364, %v3856, %v3655
        %v3858 = vrot.slane %v3655, 4
        %v3859 = vsel %vm364, %v3659, %v3858
        %v3861 = vunpack.c.l.s4 1983009808
        %v3862 = vunpack.c.0.s8 %v3861
        %v3863 = vperm.slane %v3857, %v3862
        %v3865 = vunpack.c.l.s4 1983009808
        %v3866 = vunpack.c.0.s8 %v3865
        %v3867 = vperm.slane %v3859, %v3866
        %v3868 = vrot.slane %v3665, 4
        %v3869 = vsel %vm364, %v3868, %v3661
        %v3870 = vrot.slane %v3661, 4
        %v3871 = vsel %vm364, %v3665, %v3870
        %v3873 = vunpack.c.l.s4 1983009808
        %v3874 = vunpack.c.0.s8 %v3873
        %v3875 = vperm.slane %v3869, %v3874
        %v3877 = vunpack.c.l.s4 1983009808
        %v3878 = vunpack.c.0.s8 %v3877
        %v3879 = vperm.slane %v3871, %v3878
        %v3880 = vrot.slane %v3667, 4
        %v3881 = vsel %vm364, %v3880, %v3663
        %v3882 = vrot.slane %v3663, 4
        %v3883 = vsel %vm364, %v3667, %v3882
        %v3885 = vunpack.c.l.s4 1983009808
        %v3886 = vunpack.c.0.s8 %v3885
        %v3887 = vperm.slane %v3881, %v3886
        %v3889 = vunpack.c.l.s4 1983009808
        %v3890 = vunpack.c.0.s8 %v3889
        %v3891 = vperm.slane %v3883, %v3890
        %v3892 = vrot.slane %v3863, 4
        %v3893 = vsel %vm364, %v3892, %v3851
        %v3894 = vrot.slane %v3851, 4
        %v3895 = vsel %vm364, %v3863, %v3894
        %v3897 = vunpack.c.l.s4 1934713408
        %v3898 = vunpack.c.0.s8 %v3897
        %v3899 = vperm.slane %v3893, %v3898
        %v3901 = vunpack.c.l.s4 1934713408
        %v3902 = vunpack.c.0.s8 %v3901
        %v3903 = vperm.slane %v3895, %v3902
        %v3904 = vrot.slane %v3867, 4
        %v3905 = vsel %vm364, %v3904, %v3855
        %v3906 = vrot.slane %v3855, 4
        %v3907 = vsel %vm364, %v3867, %v3906
        %v3909 = vunpack.c.l.s4 1934713408
        %v3910 = vunpack.c.0.s8 %v3909
        %v3911 = vperm.slane %v3905, %v3910
        %v3913 = vunpack.c.l.s4 1934713408
        %v3914 = vunpack.c.0.s8 %v3913
        %v3915 = vperm.slane %v3907, %v3914
        %v3916 = vrot.slane %v3887, 4
        %v3917 = vsel %vm364, %v3916, %v3875
        %v3918 = vrot.slane %v3875, 4
        %v3919 = vsel %vm364, %v3887, %v3918
        %v3921 = vunpack.c.l.s4 1934713408
        %v3922 = vunpack.c.0.s8 %v3921
        %v3923 = vperm.slane %v3917, %v3922
        %v3925 = vunpack.c.l.s4 1934713408
        %v3926 = vunpack.c.0.s8 %v3925
        %v3927 = vperm.slane %v3919, %v3926
        %v3928 = vrot.slane %v3891, 4
        %v3929 = vsel %vm364, %v3928, %v3879
        %v3930 = vrot.slane %v3879, 4
        %v3931 = vsel %vm364, %v3891, %v3930
        %v3933 = vunpack.c.l.s4 1934713408
        %v3934 = vunpack.c.0.s8 %v3933
        %v3935 = vperm.slane %v3929, %v3934
        %v3937 = vunpack.c.l.s4 1934713408
        %v3938 = vunpack.c.0.s8 %v3937
        %v3939 = vperm.slane %v3931, %v3938
        %v3940 = vrot.slane %v3923, 4
        %v3941 = vsel %vm364, %v3940, %v3899
        %v3942 = vrot.slane %v3899, 4
        %v3943 = vsel %vm364, %v3923, %v3942
        %v3944 = vrot.slane %v3927, 4
        %v3945 = vsel %vm364, %v3944, %v3903
        %v3946 = vrot.slane %v3903, 4
        %v3947 = vsel %vm364, %v3927, %v3946
        %v3948 = vrot.slane %v3935, 4
        %v3949 = vsel %vm364, %v3948, %v3911
        %v3950 = vrot.slane %v3911, 4
        %v3951 = vsel %vm364, %v3935, %v3950
        %v3952 = vrot.slane %v3939, 4
        %v3953 = vsel %vm364, %v3952, %v3915
        %v3954 = vrot.slane %v3915, 4
        %v3955 = vsel %vm364, %v3939, %v3954
        %v3956 = vrot.slane %v3673, 4
        %v3957 = vsel %vm364, %v3956, %v3669
        %v3958 = vrot.slane %v3669, 4
        %v3959 = vsel %vm364, %v3673, %v3958
        %v3961 = vunpack.c.l.s4 1983009808
        %v3962 = vunpack.c.0.s8 %v3961
        %v3963 = vperm.slane %v3957, %v3962
        %v3965 = vunpack.c.l.s4 1983009808
        %v3966 = vunpack.c.0.s8 %v3965
        %v3967 = vperm.slane %v3959, %v3966
        %v3968 = vrot.slane %v3675, 4
        %v3969 = vsel %vm364, %v3968, %v3671
        %v3970 = vrot.slane %v3671, 4
        %v3971 = vsel %vm364, %v3675, %v3970
        %v3973 = vunpack.c.l.s4 1983009808
        %v3974 = vunpack.c.0.s8 %v3973
        %v3975 = vperm.slane %v3969, %v3974
        %v3977 = vunpack.c.l.s4 1983009808
        %v3978 = vunpack.c.0.s8 %v3977
        %v3979 = vperm.slane %v3971, %v3978
        %v3980 = vrot.slane %v3681, 4
        %v3981 = vsel %vm364, %v3980, %v3677
        %v3982 = vrot.slane %v3677, 4
        %v3983 = vsel %vm364, %v3681, %v3982
        %v3985 = vunpack.c.l.s4 1983009808
        %v3986 = vunpack.c.0.s8 %v3985
        %v3987 = vperm.slane %v3981, %v3986
        %v3989 = vunpack.c.l.s4 1983009808
        %v3990 = vunpack.c.0.s8 %v3989
        %v3991 = vperm.slane %v3983, %v3990
        %v3992 = vrot.slane %v3683, 4
        %v3993 = vsel %vm364, %v3992, %v3679
        %v3994 = vrot.slane %v3679, 4
        %v3995 = vsel %vm364, %v3683, %v3994
        %v3997 = vunpack.c.l.s4 1983009808
        %v3998 = vunpack.c.0.s8 %v3997
        %v3999 = vperm.slane %v3993, %v3998
        %v4001 = vunpack.c.l.s4 1983009808
        %v4002 = vunpack.c.0.s8 %v4001
        %v4003 = vperm.slane %v3995, %v4002
        %v4004 = vrot.slane %v3975, 4
        %v4005 = vsel %vm364, %v4004, %v3963
        %v4006 = vrot.slane %v3963, 4
        %v4007 = vsel %vm364, %v3975, %v4006
        %v4009 = vunpack.c.l.s4 1934713408
        %v4010 = vunpack.c.0.s8 %v4009
        %v4011 = vperm.slane %v4005, %v4010
        %v4013 = vunpack.c.l.s4 1934713408
        %v4014 = vunpack.c.0.s8 %v4013
        %v4015 = vperm.slane %v4007, %v4014
        %v4016 = vrot.slane %v3979, 4
        %v4017 = vsel %vm364, %v4016, %v3967
        %v4018 = vrot.slane %v3967, 4
        %v4019 = vsel %vm364, %v3979, %v4018
        %v4021 = vunpack.c.l.s4 1934713408
        %v4022 = vunpack.c.0.s8 %v4021
        %v4023 = vperm.slane %v4017, %v4022
        %v4025 = vunpack.c.l.s4 1934713408
        %v4026 = vunpack.c.0.s8 %v4025
        %v4027 = vperm.slane %v4019, %v4026
        %v4028 = vrot.slane %v3999, 4
        %v4029 = vsel %vm364, %v4028, %v3987
        %v4030 = vrot.slane %v3987, 4
        %v4031 = vsel %vm364, %v3999, %v4030
        %v4033 = vunpack.c.l.s4 1934713408
        %v4034 = vunpack.c.0.s8 %v4033
        %v4035 = vperm.slane %v4029, %v4034
        %v4037 = vunpack.c.l.s4 1934713408
        %v4038 = vunpack.c.0.s8 %v4037
        %v4039 = vperm.slane %v4031, %v4038
        %v4040 = vrot.slane %v4003, 4
        %v4041 = vsel %vm364, %v4040, %v3991
        %v4042 = vrot.slane %v3991, 4
        %v4043 = vsel %vm364, %v4003, %v4042
        %v4045 = vunpack.c.l.s4 1934713408
        %v4046 = vunpack.c.0.s8 %v4045
        %v4047 = vperm.slane %v4041, %v4046
        %v4049 = vunpack.c.l.s4 1934713408
        %v4050 = vunpack.c.0.s8 %v4049
        %v4051 = vperm.slane %v4043, %v4050
        %v4052 = vrot.slane %v4035, 4
        %v4053 = vsel %vm364, %v4052, %v4011
        %v4054 = vrot.slane %v4011, 4
        %v4055 = vsel %vm364, %v4035, %v4054
        %v4056 = vrot.slane %v4039, 4
        %v4057 = vsel %vm364, %v4056, %v4015
        %v4058 = vrot.slane %v4015, 4
        %v4059 = vsel %vm364, %v4039, %v4058
        %v4060 = vrot.slane %v4047, 4
        %v4061 = vsel %vm364, %v4060, %v4023
        %v4062 = vrot.slane %v4023, 4
        %v4063 = vsel %vm364, %v4047, %v4062
        %v4064 = vrot.slane %v4051, 4
        %v4065 = vsel %vm364, %v4064, %v4027
        %v4066 = vrot.slane %v4027, 4
        %v4067 = vsel %vm364, %v4051, %v4066
        %v4068 = vrot.slane %v3689, 4
        %v4069 = vsel %vm364, %v4068, %v3685
        %v4070 = vrot.slane %v3685, 4
        %v4071 = vsel %vm364, %v3689, %v4070
        %v4073 = vunpack.c.l.s4 1983009808
        %v4074 = vunpack.c.0.s8 %v4073
        %v4075 = vperm.slane %v4069, %v4074
        %v4077 = vunpack.c.l.s4 1983009808
        %v4078 = vunpack.c.0.s8 %v4077
        %v4079 = vperm.slane %v4071, %v4078
        %v4080 = vrot.slane %v3691, 4
        %v4081 = vsel %vm364, %v4080, %v3687
        %v4082 = vrot.slane %v3687, 4
        %v4083 = vsel %vm364, %v3691, %v4082
        %v4085 = vunpack.c.l.s4 1983009808
        %v4086 = vunpack.c.0.s8 %v4085
        %v4087 = vperm.slane %v4081, %v4086
        %v4089 = vunpack.c.l.s4 1983009808
        %v4090 = vunpack.c.0.s8 %v4089
        %v4091 = vperm.slane %v4083, %v4090
        %v4092 = vrot.slane %v3697, 4
        %v4093 = vsel %vm364, %v4092, %v3693
        %v4094 = vrot.slane %v3693, 4
        %v4095 = vsel %vm364, %v3697, %v4094
        %v4097 = vunpack.c.l.s4 1983009808
        %v4098 = vunpack.c.0.s8 %v4097
        %v4099 = vperm.slane %v4093, %v4098
        %v4101 = vunpack.c.l.s4 1983009808
        %v4102 = vunpack.c.0.s8 %v4101
        %v4103 = vperm.slane %v4095, %v4102
        %v4104 = vrot.slane %v3699, 4
        %v4105 = vsel %vm364, %v4104, %v3695
        %v4106 = vrot.slane %v3695, 4
        %v4107 = vsel %vm364, %v3699, %v4106
        %v4109 = vunpack.c.l.s4 1983009808
        %v4110 = vunpack.c.0.s8 %v4109
        %v4111 = vperm.slane %v4105, %v4110
        %v4113 = vunpack.c.l.s4 1983009808
        %v4114 = vunpack.c.0.s8 %v4113
        %v4115 = vperm.slane %v4107, %v4114
        %v4116 = vrot.slane %v4087, 4
        %v4117 = vsel %vm364, %v4116, %v4075
        %v4118 = vrot.slane %v4075, 4
        %v4119 = vsel %vm364, %v4087, %v4118
        %v4121 = vunpack.c.l.s4 1934713408
        %v4122 = vunpack.c.0.s8 %v4121
        %v4123 = vperm.slane %v4117, %v4122
        %v4125 = vunpack.c.l.s4 1934713408
        %v4126 = vunpack.c.0.s8 %v4125
        %v4127 = vperm.slane %v4119, %v4126
        %v4128 = vrot.slane %v4091, 4
        %v4129 = vsel %vm364, %v4128, %v4079
        %v4130 = vrot.slane %v4079, 4
        %v4131 = vsel %vm364, %v4091, %v4130
        %v4133 = vunpack.c.l.s4 1934713408
        %v4134 = vunpack.c.0.s8 %v4133
        %v4135 = vperm.slane %v4129, %v4134
        %v4137 = vunpack.c.l.s4 1934713408
        %v4138 = vunpack.c.0.s8 %v4137
        %v4139 = vperm.slane %v4131, %v4138
        %v4140 = vrot.slane %v4111, 4
        %v4141 = vsel %vm364, %v4140, %v4099
        %v4142 = vrot.slane %v4099, 4
        %v4143 = vsel %vm364, %v4111, %v4142
        %v4145 = vunpack.c.l.s4 1934713408
        %v4146 = vunpack.c.0.s8 %v4145
        %v4147 = vperm.slane %v4141, %v4146
        %v4149 = vunpack.c.l.s4 1934713408
        %v4150 = vunpack.c.0.s8 %v4149
        %v4151 = vperm.slane %v4143, %v4150
        %v4152 = vrot.slane %v4115, 4
        %v4153 = vsel %vm364, %v4152, %v4103
        %v4154 = vrot.slane %v4103, 4
        %v4155 = vsel %vm364, %v4115, %v4154
        %v4157 = vunpack.c.l.s4 1934713408
        %v4158 = vunpack.c.0.s8 %v4157
        %v4159 = vperm.slane %v4153, %v4158
        %v4161 = vunpack.c.l.s4 1934713408
        %v4162 = vunpack.c.0.s8 %v4161
        %v4163 = vperm.slane %v4155, %v4162
        %v4164 = vrot.slane %v4147, 4
        %v4165 = vsel %vm364, %v4164, %v4123
        %v4166 = vrot.slane %v4123, 4
        %v4167 = vsel %vm364, %v4147, %v4166
        %v4168 = vrot.slane %v4151, 4
        %v4169 = vsel %vm364, %v4168, %v4127
        %v4170 = vrot.slane %v4127, 4
        %v4171 = vsel %vm364, %v4151, %v4170
        %v4172 = vrot.slane %v4159, 4
        %v4173 = vsel %vm364, %v4172, %v4135
        %v4174 = vrot.slane %v4135, 4
        %v4175 = vsel %vm364, %v4159, %v4174
        %v4176 = vrot.slane %v4163, 4
        %v4177 = vsel %vm364, %v4176, %v4139
        %v4178 = vrot.slane %v4139, 4
        %v4179 = vsel %vm364, %v4163, %v4178
        %4184 = vrot.lane.b32.xlu0 %v3831, 16
        %v4185 = vpop.permute.xlu0 %4184
        %4186 = vrot.lane.b32.xlu0 %v3943, 16
        %v4187 = vpop.permute.xlu0 %4186
        %4188 = vrot.lane.b32.xlu0 %v4055, 16
        %v4189 = vpop.permute.xlu0 %4188
        %4190 = vrot.lane.b32.xlu0 %v4167, 16
        %v4191 = vpop.permute.xlu0 %4190
        %4200 = vrot.lane.b32.xlu0 %v3833, 32
        %v4201 = vpop.permute.xlu0 %4200
        %4202 = vrot.lane.b32.xlu0 %v3945, 32
        %v4203 = vpop.permute.xlu0 %4202
        %4204 = vrot.lane.b32.xlu0 %v4057, 32
        %v4205 = vpop.permute.xlu0 %4204
        %4206 = vrot.lane.b32.xlu0 %v4169, 32
        %v4207 = vpop.permute.xlu0 %4206
        %4216 = vrot.lane.b32.xlu0 %v3835, 48
        %v4217 = vpop.permute.xlu0 %4216
        %4218 = vrot.lane.b32.xlu0 %v3947, 48
        %v4219 = vpop.permute.xlu0 %4218
        %4220 = vrot.lane.b32.xlu0 %v4059, 48
        %v4221 = vpop.permute.xlu0 %4220
        %4222 = vrot.lane.b32.xlu0 %v4171, 48
        %v4223 = vpop.permute.xlu0 %4222
        %4232 = vrot.lane.b32.xlu0 %v3837, 64
        %v4233 = vpop.permute.xlu0 %4232
        %4234 = vrot.lane.b32.xlu0 %v3949, 64
        %v4235 = vpop.permute.xlu0 %4234
        %4236 = vrot.lane.b32.xlu0 %v4061, 64
        %v4237 = vpop.permute.xlu0 %4236
        %4238 = vrot.lane.b32.xlu0 %v4173, 64
        %v4239 = vpop.permute.xlu0 %4238
        %4248 = vrot.lane.b32.xlu0 %v3839, 80
        %v4249 = vpop.permute.xlu0 %4248
        %4250 = vrot.lane.b32.xlu0 %v3951, 80
        %v4251 = vpop.permute.xlu0 %4250
        %4252 = vrot.lane.b32.xlu0 %v4063, 80
        %v4253 = vpop.permute.xlu0 %4252
        %4254 = vrot.lane.b32.xlu0 %v4175, 80
        %v4255 = vpop.permute.xlu0 %4254
        %4264 = vrot.lane.b32.xlu0 %v3841, 96
        %v4265 = vpop.permute.xlu0 %4264
        %4266 = vrot.lane.b32.xlu0 %v3953, 96
        %v4267 = vpop.permute.xlu0 %4266
        %4268 = vrot.lane.b32.xlu0 %v4065, 96
        %v4269 = vpop.permute.xlu0 %4268
        %4270 = vrot.lane.b32.xlu0 %v4177, 96
        %v4271 = vpop.permute.xlu0 %4270
        %4280 = vrot.lane.b32.xlu0 %v3843, 112
        %v4281 = vpop.permute.xlu0 %4280
        %4282 = vrot.lane.b32.xlu0 %v3955, 112
        %v4283 = vpop.permute.xlu0 %4282
        %4284 = vrot.lane.b32.xlu0 %v4067, 112
        %v4285 = vpop.permute.xlu0 %4284
        %4286 = vrot.lane.b32.xlu0 %v4179, 112
        %v4287 = vpop.permute.xlu0 %4286
        %v4292 = vsel %vm465, %v3829, %v4185
        %v4293 = vsel %vm465, %v3941, %v4187
        %v4294 = vsel %vm465, %v4053, %v4189
        %v4295 = vsel %vm465, %v4165, %v4191
        %v4296 = vsel %vm467, %v4292, %v4201
        %v4297 = vsel %vm467, %v4293, %v4203
        %v4298 = vsel %vm467, %v4294, %v4205
        %v4299 = vsel %vm467, %v4295, %v4207
        %v4300 = vsel %vm469, %v4296, %v4217
        %v4301 = vsel %vm469, %v4297, %v4219
        %v4302 = vsel %vm469, %v4298, %v4221
        %v4303 = vsel %vm469, %v4299, %v4223
        %v4304 = vsel %vm471, %v4300, %v4233
        %v4305 = vsel %vm471, %v4301, %v4235
        %v4306 = vsel %vm471, %v4302, %v4237
        %v4307 = vsel %vm471, %v4303, %v4239
        %v4308 = vsel %vm473, %v4304, %v4249
        %v4309 = vsel %vm473, %v4305, %v4251
        %v4310 = vsel %vm473, %v4306, %v4253
        %v4311 = vsel %vm473, %v4307, %v4255
        %v4312 = vsel %vm475, %v4308, %v4265
        %v4313 = vsel %vm475, %v4309, %v4267
        %v4314 = vsel %vm475, %v4310, %v4269
        %v4315 = vsel %vm475, %v4311, %v4271
        %v4316 = vsel %vm477, %v4312, %v4281
        %v4317 = vsel %vm477, %v4313, %v4283
        %v4318 = vsel %vm477, %v4314, %v4285
        %v4319 = vsel %vm477, %v4315, %v4287
        %4320 = vst [vmem:[#allocation5 + $0x20] sm:$0xff] %v4316
        %4321 = vst [vmem:[#allocation5 + $0x28] sm:$0xff] %v4317
        %4322 = vst [vmem:[#allocation5 + $0x30] sm:$0xff] %v4318
        %4323 = vst [vmem:[#allocation5 + $0x38] sm:$0xff] %v4319
        %v4324 = vld [vmem:[#allocation3] sm:$0xff]
        %v4325 = vld [vmem:[#allocation3 + $0x10] sm:$0xff]
        %v4326 = vld [vmem:[#allocation3 + $0x20] sm:$0xff]
        %v4327 = vld [vmem:[#allocation3 + $0x30] sm:$0xff]
        %v4328 = vld [vmem:[#allocation3 + $0x40] sm:$0xff]
        %v4329 = vld [vmem:[#allocation3 + $0x50] sm:$0xff]
        %v4330 = vld [vmem:[#allocation3 + $0x60] sm:$0xff]
        %v4331 = vld [vmem:[#allocation3 + $0x70] sm:$0xff]
        %v4332 = vld [vmem:[#allocation3 + $0x80] sm:$0xff]
        %v4333 = vld [vmem:[#allocation3 + $0x90] sm:$0xff]
        %v4334 = vld [vmem:[#allocation3 + $0xa0] sm:$0xff]
        %v4335 = vld [vmem:[#allocation3 + $0xb0] sm:$0xff]
        %v4336 = vld [vmem:[#allocation3 + $0xc0] sm:$0xff]
        %v4337 = vld [vmem:[#allocation3 + $0xd0] sm:$0xff]
        %v4338 = vld [vmem:[#allocation3 + $0xe0] sm:$0xff]
        %v4339 = vld [vmem:[#allocation3 + $0xf0] sm:$0xff]
        %v4340 = vld [vmem:[#allocation3 + $0x100] sm:$0xff]
        %v4341 = vld [vmem:[#allocation3 + $0x110] sm:$0xff]
        %v4342 = vld [vmem:[#allocation3 + $0x120] sm:$0xff]
        %v4343 = vld [vmem:[#allocation3 + $0x130] sm:$0xff]
        %v4344 = vld [vmem:[#allocation3 + $0x140] sm:$0xff]
        %v4345 = vld [vmem:[#allocation3 + $0x150] sm:$0xff]
        %v4346 = vld [vmem:[#allocation3 + $0x160] sm:$0xff]
        %v4347 = vld [vmem:[#allocation3 + $0x170] sm:$0xff]
        %v4348 = vld [vmem:[#allocation3 + $0x180] sm:$0xff]
        %v4349 = vld [vmem:[#allocation3 + $0x190] sm:$0xff]
        %v4350 = vld [vmem:[#allocation3 + $0x1a0] sm:$0xff]
        %v4351 = vld [vmem:[#allocation3 + $0x1b0] sm:$0xff]
        %v4352 = vld [vmem:[#allocation3 + $0x1c0] sm:$0xff]
        %v4353 = vld [vmem:[#allocation3 + $0x1d0] sm:$0xff]
        %v4354 = vld [vmem:[#allocation3 + $0x1e0] sm:$0xff]
        %v4355 = vld [vmem:[#allocation3 + $0x1f0] sm:$0xff]
        %4388 = vrot.lane.b32.xlu0 %v4324, 126
        %v4389 = vpop.permute.xlu0 %4388
        %4390 = vrot.lane.b32.xlu0 %v4325, 126
        %v4391 = vpop.permute.xlu0 %4390
        %4392 = vrot.lane.b32.xlu0 %v4326, 126
        %v4393 = vpop.permute.xlu0 %4392
        %4394 = vrot.lane.b32.xlu0 %v4327, 126
        %v4395 = vpop.permute.xlu0 %4394
        %4396 = vrot.lane.b32.xlu0 %v4328, 126
        %v4397 = vpop.permute.xlu0 %4396
        %4398 = vrot.lane.b32.xlu0 %v4329, 126
        %v4399 = vpop.permute.xlu0 %4398
        %4400 = vrot.lane.b32.xlu0 %v4330, 126
        %v4401 = vpop.permute.xlu0 %4400
        %4402 = vrot.lane.b32.xlu0 %v4331, 126
        %v4403 = vpop.permute.xlu0 %4402
        %4404 = vrot.lane.b32.xlu0 %v4332, 126
        %v4405 = vpop.permute.xlu0 %4404
        %4406 = vrot.lane.b32.xlu0 %v4333, 126
        %v4407 = vpop.permute.xlu0 %4406
        %4408 = vrot.lane.b32.xlu0 %v4334, 126
        %v4409 = vpop.permute.xlu0 %4408
        %4410 = vrot.lane.b32.xlu0 %v4335, 126
        %v4411 = vpop.permute.xlu0 %4410
        %4412 = vrot.lane.b32.xlu0 %v4336, 126
        %v4413 = vpop.permute.xlu0 %4412
        %4414 = vrot.lane.b32.xlu0 %v4337, 126
        %v4415 = vpop.permute.xlu0 %4414
        %4416 = vrot.lane.b32.xlu0 %v4338, 126
        %v4417 = vpop.permute.xlu0 %4416
        %4418 = vrot.lane.b32.xlu0 %v4339, 126
        %v4419 = vpop.permute.xlu0 %4418
        %4420 = vrot.lane.b32.xlu0 %v4340, 126
        %v4421 = vpop.permute.xlu0 %4420
        %4422 = vrot.lane.b32.xlu0 %v4341, 126
        %v4423 = vpop.permute.xlu0 %4422
        %4424 = vrot.lane.b32.xlu0 %v4342, 126
        %v4425 = vpop.permute.xlu0 %4424
        %4426 = vrot.lane.b32.xlu0 %v4343, 126
        %v4427 = vpop.permute.xlu0 %4426
        %4428 = vrot.lane.b32.xlu0 %v4344, 126
        %v4429 = vpop.permute.xlu0 %4428
        %4430 = vrot.lane.b32.xlu0 %v4345, 126
        %v4431 = vpop.permute.xlu0 %4430
        %4432 = vrot.lane.b32.xlu0 %v4346, 126
        %v4433 = vpop.permute.xlu0 %4432
        %4434 = vrot.lane.b32.xlu0 %v4347, 126
        %v4435 = vpop.permute.xlu0 %4434
        %4436 = vrot.lane.b32.xlu0 %v4348, 126
        %v4437 = vpop.permute.xlu0 %4436
        %4438 = vrot.lane.b32.xlu0 %v4349, 126
        %v4439 = vpop.permute.xlu0 %4438
        %4440 = vrot.lane.b32.xlu0 %v4350, 126
        %v4441 = vpop.permute.xlu0 %4440
        %4442 = vrot.lane.b32.xlu0 %v4351, 126
        %v4443 = vpop.permute.xlu0 %4442
        %4444 = vrot.lane.b32.xlu0 %v4352, 126
        %v4445 = vpop.permute.xlu0 %4444
        %4446 = vrot.lane.b32.xlu0 %v4353, 126
        %v4447 = vpop.permute.xlu0 %4446
        %4448 = vrot.lane.b32.xlu0 %v4354, 126
        %v4449 = vpop.permute.xlu0 %4448
        %4450 = vrot.lane.b32.xlu0 %v4355, 126
        %v4451 = vpop.permute.xlu0 %4450
        %v4484 = vrot.slane %v4393, 4
        %v4485 = vsel %vm364, %v4484, %v4389
        %v4486 = vrot.slane %v4389, 4
        %v4487 = vsel %vm364, %v4393, %v4486
        %v4489 = vunpack.c.l.s4 1983009808
        %v4490 = vunpack.c.0.s8 %v4489
        %v4491 = vperm.slane %v4485, %v4490
        %v4493 = vunpack.c.l.s4 1983009808
        %v4494 = vunpack.c.0.s8 %v4493
        %v4495 = vperm.slane %v4487, %v4494
        %v4496 = vrot.slane %v4395, 4
        %v4497 = vsel %vm364, %v4496, %v4391
        %v4498 = vrot.slane %v4391, 4
        %v4499 = vsel %vm364, %v4395, %v4498
        %v4501 = vunpack.c.l.s4 1983009808
        %v4502 = vunpack.c.0.s8 %v4501
        %v4503 = vperm.slane %v4497, %v4502
        %v4505 = vunpack.c.l.s4 1983009808
        %v4506 = vunpack.c.0.s8 %v4505
        %v4507 = vperm.slane %v4499, %v4506
        %v4508 = vrot.slane %v4401, 4
        %v4509 = vsel %vm364, %v4508, %v4397
        %v4510 = vrot.slane %v4397, 4
        %v4511 = vsel %vm364, %v4401, %v4510
        %v4513 = vunpack.c.l.s4 1983009808
        %v4514 = vunpack.c.0.s8 %v4513
        %v4515 = vperm.slane %v4509, %v4514
        %v4517 = vunpack.c.l.s4 1983009808
        %v4518 = vunpack.c.0.s8 %v4517
        %v4519 = vperm.slane %v4511, %v4518
        %v4520 = vrot.slane %v4403, 4
        %v4521 = vsel %vm364, %v4520, %v4399
        %v4522 = vrot.slane %v4399, 4
        %v4523 = vsel %vm364, %v4403, %v4522
        %v4525 = vunpack.c.l.s4 1983009808
        %v4526 = vunpack.c.0.s8 %v4525
        %v4527 = vperm.slane %v4521, %v4526
        %v4529 = vunpack.c.l.s4 1983009808
        %v4530 = vunpack.c.0.s8 %v4529
        %v4531 = vperm.slane %v4523, %v4530
        %v4532 = vrot.slane %v4503, 4
        %v4533 = vsel %vm364, %v4532, %v4491
        %v4534 = vrot.slane %v4491, 4
        %v4535 = vsel %vm364, %v4503, %v4534
        %v4537 = vunpack.c.l.s4 1934713408
        %v4538 = vunpack.c.0.s8 %v4537
        %v4539 = vperm.slane %v4533, %v4538
        %v4541 = vunpack.c.l.s4 1934713408
        %v4542 = vunpack.c.0.s8 %v4541
        %v4543 = vperm.slane %v4535, %v4542
        %v4544 = vrot.slane %v4507, 4
        %v4545 = vsel %vm364, %v4544, %v4495
        %v4546 = vrot.slane %v4495, 4
        %v4547 = vsel %vm364, %v4507, %v4546
        %v4549 = vunpack.c.l.s4 1934713408
        %v4550 = vunpack.c.0.s8 %v4549
        %v4551 = vperm.slane %v4545, %v4550
        %v4553 = vunpack.c.l.s4 1934713408
        %v4554 = vunpack.c.0.s8 %v4553
        %v4555 = vperm.slane %v4547, %v4554
        %v4556 = vrot.slane %v4527, 4
        %v4557 = vsel %vm364, %v4556, %v4515
        %v4558 = vrot.slane %v4515, 4
        %v4559 = vsel %vm364, %v4527, %v4558
        %v4561 = vunpack.c.l.s4 1934713408
        %v4562 = vunpack.c.0.s8 %v4561
        %v4563 = vperm.slane %v4557, %v4562
        %v4565 = vunpack.c.l.s4 1934713408
        %v4566 = vunpack.c.0.s8 %v4565
        %v4567 = vperm.slane %v4559, %v4566
        %v4568 = vrot.slane %v4531, 4
        %v4569 = vsel %vm364, %v4568, %v4519
        %v4570 = vrot.slane %v4519, 4
        %v4571 = vsel %vm364, %v4531, %v4570
        %v4573 = vunpack.c.l.s4 1934713408
        %v4574 = vunpack.c.0.s8 %v4573
        %v4575 = vperm.slane %v4569, %v4574
        %v4577 = vunpack.c.l.s4 1934713408
        %v4578 = vunpack.c.0.s8 %v4577
        %v4579 = vperm.slane %v4571, %v4578
        %v4580 = vrot.slane %v4563, 4
        %v4581 = vsel %vm364, %v4580, %v4539
        %v4582 = vrot.slane %v4539, 4
        %v4583 = vsel %vm364, %v4563, %v4582
        %v4584 = vrot.slane %v4567, 4
        %v4585 = vsel %vm364, %v4584, %v4543
        %v4586 = vrot.slane %v4543, 4
        %v4587 = vsel %vm364, %v4567, %v4586
        %v4588 = vrot.slane %v4575, 4
        %v4589 = vsel %vm364, %v4588, %v4551
        %v4590 = vrot.slane %v4551, 4
        %v4591 = vsel %vm364, %v4575, %v4590
        %v4592 = vrot.slane %v4579, 4
        %v4593 = vsel %vm364, %v4592, %v4555
        %v4594 = vrot.slane %v4555, 4
        %v4595 = vsel %vm364, %v4579, %v4594
        %v4596 = vrot.slane %v4409, 4
        %v4597 = vsel %vm364, %v4596, %v4405
        %v4598 = vrot.slane %v4405, 4
        %v4599 = vsel %vm364, %v4409, %v4598
        %v4601 = vunpack.c.l.s4 1983009808
        %v4602 = vunpack.c.0.s8 %v4601
        %v4603 = vperm.slane %v4597, %v4602
        %v4605 = vunpack.c.l.s4 1983009808
        %v4606 = vunpack.c.0.s8 %v4605
        %v4607 = vperm.slane %v4599, %v4606
        %v4608 = vrot.slane %v4411, 4
        %v4609 = vsel %vm364, %v4608, %v4407
        %v4610 = vrot.slane %v4407, 4
        %v4611 = vsel %vm364, %v4411, %v4610
        %v4613 = vunpack.c.l.s4 1983009808
        %v4614 = vunpack.c.0.s8 %v4613
        %v4615 = vperm.slane %v4609, %v4614
        %v4617 = vunpack.c.l.s4 1983009808
        %v4618 = vunpack.c.0.s8 %v4617
        %v4619 = vperm.slane %v4611, %v4618
        %v4620 = vrot.slane %v4417, 4
        %v4621 = vsel %vm364, %v4620, %v4413
        %v4622 = vrot.slane %v4413, 4
        %v4623 = vsel %vm364, %v4417, %v4622
        %v4625 = vunpack.c.l.s4 1983009808
        %v4626 = vunpack.c.0.s8 %v4625
        %v4627 = vperm.slane %v4621, %v4626
        %v4629 = vunpack.c.l.s4 1983009808
        %v4630 = vunpack.c.0.s8 %v4629
        %v4631 = vperm.slane %v4623, %v4630
        %v4632 = vrot.slane %v4419, 4
        %v4633 = vsel %vm364, %v4632, %v4415
        %v4634 = vrot.slane %v4415, 4
        %v4635 = vsel %vm364, %v4419, %v4634
        %v4637 = vunpack.c.l.s4 1983009808
        %v4638 = vunpack.c.0.s8 %v4637
        %v4639 = vperm.slane %v4633, %v4638
        %v4641 = vunpack.c.l.s4 1983009808
        %v4642 = vunpack.c.0.s8 %v4641
        %v4643 = vperm.slane %v4635, %v4642
        %v4644 = vrot.slane %v4615, 4
        %v4645 = vsel %vm364, %v4644, %v4603
        %v4646 = vrot.slane %v4603, 4
        %v4647 = vsel %vm364, %v4615, %v4646
        %v4649 = vunpack.c.l.s4 1934713408
        %v4650 = vunpack.c.0.s8 %v4649
        %v4651 = vperm.slane %v4645, %v4650
        %v4653 = vunpack.c.l.s4 1934713408
        %v4654 = vunpack.c.0.s8 %v4653
        %v4655 = vperm.slane %v4647, %v4654
        %v4656 = vrot.slane %v4619, 4
        %v4657 = vsel %vm364, %v4656, %v4607
        %v4658 = vrot.slane %v4607, 4
        %v4659 = vsel %vm364, %v4619, %v4658
        %v4661 = vunpack.c.l.s4 1934713408
        %v4662 = vunpack.c.0.s8 %v4661
        %v4663 = vperm.slane %v4657, %v4662
        %v4665 = vunpack.c.l.s4 1934713408
        %v4666 = vunpack.c.0.s8 %v4665
        %v4667 = vperm.slane %v4659, %v4666
        %v4668 = vrot.slane %v4639, 4
        %v4669 = vsel %vm364, %v4668, %v4627
        %v4670 = vrot.slane %v4627, 4
        %v4671 = vsel %vm364, %v4639, %v4670
        %v4673 = vunpack.c.l.s4 1934713408
        %v4674 = vunpack.c.0.s8 %v4673
        %v4675 = vperm.slane %v4669, %v4674
        %v4677 = vunpack.c.l.s4 1934713408
        %v4678 = vunpack.c.0.s8 %v4677
        %v4679 = vperm.slane %v4671, %v4678
        %v4680 = vrot.slane %v4643, 4
        %v4681 = vsel %vm364, %v4680, %v4631
        %v4682 = vrot.slane %v4631, 4
        %v4683 = vsel %vm364, %v4643, %v4682
        %v4685 = vunpack.c.l.s4 1934713408
        %v4686 = vunpack.c.0.s8 %v4685
        %v4687 = vperm.slane %v4681, %v4686
        %v4689 = vunpack.c.l.s4 1934713408
        %v4690 = vunpack.c.0.s8 %v4689
        %v4691 = vperm.slane %v4683, %v4690
        %v4692 = vrot.slane %v4675, 4
        %v4693 = vsel %vm364, %v4692, %v4651
        %v4694 = vrot.slane %v4651, 4
        %v4695 = vsel %vm364, %v4675, %v4694
        %v4696 = vrot.slane %v4679, 4
        %v4697 = vsel %vm364, %v4696, %v4655
        %v4698 = vrot.slane %v4655, 4
        %v4699 = vsel %vm364, %v4679, %v4698
        %v4700 = vrot.slane %v4687, 4
        %v4701 = vsel %vm364, %v4700, %v4663
        %v4702 = vrot.slane %v4663, 4
        %v4703 = vsel %vm364, %v4687, %v4702
        %v4704 = vrot.slane %v4691, 4
        %v4705 = vsel %vm364, %v4704, %v4667
        %v4706 = vrot.slane %v4667, 4
        %v4707 = vsel %vm364, %v4691, %v4706
        %v4708 = vrot.slane %v4425, 4
        %v4709 = vsel %vm364, %v4708, %v4421
        %v4710 = vrot.slane %v4421, 4
        %v4711 = vsel %vm364, %v4425, %v4710
        %v4713 = vunpack.c.l.s4 1983009808
        %v4714 = vunpack.c.0.s8 %v4713
        %v4715 = vperm.slane %v4709, %v4714
        %v4717 = vunpack.c.l.s4 1983009808
        %v4718 = vunpack.c.0.s8 %v4717
        %v4719 = vperm.slane %v4711, %v4718
        %v4720 = vrot.slane %v4427, 4
        %v4721 = vsel %vm364, %v4720, %v4423
        %v4722 = vrot.slane %v4423, 4
        %v4723 = vsel %vm364, %v4427, %v4722
        %v4725 = vunpack.c.l.s4 1983009808
        %v4726 = vunpack.c.0.s8 %v4725
        %v4727 = vperm.slane %v4721, %v4726
        %v4729 = vunpack.c.l.s4 1983009808
        %v4730 = vunpack.c.0.s8 %v4729
        %v4731 = vperm.slane %v4723, %v4730
        %v4732 = vrot.slane %v4433, 4
        %v4733 = vsel %vm364, %v4732, %v4429
        %v4734 = vrot.slane %v4429, 4
        %v4735 = vsel %vm364, %v4433, %v4734
        %v4737 = vunpack.c.l.s4 1983009808
        %v4738 = vunpack.c.0.s8 %v4737
        %v4739 = vperm.slane %v4733, %v4738
        %v4741 = vunpack.c.l.s4 1983009808
        %v4742 = vunpack.c.0.s8 %v4741
        %v4743 = vperm.slane %v4735, %v4742
        %v4744 = vrot.slane %v4435, 4
        %v4745 = vsel %vm364, %v4744, %v4431
        %v4746 = vrot.slane %v4431, 4
        %v4747 = vsel %vm364, %v4435, %v4746
        %v4749 = vunpack.c.l.s4 1983009808
        %v4750 = vunpack.c.0.s8 %v4749
        %v4751 = vperm.slane %v4745, %v4750
        %v4753 = vunpack.c.l.s4 1983009808
        %v4754 = vunpack.c.0.s8 %v4753
        %v4755 = vperm.slane %v4747, %v4754
        %v4756 = vrot.slane %v4727, 4
        %v4757 = vsel %vm364, %v4756, %v4715
        %v4758 = vrot.slane %v4715, 4
        %v4759 = vsel %vm364, %v4727, %v4758
        %v4761 = vunpack.c.l.s4 1934713408
        %v4762 = vunpack.c.0.s8 %v4761
        %v4763 = vperm.slane %v4757, %v4762
        %v4765 = vunpack.c.l.s4 1934713408
        %v4766 = vunpack.c.0.s8 %v4765
        %v4767 = vperm.slane %v4759, %v4766
        %v4768 = vrot.slane %v4731, 4
        %v4769 = vsel %vm364, %v4768, %v4719
        %v4770 = vrot.slane %v4719, 4
        %v4771 = vsel %vm364, %v4731, %v4770
        %v4773 = vunpack.c.l.s4 1934713408
        %v4774 = vunpack.c.0.s8 %v4773
        %v4775 = vperm.slane %v4769, %v4774
        %v4777 = vunpack.c.l.s4 1934713408
        %v4778 = vunpack.c.0.s8 %v4777
        %v4779 = vperm.slane %v4771, %v4778
        %v4780 = vrot.slane %v4751, 4
        %v4781 = vsel %vm364, %v4780, %v4739
        %v4782 = vrot.slane %v4739, 4
        %v4783 = vsel %vm364, %v4751, %v4782
        %v4785 = vunpack.c.l.s4 1934713408
        %v4786 = vunpack.c.0.s8 %v4785
        %v4787 = vperm.slane %v4781, %v4786
        %v4789 = vunpack.c.l.s4 1934713408
        %v4790 = vunpack.c.0.s8 %v4789
        %v4791 = vperm.slane %v4783, %v4790
        %v4792 = vrot.slane %v4755, 4
        %v4793 = vsel %vm364, %v4792, %v4743
        %v4794 = vrot.slane %v4743, 4
        %v4795 = vsel %vm364, %v4755, %v4794
        %v4797 = vunpack.c.l.s4 1934713408
        %v4798 = vunpack.c.0.s8 %v4797
        %v4799 = vperm.slane %v4793, %v4798
        %v4801 = vunpack.c.l.s4 1934713408
        %v4802 = vunpack.c.0.s8 %v4801
        %v4803 = vperm.slane %v4795, %v4802
        %v4804 = vrot.slane %v4787, 4
        %v4805 = vsel %vm364, %v4804, %v4763
        %v4806 = vrot.slane %v4763, 4
        %v4807 = vsel %vm364, %v4787, %v4806
        %v4808 = vrot.slane %v4791, 4
        %v4809 = vsel %vm364, %v4808, %v4767
        %v4810 = vrot.slane %v4767, 4
        %v4811 = vsel %vm364, %v4791, %v4810
        %v4812 = vrot.slane %v4799, 4
        %v4813 = vsel %vm364, %v4812, %v4775
        %v4814 = vrot.slane %v4775, 4
        %v4815 = vsel %vm364, %v4799, %v4814
        %v4816 = vrot.slane %v4803, 4
        %v4817 = vsel %vm364, %v4816, %v4779
        %v4818 = vrot.slane %v4779, 4
        %v4819 = vsel %vm364, %v4803, %v4818
        %v4820 = vrot.slane %v4441, 4
        %v4821 = vsel %vm364, %v4820, %v4437
        %v4822 = vrot.slane %v4437, 4
        %v4823 = vsel %vm364, %v4441, %v4822
        %v4825 = vunpack.c.l.s4 1983009808
        %v4826 = vunpack.c.0.s8 %v4825
        %v4827 = vperm.slane %v4821, %v4826
        %v4829 = vunpack.c.l.s4 1983009808
        %v4830 = vunpack.c.0.s8 %v4829
        %v4831 = vperm.slane %v4823, %v4830
        %v4832 = vrot.slane %v4443, 4
        %v4833 = vsel %vm364, %v4832, %v4439
        %v4834 = vrot.slane %v4439, 4
        %v4835 = vsel %vm364, %v4443, %v4834
        %v4837 = vunpack.c.l.s4 1983009808
        %v4838 = vunpack.c.0.s8 %v4837
        %v4839 = vperm.slane %v4833, %v4838
        %v4841 = vunpack.c.l.s4 1983009808
        %v4842 = vunpack.c.0.s8 %v4841
        %v4843 = vperm.slane %v4835, %v4842
        %v4844 = vrot.slane %v4449, 4
        %v4845 = vsel %vm364, %v4844, %v4445
        %v4846 = vrot.slane %v4445, 4
        %v4847 = vsel %vm364, %v4449, %v4846
        %v4849 = vunpack.c.l.s4 1983009808
        %v4850 = vunpack.c.0.s8 %v4849
        %v4851 = vperm.slane %v4845, %v4850
        %v4853 = vunpack.c.l.s4 1983009808
        %v4854 = vunpack.c.0.s8 %v4853
        %v4855 = vperm.slane %v4847, %v4854
        %v4856 = vrot.slane %v4451, 4
        %v4857 = vsel %vm364, %v4856, %v4447
        %v4858 = vrot.slane %v4447, 4
        %v4859 = vsel %vm364, %v4451, %v4858
        %v4861 = vunpack.c.l.s4 1983009808
        %v4862 = vunpack.c.0.s8 %v4861
        %v4863 = vperm.slane %v4857, %v4862
        %v4865 = vunpack.c.l.s4 1983009808
        %v4866 = vunpack.c.0.s8 %v4865
        %v4867 = vperm.slane %v4859, %v4866
        %v4868 = vrot.slane %v4839, 4
        %v4869 = vsel %vm364, %v4868, %v4827
        %v4870 = vrot.slane %v4827, 4
        %v4871 = vsel %vm364, %v4839, %v4870
        %v4873 = vunpack.c.l.s4 1934713408
        %v4874 = vunpack.c.0.s8 %v4873
        %v4875 = vperm.slane %v4869, %v4874
        %v4877 = vunpack.c.l.s4 1934713408
        %v4878 = vunpack.c.0.s8 %v4877
        %v4879 = vperm.slane %v4871, %v4878
        %v4880 = vrot.slane %v4843, 4
        %v4881 = vsel %vm364, %v4880, %v4831
        %v4882 = vrot.slane %v4831, 4
        %v4883 = vsel %vm364, %v4843, %v4882
        %v4885 = vunpack.c.l.s4 1934713408
        %v4886 = vunpack.c.0.s8 %v4885
        %v4887 = vperm.slane %v4881, %v4886
        %v4889 = vunpack.c.l.s4 1934713408
        %v4890 = vunpack.c.0.s8 %v4889
        %v4891 = vperm.slane %v4883, %v4890
        %v4892 = vrot.slane %v4863, 4
        %v4893 = vsel %vm364, %v4892, %v4851
        %v4894 = vrot.slane %v4851, 4
        %v4895 = vsel %vm364, %v4863, %v4894
        %v4897 = vunpack.c.l.s4 1934713408
        %v4898 = vunpack.c.0.s8 %v4897
        %v4899 = vperm.slane %v4893, %v4898
        %v4901 = vunpack.c.l.s4 1934713408
        %v4902 = vunpack.c.0.s8 %v4901
        %v4903 = vperm.slane %v4895, %v4902
        %v4904 = vrot.slane %v4867, 4
        %v4905 = vsel %vm364, %v4904, %v4855
        %v4906 = vrot.slane %v4855, 4
        %v4907 = vsel %vm364, %v4867, %v4906
        %v4909 = vunpack.c.l.s4 1934713408
        %v4910 = vunpack.c.0.s8 %v4909
        %v4911 = vperm.slane %v4905, %v4910
        %v4913 = vunpack.c.l.s4 1934713408
        %v4914 = vunpack.c.0.s8 %v4913
        %v4915 = vperm.slane %v4907, %v4914
        %v4916 = vrot.slane %v4899, 4
        %v4917 = vsel %vm364, %v4916, %v4875
        %v4918 = vrot.slane %v4875, 4
        %v4919 = vsel %vm364, %v4899, %v4918
        %v4920 = vrot.slane %v4903, 4
        %v4921 = vsel %vm364, %v4920, %v4879
        %v4922 = vrot.slane %v4879, 4
        %v4923 = vsel %vm364, %v4903, %v4922
        %v4924 = vrot.slane %v4911, 4
        %v4925 = vsel %vm364, %v4924, %v4887
        %v4926 = vrot.slane %v4887, 4
        %v4927 = vsel %vm364, %v4911, %v4926
        %v4928 = vrot.slane %v4915, 4
        %v4929 = vsel %vm364, %v4928, %v4891
        %v4930 = vrot.slane %v4891, 4
        %v4931 = vsel %vm364, %v4915, %v4930
        %4936 = vrot.lane.b32.xlu0 %v4583, 16
        %v4937 = vpop.permute.xlu0 %4936
        %4938 = vrot.lane.b32.xlu0 %v4695, 16
        %v4939 = vpop.permute.xlu0 %4938
        %4940 = vrot.lane.b32.xlu0 %v4807, 16
        %v4941 = vpop.permute.xlu0 %4940
        %4942 = vrot.lane.b32.xlu0 %v4919, 16
        %v4943 = vpop.permute.xlu0 %4942
        %4952 = vrot.lane.b32.xlu0 %v4585, 32
        %v4953 = vpop.permute.xlu0 %4952
        %4954 = vrot.lane.b32.xlu0 %v4697, 32
        %v4955 = vpop.permute.xlu0 %4954
        %4956 = vrot.lane.b32.xlu0 %v4809, 32
        %v4957 = vpop.permute.xlu0 %4956
        %4958 = vrot.lane.b32.xlu0 %v4921, 32
        %v4959 = vpop.permute.xlu0 %4958
        %4968 = vrot.lane.b32.xlu0 %v4587, 48
        %v4969 = vpop.permute.xlu0 %4968
        %4970 = vrot.lane.b32.xlu0 %v4699, 48
        %v4971 = vpop.permute.xlu0 %4970
        %4972 = vrot.lane.b32.xlu0 %v4811, 48
        %v4973 = vpop.permute.xlu0 %4972
        %4974 = vrot.lane.b32.xlu0 %v4923, 48
        %v4975 = vpop.permute.xlu0 %4974
        %4984 = vrot.lane.b32.xlu0 %v4589, 64
        %v4985 = vpop.permute.xlu0 %4984
        %4986 = vrot.lane.b32.xlu0 %v4701, 64
        %v4987 = vpop.permute.xlu0 %4986
        %4988 = vrot.lane.b32.xlu0 %v4813, 64
        %v4989 = vpop.permute.xlu0 %4988
        %4990 = vrot.lane.b32.xlu0 %v4925, 64
        %v4991 = vpop.permute.xlu0 %4990
        %5000 = vrot.lane.b32.xlu0 %v4591, 80
        %v5001 = vpop.permute.xlu0 %5000
        %5002 = vrot.lane.b32.xlu0 %v4703, 80
        %v5003 = vpop.permute.xlu0 %5002
        %5004 = vrot.lane.b32.xlu0 %v4815, 80
        %v5005 = vpop.permute.xlu0 %5004
        %5006 = vrot.lane.b32.xlu0 %v4927, 80
        %v5007 = vpop.permute.xlu0 %5006
        %5016 = vrot.lane.b32.xlu0 %v4593, 96
        %v5017 = vpop.permute.xlu0 %5016
        %5018 = vrot.lane.b32.xlu0 %v4705, 96
        %v5019 = vpop.permute.xlu0 %5018
        %5020 = vrot.lane.b32.xlu0 %v4817, 96
        %v5021 = vpop.permute.xlu0 %5020
        %5022 = vrot.lane.b32.xlu0 %v4929, 96
        %v5023 = vpop.permute.xlu0 %5022
        %5032 = vrot.lane.b32.xlu0 %v4595, 112
        %v5033 = vpop.permute.xlu0 %5032
        %5034 = vrot.lane.b32.xlu0 %v4707, 112
        %v5035 = vpop.permute.xlu0 %5034
        %5036 = vrot.lane.b32.xlu0 %v4819, 112
        %v5037 = vpop.permute.xlu0 %5036
        %5038 = vrot.lane.b32.xlu0 %v4931, 112
        %v5039 = vpop.permute.xlu0 %5038
        %v5044 = vsel %vm465, %v4581, %v4937
        %v5045 = vsel %vm465, %v4693, %v4939
        %v5046 = vsel %vm465, %v4805, %v4941
        %v5047 = vsel %vm465, %v4917, %v4943
        %v5048 = vsel %vm467, %v5044, %v4953
        %v5049 = vsel %vm467, %v5045, %v4955
        %v5050 = vsel %vm467, %v5046, %v4957
        %v5051 = vsel %vm467, %v5047, %v4959
        %v5052 = vsel %vm469, %v5048, %v4969
        %v5053 = vsel %vm469, %v5049, %v4971
        %v5054 = vsel %vm469, %v5050, %v4973
        %v5055 = vsel %vm469, %v5051, %v4975
        %v5056 = vsel %vm471, %v5052, %v4985
        %v5057 = vsel %vm471, %v5053, %v4987
        %v5058 = vsel %vm471, %v5054, %v4989
        %v5059 = vsel %vm471, %v5055, %v4991
        %v5060 = vsel %vm473, %v5056, %v5001
        %v5061 = vsel %vm473, %v5057, %v5003
        %v5062 = vsel %vm473, %v5058, %v5005
        %v5063 = vsel %vm473, %v5059, %v5007
        %v5064 = vsel %vm475, %v5060, %v5017
        %v5065 = vsel %vm475, %v5061, %v5019
        %v5066 = vsel %vm475, %v5062, %v5021
        %v5067 = vsel %vm475, %v5063, %v5023
        %v5068 = vsel %vm477, %v5064, %v5033
        %v5069 = vsel %vm477, %v5065, %v5035
        %v5070 = vsel %vm477, %v5066, %v5037
        %v5071 = vsel %vm477, %v5067, %v5039
        %5072 = vst [vmem:[#allocation5 + $0x40] sm:$0xff] %v5068
        %5073 = vst [vmem:[#allocation5 + $0x48] sm:$0xff] %v5069
        %5074 = vst [vmem:[#allocation5 + $0x50] sm:$0xff] %v5070
        %5075 = vst [vmem:[#allocation5 + $0x58] sm:$0xff] %v5071
        %v5076 = vld [vmem:[#allocation3 + $0x1] sm:$0xff]
        %v5077 = vld [vmem:[#allocation3 + $0x11] sm:$0xff]
        %v5078 = vld [vmem:[#allocation3 + $0x21] sm:$0xff]
        %v5079 = vld [vmem:[#allocation3 + $0x31] sm:$0xff]
        %v5080 = vld [vmem:[#allocation3 + $0x41] sm:$0xff]
        %v5081 = vld [vmem:[#allocation3 + $0x51] sm:$0xff]
        %v5082 = vld [vmem:[#allocation3 + $0x61] sm:$0xff]
        %v5083 = vld [vmem:[#allocation3 + $0x71] sm:$0xff]
        %v5084 = vld [vmem:[#allocation3 + $0x81] sm:$0xff]
        %v5085 = vld [vmem:[#allocation3 + $0x91] sm:$0xff]
        %v5086 = vld [vmem:[#allocation3 + $0xa1] sm:$0xff]
        %v5087 = vld [vmem:[#allocation3 + $0xb1] sm:$0xff]
        %v5088 = vld [vmem:[#allocation3 + $0xc1] sm:$0xff]
        %v5089 = vld [vmem:[#allocation3 + $0xd1] sm:$0xff]
        %v5090 = vld [vmem:[#allocation3 + $0xe1] sm:$0xff]
        %v5091 = vld [vmem:[#allocation3 + $0xf1] sm:$0xff]
        %v5092 = vld [vmem:[#allocation3 + $0x101] sm:$0xff]
        %v5093 = vld [vmem:[#allocation3 + $0x111] sm:$0xff]
        %v5094 = vld [vmem:[#allocation3 + $0x121] sm:$0xff]
        %v5095 = vld [vmem:[#allocation3 + $0x131] sm:$0xff]
        %v5096 = vld [vmem:[#allocation3 + $0x141] sm:$0xff]
        %v5097 = vld [vmem:[#allocation3 + $0x151] sm:$0xff]
        %v5098 = vld [vmem:[#allocation3 + $0x161] sm:$0xff]
        %v5099 = vld [vmem:[#allocation3 + $0x171] sm:$0xff]
        %v5100 = vld [vmem:[#allocation3 + $0x181] sm:$0xff]
        %v5101 = vld [vmem:[#allocation3 + $0x191] sm:$0xff]
        %v5102 = vld [vmem:[#allocation3 + $0x1a1] sm:$0xff]
        %v5103 = vld [vmem:[#allocation3 + $0x1b1] sm:$0xff]
        %v5104 = vld [vmem:[#allocation3 + $0x1c1] sm:$0xff]
        %v5105 = vld [vmem:[#allocation3 + $0x1d1] sm:$0xff]
        %v5106 = vld [vmem:[#allocation3 + $0x1e1] sm:$0xff]
        %v5107 = vld [vmem:[#allocation3 + $0x1f1] sm:$0xff]
        %v5108 = vrot.slane %v5078, 4
        %v5109 = vsel %vm364, %v5108, %v5076
        %v5110 = vrot.slane %v5076, 4
        %v5111 = vsel %vm364, %v5078, %v5110
        %v5113 = vunpack.c.l.s4 1983009808
        %v5114 = vunpack.c.0.s8 %v5113
        %v5115 = vperm.slane %v5109, %v5114
        %v5117 = vunpack.c.l.s4 1983009808
        %v5118 = vunpack.c.0.s8 %v5117
        %v5119 = vperm.slane %v5111, %v5118
        %v5120 = vrot.slane %v5079, 4
        %v5121 = vsel %vm364, %v5120, %v5077
        %v5122 = vrot.slane %v5077, 4
        %v5123 = vsel %vm364, %v5079, %v5122
        %v5125 = vunpack.c.l.s4 1983009808
        %v5126 = vunpack.c.0.s8 %v5125
        %v5127 = vperm.slane %v5121, %v5126
        %v5129 = vunpack.c.l.s4 1983009808
        %v5130 = vunpack.c.0.s8 %v5129
        %v5131 = vperm.slane %v5123, %v5130
        %v5132 = vrot.slane %v5082, 4
        %v5133 = vsel %vm364, %v5132, %v5080
        %v5134 = vrot.slane %v5080, 4
        %v5135 = vsel %vm364, %v5082, %v5134
        %v5137 = vunpack.c.l.s4 1983009808
        %v5138 = vunpack.c.0.s8 %v5137
        %v5139 = vperm.slane %v5133, %v5138
        %v5141 = vunpack.c.l.s4 1983009808
        %v5142 = vunpack.c.0.s8 %v5141
        %v5143 = vperm.slane %v5135, %v5142
        %v5144 = vrot.slane %v5083, 4
        %v5145 = vsel %vm364, %v5144, %v5081
        %v5146 = vrot.slane %v5081, 4
        %v5147 = vsel %vm364, %v5083, %v5146
        %v5149 = vunpack.c.l.s4 1983009808
        %v5150 = vunpack.c.0.s8 %v5149
        %v5151 = vperm.slane %v5145, %v5150
        %v5153 = vunpack.c.l.s4 1983009808
        %v5154 = vunpack.c.0.s8 %v5153
        %v5155 = vperm.slane %v5147, %v5154
        %v5156 = vrot.slane %v5127, 4
        %v5157 = vsel %vm364, %v5156, %v5115
        %v5158 = vrot.slane %v5115, 4
        %v5159 = vsel %vm364, %v5127, %v5158
        %v5161 = vunpack.c.l.s4 1934713408
        %v5162 = vunpack.c.0.s8 %v5161
        %v5163 = vperm.slane %v5157, %v5162
        %v5165 = vunpack.c.l.s4 1934713408
        %v5166 = vunpack.c.0.s8 %v5165
        %v5167 = vperm.slane %v5159, %v5166
        %v5168 = vrot.slane %v5131, 4
        %v5169 = vsel %vm364, %v5168, %v5119
        %v5170 = vrot.slane %v5119, 4
        %v5171 = vsel %vm364, %v5131, %v5170
        %v5173 = vunpack.c.l.s4 1934713408
        %v5174 = vunpack.c.0.s8 %v5173
        %v5175 = vperm.slane %v5169, %v5174
        %v5177 = vunpack.c.l.s4 1934713408
        %v5178 = vunpack.c.0.s8 %v5177
        %v5179 = vperm.slane %v5171, %v5178
        %v5180 = vrot.slane %v5151, 4
        %v5181 = vsel %vm364, %v5180, %v5139
        %v5182 = vrot.slane %v5139, 4
        %v5183 = vsel %vm364, %v5151, %v5182
        %v5185 = vunpack.c.l.s4 1934713408
        %v5186 = vunpack.c.0.s8 %v5185
        %v5187 = vperm.slane %v5181, %v5186
        %v5189 = vunpack.c.l.s4 1934713408
        %v5190 = vunpack.c.0.s8 %v5189
        %v5191 = vperm.slane %v5183, %v5190
        %v5192 = vrot.slane %v5155, 4
        %v5193 = vsel %vm364, %v5192, %v5143
        %v5194 = vrot.slane %v5143, 4
        %v5195 = vsel %vm364, %v5155, %v5194
        %v5197 = vunpack.c.l.s4 1934713408
        %v5198 = vunpack.c.0.s8 %v5197
        %v5199 = vperm.slane %v5193, %v5198
        %v5201 = vunpack.c.l.s4 1934713408
        %v5202 = vunpack.c.0.s8 %v5201
        %v5203 = vperm.slane %v5195, %v5202
        %v5204 = vrot.slane %v5187, 4
        %v5205 = vsel %vm364, %v5204, %v5163
        %v5206 = vrot.slane %v5163, 4
        %v5207 = vsel %vm364, %v5187, %v5206
        %v5208 = vrot.slane %v5191, 4
        %v5209 = vsel %vm364, %v5208, %v5167
        %v5210 = vrot.slane %v5167, 4
        %v5211 = vsel %vm364, %v5191, %v5210
        %v5212 = vrot.slane %v5199, 4
        %v5213 = vsel %vm364, %v5212, %v5175
        %v5214 = vrot.slane %v5175, 4
        %v5215 = vsel %vm364, %v5199, %v5214
        %v5216 = vrot.slane %v5203, 4
        %v5217 = vsel %vm364, %v5216, %v5179
        %v5218 = vrot.slane %v5179, 4
        %v5219 = vsel %vm364, %v5203, %v5218
        %v5220 = vrot.slane %v5086, 4
        %v5221 = vsel %vm364, %v5220, %v5084
        %v5222 = vrot.slane %v5084, 4
        %v5223 = vsel %vm364, %v5086, %v5222
        %v5225 = vunpack.c.l.s4 1983009808
        %v5226 = vunpack.c.0.s8 %v5225
        %v5227 = vperm.slane %v5221, %v5226
        %v5229 = vunpack.c.l.s4 1983009808
        %v5230 = vunpack.c.0.s8 %v5229
        %v5231 = vperm.slane %v5223, %v5230
        %v5232 = vrot.slane %v5087, 4
        %v5233 = vsel %vm364, %v5232, %v5085
        %v5234 = vrot.slane %v5085, 4
        %v5235 = vsel %vm364, %v5087, %v5234
        %v5237 = vunpack.c.l.s4 1983009808
        %v5238 = vunpack.c.0.s8 %v5237
        %v5239 = vperm.slane %v5233, %v5238
        %v5241 = vunpack.c.l.s4 1983009808
        %v5242 = vunpack.c.0.s8 %v5241
        %v5243 = vperm.slane %v5235, %v5242
        %v5244 = vrot.slane %v5090, 4
        %v5245 = vsel %vm364, %v5244, %v5088
        %v5246 = vrot.slane %v5088, 4
        %v5247 = vsel %vm364, %v5090, %v5246
        %v5249 = vunpack.c.l.s4 1983009808
        %v5250 = vunpack.c.0.s8 %v5249
        %v5251 = vperm.slane %v5245, %v5250
        %v5253 = vunpack.c.l.s4 1983009808
        %v5254 = vunpack.c.0.s8 %v5253
        %v5255 = vperm.slane %v5247, %v5254
        %v5256 = vrot.slane %v5091, 4
        %v5257 = vsel %vm364, %v5256, %v5089
        %v5258 = vrot.slane %v5089, 4
        %v5259 = vsel %vm364, %v5091, %v5258
        %v5261 = vunpack.c.l.s4 1983009808
        %v5262 = vunpack.c.0.s8 %v5261
        %v5263 = vperm.slane %v5257, %v5262
        %v5265 = vunpack.c.l.s4 1983009808
        %v5266 = vunpack.c.0.s8 %v5265
        %v5267 = vperm.slane %v5259, %v5266
        %v5268 = vrot.slane %v5239, 4
        %v5269 = vsel %vm364, %v5268, %v5227
        %v5270 = vrot.slane %v5227, 4
        %v5271 = vsel %vm364, %v5239, %v5270
        %v5273 = vunpack.c.l.s4 1934713408
        %v5274 = vunpack.c.0.s8 %v5273
        %v5275 = vperm.slane %v5269, %v5274
        %v5277 = vunpack.c.l.s4 1934713408
        %v5278 = vunpack.c.0.s8 %v5277
        %v5279 = vperm.slane %v5271, %v5278
        %v5280 = vrot.slane %v5243, 4
        %v5281 = vsel %vm364, %v5280, %v5231
        %v5282 = vrot.slane %v5231, 4
        %v5283 = vsel %vm364, %v5243, %v5282
        %v5285 = vunpack.c.l.s4 1934713408
        %v5286 = vunpack.c.0.s8 %v5285
        %v5287 = vperm.slane %v5281, %v5286
        %v5289 = vunpack.c.l.s4 1934713408
        %v5290 = vunpack.c.0.s8 %v5289
        %v5291 = vperm.slane %v5283, %v5290
        %v5292 = vrot.slane %v5263, 4
        %v5293 = vsel %vm364, %v5292, %v5251
        %v5294 = vrot.slane %v5251, 4
        %v5295 = vsel %vm364, %v5263, %v5294
        %v5297 = vunpack.c.l.s4 1934713408
        %v5298 = vunpack.c.0.s8 %v5297
        %v5299 = vperm.slane %v5293, %v5298
        %v5301 = vunpack.c.l.s4 1934713408
        %v5302 = vunpack.c.0.s8 %v5301
        %v5303 = vperm.slane %v5295, %v5302
        %v5304 = vrot.slane %v5267, 4
        %v5305 = vsel %vm364, %v5304, %v5255
        %v5306 = vrot.slane %v5255, 4
        %v5307 = vsel %vm364, %v5267, %v5306
        %v5309 = vunpack.c.l.s4 1934713408
        %v5310 = vunpack.c.0.s8 %v5309
        %v5311 = vperm.slane %v5305, %v5310
        %v5313 = vunpack.c.l.s4 1934713408
        %v5314 = vunpack.c.0.s8 %v5313
        %v5315 = vperm.slane %v5307, %v5314
        %v5316 = vrot.slane %v5299, 4
        %v5317 = vsel %vm364, %v5316, %v5275
        %v5318 = vrot.slane %v5275, 4
        %v5319 = vsel %vm364, %v5299, %v5318
        %v5320 = vrot.slane %v5303, 4
        %v5321 = vsel %vm364, %v5320, %v5279
        %v5322 = vrot.slane %v5279, 4
        %v5323 = vsel %vm364, %v5303, %v5322
        %v5324 = vrot.slane %v5311, 4
        %v5325 = vsel %vm364, %v5324, %v5287
        %v5326 = vrot.slane %v5287, 4
        %v5327 = vsel %vm364, %v5311, %v5326
        %v5328 = vrot.slane %v5315, 4
        %v5329 = vsel %vm364, %v5328, %v5291
        %v5330 = vrot.slane %v5291, 4
        %v5331 = vsel %vm364, %v5315, %v5330
        %v5332 = vrot.slane %v5094, 4
        %v5333 = vsel %vm364, %v5332, %v5092
        %v5334 = vrot.slane %v5092, 4
        %v5335 = vsel %vm364, %v5094, %v5334
        %v5337 = vunpack.c.l.s4 1983009808
        %v5338 = vunpack.c.0.s8 %v5337
        %v5339 = vperm.slane %v5333, %v5338
        %v5341 = vunpack.c.l.s4 1983009808
        %v5342 = vunpack.c.0.s8 %v5341
        %v5343 = vperm.slane %v5335, %v5342
        %v5344 = vrot.slane %v5095, 4
        %v5345 = vsel %vm364, %v5344, %v5093
        %v5346 = vrot.slane %v5093, 4
        %v5347 = vsel %vm364, %v5095, %v5346
        %v5349 = vunpack.c.l.s4 1983009808
        %v5350 = vunpack.c.0.s8 %v5349
        %v5351 = vperm.slane %v5345, %v5350
        %v5353 = vunpack.c.l.s4 1983009808
        %v5354 = vunpack.c.0.s8 %v5353
        %v5355 = vperm.slane %v5347, %v5354
        %v5356 = vrot.slane %v5098, 4
        %v5357 = vsel %vm364, %v5356, %v5096
        %v5358 = vrot.slane %v5096, 4
        %v5359 = vsel %vm364, %v5098, %v5358
        %v5361 = vunpack.c.l.s4 1983009808
        %v5362 = vunpack.c.0.s8 %v5361
        %v5363 = vperm.slane %v5357, %v5362
        %v5365 = vunpack.c.l.s4 1983009808
        %v5366 = vunpack.c.0.s8 %v5365
        %v5367 = vperm.slane %v5359, %v5366
        %v5368 = vrot.slane %v5099, 4
        %v5369 = vsel %vm364, %v5368, %v5097
        %v5370 = vrot.slane %v5097, 4
        %v5371 = vsel %vm364, %v5099, %v5370
        %v5373 = vunpack.c.l.s4 1983009808
        %v5374 = vunpack.c.0.s8 %v5373
        %v5375 = vperm.slane %v5369, %v5374
        %v5377 = vunpack.c.l.s4 1983009808
        %v5378 = vunpack.c.0.s8 %v5377
        %v5379 = vperm.slane %v5371, %v5378
        %v5380 = vrot.slane %v5351, 4
        %v5381 = vsel %vm364, %v5380, %v5339
        %v5382 = vrot.slane %v5339, 4
        %v5383 = vsel %vm364, %v5351, %v5382
        %v5385 = vunpack.c.l.s4 1934713408
        %v5386 = vunpack.c.0.s8 %v5385
        %v5387 = vperm.slane %v5381, %v5386
        %v5389 = vunpack.c.l.s4 1934713408
        %v5390 = vunpack.c.0.s8 %v5389
        %v5391 = vperm.slane %v5383, %v5390
        %v5392 = vrot.slane %v5355, 4
        %v5393 = vsel %vm364, %v5392, %v5343
        %v5394 = vrot.slane %v5343, 4
        %v5395 = vsel %vm364, %v5355, %v5394
        %v5397 = vunpack.c.l.s4 1934713408
        %v5398 = vunpack.c.0.s8 %v5397
        %v5399 = vperm.slane %v5393, %v5398
        %v5401 = vunpack.c.l.s4 1934713408
        %v5402 = vunpack.c.0.s8 %v5401
        %v5403 = vperm.slane %v5395, %v5402
        %v5404 = vrot.slane %v5375, 4
        %v5405 = vsel %vm364, %v5404, %v5363
        %v5406 = vrot.slane %v5363, 4
        %v5407 = vsel %vm364, %v5375, %v5406
        %v5409 = vunpack.c.l.s4 1934713408
        %v5410 = vunpack.c.0.s8 %v5409
        %v5411 = vperm.slane %v5405, %v5410
        %v5413 = vunpack.c.l.s4 1934713408
        %v5414 = vunpack.c.0.s8 %v5413
        %v5415 = vperm.slane %v5407, %v5414
        %v5416 = vrot.slane %v5379, 4
        %v5417 = vsel %vm364, %v5416, %v5367
        %v5418 = vrot.slane %v5367, 4
        %v5419 = vsel %vm364, %v5379, %v5418
        %v5421 = vunpack.c.l.s4 1934713408
        %v5422 = vunpack.c.0.s8 %v5421
        %v5423 = vperm.slane %v5417, %v5422
        %v5425 = vunpack.c.l.s4 1934713408
        %v5426 = vunpack.c.0.s8 %v5425
        %v5427 = vperm.slane %v5419, %v5426
        %v5428 = vrot.slane %v5411, 4
        %v5429 = vsel %vm364, %v5428, %v5387
        %v5430 = vrot.slane %v5387, 4
        %v5431 = vsel %vm364, %v5411, %v5430
        %v5432 = vrot.slane %v5415, 4
        %v5433 = vsel %vm364, %v5432, %v5391
        %v5434 = vrot.slane %v5391, 4
        %v5435 = vsel %vm364, %v5415, %v5434
        %v5436 = vrot.slane %v5423, 4
        %v5437 = vsel %vm364, %v5436, %v5399
        %v5438 = vrot.slane %v5399, 4
        %v5439 = vsel %vm364, %v5423, %v5438
        %v5440 = vrot.slane %v5427, 4
        %v5441 = vsel %vm364, %v5440, %v5403
        %v5442 = vrot.slane %v5403, 4
        %v5443 = vsel %vm364, %v5427, %v5442
        %v5444 = vrot.slane %v5102, 4
        %v5445 = vsel %vm364, %v5444, %v5100
        %v5446 = vrot.slane %v5100, 4
        %v5447 = vsel %vm364, %v5102, %v5446
        %v5449 = vunpack.c.l.s4 1983009808
        %v5450 = vunpack.c.0.s8 %v5449
        %v5451 = vperm.slane %v5445, %v5450
        %v5453 = vunpack.c.l.s4 1983009808
        %v5454 = vunpack.c.0.s8 %v5453
        %v5455 = vperm.slane %v5447, %v5454
        %v5456 = vrot.slane %v5103, 4
        %v5457 = vsel %vm364, %v5456, %v5101
        %v5458 = vrot.slane %v5101, 4
        %v5459 = vsel %vm364, %v5103, %v5458
        %v5461 = vunpack.c.l.s4 1983009808
        %v5462 = vunpack.c.0.s8 %v5461
        %v5463 = vperm.slane %v5457, %v5462
        %v5465 = vunpack.c.l.s4 1983009808
        %v5466 = vunpack.c.0.s8 %v5465
        %v5467 = vperm.slane %v5459, %v5466
        %v5468 = vrot.slane %v5106, 4
        %v5469 = vsel %vm364, %v5468, %v5104
        %v5470 = vrot.slane %v5104, 4
        %v5471 = vsel %vm364, %v5106, %v5470
        %v5473 = vunpack.c.l.s4 1983009808
        %v5474 = vunpack.c.0.s8 %v5473
        %v5475 = vperm.slane %v5469, %v5474
        %v5477 = vunpack.c.l.s4 1983009808
        %v5478 = vunpack.c.0.s8 %v5477
        %v5479 = vperm.slane %v5471, %v5478
        %v5480 = vrot.slane %v5107, 4
        %v5481 = vsel %vm364, %v5480, %v5105
        %v5482 = vrot.slane %v5105, 4
        %v5483 = vsel %vm364, %v5107, %v5482
        %v5485 = vunpack.c.l.s4 1983009808
        %v5486 = vunpack.c.0.s8 %v5485
        %v5487 = vperm.slane %v5481, %v5486
        %v5489 = vunpack.c.l.s4 1983009808
        %v5490 = vunpack.c.0.s8 %v5489
        %v5491 = vperm.slane %v5483, %v5490
        %v5492 = vrot.slane %v5463, 4
        %v5493 = vsel %vm364, %v5492, %v5451
        %v5494 = vrot.slane %v5451, 4
        %v5495 = vsel %vm364, %v5463, %v5494
        %v5497 = vunpack.c.l.s4 1934713408
        %v5498 = vunpack.c.0.s8 %v5497
        %v5499 = vperm.slane %v5493, %v5498
        %v5501 = vunpack.c.l.s4 1934713408
        %v5502 = vunpack.c.0.s8 %v5501
        %v5503 = vperm.slane %v5495, %v5502
        %v5504 = vrot.slane %v5467, 4
        %v5505 = vsel %vm364, %v5504, %v5455
        %v5506 = vrot.slane %v5455, 4
        %v5507 = vsel %vm364, %v5467, %v5506
        %v5509 = vunpack.c.l.s4 1934713408
        %v5510 = vunpack.c.0.s8 %v5509
        %v5511 = vperm.slane %v5505, %v5510
        %v5513 = vunpack.c.l.s4 1934713408
        %v5514 = vunpack.c.0.s8 %v5513
        %v5515 = vperm.slane %v5507, %v5514
        %v5516 = vrot.slane %v5487, 4
        %v5517 = vsel %vm364, %v5516, %v5475
        %v5518 = vrot.slane %v5475, 4
        %v5519 = vsel %vm364, %v5487, %v5518
        %v5521 = vunpack.c.l.s4 1934713408
        %v5522 = vunpack.c.0.s8 %v5521
        %v5523 = vperm.slane %v5517, %v5522
        %v5525 = vunpack.c.l.s4 1934713408
        %v5526 = vunpack.c.0.s8 %v5525
        %v5527 = vperm.slane %v5519, %v5526
        %v5528 = vrot.slane %v5491, 4
        %v5529 = vsel %vm364, %v5528, %v5479
        %v5530 = vrot.slane %v5479, 4
        %v5531 = vsel %vm364, %v5491, %v5530
        %v5533 = vunpack.c.l.s4 1934713408
        %v5534 = vunpack.c.0.s8 %v5533
        %v5535 = vperm.slane %v5529, %v5534
        %v5537 = vunpack.c.l.s4 1934713408
        %v5538 = vunpack.c.0.s8 %v5537
        %v5539 = vperm.slane %v5531, %v5538
        %v5540 = vrot.slane %v5523, 4
        %v5541 = vsel %vm364, %v5540, %v5499
        %v5542 = vrot.slane %v5499, 4
        %v5543 = vsel %vm364, %v5523, %v5542
        %v5544 = vrot.slane %v5527, 4
        %v5545 = vsel %vm364, %v5544, %v5503
        %v5546 = vrot.slane %v5503, 4
        %v5547 = vsel %vm364, %v5527, %v5546
        %v5548 = vrot.slane %v5535, 4
        %v5549 = vsel %vm364, %v5548, %v5511
        %v5550 = vrot.slane %v5511, 4
        %v5551 = vsel %vm364, %v5535, %v5550
        %v5552 = vrot.slane %v5539, 4
        %v5553 = vsel %vm364, %v5552, %v5515
        %v5554 = vrot.slane %v5515, 4
        %v5555 = vsel %vm364, %v5539, %v5554
        %5560 = vrot.lane.b32.xlu0 %v5207, 16
        %v5561 = vpop.permute.xlu0 %5560
        %5562 = vrot.lane.b32.xlu0 %v5319, 16
        %v5563 = vpop.permute.xlu0 %5562
        %5564 = vrot.lane.b32.xlu0 %v5431, 16
        %v5565 = vpop.permute.xlu0 %5564
        %5566 = vrot.lane.b32.xlu0 %v5543, 16
        %v5567 = vpop.permute.xlu0 %5566
        %5576 = vrot.lane.b32.xlu0 %v5209, 32
        %v5577 = vpop.permute.xlu0 %5576
        %5578 = vrot.lane.b32.xlu0 %v5321, 32
        %v5579 = vpop.permute.xlu0 %5578
        %5580 = vrot.lane.b32.xlu0 %v5433, 32
        %v5581 = vpop.permute.xlu0 %5580
        %5582 = vrot.lane.b32.xlu0 %v5545, 32
        %v5583 = vpop.permute.xlu0 %5582
        %5592 = vrot.lane.b32.xlu0 %v5211, 48
        %v5593 = vpop.permute.xlu0 %5592
        %5594 = vrot.lane.b32.xlu0 %v5323, 48
        %v5595 = vpop.permute.xlu0 %5594
        %5596 = vrot.lane.b32.xlu0 %v5435, 48
        %v5597 = vpop.permute.xlu0 %5596
        %5598 = vrot.lane.b32.xlu0 %v5547, 48
        %v5599 = vpop.permute.xlu0 %5598
        %5608 = vrot.lane.b32.xlu0 %v5213, 64
        %v5609 = vpop.permute.xlu0 %5608
        %5610 = vrot.lane.b32.xlu0 %v5325, 64
        %v5611 = vpop.permute.xlu0 %5610
        %5612 = vrot.lane.b32.xlu0 %v5437, 64
        %v5613 = vpop.permute.xlu0 %5612
        %5614 = vrot.lane.b32.xlu0 %v5549, 64
        %v5615 = vpop.permute.xlu0 %5614
        %5624 = vrot.lane.b32.xlu0 %v5215, 80
        %v5625 = vpop.permute.xlu0 %5624
        %5626 = vrot.lane.b32.xlu0 %v5327, 80
        %v5627 = vpop.permute.xlu0 %5626
        %5628 = vrot.lane.b32.xlu0 %v5439, 80
        %v5629 = vpop.permute.xlu0 %5628
        %5630 = vrot.lane.b32.xlu0 %v5551, 80
        %v5631 = vpop.permute.xlu0 %5630
        %5640 = vrot.lane.b32.xlu0 %v5217, 96
        %v5641 = vpop.permute.xlu0 %5640
        %5642 = vrot.lane.b32.xlu0 %v5329, 96
        %v5643 = vpop.permute.xlu0 %5642
        %5644 = vrot.lane.b32.xlu0 %v5441, 96
        %v5645 = vpop.permute.xlu0 %5644
        %5646 = vrot.lane.b32.xlu0 %v5553, 96
        %v5647 = vpop.permute.xlu0 %5646
        %5656 = vrot.lane.b32.xlu0 %v5219, 112
        %v5657 = vpop.permute.xlu0 %5656
        %5658 = vrot.lane.b32.xlu0 %v5331, 112
        %v5659 = vpop.permute.xlu0 %5658
        %5660 = vrot.lane.b32.xlu0 %v5443, 112
        %v5661 = vpop.permute.xlu0 %5660
        %5662 = vrot.lane.b32.xlu0 %v5555, 112
        %v5663 = vpop.permute.xlu0 %5662
        %v5668 = vsel %vm465, %v5205, %v5561
        %v5669 = vsel %vm465, %v5317, %v5563
        %v5670 = vsel %vm465, %v5429, %v5565
        %v5671 = vsel %vm465, %v5541, %v5567
        %v5672 = vsel %vm467, %v5668, %v5577
        %v5673 = vsel %vm467, %v5669, %v5579
        %v5674 = vsel %vm467, %v5670, %v5581
        %v5675 = vsel %vm467, %v5671, %v5583
        %v5676 = vsel %vm469, %v5672, %v5593
        %v5677 = vsel %vm469, %v5673, %v5595
        %v5678 = vsel %vm469, %v5674, %v5597
        %v5679 = vsel %vm469, %v5675, %v5599
        %v5680 = vsel %vm471, %v5676, %v5609
        %v5681 = vsel %vm471, %v5677, %v5611
        %v5682 = vsel %vm471, %v5678, %v5613
        %v5683 = vsel %vm471, %v5679, %v5615
        %v5684 = vsel %vm473, %v5680, %v5625
        %v5685 = vsel %vm473, %v5681, %v5627
        %v5686 = vsel %vm473, %v5682, %v5629
        %v5687 = vsel %vm473, %v5683, %v5631
        %v5688 = vsel %vm475, %v5684, %v5641
        %v5689 = vsel %vm475, %v5685, %v5643
        %v5690 = vsel %vm475, %v5686, %v5645
        %v5691 = vsel %vm475, %v5687, %v5647
        %v5692 = vsel %vm477, %v5688, %v5657
        %v5693 = vsel %vm477, %v5689, %v5659
        %v5694 = vsel %vm477, %v5690, %v5661
        %v5695 = vsel %vm477, %v5691, %v5663
        %5696 = vst [vmem:[#allocation5 + $0x60] sm:$0xff] %v5692
        %5697 = vst [vmem:[#allocation5 + $0x68] sm:$0xff] %v5693
        %5698 = vst [vmem:[#allocation5 + $0x70] sm:$0xff] %v5694
        %5699 = vst [vmem:[#allocation5 + $0x78] sm:$0xff] %v5695
        %v5700 = vld [vmem:[#allocation3 + $0x1] sm:$0xff]
        %v5701 = vld [vmem:[#allocation3 + $0x11] sm:$0xff]
        %v5702 = vld [vmem:[#allocation3 + $0x21] sm:$0xff]
        %v5703 = vld [vmem:[#allocation3 + $0x31] sm:$0xff]
        %v5704 = vld [vmem:[#allocation3 + $0x41] sm:$0xff]
        %v5705 = vld [vmem:[#allocation3 + $0x51] sm:$0xff]
        %v5706 = vld [vmem:[#allocation3 + $0x61] sm:$0xff]
        %v5707 = vld [vmem:[#allocation3 + $0x71] sm:$0xff]
        %v5708 = vld [vmem:[#allocation3 + $0x81] sm:$0xff]
        %v5709 = vld [vmem:[#allocation3 + $0x91] sm:$0xff]
        %v5710 = vld [vmem:[#allocation3 + $0xa1] sm:$0xff]
        %v5711 = vld [vmem:[#allocation3 + $0xb1] sm:$0xff]
        %v5712 = vld [vmem:[#allocation3 + $0xc1] sm:$0xff]
        %v5713 = vld [vmem:[#allocation3 + $0xd1] sm:$0xff]
        %v5714 = vld [vmem:[#allocation3 + $0xe1] sm:$0xff]
        %v5715 = vld [vmem:[#allocation3 + $0xf1] sm:$0xff]
        %v5716 = vld [vmem:[#allocation3 + $0x101] sm:$0xff]
        %v5717 = vld [vmem:[#allocation3 + $0x111] sm:$0xff]
        %v5718 = vld [vmem:[#allocation3 + $0x121] sm:$0xff]
        %v5719 = vld [vmem:[#allocation3 + $0x131] sm:$0xff]
        %v5720 = vld [vmem:[#allocation3 + $0x141] sm:$0xff]
        %v5721 = vld [vmem:[#allocation3 + $0x151] sm:$0xff]
        %v5722 = vld [vmem:[#allocation3 + $0x161] sm:$0xff]
        %v5723 = vld [vmem:[#allocation3 + $0x171] sm:$0xff]
        %v5724 = vld [vmem:[#allocation3 + $0x181] sm:$0xff]
        %v5725 = vld [vmem:[#allocation3 + $0x191] sm:$0xff]
        %v5726 = vld [vmem:[#allocation3 + $0x1a1] sm:$0xff]
        %v5727 = vld [vmem:[#allocation3 + $0x1b1] sm:$0xff]
        %v5728 = vld [vmem:[#allocation3 + $0x1c1] sm:$0xff]
        %v5729 = vld [vmem:[#allocation3 + $0x1d1] sm:$0xff]
        %v5730 = vld [vmem:[#allocation3 + $0x1e1] sm:$0xff]
        %v5731 = vld [vmem:[#allocation3 + $0x1f1] sm:$0xff]
        %5764 = vrot.lane.b32.xlu0 %v5700, 127
        %v5765 = vpop.permute.xlu0 %5764
        %5766 = vrot.lane.b32.xlu0 %v5701, 127
        %v5767 = vpop.permute.xlu0 %5766
        %5768 = vrot.lane.b32.xlu0 %v5702, 127
        %v5769 = vpop.permute.xlu0 %5768
        %5770 = vrot.lane.b32.xlu0 %v5703, 127
        %v5771 = vpop.permute.xlu0 %5770
        %5772 = vrot.lane.b32.xlu0 %v5704, 127
        %v5773 = vpop.permute.xlu0 %5772
        %5774 = vrot.lane.b32.xlu0 %v5705, 127
        %v5775 = vpop.permute.xlu0 %5774
        %5776 = vrot.lane.b32.xlu0 %v5706, 127
        %v5777 = vpop.permute.xlu0 %5776
        %5778 = vrot.lane.b32.xlu0 %v5707, 127
        %v5779 = vpop.permute.xlu0 %5778
        %5780 = vrot.lane.b32.xlu0 %v5708, 127
        %v5781 = vpop.permute.xlu0 %5780
        %5782 = vrot.lane.b32.xlu0 %v5709, 127
        %v5783 = vpop.permute.xlu0 %5782
        %5784 = vrot.lane.b32.xlu0 %v5710, 127
        %v5785 = vpop.permute.xlu0 %5784
        %5786 = vrot.lane.b32.xlu0 %v5711, 127
        %v5787 = vpop.permute.xlu0 %5786
        %5788 = vrot.lane.b32.xlu0 %v5712, 127
        %v5789 = vpop.permute.xlu0 %5788
        %5790 = vrot.lane.b32.xlu0 %v5713, 127
        %v5791 = vpop.permute.xlu0 %5790
        %5792 = vrot.lane.b32.xlu0 %v5714, 127
        %v5793 = vpop.permute.xlu0 %5792
        %5794 = vrot.lane.b32.xlu0 %v5715, 127
        %v5795 = vpop.permute.xlu0 %5794
        %5796 = vrot.lane.b32.xlu0 %v5716, 127
        %v5797 = vpop.permute.xlu0 %5796
        %5798 = vrot.lane.b32.xlu0 %v5717, 127
        %v5799 = vpop.permute.xlu0 %5798
        %5800 = vrot.lane.b32.xlu0 %v5718, 127
        %v5801 = vpop.permute.xlu0 %5800
        %5802 = vrot.lane.b32.xlu0 %v5719, 127
        %v5803 = vpop.permute.xlu0 %5802
        %5804 = vrot.lane.b32.xlu0 %v5720, 127
        %v5805 = vpop.permute.xlu0 %5804
        %5806 = vrot.lane.b32.xlu0 %v5721, 127
        %v5807 = vpop.permute.xlu0 %5806
        %5808 = vrot.lane.b32.xlu0 %v5722, 127
        %v5809 = vpop.permute.xlu0 %5808
        %5810 = vrot.lane.b32.xlu0 %v5723, 127
        %v5811 = vpop.permute.xlu0 %5810
        %5812 = vrot.lane.b32.xlu0 %v5724, 127
        %v5813 = vpop.permute.xlu0 %5812
        %5814 = vrot.lane.b32.xlu0 %v5725, 127
        %v5815 = vpop.permute.xlu0 %5814
        %5816 = vrot.lane.b32.xlu0 %v5726, 127
        %v5817 = vpop.permute.xlu0 %5816
        %5818 = vrot.lane.b32.xlu0 %v5727, 127
        %v5819 = vpop.permute.xlu0 %5818
        %5820 = vrot.lane.b32.xlu0 %v5728, 127
        %v5821 = vpop.permute.xlu0 %5820
        %5822 = vrot.lane.b32.xlu0 %v5729, 127
        %v5823 = vpop.permute.xlu0 %5822
        %5824 = vrot.lane.b32.xlu0 %v5730, 127
        %v5825 = vpop.permute.xlu0 %5824
        %5826 = vrot.lane.b32.xlu0 %v5731, 127
        %v5827 = vpop.permute.xlu0 %5826
        %v5860 = vrot.slane %v5769, 4
        %v5861 = vsel %vm364, %v5860, %v5765
        %v5862 = vrot.slane %v5765, 4
        %v5863 = vsel %vm364, %v5769, %v5862
        %v5865 = vunpack.c.l.s4 1983009808
        %v5866 = vunpack.c.0.s8 %v5865
        %v5867 = vperm.slane %v5861, %v5866
        %v5869 = vunpack.c.l.s4 1983009808
        %v5870 = vunpack.c.0.s8 %v5869
        %v5871 = vperm.slane %v5863, %v5870
        %v5872 = vrot.slane %v5771, 4
        %v5873 = vsel %vm364, %v5872, %v5767
        %v5874 = vrot.slane %v5767, 4
        %v5875 = vsel %vm364, %v5771, %v5874
        %v5877 = vunpack.c.l.s4 1983009808
        %v5878 = vunpack.c.0.s8 %v5877
        %v5879 = vperm.slane %v5873, %v5878
        %v5881 = vunpack.c.l.s4 1983009808
        %v5882 = vunpack.c.0.s8 %v5881
        %v5883 = vperm.slane %v5875, %v5882
        %v5884 = vrot.slane %v5777, 4
        %v5885 = vsel %vm364, %v5884, %v5773
        %v5886 = vrot.slane %v5773, 4
        %v5887 = vsel %vm364, %v5777, %v5886
        %v5889 = vunpack.c.l.s4 1983009808
        %v5890 = vunpack.c.0.s8 %v5889
        %v5891 = vperm.slane %v5885, %v5890
        %v5893 = vunpack.c.l.s4 1983009808
        %v5894 = vunpack.c.0.s8 %v5893
        %v5895 = vperm.slane %v5887, %v5894
        %v5896 = vrot.slane %v5779, 4
        %v5897 = vsel %vm364, %v5896, %v5775
        %v5898 = vrot.slane %v5775, 4
        %v5899 = vsel %vm364, %v5779, %v5898
        %v5901 = vunpack.c.l.s4 1983009808
        %v5902 = vunpack.c.0.s8 %v5901
        %v5903 = vperm.slane %v5897, %v5902
        %v5905 = vunpack.c.l.s4 1983009808
        %v5906 = vunpack.c.0.s8 %v5905
        %v5907 = vperm.slane %v5899, %v5906
        %v5908 = vrot.slane %v5879, 4
        %v5909 = vsel %vm364, %v5908, %v5867
        %v5910 = vrot.slane %v5867, 4
        %v5911 = vsel %vm364, %v5879, %v5910
        %v5913 = vunpack.c.l.s4 1934713408
        %v5914 = vunpack.c.0.s8 %v5913
        %v5915 = vperm.slane %v5909, %v5914
        %v5917 = vunpack.c.l.s4 1934713408
        %v5918 = vunpack.c.0.s8 %v5917
        %v5919 = vperm.slane %v5911, %v5918
        %v5920 = vrot.slane %v5883, 4
        %v5921 = vsel %vm364, %v5920, %v5871
        %v5922 = vrot.slane %v5871, 4
        %v5923 = vsel %vm364, %v5883, %v5922
        %v5925 = vunpack.c.l.s4 1934713408
        %v5926 = vunpack.c.0.s8 %v5925
        %v5927 = vperm.slane %v5921, %v5926
        %v5929 = vunpack.c.l.s4 1934713408
        %v5930 = vunpack.c.0.s8 %v5929
        %v5931 = vperm.slane %v5923, %v5930
        %v5932 = vrot.slane %v5903, 4
        %v5933 = vsel %vm364, %v5932, %v5891
        %v5934 = vrot.slane %v5891, 4
        %v5935 = vsel %vm364, %v5903, %v5934
        %v5937 = vunpack.c.l.s4 1934713408
        %v5938 = vunpack.c.0.s8 %v5937
        %v5939 = vperm.slane %v5933, %v5938
        %v5941 = vunpack.c.l.s4 1934713408
        %v5942 = vunpack.c.0.s8 %v5941
        %v5943 = vperm.slane %v5935, %v5942
        %v5944 = vrot.slane %v5907, 4
        %v5945 = vsel %vm364, %v5944, %v5895
        %v5946 = vrot.slane %v5895, 4
        %v5947 = vsel %vm364, %v5907, %v5946
        %v5949 = vunpack.c.l.s4 1934713408
        %v5950 = vunpack.c.0.s8 %v5949
        %v5951 = vperm.slane %v5945, %v5950
        %v5953 = vunpack.c.l.s4 1934713408
        %v5954 = vunpack.c.0.s8 %v5953
        %v5955 = vperm.slane %v5947, %v5954
        %v5956 = vrot.slane %v5939, 4
        %v5957 = vsel %vm364, %v5956, %v5915
        %v5958 = vrot.slane %v5915, 4
        %v5959 = vsel %vm364, %v5939, %v5958
        %v5960 = vrot.slane %v5943, 4
        %v5961 = vsel %vm364, %v5960, %v5919
        %v5962 = vrot.slane %v5919, 4
        %v5963 = vsel %vm364, %v5943, %v5962
        %v5964 = vrot.slane %v5951, 4
        %v5965 = vsel %vm364, %v5964, %v5927
        %v5966 = vrot.slane %v5927, 4
        %v5967 = vsel %vm364, %v5951, %v5966
        %v5968 = vrot.slane %v5955, 4
        %v5969 = vsel %vm364, %v5968, %v5931
        %v5970 = vrot.slane %v5931, 4
        %v5971 = vsel %vm364, %v5955, %v5970
        %v5972 = vrot.slane %v5785, 4
        %v5973 = vsel %vm364, %v5972, %v5781
        %v5974 = vrot.slane %v5781, 4
        %v5975 = vsel %vm364, %v5785, %v5974
        %v5977 = vunpack.c.l.s4 1983009808
        %v5978 = vunpack.c.0.s8 %v5977
        %v5979 = vperm.slane %v5973, %v5978
        %v5981 = vunpack.c.l.s4 1983009808
        %v5982 = vunpack.c.0.s8 %v5981
        %v5983 = vperm.slane %v5975, %v5982
        %v5984 = vrot.slane %v5787, 4
        %v5985 = vsel %vm364, %v5984, %v5783
        %v5986 = vrot.slane %v5783, 4
        %v5987 = vsel %vm364, %v5787, %v5986
        %v5989 = vunpack.c.l.s4 1983009808
        %v5990 = vunpack.c.0.s8 %v5989
        %v5991 = vperm.slane %v5985, %v5990
        %v5993 = vunpack.c.l.s4 1983009808
        %v5994 = vunpack.c.0.s8 %v5993
        %v5995 = vperm.slane %v5987, %v5994
        %v5996 = vrot.slane %v5793, 4
        %v5997 = vsel %vm364, %v5996, %v5789
        %v5998 = vrot.slane %v5789, 4
        %v5999 = vsel %vm364, %v5793, %v5998
        %v6001 = vunpack.c.l.s4 1983009808
        %v6002 = vunpack.c.0.s8 %v6001
        %v6003 = vperm.slane %v5997, %v6002
        %v6005 = vunpack.c.l.s4 1983009808
        %v6006 = vunpack.c.0.s8 %v6005
        %v6007 = vperm.slane %v5999, %v6006
        %v6008 = vrot.slane %v5795, 4
        %v6009 = vsel %vm364, %v6008, %v5791
        %v6010 = vrot.slane %v5791, 4
        %v6011 = vsel %vm364, %v5795, %v6010
        %v6013 = vunpack.c.l.s4 1983009808
        %v6014 = vunpack.c.0.s8 %v6013
        %v6015 = vperm.slane %v6009, %v6014
        %v6017 = vunpack.c.l.s4 1983009808
        %v6018 = vunpack.c.0.s8 %v6017
        %v6019 = vperm.slane %v6011, %v6018
        %v6020 = vrot.slane %v5991, 4
        %v6021 = vsel %vm364, %v6020, %v5979
        %v6022 = vrot.slane %v5979, 4
        %v6023 = vsel %vm364, %v5991, %v6022
        %v6025 = vunpack.c.l.s4 1934713408
        %v6026 = vunpack.c.0.s8 %v6025
        %v6027 = vperm.slane %v6021, %v6026
        %v6029 = vunpack.c.l.s4 1934713408
        %v6030 = vunpack.c.0.s8 %v6029
        %v6031 = vperm.slane %v6023, %v6030
        %v6032 = vrot.slane %v5995, 4
        %v6033 = vsel %vm364, %v6032, %v5983
        %v6034 = vrot.slane %v5983, 4
        %v6035 = vsel %vm364, %v5995, %v6034
        %v6037 = vunpack.c.l.s4 1934713408
        %v6038 = vunpack.c.0.s8 %v6037
        %v6039 = vperm.slane %v6033, %v6038
        %v6041 = vunpack.c.l.s4 1934713408
        %v6042 = vunpack.c.0.s8 %v6041
        %v6043 = vperm.slane %v6035, %v6042
        %v6044 = vrot.slane %v6015, 4
        %v6045 = vsel %vm364, %v6044, %v6003
        %v6046 = vrot.slane %v6003, 4
        %v6047 = vsel %vm364, %v6015, %v6046
        %v6049 = vunpack.c.l.s4 1934713408
        %v6050 = vunpack.c.0.s8 %v6049
        %v6051 = vperm.slane %v6045, %v6050
        %v6053 = vunpack.c.l.s4 1934713408
        %v6054 = vunpack.c.0.s8 %v6053
        %v6055 = vperm.slane %v6047, %v6054
        %v6056 = vrot.slane %v6019, 4
        %v6057 = vsel %vm364, %v6056, %v6007
        %v6058 = vrot.slane %v6007, 4
        %v6059 = vsel %vm364, %v6019, %v6058
        %v6061 = vunpack.c.l.s4 1934713408
        %v6062 = vunpack.c.0.s8 %v6061
        %v6063 = vperm.slane %v6057, %v6062
        %v6065 = vunpack.c.l.s4 1934713408
        %v6066 = vunpack.c.0.s8 %v6065
        %v6067 = vperm.slane %v6059, %v6066
        %v6068 = vrot.slane %v6051, 4
        %v6069 = vsel %vm364, %v6068, %v6027
        %v6070 = vrot.slane %v6027, 4
        %v6071 = vsel %vm364, %v6051, %v6070
        %v6072 = vrot.slane %v6055, 4
        %v6073 = vsel %vm364, %v6072, %v6031
        %v6074 = vrot.slane %v6031, 4
        %v6075 = vsel %vm364, %v6055, %v6074
        %v6076 = vrot.slane %v6063, 4
        %v6077 = vsel %vm364, %v6076, %v6039
        %v6078 = vrot.slane %v6039, 4
        %v6079 = vsel %vm364, %v6063, %v6078
        %v6080 = vrot.slane %v6067, 4
        %v6081 = vsel %vm364, %v6080, %v6043
        %v6082 = vrot.slane %v6043, 4
        %v6083 = vsel %vm364, %v6067, %v6082
        %v6084 = vrot.slane %v5801, 4
        %v6085 = vsel %vm364, %v6084, %v5797
        %v6086 = vrot.slane %v5797, 4
        %v6087 = vsel %vm364, %v5801, %v6086
        %v6089 = vunpack.c.l.s4 1983009808
        %v6090 = vunpack.c.0.s8 %v6089
        %v6091 = vperm.slane %v6085, %v6090
        %v6093 = vunpack.c.l.s4 1983009808
        %v6094 = vunpack.c.0.s8 %v6093
        %v6095 = vperm.slane %v6087, %v6094
        %v6096 = vrot.slane %v5803, 4
        %v6097 = vsel %vm364, %v6096, %v5799
        %v6098 = vrot.slane %v5799, 4
        %v6099 = vsel %vm364, %v5803, %v6098
        %v6101 = vunpack.c.l.s4 1983009808
        %v6102 = vunpack.c.0.s8 %v6101
        %v6103 = vperm.slane %v6097, %v6102
        %v6105 = vunpack.c.l.s4 1983009808
        %v6106 = vunpack.c.0.s8 %v6105
        %v6107 = vperm.slane %v6099, %v6106
        %v6108 = vrot.slane %v5809, 4
        %v6109 = vsel %vm364, %v6108, %v5805
        %v6110 = vrot.slane %v5805, 4
        %v6111 = vsel %vm364, %v5809, %v6110
        %v6113 = vunpack.c.l.s4 1983009808
        %v6114 = vunpack.c.0.s8 %v6113
        %v6115 = vperm.slane %v6109, %v6114
        %v6117 = vunpack.c.l.s4 1983009808
        %v6118 = vunpack.c.0.s8 %v6117
        %v6119 = vperm.slane %v6111, %v6118
        %v6120 = vrot.slane %v5811, 4
        %v6121 = vsel %vm364, %v6120, %v5807
        %v6122 = vrot.slane %v5807, 4
        %v6123 = vsel %vm364, %v5811, %v6122
        %v6125 = vunpack.c.l.s4 1983009808
        %v6126 = vunpack.c.0.s8 %v6125
        %v6127 = vperm.slane %v6121, %v6126
        %v6129 = vunpack.c.l.s4 1983009808
        %v6130 = vunpack.c.0.s8 %v6129
        %v6131 = vperm.slane %v6123, %v6130
        %v6132 = vrot.slane %v6103, 4
        %v6133 = vsel %vm364, %v6132, %v6091
        %v6134 = vrot.slane %v6091, 4
        %v6135 = vsel %vm364, %v6103, %v6134
        %v6137 = vunpack.c.l.s4 1934713408
        %v6138 = vunpack.c.0.s8 %v6137
        %v6139 = vperm.slane %v6133, %v6138
        %v6141 = vunpack.c.l.s4 1934713408
        %v6142 = vunpack.c.0.s8 %v6141
        %v6143 = vperm.slane %v6135, %v6142
        %v6144 = vrot.slane %v6107, 4
        %v6145 = vsel %vm364, %v6144, %v6095
        %v6146 = vrot.slane %v6095, 4
        %v6147 = vsel %vm364, %v6107, %v6146
        %v6149 = vunpack.c.l.s4 1934713408
        %v6150 = vunpack.c.0.s8 %v6149
        %v6151 = vperm.slane %v6145, %v6150
        %v6153 = vunpack.c.l.s4 1934713408
        %v6154 = vunpack.c.0.s8 %v6153
        %v6155 = vperm.slane %v6147, %v6154
        %v6156 = vrot.slane %v6127, 4
        %v6157 = vsel %vm364, %v6156, %v6115
        %v6158 = vrot.slane %v6115, 4
        %v6159 = vsel %vm364, %v6127, %v6158
        %v6161 = vunpack.c.l.s4 1934713408
        %v6162 = vunpack.c.0.s8 %v6161
        %v6163 = vperm.slane %v6157, %v6162
        %v6165 = vunpack.c.l.s4 1934713408
        %v6166 = vunpack.c.0.s8 %v6165
        %v6167 = vperm.slane %v6159, %v6166
        %v6168 = vrot.slane %v6131, 4
        %v6169 = vsel %vm364, %v6168, %v6119
        %v6170 = vrot.slane %v6119, 4
        %v6171 = vsel %vm364, %v6131, %v6170
        %v6173 = vunpack.c.l.s4 1934713408
        %v6174 = vunpack.c.0.s8 %v6173
        %v6175 = vperm.slane %v6169, %v6174
        %v6177 = vunpack.c.l.s4 1934713408
        %v6178 = vunpack.c.0.s8 %v6177
        %v6179 = vperm.slane %v6171, %v6178
        %v6180 = vrot.slane %v6163, 4
        %v6181 = vsel %vm364, %v6180, %v6139
        %v6182 = vrot.slane %v6139, 4
        %v6183 = vsel %vm364, %v6163, %v6182
        %v6184 = vrot.slane %v6167, 4
        %v6185 = vsel %vm364, %v6184, %v6143
        %v6186 = vrot.slane %v6143, 4
        %v6187 = vsel %vm364, %v6167, %v6186
        %v6188 = vrot.slane %v6175, 4
        %v6189 = vsel %vm364, %v6188, %v6151
        %v6190 = vrot.slane %v6151, 4
        %v6191 = vsel %vm364, %v6175, %v6190
        %v6192 = vrot.slane %v6179, 4
        %v6193 = vsel %vm364, %v6192, %v6155
        %v6194 = vrot.slane %v6155, 4
        %v6195 = vsel %vm364, %v6179, %v6194
        %v6196 = vrot.slane %v5817, 4
        %v6197 = vsel %vm364, %v6196, %v5813
        %v6198 = vrot.slane %v5813, 4
        %v6199 = vsel %vm364, %v5817, %v6198
        %v6201 = vunpack.c.l.s4 1983009808
        %v6202 = vunpack.c.0.s8 %v6201
        %v6203 = vperm.slane %v6197, %v6202
        %v6205 = vunpack.c.l.s4 1983009808
        %v6206 = vunpack.c.0.s8 %v6205
        %v6207 = vperm.slane %v6199, %v6206
        %v6208 = vrot.slane %v5819, 4
        %v6209 = vsel %vm364, %v6208, %v5815
        %v6210 = vrot.slane %v5815, 4
        %v6211 = vsel %vm364, %v5819, %v6210
        %v6213 = vunpack.c.l.s4 1983009808
        %v6214 = vunpack.c.0.s8 %v6213
        %v6215 = vperm.slane %v6209, %v6214
        %v6217 = vunpack.c.l.s4 1983009808
        %v6218 = vunpack.c.0.s8 %v6217
        %v6219 = vperm.slane %v6211, %v6218
        %v6220 = vrot.slane %v5825, 4
        %v6221 = vsel %vm364, %v6220, %v5821
        %v6222 = vrot.slane %v5821, 4
        %v6223 = vsel %vm364, %v5825, %v6222
        %v6225 = vunpack.c.l.s4 1983009808
        %v6226 = vunpack.c.0.s8 %v6225
        %v6227 = vperm.slane %v6221, %v6226
        %v6229 = vunpack.c.l.s4 1983009808
        %v6230 = vunpack.c.0.s8 %v6229
        %v6231 = vperm.slane %v6223, %v6230
        %v6232 = vrot.slane %v5827, 4
        %v6233 = vsel %vm364, %v6232, %v5823
        %v6234 = vrot.slane %v5823, 4
        %v6235 = vsel %vm364, %v5827, %v6234
        %v6237 = vunpack.c.l.s4 1983009808
        %v6238 = vunpack.c.0.s8 %v6237
        %v6239 = vperm.slane %v6233, %v6238
        %v6241 = vunpack.c.l.s4 1983009808
        %v6242 = vunpack.c.0.s8 %v6241
        %v6243 = vperm.slane %v6235, %v6242
        %v6244 = vrot.slane %v6215, 4
        %v6245 = vsel %vm364, %v6244, %v6203
        %v6246 = vrot.slane %v6203, 4
        %v6247 = vsel %vm364, %v6215, %v6246
        %v6249 = vunpack.c.l.s4 1934713408
        %v6250 = vunpack.c.0.s8 %v6249
        %v6251 = vperm.slane %v6245, %v6250
        %v6253 = vunpack.c.l.s4 1934713408
        %v6254 = vunpack.c.0.s8 %v6253
        %v6255 = vperm.slane %v6247, %v6254
        %v6256 = vrot.slane %v6219, 4
        %v6257 = vsel %vm364, %v6256, %v6207
        %v6258 = vrot.slane %v6207, 4
        %v6259 = vsel %vm364, %v6219, %v6258
        %v6261 = vunpack.c.l.s4 1934713408
        %v6262 = vunpack.c.0.s8 %v6261
        %v6263 = vperm.slane %v6257, %v6262
        %v6265 = vunpack.c.l.s4 1934713408
        %v6266 = vunpack.c.0.s8 %v6265
        %v6267 = vperm.slane %v6259, %v6266
        %v6268 = vrot.slane %v6239, 4
        %v6269 = vsel %vm364, %v6268, %v6227
        %v6270 = vrot.slane %v6227, 4
        %v6271 = vsel %vm364, %v6239, %v6270
        %v6273 = vunpack.c.l.s4 1934713408
        %v6274 = vunpack.c.0.s8 %v6273
        %v6275 = vperm.slane %v6269, %v6274
        %v6277 = vunpack.c.l.s4 1934713408
        %v6278 = vunpack.c.0.s8 %v6277
        %v6279 = vperm.slane %v6271, %v6278
        %v6280 = vrot.slane %v6243, 4
        %v6281 = vsel %vm364, %v6280, %v6231
        %v6282 = vrot.slane %v6231, 4
        %v6283 = vsel %vm364, %v6243, %v6282
        %v6285 = vunpack.c.l.s4 1934713408
        %v6286 = vunpack.c.0.s8 %v6285
        %v6287 = vperm.slane %v6281, %v6286
        %v6289 = vunpack.c.l.s4 1934713408
        %v6290 = vunpack.c.0.s8 %v6289
        %v6291 = vperm.slane %v6283, %v6290
        %v6292 = vrot.slane %v6275, 4
        %v6293 = vsel %vm364, %v6292, %v6251
        %v6294 = vrot.slane %v6251, 4
        %v6295 = vsel %vm364, %v6275, %v6294
        %v6296 = vrot.slane %v6279, 4
        %v6297 = vsel %vm364, %v6296, %v6255
        %v6298 = vrot.slane %v6255, 4
        %v6299 = vsel %vm364, %v6279, %v6298
        %v6300 = vrot.slane %v6287, 4
        %v6301 = vsel %vm364, %v6300, %v6263
        %v6302 = vrot.slane %v6263, 4
        %v6303 = vsel %vm364, %v6287, %v6302
        %v6304 = vrot.slane %v6291, 4
        %v6305 = vsel %vm364, %v6304, %v6267
        %v6306 = vrot.slane %v6267, 4
        %v6307 = vsel %vm364, %v6291, %v6306
        %6312 = vrot.lane.b32.xlu0 %v5959, 16
        %v6313 = vpop.permute.xlu0 %6312
        %6314 = vrot.lane.b32.xlu0 %v6071, 16
        %v6315 = vpop.permute.xlu0 %6314
        %6316 = vrot.lane.b32.xlu0 %v6183, 16
        %v6317 = vpop.permute.xlu0 %6316
        %6318 = vrot.lane.b32.xlu0 %v6295, 16
        %v6319 = vpop.permute.xlu0 %6318
        %6328 = vrot.lane.b32.xlu0 %v5961, 32
        %v6329 = vpop.permute.xlu0 %6328
        %6330 = vrot.lane.b32.xlu0 %v6073, 32
        %v6331 = vpop.permute.xlu0 %6330
        %6332 = vrot.lane.b32.xlu0 %v6185, 32
        %v6333 = vpop.permute.xlu0 %6332
        %6334 = vrot.lane.b32.xlu0 %v6297, 32
        %v6335 = vpop.permute.xlu0 %6334
        %6344 = vrot.lane.b32.xlu0 %v5963, 48
        %v6345 = vpop.permute.xlu0 %6344
        %6346 = vrot.lane.b32.xlu0 %v6075, 48
        %v6347 = vpop.permute.xlu0 %6346
        %6348 = vrot.lane.b32.xlu0 %v6187, 48
        %v6349 = vpop.permute.xlu0 %6348
        %6350 = vrot.lane.b32.xlu0 %v6299, 48
        %v6351 = vpop.permute.xlu0 %6350
        %6360 = vrot.lane.b32.xlu0 %v5965, 64
        %v6361 = vpop.permute.xlu0 %6360
        %6362 = vrot.lane.b32.xlu0 %v6077, 64
        %v6363 = vpop.permute.xlu0 %6362
        %6364 = vrot.lane.b32.xlu0 %v6189, 64
        %v6365 = vpop.permute.xlu0 %6364
        %6366 = vrot.lane.b32.xlu0 %v6301, 64
        %v6367 = vpop.permute.xlu0 %6366
        %6376 = vrot.lane.b32.xlu0 %v5967, 80
        %v6377 = vpop.permute.xlu0 %6376
        %6378 = vrot.lane.b32.xlu0 %v6079, 80
        %v6379 = vpop.permute.xlu0 %6378
        %6380 = vrot.lane.b32.xlu0 %v6191, 80
        %v6381 = vpop.permute.xlu0 %6380
        %6382 = vrot.lane.b32.xlu0 %v6303, 80
        %v6383 = vpop.permute.xlu0 %6382
        %6392 = vrot.lane.b32.xlu0 %v5969, 96
        %v6393 = vpop.permute.xlu0 %6392
        %6394 = vrot.lane.b32.xlu0 %v6081, 96
        %v6395 = vpop.permute.xlu0 %6394
        %6396 = vrot.lane.b32.xlu0 %v6193, 96
        %v6397 = vpop.permute.xlu0 %6396
        %6398 = vrot.lane.b32.xlu0 %v6305, 96
        %v6399 = vpop.permute.xlu0 %6398
        %6408 = vrot.lane.b32.xlu0 %v5971, 112
        %v6409 = vpop.permute.xlu0 %6408
        %6410 = vrot.lane.b32.xlu0 %v6083, 112
        %v6411 = vpop.permute.xlu0 %6410
        %6412 = vrot.lane.b32.xlu0 %v6195, 112
        %v6413 = vpop.permute.xlu0 %6412
        %6414 = vrot.lane.b32.xlu0 %v6307, 112
        %v6415 = vpop.permute.xlu0 %6414
        %v6420 = vsel %vm465, %v5957, %v6313
        %v6421 = vsel %vm465, %v6069, %v6315
        %v6422 = vsel %vm465, %v6181, %v6317
        %v6423 = vsel %vm465, %v6293, %v6319
        %v6424 = vsel %vm467, %v6420, %v6329
        %v6425 = vsel %vm467, %v6421, %v6331
        %v6426 = vsel %vm467, %v6422, %v6333
        %v6427 = vsel %vm467, %v6423, %v6335
        %v6428 = vsel %vm469, %v6424, %v6345
        %v6429 = vsel %vm469, %v6425, %v6347
        %v6430 = vsel %vm469, %v6426, %v6349
        %v6431 = vsel %vm469, %v6427, %v6351
        %v6432 = vsel %vm471, %v6428, %v6361
        %v6433 = vsel %vm471, %v6429, %v6363
        %v6434 = vsel %vm471, %v6430, %v6365
        %v6435 = vsel %vm471, %v6431, %v6367
        %v6436 = vsel %vm473, %v6432, %v6377
        %v6437 = vsel %vm473, %v6433, %v6379
        %v6438 = vsel %vm473, %v6434, %v6381
        %v6439 = vsel %vm473, %v6435, %v6383
        %v6440 = vsel %vm475, %v6436, %v6393
        %v6441 = vsel %vm475, %v6437, %v6395
        %v6442 = vsel %vm475, %v6438, %v6397
        %v6443 = vsel %vm475, %v6439, %v6399
        %v6444 = vsel %vm477, %v6440, %v6409
        %v6445 = vsel %vm477, %v6441, %v6411
        %v6446 = vsel %vm477, %v6442, %v6413
        %v6447 = vsel %vm477, %v6443, %v6415
        %6448 = vst [vmem:[#allocation5 + $0x80] sm:$0xff] %v6444
        %6449 = vst [vmem:[#allocation5 + $0x88] sm:$0xff] %v6445
        %6450 = vst [vmem:[#allocation5 + $0x90] sm:$0xff] %v6446
        %6451 = vst [vmem:[#allocation5 + $0x98] sm:$0xff] %v6447
        %v6452 = vld [vmem:[#allocation3 + $0x1] sm:$0xff]
        %v6453 = vld [vmem:[#allocation3 + $0x11] sm:$0xff]
        %v6454 = vld [vmem:[#allocation3 + $0x21] sm:$0xff]
        %v6455 = vld [vmem:[#allocation3 + $0x31] sm:$0xff]
        %v6456 = vld [vmem:[#allocation3 + $0x41] sm:$0xff]
        %v6457 = vld [vmem:[#allocation3 + $0x51] sm:$0xff]
        %v6458 = vld [vmem:[#allocation3 + $0x61] sm:$0xff]
        %v6459 = vld [vmem:[#allocation3 + $0x71] sm:$0xff]
        %v6460 = vld [vmem:[#allocation3 + $0x81] sm:$0xff]
        %v6461 = vld [vmem:[#allocation3 + $0x91] sm:$0xff]
        %v6462 = vld [vmem:[#allocation3 + $0xa1] sm:$0xff]
        %v6463 = vld [vmem:[#allocation3 + $0xb1] sm:$0xff]
        %v6464 = vld [vmem:[#allocation3 + $0xc1] sm:$0xff]
        %v6465 = vld [vmem:[#allocation3 + $0xd1] sm:$0xff]
        %v6466 = vld [vmem:[#allocation3 + $0xe1] sm:$0xff]
        %v6467 = vld [vmem:[#allocation3 + $0xf1] sm:$0xff]
        %v6468 = vld [vmem:[#allocation3 + $0x101] sm:$0xff]
        %v6469 = vld [vmem:[#allocation3 + $0x111] sm:$0xff]
        %v6470 = vld [vmem:[#allocation3 + $0x121] sm:$0xff]
        %v6471 = vld [vmem:[#allocation3 + $0x131] sm:$0xff]
        %v6472 = vld [vmem:[#allocation3 + $0x141] sm:$0xff]
        %v6473 = vld [vmem:[#allocation3 + $0x151] sm:$0xff]
        %v6474 = vld [vmem:[#allocation3 + $0x161] sm:$0xff]
        %v6475 = vld [vmem:[#allocation3 + $0x171] sm:$0xff]
        %v6476 = vld [vmem:[#allocation3 + $0x181] sm:$0xff]
        %v6477 = vld [vmem:[#allocation3 + $0x191] sm:$0xff]
        %v6478 = vld [vmem:[#allocation3 + $0x1a1] sm:$0xff]
        %v6479 = vld [vmem:[#allocation3 + $0x1b1] sm:$0xff]
        %v6480 = vld [vmem:[#allocation3 + $0x1c1] sm:$0xff]
        %v6481 = vld [vmem:[#allocation3 + $0x1d1] sm:$0xff]
        %v6482 = vld [vmem:[#allocation3 + $0x1e1] sm:$0xff]
        %v6483 = vld [vmem:[#allocation3 + $0x1f1] sm:$0xff]
        %6516 = vrot.lane.b32.xlu0 %v6452, 126
        %v6517 = vpop.permute.xlu0 %6516
        %6518 = vrot.lane.b32.xlu0 %v6453, 126
        %v6519 = vpop.permute.xlu0 %6518
        %6520 = vrot.lane.b32.xlu0 %v6454, 126
        %v6521 = vpop.permute.xlu0 %6520
        %6522 = vrot.lane.b32.xlu0 %v6455, 126
        %v6523 = vpop.permute.xlu0 %6522
        %6524 = vrot.lane.b32.xlu0 %v6456, 126
        %v6525 = vpop.permute.xlu0 %6524
        %6526 = vrot.lane.b32.xlu0 %v6457, 126
        %v6527 = vpop.permute.xlu0 %6526
        %6528 = vrot.lane.b32.xlu0 %v6458, 126
        %v6529 = vpop.permute.xlu0 %6528
        %6530 = vrot.lane.b32.xlu0 %v6459, 126
        %v6531 = vpop.permute.xlu0 %6530
        %6532 = vrot.lane.b32.xlu0 %v6460, 126
        %v6533 = vpop.permute.xlu0 %6532
        %6534 = vrot.lane.b32.xlu0 %v6461, 126
        %v6535 = vpop.permute.xlu0 %6534
        %6536 = vrot.lane.b32.xlu0 %v6462, 126
        %v6537 = vpop.permute.xlu0 %6536
        %6538 = vrot.lane.b32.xlu0 %v6463, 126
        %v6539 = vpop.permute.xlu0 %6538
        %6540 = vrot.lane.b32.xlu0 %v6464, 126
        %v6541 = vpop.permute.xlu0 %6540
        %6542 = vrot.lane.b32.xlu0 %v6465, 126
        %v6543 = vpop.permute.xlu0 %6542
        %6544 = vrot.lane.b32.xlu0 %v6466, 126
        %v6545 = vpop.permute.xlu0 %6544
        %6546 = vrot.lane.b32.xlu0 %v6467, 126
        %v6547 = vpop.permute.xlu0 %6546
        %6548 = vrot.lane.b32.xlu0 %v6468, 126
        %v6549 = vpop.permute.xlu0 %6548
        %6550 = vrot.lane.b32.xlu0 %v6469, 126
        %v6551 = vpop.permute.xlu0 %6550
        %6552 = vrot.lane.b32.xlu0 %v6470, 126
        %v6553 = vpop.permute.xlu0 %6552
        %6554 = vrot.lane.b32.xlu0 %v6471, 126
        %v6555 = vpop.permute.xlu0 %6554
        %6556 = vrot.lane.b32.xlu0 %v6472, 126
        %v6557 = vpop.permute.xlu0 %6556
        %6558 = vrot.lane.b32.xlu0 %v6473, 126
        %v6559 = vpop.permute.xlu0 %6558
        %6560 = vrot.lane.b32.xlu0 %v6474, 126
        %v6561 = vpop.permute.xlu0 %6560
        %6562 = vrot.lane.b32.xlu0 %v6475, 126
        %v6563 = vpop.permute.xlu0 %6562
        %6564 = vrot.lane.b32.xlu0 %v6476, 126
        %v6565 = vpop.permute.xlu0 %6564
        %6566 = vrot.lane.b32.xlu0 %v6477, 126
        %v6567 = vpop.permute.xlu0 %6566
        %6568 = vrot.lane.b32.xlu0 %v6478, 126
        %v6569 = vpop.permute.xlu0 %6568
        %6570 = vrot.lane.b32.xlu0 %v6479, 126
        %v6571 = vpop.permute.xlu0 %6570
        %6572 = vrot.lane.b32.xlu0 %v6480, 126
        %v6573 = vpop.permute.xlu0 %6572
        %6574 = vrot.lane.b32.xlu0 %v6481, 126
        %v6575 = vpop.permute.xlu0 %6574
        %6576 = vrot.lane.b32.xlu0 %v6482, 126
        %v6577 = vpop.permute.xlu0 %6576
        %6578 = vrot.lane.b32.xlu0 %v6483, 126
        %v6579 = vpop.permute.xlu0 %6578
        %v6612 = vrot.slane %v6521, 4
        %v6613 = vsel %vm364, %v6612, %v6517
        %v6614 = vrot.slane %v6517, 4
        %v6615 = vsel %vm364, %v6521, %v6614
        %v6617 = vunpack.c.l.s4 1983009808
        %v6618 = vunpack.c.0.s8 %v6617
        %v6619 = vperm.slane %v6613, %v6618
        %v6621 = vunpack.c.l.s4 1983009808
        %v6622 = vunpack.c.0.s8 %v6621
        %v6623 = vperm.slane %v6615, %v6622
        %v6624 = vrot.slane %v6523, 4
        %v6625 = vsel %vm364, %v6624, %v6519
        %v6626 = vrot.slane %v6519, 4
        %v6627 = vsel %vm364, %v6523, %v6626
        %v6629 = vunpack.c.l.s4 1983009808
        %v6630 = vunpack.c.0.s8 %v6629
        %v6631 = vperm.slane %v6625, %v6630
        %v6633 = vunpack.c.l.s4 1983009808
        %v6634 = vunpack.c.0.s8 %v6633
        %v6635 = vperm.slane %v6627, %v6634
        %v6636 = vrot.slane %v6529, 4
        %v6637 = vsel %vm364, %v6636, %v6525
        %v6638 = vrot.slane %v6525, 4
        %v6639 = vsel %vm364, %v6529, %v6638
        %v6641 = vunpack.c.l.s4 1983009808
        %v6642 = vunpack.c.0.s8 %v6641
        %v6643 = vperm.slane %v6637, %v6642
        %v6645 = vunpack.c.l.s4 1983009808
        %v6646 = vunpack.c.0.s8 %v6645
        %v6647 = vperm.slane %v6639, %v6646
        %v6648 = vrot.slane %v6531, 4
        %v6649 = vsel %vm364, %v6648, %v6527
        %v6650 = vrot.slane %v6527, 4
        %v6651 = vsel %vm364, %v6531, %v6650
        %v6653 = vunpack.c.l.s4 1983009808
        %v6654 = vunpack.c.0.s8 %v6653
        %v6655 = vperm.slane %v6649, %v6654
        %v6657 = vunpack.c.l.s4 1983009808
        %v6658 = vunpack.c.0.s8 %v6657
        %v6659 = vperm.slane %v6651, %v6658
        %v6660 = vrot.slane %v6631, 4
        %v6661 = vsel %vm364, %v6660, %v6619
        %v6662 = vrot.slane %v6619, 4
        %v6663 = vsel %vm364, %v6631, %v6662
        %v6665 = vunpack.c.l.s4 1934713408
        %v6666 = vunpack.c.0.s8 %v6665
        %v6667 = vperm.slane %v6661, %v6666
        %v6669 = vunpack.c.l.s4 1934713408
        %v6670 = vunpack.c.0.s8 %v6669
        %v6671 = vperm.slane %v6663, %v6670
        %v6672 = vrot.slane %v6635, 4
        %v6673 = vsel %vm364, %v6672, %v6623
        %v6674 = vrot.slane %v6623, 4
        %v6675 = vsel %vm364, %v6635, %v6674
        %v6677 = vunpack.c.l.s4 1934713408
        %v6678 = vunpack.c.0.s8 %v6677
        %v6679 = vperm.slane %v6673, %v6678
        %v6681 = vunpack.c.l.s4 1934713408
        %v6682 = vunpack.c.0.s8 %v6681
        %v6683 = vperm.slane %v6675, %v6682
        %v6684 = vrot.slane %v6655, 4
        %v6685 = vsel %vm364, %v6684, %v6643
        %v6686 = vrot.slane %v6643, 4
        %v6687 = vsel %vm364, %v6655, %v6686
        %v6689 = vunpack.c.l.s4 1934713408
        %v6690 = vunpack.c.0.s8 %v6689
        %v6691 = vperm.slane %v6685, %v6690
        %v6693 = vunpack.c.l.s4 1934713408
        %v6694 = vunpack.c.0.s8 %v6693
        %v6695 = vperm.slane %v6687, %v6694
        %v6696 = vrot.slane %v6659, 4
        %v6697 = vsel %vm364, %v6696, %v6647
        %v6698 = vrot.slane %v6647, 4
        %v6699 = vsel %vm364, %v6659, %v6698
        %v6701 = vunpack.c.l.s4 1934713408
        %v6702 = vunpack.c.0.s8 %v6701
        %v6703 = vperm.slane %v6697, %v6702
        %v6705 = vunpack.c.l.s4 1934713408
        %v6706 = vunpack.c.0.s8 %v6705
        %v6707 = vperm.slane %v6699, %v6706
        %v6708 = vrot.slane %v6691, 4
        %v6709 = vsel %vm364, %v6708, %v6667
        %v6710 = vrot.slane %v6667, 4
        %v6711 = vsel %vm364, %v6691, %v6710
        %v6712 = vrot.slane %v6695, 4
        %v6713 = vsel %vm364, %v6712, %v6671
        %v6714 = vrot.slane %v6671, 4
        %v6715 = vsel %vm364, %v6695, %v6714
        %v6716 = vrot.slane %v6703, 4
        %v6717 = vsel %vm364, %v6716, %v6679
        %v6718 = vrot.slane %v6679, 4
        %v6719 = vsel %vm364, %v6703, %v6718
        %v6720 = vrot.slane %v6707, 4
        %v6721 = vsel %vm364, %v6720, %v6683
        %v6722 = vrot.slane %v6683, 4
        %v6723 = vsel %vm364, %v6707, %v6722
        %v6724 = vrot.slane %v6537, 4
        %v6725 = vsel %vm364, %v6724, %v6533
        %v6726 = vrot.slane %v6533, 4
        %v6727 = vsel %vm364, %v6537, %v6726
        %v6729 = vunpack.c.l.s4 1983009808
        %v6730 = vunpack.c.0.s8 %v6729
        %v6731 = vperm.slane %v6725, %v6730
        %v6733 = vunpack.c.l.s4 1983009808
        %v6734 = vunpack.c.0.s8 %v6733
        %v6735 = vperm.slane %v6727, %v6734
        %v6736 = vrot.slane %v6539, 4
        %v6737 = vsel %vm364, %v6736, %v6535
        %v6738 = vrot.slane %v6535, 4
        %v6739 = vsel %vm364, %v6539, %v6738
        %v6741 = vunpack.c.l.s4 1983009808
        %v6742 = vunpack.c.0.s8 %v6741
        %v6743 = vperm.slane %v6737, %v6742
        %v6745 = vunpack.c.l.s4 1983009808
        %v6746 = vunpack.c.0.s8 %v6745
        %v6747 = vperm.slane %v6739, %v6746
        %v6748 = vrot.slane %v6545, 4
        %v6749 = vsel %vm364, %v6748, %v6541
        %v6750 = vrot.slane %v6541, 4
        %v6751 = vsel %vm364, %v6545, %v6750
        %v6753 = vunpack.c.l.s4 1983009808
        %v6754 = vunpack.c.0.s8 %v6753
        %v6755 = vperm.slane %v6749, %v6754
        %v6757 = vunpack.c.l.s4 1983009808
        %v6758 = vunpack.c.0.s8 %v6757
        %v6759 = vperm.slane %v6751, %v6758
        %v6760 = vrot.slane %v6547, 4
        %v6761 = vsel %vm364, %v6760, %v6543
        %v6762 = vrot.slane %v6543, 4
        %v6763 = vsel %vm364, %v6547, %v6762
        %v6765 = vunpack.c.l.s4 1983009808
        %v6766 = vunpack.c.0.s8 %v6765
        %v6767 = vperm.slane %v6761, %v6766
        %v6769 = vunpack.c.l.s4 1983009808
        %v6770 = vunpack.c.0.s8 %v6769
        %v6771 = vperm.slane %v6763, %v6770
        %v6772 = vrot.slane %v6743, 4
        %v6773 = vsel %vm364, %v6772, %v6731
        %v6774 = vrot.slane %v6731, 4
        %v6775 = vsel %vm364, %v6743, %v6774
        %v6777 = vunpack.c.l.s4 1934713408
        %v6778 = vunpack.c.0.s8 %v6777
        %v6779 = vperm.slane %v6773, %v6778
        %v6781 = vunpack.c.l.s4 1934713408
        %v6782 = vunpack.c.0.s8 %v6781
        %v6783 = vperm.slane %v6775, %v6782
        %v6784 = vrot.slane %v6747, 4
        %v6785 = vsel %vm364, %v6784, %v6735
        %v6786 = vrot.slane %v6735, 4
        %v6787 = vsel %vm364, %v6747, %v6786
        %v6789 = vunpack.c.l.s4 1934713408
        %v6790 = vunpack.c.0.s8 %v6789
        %v6791 = vperm.slane %v6785, %v6790
        %v6793 = vunpack.c.l.s4 1934713408
        %v6794 = vunpack.c.0.s8 %v6793
        %v6795 = vperm.slane %v6787, %v6794
        %v6796 = vrot.slane %v6767, 4
        %v6797 = vsel %vm364, %v6796, %v6755
        %v6798 = vrot.slane %v6755, 4
        %v6799 = vsel %vm364, %v6767, %v6798
        %v6801 = vunpack.c.l.s4 1934713408
        %v6802 = vunpack.c.0.s8 %v6801
        %v6803 = vperm.slane %v6797, %v6802
        %v6805 = vunpack.c.l.s4 1934713408
        %v6806 = vunpack.c.0.s8 %v6805
        %v6807 = vperm.slane %v6799, %v6806
        %v6808 = vrot.slane %v6771, 4
        %v6809 = vsel %vm364, %v6808, %v6759
        %v6810 = vrot.slane %v6759, 4
        %v6811 = vsel %vm364, %v6771, %v6810
        %v6813 = vunpack.c.l.s4 1934713408
        %v6814 = vunpack.c.0.s8 %v6813
        %v6815 = vperm.slane %v6809, %v6814
        %v6817 = vunpack.c.l.s4 1934713408
        %v6818 = vunpack.c.0.s8 %v6817
        %v6819 = vperm.slane %v6811, %v6818
        %v6820 = vrot.slane %v6803, 4
        %v6821 = vsel %vm364, %v6820, %v6779
        %v6822 = vrot.slane %v6779, 4
        %v6823 = vsel %vm364, %v6803, %v6822
        %v6824 = vrot.slane %v6807, 4
        %v6825 = vsel %vm364, %v6824, %v6783
        %v6826 = vrot.slane %v6783, 4
        %v6827 = vsel %vm364, %v6807, %v6826
        %v6828 = vrot.slane %v6815, 4
        %v6829 = vsel %vm364, %v6828, %v6791
        %v6830 = vrot.slane %v6791, 4
        %v6831 = vsel %vm364, %v6815, %v6830
        %v6832 = vrot.slane %v6819, 4
        %v6833 = vsel %vm364, %v6832, %v6795
        %v6834 = vrot.slane %v6795, 4
        %v6835 = vsel %vm364, %v6819, %v6834
        %v6836 = vrot.slane %v6553, 4
        %v6837 = vsel %vm364, %v6836, %v6549
        %v6838 = vrot.slane %v6549, 4
        %v6839 = vsel %vm364, %v6553, %v6838
        %v6841 = vunpack.c.l.s4 1983009808
        %v6842 = vunpack.c.0.s8 %v6841
        %v6843 = vperm.slane %v6837, %v6842
        %v6845 = vunpack.c.l.s4 1983009808
        %v6846 = vunpack.c.0.s8 %v6845
        %v6847 = vperm.slane %v6839, %v6846
        %v6848 = vrot.slane %v6555, 4
        %v6849 = vsel %vm364, %v6848, %v6551
        %v6850 = vrot.slane %v6551, 4
        %v6851 = vsel %vm364, %v6555, %v6850
        %v6853 = vunpack.c.l.s4 1983009808
        %v6854 = vunpack.c.0.s8 %v6853
        %v6855 = vperm.slane %v6849, %v6854
        %v6857 = vunpack.c.l.s4 1983009808
        %v6858 = vunpack.c.0.s8 %v6857
        %v6859 = vperm.slane %v6851, %v6858
        %v6860 = vrot.slane %v6561, 4
        %v6861 = vsel %vm364, %v6860, %v6557
        %v6862 = vrot.slane %v6557, 4
        %v6863 = vsel %vm364, %v6561, %v6862
        %v6865 = vunpack.c.l.s4 1983009808
        %v6866 = vunpack.c.0.s8 %v6865
        %v6867 = vperm.slane %v6861, %v6866
        %v6869 = vunpack.c.l.s4 1983009808
        %v6870 = vunpack.c.0.s8 %v6869
        %v6871 = vperm.slane %v6863, %v6870
        %v6872 = vrot.slane %v6563, 4
        %v6873 = vsel %vm364, %v6872, %v6559
        %v6874 = vrot.slane %v6559, 4
        %v6875 = vsel %vm364, %v6563, %v6874
        %v6877 = vunpack.c.l.s4 1983009808
        %v6878 = vunpack.c.0.s8 %v6877
        %v6879 = vperm.slane %v6873, %v6878
        %v6881 = vunpack.c.l.s4 1983009808
        %v6882 = vunpack.c.0.s8 %v6881
        %v6883 = vperm.slane %v6875, %v6882
        %v6884 = vrot.slane %v6855, 4
        %v6885 = vsel %vm364, %v6884, %v6843
        %v6886 = vrot.slane %v6843, 4
        %v6887 = vsel %vm364, %v6855, %v6886
        %v6889 = vunpack.c.l.s4 1934713408
        %v6890 = vunpack.c.0.s8 %v6889
        %v6891 = vperm.slane %v6885, %v6890
        %v6893 = vunpack.c.l.s4 1934713408
        %v6894 = vunpack.c.0.s8 %v6893
        %v6895 = vperm.slane %v6887, %v6894
        %v6896 = vrot.slane %v6859, 4
        %v6897 = vsel %vm364, %v6896, %v6847
        %v6898 = vrot.slane %v6847, 4
        %v6899 = vsel %vm364, %v6859, %v6898
        %v6901 = vunpack.c.l.s4 1934713408
        %v6902 = vunpack.c.0.s8 %v6901
        %v6903 = vperm.slane %v6897, %v6902
        %v6905 = vunpack.c.l.s4 1934713408
        %v6906 = vunpack.c.0.s8 %v6905
        %v6907 = vperm.slane %v6899, %v6906
        %v6908 = vrot.slane %v6879, 4
        %v6909 = vsel %vm364, %v6908, %v6867
        %v6910 = vrot.slane %v6867, 4
        %v6911 = vsel %vm364, %v6879, %v6910
        %v6913 = vunpack.c.l.s4 1934713408
        %v6914 = vunpack.c.0.s8 %v6913
        %v6915 = vperm.slane %v6909, %v6914
        %v6917 = vunpack.c.l.s4 1934713408
        %v6918 = vunpack.c.0.s8 %v6917
        %v6919 = vperm.slane %v6911, %v6918
        %v6920 = vrot.slane %v6883, 4
        %v6921 = vsel %vm364, %v6920, %v6871
        %v6922 = vrot.slane %v6871, 4
        %v6923 = vsel %vm364, %v6883, %v6922
        %v6925 = vunpack.c.l.s4 1934713408
        %v6926 = vunpack.c.0.s8 %v6925
        %v6927 = vperm.slane %v6921, %v6926
        %v6929 = vunpack.c.l.s4 1934713408
        %v6930 = vunpack.c.0.s8 %v6929
        %v6931 = vperm.slane %v6923, %v6930
        %v6932 = vrot.slane %v6915, 4
        %v6933 = vsel %vm364, %v6932, %v6891
        %v6934 = vrot.slane %v6891, 4
        %v6935 = vsel %vm364, %v6915, %v6934
        %v6936 = vrot.slane %v6919, 4
        %v6937 = vsel %vm364, %v6936, %v6895
        %v6938 = vrot.slane %v6895, 4
        %v6939 = vsel %vm364, %v6919, %v6938
        %v6940 = vrot.slane %v6927, 4
        %v6941 = vsel %vm364, %v6940, %v6903
        %v6942 = vrot.slane %v6903, 4
        %v6943 = vsel %vm364, %v6927, %v6942
        %v6944 = vrot.slane %v6931, 4
        %v6945 = vsel %vm364, %v6944, %v6907
        %v6946 = vrot.slane %v6907, 4
        %v6947 = vsel %vm364, %v6931, %v6946
        %v6948 = vrot.slane %v6569, 4
        %v6949 = vsel %vm364, %v6948, %v6565
        %v6950 = vrot.slane %v6565, 4
        %v6951 = vsel %vm364, %v6569, %v6950
        %v6953 = vunpack.c.l.s4 1983009808
        %v6954 = vunpack.c.0.s8 %v6953
        %v6955 = vperm.slane %v6949, %v6954
        %v6957 = vunpack.c.l.s4 1983009808
        %v6958 = vunpack.c.0.s8 %v6957
        %v6959 = vperm.slane %v6951, %v6958
        %v6960 = vrot.slane %v6571, 4
        %v6961 = vsel %vm364, %v6960, %v6567
        %v6962 = vrot.slane %v6567, 4
        %v6963 = vsel %vm364, %v6571, %v6962
        %v6965 = vunpack.c.l.s4 1983009808
        %v6966 = vunpack.c.0.s8 %v6965
        %v6967 = vperm.slane %v6961, %v6966
        %v6969 = vunpack.c.l.s4 1983009808
        %v6970 = vunpack.c.0.s8 %v6969
        %v6971 = vperm.slane %v6963, %v6970
        %v6972 = vrot.slane %v6577, 4
        %v6973 = vsel %vm364, %v6972, %v6573
        %v6974 = vrot.slane %v6573, 4
        %v6975 = vsel %vm364, %v6577, %v6974
        %v6977 = vunpack.c.l.s4 1983009808
        %v6978 = vunpack.c.0.s8 %v6977
        %v6979 = vperm.slane %v6973, %v6978
        %v6981 = vunpack.c.l.s4 1983009808
        %v6982 = vunpack.c.0.s8 %v6981
        %v6983 = vperm.slane %v6975, %v6982
        %v6984 = vrot.slane %v6579, 4
        %v6985 = vsel %vm364, %v6984, %v6575
        %v6986 = vrot.slane %v6575, 4
        %v6987 = vsel %vm364, %v6579, %v6986
        %v6989 = vunpack.c.l.s4 1983009808
        %v6990 = vunpack.c.0.s8 %v6989
        %v6991 = vperm.slane %v6985, %v6990
        %v6993 = vunpack.c.l.s4 1983009808
        %v6994 = vunpack.c.0.s8 %v6993
        %v6995 = vperm.slane %v6987, %v6994
        %v6996 = vrot.slane %v6967, 4
        %v6997 = vsel %vm364, %v6996, %v6955
        %v6998 = vrot.slane %v6955, 4
        %v6999 = vsel %vm364, %v6967, %v6998
        %v7001 = vunpack.c.l.s4 1934713408
        %v7002 = vunpack.c.0.s8 %v7001
        %v7003 = vperm.slane %v6997, %v7002
        %v7005 = vunpack.c.l.s4 1934713408
        %v7006 = vunpack.c.0.s8 %v7005
        %v7007 = vperm.slane %v6999, %v7006
        %v7008 = vrot.slane %v6971, 4
        %v7009 = vsel %vm364, %v7008, %v6959
        %v7010 = vrot.slane %v6959, 4
        %v7011 = vsel %vm364, %v6971, %v7010
        %v7013 = vunpack.c.l.s4 1934713408
        %v7014 = vunpack.c.0.s8 %v7013
        %v7015 = vperm.slane %v7009, %v7014
        %v7017 = vunpack.c.l.s4 1934713408
        %v7018 = vunpack.c.0.s8 %v7017
        %v7019 = vperm.slane %v7011, %v7018
        %v7020 = vrot.slane %v6991, 4
        %v7021 = vsel %vm364, %v7020, %v6979
        %v7022 = vrot.slane %v6979, 4
        %v7023 = vsel %vm364, %v6991, %v7022
        %v7025 = vunpack.c.l.s4 1934713408
        %v7026 = vunpack.c.0.s8 %v7025
        %v7027 = vperm.slane %v7021, %v7026
        %v7029 = vunpack.c.l.s4 1934713408
        %v7030 = vunpack.c.0.s8 %v7029
        %v7031 = vperm.slane %v7023, %v7030
        %v7032 = vrot.slane %v6995, 4
        %v7033 = vsel %vm364, %v7032, %v6983
        %v7034 = vrot.slane %v6983, 4
        %v7035 = vsel %vm364, %v6995, %v7034
        %v7037 = vunpack.c.l.s4 1934713408
        %v7038 = vunpack.c.0.s8 %v7037
        %v7039 = vperm.slane %v7033, %v7038
        %v7041 = vunpack.c.l.s4 1934713408
        %v7042 = vunpack.c.0.s8 %v7041
        %v7043 = vperm.slane %v7035, %v7042
        %v7044 = vrot.slane %v7027, 4
        %v7045 = vsel %vm364, %v7044, %v7003
        %v7046 = vrot.slane %v7003, 4
        %v7047 = vsel %vm364, %v7027, %v7046
        %v7048 = vrot.slane %v7031, 4
        %v7049 = vsel %vm364, %v7048, %v7007
        %v7050 = vrot.slane %v7007, 4
        %v7051 = vsel %vm364, %v7031, %v7050
        %v7052 = vrot.slane %v7039, 4
        %v7053 = vsel %vm364, %v7052, %v7015
        %v7054 = vrot.slane %v7015, 4
        %v7055 = vsel %vm364, %v7039, %v7054
        %v7056 = vrot.slane %v7043, 4
        %v7057 = vsel %vm364, %v7056, %v7019
        %v7058 = vrot.slane %v7019, 4
        %v7059 = vsel %vm364, %v7043, %v7058
        %7064 = vrot.lane.b32.xlu0 %v6711, 16
        %v7065 = vpop.permute.xlu0 %7064
        %7066 = vrot.lane.b32.xlu0 %v6823, 16
        %v7067 = vpop.permute.xlu0 %7066
        %7068 = vrot.lane.b32.xlu0 %v6935, 16
        %v7069 = vpop.permute.xlu0 %7068
        %7070 = vrot.lane.b32.xlu0 %v7047, 16
        %v7071 = vpop.permute.xlu0 %7070
        %7080 = vrot.lane.b32.xlu0 %v6713, 32
        %v7081 = vpop.permute.xlu0 %7080
        %7082 = vrot.lane.b32.xlu0 %v6825, 32
        %v7083 = vpop.permute.xlu0 %7082
        %7084 = vrot.lane.b32.xlu0 %v6937, 32
        %v7085 = vpop.permute.xlu0 %7084
        %7086 = vrot.lane.b32.xlu0 %v7049, 32
        %v7087 = vpop.permute.xlu0 %7086
        %7096 = vrot.lane.b32.xlu0 %v6715, 48
        %v7097 = vpop.permute.xlu0 %7096
        %7098 = vrot.lane.b32.xlu0 %v6827, 48
        %v7099 = vpop.permute.xlu0 %7098
        %7100 = vrot.lane.b32.xlu0 %v6939, 48
        %v7101 = vpop.permute.xlu0 %7100
        %7102 = vrot.lane.b32.xlu0 %v7051, 48
        %v7103 = vpop.permute.xlu0 %7102
        %7112 = vrot.lane.b32.xlu0 %v6717, 64
        %v7113 = vpop.permute.xlu0 %7112
        %7114 = vrot.lane.b32.xlu0 %v6829, 64
        %v7115 = vpop.permute.xlu0 %7114
        %7116 = vrot.lane.b32.xlu0 %v6941, 64
        %v7117 = vpop.permute.xlu0 %7116
        %7118 = vrot.lane.b32.xlu0 %v7053, 64
        %v7119 = vpop.permute.xlu0 %7118
        %7128 = vrot.lane.b32.xlu0 %v6719, 80
        %v7129 = vpop.permute.xlu0 %7128
        %7130 = vrot.lane.b32.xlu0 %v6831, 80
        %v7131 = vpop.permute.xlu0 %7130
        %7132 = vrot.lane.b32.xlu0 %v6943, 80
        %v7133 = vpop.permute.xlu0 %7132
        %7134 = vrot.lane.b32.xlu0 %v7055, 80
        %v7135 = vpop.permute.xlu0 %7134
        %7144 = vrot.lane.b32.xlu0 %v6721, 96
        %v7145 = vpop.permute.xlu0 %7144
        %7146 = vrot.lane.b32.xlu0 %v6833, 96
        %v7147 = vpop.permute.xlu0 %7146
        %7148 = vrot.lane.b32.xlu0 %v6945, 96
        %v7149 = vpop.permute.xlu0 %7148
        %7150 = vrot.lane.b32.xlu0 %v7057, 96
        %v7151 = vpop.permute.xlu0 %7150
        %7160 = vrot.lane.b32.xlu0 %v6723, 112
        %v7161 = vpop.permute.xlu0 %7160
        %7162 = vrot.lane.b32.xlu0 %v6835, 112
        %v7163 = vpop.permute.xlu0 %7162
        %7164 = vrot.lane.b32.xlu0 %v6947, 112
        %v7165 = vpop.permute.xlu0 %7164
        %7166 = vrot.lane.b32.xlu0 %v7059, 112
        %v7167 = vpop.permute.xlu0 %7166
        %v7172 = vsel %vm465, %v6709, %v7065
        %v7173 = vsel %vm465, %v6821, %v7067
        %v7174 = vsel %vm465, %v6933, %v7069
        %v7175 = vsel %vm465, %v7045, %v7071
        %v7176 = vsel %vm467, %v7172, %v7081
        %v7177 = vsel %vm467, %v7173, %v7083
        %v7178 = vsel %vm467, %v7174, %v7085
        %v7179 = vsel %vm467, %v7175, %v7087
        %v7180 = vsel %vm469, %v7176, %v7097
        %v7181 = vsel %vm469, %v7177, %v7099
        %v7182 = vsel %vm469, %v7178, %v7101
        %v7183 = vsel %vm469, %v7179, %v7103
        %v7184 = vsel %vm471, %v7180, %v7113
        %v7185 = vsel %vm471, %v7181, %v7115
        %v7186 = vsel %vm471, %v7182, %v7117
        %v7187 = vsel %vm471, %v7183, %v7119
        %v7188 = vsel %vm473, %v7184, %v7129
        %v7189 = vsel %vm473, %v7185, %v7131
        %v7190 = vsel %vm473, %v7186, %v7133
        %v7191 = vsel %vm473, %v7187, %v7135
        %v7192 = vsel %vm475, %v7188, %v7145
        %v7193 = vsel %vm475, %v7189, %v7147
        %v7194 = vsel %vm475, %v7190, %v7149
        %v7195 = vsel %vm475, %v7191, %v7151
        %v7196 = vsel %vm477, %v7192, %v7161
        %v7197 = vsel %vm477, %v7193, %v7163
        %v7198 = vsel %vm477, %v7194, %v7165
        %v7199 = vsel %vm477, %v7195, %v7167
        %7200 = vst [vmem:[#allocation5 + $0xa0] sm:$0xff] %v7196
        %7201 = vst [vmem:[#allocation5 + $0xa8] sm:$0xff] %v7197
        %7202 = vst [vmem:[#allocation5 + $0xb0] sm:$0xff] %v7198
        %7203 = vst [vmem:[#allocation5 + $0xb8] sm:$0xff] %v7199
        %v7204 = vld [vmem:[#allocation3 + $0x2] sm:$0xff]
        %v7205 = vld [vmem:[#allocation3 + $0x12] sm:$0xff]
        %v7206 = vld [vmem:[#allocation3 + $0x22] sm:$0xff]
        %v7207 = vld [vmem:[#allocation3 + $0x32] sm:$0xff]
        %v7208 = vld [vmem:[#allocation3 + $0x42] sm:$0xff]
        %v7209 = vld [vmem:[#allocation3 + $0x52] sm:$0xff]
        %v7210 = vld [vmem:[#allocation3 + $0x62] sm:$0xff]
        %v7211 = vld [vmem:[#allocation3 + $0x72] sm:$0xff]
        %v7212 = vld [vmem:[#allocation3 + $0x82] sm:$0xff]
        %v7213 = vld [vmem:[#allocation3 + $0x92] sm:$0xff]
        %v7214 = vld [vmem:[#allocation3 + $0xa2] sm:$0xff]
        %v7215 = vld [vmem:[#allocation3 + $0xb2] sm:$0xff]
        %v7216 = vld [vmem:[#allocation3 + $0xc2] sm:$0xff]
        %v7217 = vld [vmem:[#allocation3 + $0xd2] sm:$0xff]
        %v7218 = vld [vmem:[#allocation3 + $0xe2] sm:$0xff]
        %v7219 = vld [vmem:[#allocation3 + $0xf2] sm:$0xff]
        %v7220 = vld [vmem:[#allocation3 + $0x102] sm:$0xff]
        %v7221 = vld [vmem:[#allocation3 + $0x112] sm:$0xff]
        %v7222 = vld [vmem:[#allocation3 + $0x122] sm:$0xff]
        %v7223 = vld [vmem:[#allocation3 + $0x132] sm:$0xff]
        %v7224 = vld [vmem:[#allocation3 + $0x142] sm:$0xff]
        %v7225 = vld [vmem:[#allocation3 + $0x152] sm:$0xff]
        %v7226 = vld [vmem:[#allocation3 + $0x162] sm:$0xff]
        %v7227 = vld [vmem:[#allocation3 + $0x172] sm:$0xff]
        %v7228 = vld [vmem:[#allocation3 + $0x182] sm:$0xff]
        %v7229 = vld [vmem:[#allocation3 + $0x192] sm:$0xff]
        %v7230 = vld [vmem:[#allocation3 + $0x1a2] sm:$0xff]
        %v7231 = vld [vmem:[#allocation3 + $0x1b2] sm:$0xff]
        %v7232 = vld [vmem:[#allocation3 + $0x1c2] sm:$0xff]
        %v7233 = vld [vmem:[#allocation3 + $0x1d2] sm:$0xff]
        %v7234 = vld [vmem:[#allocation3 + $0x1e2] sm:$0xff]
        %v7235 = vld [vmem:[#allocation3 + $0x1f2] sm:$0xff]
        %v7236 = vrot.slane %v7206, 4
        %v7237 = vsel %vm364, %v7236, %v7204
        %v7238 = vrot.slane %v7204, 4
        %v7239 = vsel %vm364, %v7206, %v7238
        %v7241 = vunpack.c.l.s4 1983009808
        %v7242 = vunpack.c.0.s8 %v7241
        %v7243 = vperm.slane %v7237, %v7242
        %v7245 = vunpack.c.l.s4 1983009808
        %v7246 = vunpack.c.0.s8 %v7245
        %v7247 = vperm.slane %v7239, %v7246
        %v7248 = vrot.slane %v7207, 4
        %v7249 = vsel %vm364, %v7248, %v7205
        %v7250 = vrot.slane %v7205, 4
        %v7251 = vsel %vm364, %v7207, %v7250
        %v7253 = vunpack.c.l.s4 1983009808
        %v7254 = vunpack.c.0.s8 %v7253
        %v7255 = vperm.slane %v7249, %v7254
        %v7257 = vunpack.c.l.s4 1983009808
        %v7258 = vunpack.c.0.s8 %v7257
        %v7259 = vperm.slane %v7251, %v7258
        %v7260 = vrot.slane %v7210, 4
        %v7261 = vsel %vm364, %v7260, %v7208
        %v7262 = vrot.slane %v7208, 4
        %v7263 = vsel %vm364, %v7210, %v7262
        %v7265 = vunpack.c.l.s4 1983009808
        %v7266 = vunpack.c.0.s8 %v7265
        %v7267 = vperm.slane %v7261, %v7266
        %v7269 = vunpack.c.l.s4 1983009808
        %v7270 = vunpack.c.0.s8 %v7269
        %v7271 = vperm.slane %v7263, %v7270
        %v7272 = vrot.slane %v7211, 4
        %v7273 = vsel %vm364, %v7272, %v7209
        %v7274 = vrot.slane %v7209, 4
        %v7275 = vsel %vm364, %v7211, %v7274
        %v7277 = vunpack.c.l.s4 1983009808
        %v7278 = vunpack.c.0.s8 %v7277
        %v7279 = vperm.slane %v7273, %v7278
        %v7281 = vunpack.c.l.s4 1983009808
        %v7282 = vunpack.c.0.s8 %v7281
        %v7283 = vperm.slane %v7275, %v7282
        %v7284 = vrot.slane %v7255, 4
        %v7285 = vsel %vm364, %v7284, %v7243
        %v7286 = vrot.slane %v7243, 4
        %v7287 = vsel %vm364, %v7255, %v7286
        %v7289 = vunpack.c.l.s4 1934713408
        %v7290 = vunpack.c.0.s8 %v7289
        %v7291 = vperm.slane %v7285, %v7290
        %v7293 = vunpack.c.l.s4 1934713408
        %v7294 = vunpack.c.0.s8 %v7293
        %v7295 = vperm.slane %v7287, %v7294
        %v7296 = vrot.slane %v7259, 4
        %v7297 = vsel %vm364, %v7296, %v7247
        %v7298 = vrot.slane %v7247, 4
        %v7299 = vsel %vm364, %v7259, %v7298
        %v7301 = vunpack.c.l.s4 1934713408
        %v7302 = vunpack.c.0.s8 %v7301
        %v7303 = vperm.slane %v7297, %v7302
        %v7305 = vunpack.c.l.s4 1934713408
        %v7306 = vunpack.c.0.s8 %v7305
        %v7307 = vperm.slane %v7299, %v7306
        %v7308 = vrot.slane %v7279, 4
        %v7309 = vsel %vm364, %v7308, %v7267
        %v7310 = vrot.slane %v7267, 4
        %v7311 = vsel %vm364, %v7279, %v7310
        %v7313 = vunpack.c.l.s4 1934713408
        %v7314 = vunpack.c.0.s8 %v7313
        %v7315 = vperm.slane %v7309, %v7314
        %v7317 = vunpack.c.l.s4 1934713408
        %v7318 = vunpack.c.0.s8 %v7317
        %v7319 = vperm.slane %v7311, %v7318
        %v7320 = vrot.slane %v7283, 4
        %v7321 = vsel %vm364, %v7320, %v7271
        %v7322 = vrot.slane %v7271, 4
        %v7323 = vsel %vm364, %v7283, %v7322
        %v7325 = vunpack.c.l.s4 1934713408
        %v7326 = vunpack.c.0.s8 %v7325
        %v7327 = vperm.slane %v7321, %v7326
        %v7329 = vunpack.c.l.s4 1934713408
        %v7330 = vunpack.c.0.s8 %v7329
        %v7331 = vperm.slane %v7323, %v7330
        %v7332 = vrot.slane %v7315, 4
        %v7333 = vsel %vm364, %v7332, %v7291
        %v7334 = vrot.slane %v7291, 4
        %v7335 = vsel %vm364, %v7315, %v7334
        %v7336 = vrot.slane %v7319, 4
        %v7337 = vsel %vm364, %v7336, %v7295
        %v7338 = vrot.slane %v7295, 4
        %v7339 = vsel %vm364, %v7319, %v7338
        %v7340 = vrot.slane %v7327, 4
        %v7341 = vsel %vm364, %v7340, %v7303
        %v7342 = vrot.slane %v7303, 4
        %v7343 = vsel %vm364, %v7327, %v7342
        %v7344 = vrot.slane %v7331, 4
        %v7345 = vsel %vm364, %v7344, %v7307
        %v7346 = vrot.slane %v7307, 4
        %v7347 = vsel %vm364, %v7331, %v7346
        %v7348 = vrot.slane %v7214, 4
        %v7349 = vsel %vm364, %v7348, %v7212
        %v7350 = vrot.slane %v7212, 4
        %v7351 = vsel %vm364, %v7214, %v7350
        %v7353 = vunpack.c.l.s4 1983009808
        %v7354 = vunpack.c.0.s8 %v7353
        %v7355 = vperm.slane %v7349, %v7354
        %v7357 = vunpack.c.l.s4 1983009808
        %v7358 = vunpack.c.0.s8 %v7357
        %v7359 = vperm.slane %v7351, %v7358
        %v7360 = vrot.slane %v7215, 4
        %v7361 = vsel %vm364, %v7360, %v7213
        %v7362 = vrot.slane %v7213, 4
        %v7363 = vsel %vm364, %v7215, %v7362
        %v7365 = vunpack.c.l.s4 1983009808
        %v7366 = vunpack.c.0.s8 %v7365
        %v7367 = vperm.slane %v7361, %v7366
        %v7369 = vunpack.c.l.s4 1983009808
        %v7370 = vunpack.c.0.s8 %v7369
        %v7371 = vperm.slane %v7363, %v7370
        %v7372 = vrot.slane %v7218, 4
        %v7373 = vsel %vm364, %v7372, %v7216
        %v7374 = vrot.slane %v7216, 4
        %v7375 = vsel %vm364, %v7218, %v7374
        %v7377 = vunpack.c.l.s4 1983009808
        %v7378 = vunpack.c.0.s8 %v7377
        %v7379 = vperm.slane %v7373, %v7378
        %v7381 = vunpack.c.l.s4 1983009808
        %v7382 = vunpack.c.0.s8 %v7381
        %v7383 = vperm.slane %v7375, %v7382
        %v7384 = vrot.slane %v7219, 4
        %v7385 = vsel %vm364, %v7384, %v7217
        %v7386 = vrot.slane %v7217, 4
        %v7387 = vsel %vm364, %v7219, %v7386
        %v7389 = vunpack.c.l.s4 1983009808
        %v7390 = vunpack.c.0.s8 %v7389
        %v7391 = vperm.slane %v7385, %v7390
        %v7393 = vunpack.c.l.s4 1983009808
        %v7394 = vunpack.c.0.s8 %v7393
        %v7395 = vperm.slane %v7387, %v7394
        %v7396 = vrot.slane %v7367, 4
        %v7397 = vsel %vm364, %v7396, %v7355
        %v7398 = vrot.slane %v7355, 4
        %v7399 = vsel %vm364, %v7367, %v7398
        %v7401 = vunpack.c.l.s4 1934713408
        %v7402 = vunpack.c.0.s8 %v7401
        %v7403 = vperm.slane %v7397, %v7402
        %v7405 = vunpack.c.l.s4 1934713408
        %v7406 = vunpack.c.0.s8 %v7405
        %v7407 = vperm.slane %v7399, %v7406
        %v7408 = vrot.slane %v7371, 4
        %v7409 = vsel %vm364, %v7408, %v7359
        %v7410 = vrot.slane %v7359, 4
        %v7411 = vsel %vm364, %v7371, %v7410
        %v7413 = vunpack.c.l.s4 1934713408
        %v7414 = vunpack.c.0.s8 %v7413
        %v7415 = vperm.slane %v7409, %v7414
        %v7417 = vunpack.c.l.s4 1934713408
        %v7418 = vunpack.c.0.s8 %v7417
        %v7419 = vperm.slane %v7411, %v7418
        %v7420 = vrot.slane %v7391, 4
        %v7421 = vsel %vm364, %v7420, %v7379
        %v7422 = vrot.slane %v7379, 4
        %v7423 = vsel %vm364, %v7391, %v7422
        %v7425 = vunpack.c.l.s4 1934713408
        %v7426 = vunpack.c.0.s8 %v7425
        %v7427 = vperm.slane %v7421, %v7426
        %v7429 = vunpack.c.l.s4 1934713408
        %v7430 = vunpack.c.0.s8 %v7429
        %v7431 = vperm.slane %v7423, %v7430
        %v7432 = vrot.slane %v7395, 4
        %v7433 = vsel %vm364, %v7432, %v7383
        %v7434 = vrot.slane %v7383, 4
        %v7435 = vsel %vm364, %v7395, %v7434
        %v7437 = vunpack.c.l.s4 1934713408
        %v7438 = vunpack.c.0.s8 %v7437
        %v7439 = vperm.slane %v7433, %v7438
        %v7441 = vunpack.c.l.s4 1934713408
        %v7442 = vunpack.c.0.s8 %v7441
        %v7443 = vperm.slane %v7435, %v7442
        %v7444 = vrot.slane %v7427, 4
        %v7445 = vsel %vm364, %v7444, %v7403
        %v7446 = vrot.slane %v7403, 4
        %v7447 = vsel %vm364, %v7427, %v7446
        %v7448 = vrot.slane %v7431, 4
        %v7449 = vsel %vm364, %v7448, %v7407
        %v7450 = vrot.slane %v7407, 4
        %v7451 = vsel %vm364, %v7431, %v7450
        %v7452 = vrot.slane %v7439, 4
        %v7453 = vsel %vm364, %v7452, %v7415
        %v7454 = vrot.slane %v7415, 4
        %v7455 = vsel %vm364, %v7439, %v7454
        %v7456 = vrot.slane %v7443, 4
        %v7457 = vsel %vm364, %v7456, %v7419
        %v7458 = vrot.slane %v7419, 4
        %v7459 = vsel %vm364, %v7443, %v7458
        %v7460 = vrot.slane %v7222, 4
        %v7461 = vsel %vm364, %v7460, %v7220
        %v7462 = vrot.slane %v7220, 4
        %v7463 = vsel %vm364, %v7222, %v7462
        %v7465 = vunpack.c.l.s4 1983009808
        %v7466 = vunpack.c.0.s8 %v7465
        %v7467 = vperm.slane %v7461, %v7466
        %v7469 = vunpack.c.l.s4 1983009808
        %v7470 = vunpack.c.0.s8 %v7469
        %v7471 = vperm.slane %v7463, %v7470
        %v7472 = vrot.slane %v7223, 4
        %v7473 = vsel %vm364, %v7472, %v7221
        %v7474 = vrot.slane %v7221, 4
        %v7475 = vsel %vm364, %v7223, %v7474
        %v7477 = vunpack.c.l.s4 1983009808
        %v7478 = vunpack.c.0.s8 %v7477
        %v7479 = vperm.slane %v7473, %v7478
        %v7481 = vunpack.c.l.s4 1983009808
        %v7482 = vunpack.c.0.s8 %v7481
        %v7483 = vperm.slane %v7475, %v7482
        %v7484 = vrot.slane %v7226, 4
        %v7485 = vsel %vm364, %v7484, %v7224
        %v7486 = vrot.slane %v7224, 4
        %v7487 = vsel %vm364, %v7226, %v7486
        %v7489 = vunpack.c.l.s4 1983009808
        %v7490 = vunpack.c.0.s8 %v7489
        %v7491 = vperm.slane %v7485, %v7490
        %v7493 = vunpack.c.l.s4 1983009808
        %v7494 = vunpack.c.0.s8 %v7493
        %v7495 = vperm.slane %v7487, %v7494
        %v7496 = vrot.slane %v7227, 4
        %v7497 = vsel %vm364, %v7496, %v7225
        %v7498 = vrot.slane %v7225, 4
        %v7499 = vsel %vm364, %v7227, %v7498
        %v7501 = vunpack.c.l.s4 1983009808
        %v7502 = vunpack.c.0.s8 %v7501
        %v7503 = vperm.slane %v7497, %v7502
        %v7505 = vunpack.c.l.s4 1983009808
        %v7506 = vunpack.c.0.s8 %v7505
        %v7507 = vperm.slane %v7499, %v7506
        %v7508 = vrot.slane %v7479, 4
        %v7509 = vsel %vm364, %v7508, %v7467
        %v7510 = vrot.slane %v7467, 4
        %v7511 = vsel %vm364, %v7479, %v7510
        %v7513 = vunpack.c.l.s4 1934713408
        %v7514 = vunpack.c.0.s8 %v7513
        %v7515 = vperm.slane %v7509, %v7514
        %v7517 = vunpack.c.l.s4 1934713408
        %v7518 = vunpack.c.0.s8 %v7517
        %v7519 = vperm.slane %v7511, %v7518
        %v7520 = vrot.slane %v7483, 4
        %v7521 = vsel %vm364, %v7520, %v7471
        %v7522 = vrot.slane %v7471, 4
        %v7523 = vsel %vm364, %v7483, %v7522
        %v7525 = vunpack.c.l.s4 1934713408
        %v7526 = vunpack.c.0.s8 %v7525
        %v7527 = vperm.slane %v7521, %v7526
        %v7529 = vunpack.c.l.s4 1934713408
        %v7530 = vunpack.c.0.s8 %v7529
        %v7531 = vperm.slane %v7523, %v7530
        %v7532 = vrot.slane %v7503, 4
        %v7533 = vsel %vm364, %v7532, %v7491
        %v7534 = vrot.slane %v7491, 4
        %v7535 = vsel %vm364, %v7503, %v7534
        %v7537 = vunpack.c.l.s4 1934713408
        %v7538 = vunpack.c.0.s8 %v7537
        %v7539 = vperm.slane %v7533, %v7538
        %v7541 = vunpack.c.l.s4 1934713408
        %v7542 = vunpack.c.0.s8 %v7541
        %v7543 = vperm.slane %v7535, %v7542
        %v7544 = vrot.slane %v7507, 4
        %v7545 = vsel %vm364, %v7544, %v7495
        %v7546 = vrot.slane %v7495, 4
        %v7547 = vsel %vm364, %v7507, %v7546
        %v7549 = vunpack.c.l.s4 1934713408
        %v7550 = vunpack.c.0.s8 %v7549
        %v7551 = vperm.slane %v7545, %v7550
        %v7553 = vunpack.c.l.s4 1934713408
        %v7554 = vunpack.c.0.s8 %v7553
        %v7555 = vperm.slane %v7547, %v7554
        %v7556 = vrot.slane %v7539, 4
        %v7557 = vsel %vm364, %v7556, %v7515
        %v7558 = vrot.slane %v7515, 4
        %v7559 = vsel %vm364, %v7539, %v7558
        %v7560 = vrot.slane %v7543, 4
        %v7561 = vsel %vm364, %v7560, %v7519
        %v7562 = vrot.slane %v7519, 4
        %v7563 = vsel %vm364, %v7543, %v7562
        %v7564 = vrot.slane %v7551, 4
        %v7565 = vsel %vm364, %v7564, %v7527
        %v7566 = vrot.slane %v7527, 4
        %v7567 = vsel %vm364, %v7551, %v7566
        %v7568 = vrot.slane %v7555, 4
        %v7569 = vsel %vm364, %v7568, %v7531
        %v7570 = vrot.slane %v7531, 4
        %v7571 = vsel %vm364, %v7555, %v7570
        %v7572 = vrot.slane %v7230, 4
        %v7573 = vsel %vm364, %v7572, %v7228
        %v7574 = vrot.slane %v7228, 4
        %v7575 = vsel %vm364, %v7230, %v7574
        %v7577 = vunpack.c.l.s4 1983009808
        %v7578 = vunpack.c.0.s8 %v7577
        %v7579 = vperm.slane %v7573, %v7578
        %v7581 = vunpack.c.l.s4 1983009808
        %v7582 = vunpack.c.0.s8 %v7581
        %v7583 = vperm.slane %v7575, %v7582
        %v7584 = vrot.slane %v7231, 4
        %v7585 = vsel %vm364, %v7584, %v7229
        %v7586 = vrot.slane %v7229, 4
        %v7587 = vsel %vm364, %v7231, %v7586
        %v7589 = vunpack.c.l.s4 1983009808
        %v7590 = vunpack.c.0.s8 %v7589
        %v7591 = vperm.slane %v7585, %v7590
        %v7593 = vunpack.c.l.s4 1983009808
        %v7594 = vunpack.c.0.s8 %v7593
        %v7595 = vperm.slane %v7587, %v7594
        %v7596 = vrot.slane %v7234, 4
        %v7597 = vsel %vm364, %v7596, %v7232
        %v7598 = vrot.slane %v7232, 4
        %v7599 = vsel %vm364, %v7234, %v7598
        %v7601 = vunpack.c.l.s4 1983009808
        %v7602 = vunpack.c.0.s8 %v7601
        %v7603 = vperm.slane %v7597, %v7602
        %v7605 = vunpack.c.l.s4 1983009808
        %v7606 = vunpack.c.0.s8 %v7605
        %v7607 = vperm.slane %v7599, %v7606
        %v7608 = vrot.slane %v7235, 4
        %v7609 = vsel %vm364, %v7608, %v7233
        %v7610 = vrot.slane %v7233, 4
        %v7611 = vsel %vm364, %v7235, %v7610
        %v7613 = vunpack.c.l.s4 1983009808
        %v7614 = vunpack.c.0.s8 %v7613
        %v7615 = vperm.slane %v7609, %v7614
        %v7617 = vunpack.c.l.s4 1983009808
        %v7618 = vunpack.c.0.s8 %v7617
        %v7619 = vperm.slane %v7611, %v7618
        %v7620 = vrot.slane %v7591, 4
        %v7621 = vsel %vm364, %v7620, %v7579
        %v7622 = vrot.slane %v7579, 4
        %v7623 = vsel %vm364, %v7591, %v7622
        %v7625 = vunpack.c.l.s4 1934713408
        %v7626 = vunpack.c.0.s8 %v7625
        %v7627 = vperm.slane %v7621, %v7626
        %v7629 = vunpack.c.l.s4 1934713408
        %v7630 = vunpack.c.0.s8 %v7629
        %v7631 = vperm.slane %v7623, %v7630
        %v7632 = vrot.slane %v7595, 4
        %v7633 = vsel %vm364, %v7632, %v7583
        %v7634 = vrot.slane %v7583, 4
        %v7635 = vsel %vm364, %v7595, %v7634
        %v7637 = vunpack.c.l.s4 1934713408
        %v7638 = vunpack.c.0.s8 %v7637
        %v7639 = vperm.slane %v7633, %v7638
        %v7641 = vunpack.c.l.s4 1934713408
        %v7642 = vunpack.c.0.s8 %v7641
        %v7643 = vperm.slane %v7635, %v7642
        %v7644 = vrot.slane %v7615, 4
        %v7645 = vsel %vm364, %v7644, %v7603
        %v7646 = vrot.slane %v7603, 4
        %v7647 = vsel %vm364, %v7615, %v7646
        %v7649 = vunpack.c.l.s4 1934713408
        %v7650 = vunpack.c.0.s8 %v7649
        %v7651 = vperm.slane %v7645, %v7650
        %v7653 = vunpack.c.l.s4 1934713408
        %v7654 = vunpack.c.0.s8 %v7653
        %v7655 = vperm.slane %v7647, %v7654
        %v7656 = vrot.slane %v7619, 4
        %v7657 = vsel %vm364, %v7656, %v7607
        %v7658 = vrot.slane %v7607, 4
        %v7659 = vsel %vm364, %v7619, %v7658
        %v7661 = vunpack.c.l.s4 1934713408
        %v7662 = vunpack.c.0.s8 %v7661
        %v7663 = vperm.slane %v7657, %v7662
        %v7665 = vunpack.c.l.s4 1934713408
        %v7666 = vunpack.c.0.s8 %v7665
        %v7667 = vperm.slane %v7659, %v7666
        %v7668 = vrot.slane %v7651, 4
        %v7669 = vsel %vm364, %v7668, %v7627
        %v7670 = vrot.slane %v7627, 4
        %v7671 = vsel %vm364, %v7651, %v7670
        %v7672 = vrot.slane %v7655, 4
        %v7673 = vsel %vm364, %v7672, %v7631
        %v7674 = vrot.slane %v7631, 4
        %v7675 = vsel %vm364, %v7655, %v7674
        %v7676 = vrot.slane %v7663, 4
        %v7677 = vsel %vm364, %v7676, %v7639
        %v7678 = vrot.slane %v7639, 4
        %v7679 = vsel %vm364, %v7663, %v7678
        %v7680 = vrot.slane %v7667, 4
        %v7681 = vsel %vm364, %v7680, %v7643
        %v7682 = vrot.slane %v7643, 4
        %v7683 = vsel %vm364, %v7667, %v7682
        %7688 = vrot.lane.b32.xlu0 %v7335, 16
        %v7689 = vpop.permute.xlu0 %7688
        %7690 = vrot.lane.b32.xlu0 %v7447, 16
        %v7691 = vpop.permute.xlu0 %7690
        %7692 = vrot.lane.b32.xlu0 %v7559, 16
        %v7693 = vpop.permute.xlu0 %7692
        %7694 = vrot.lane.b32.xlu0 %v7671, 16
        %v7695 = vpop.permute.xlu0 %7694
        %7704 = vrot.lane.b32.xlu0 %v7337, 32
        %v7705 = vpop.permute.xlu0 %7704
        %7706 = vrot.lane.b32.xlu0 %v7449, 32
        %v7707 = vpop.permute.xlu0 %7706
        %7708 = vrot.lane.b32.xlu0 %v7561, 32
        %v7709 = vpop.permute.xlu0 %7708
        %7710 = vrot.lane.b32.xlu0 %v7673, 32
        %v7711 = vpop.permute.xlu0 %7710
        %7720 = vrot.lane.b32.xlu0 %v7339, 48
        %v7721 = vpop.permute.xlu0 %7720
        %7722 = vrot.lane.b32.xlu0 %v7451, 48
        %v7723 = vpop.permute.xlu0 %7722
        %7724 = vrot.lane.b32.xlu0 %v7563, 48
        %v7725 = vpop.permute.xlu0 %7724
        %7726 = vrot.lane.b32.xlu0 %v7675, 48
        %v7727 = vpop.permute.xlu0 %7726
        %7736 = vrot.lane.b32.xlu0 %v7341, 64
        %v7737 = vpop.permute.xlu0 %7736
        %7738 = vrot.lane.b32.xlu0 %v7453, 64
        %v7739 = vpop.permute.xlu0 %7738
        %7740 = vrot.lane.b32.xlu0 %v7565, 64
        %v7741 = vpop.permute.xlu0 %7740
        %7742 = vrot.lane.b32.xlu0 %v7677, 64
        %v7743 = vpop.permute.xlu0 %7742
        %7752 = vrot.lane.b32.xlu0 %v7343, 80
        %v7753 = vpop.permute.xlu0 %7752
        %7754 = vrot.lane.b32.xlu0 %v7455, 80
        %v7755 = vpop.permute.xlu0 %7754
        %7756 = vrot.lane.b32.xlu0 %v7567, 80
        %v7757 = vpop.permute.xlu0 %7756
        %7758 = vrot.lane.b32.xlu0 %v7679, 80
        %v7759 = vpop.permute.xlu0 %7758
        %7768 = vrot.lane.b32.xlu0 %v7345, 96
        %v7769 = vpop.permute.xlu0 %7768
        %7770 = vrot.lane.b32.xlu0 %v7457, 96
        %v7771 = vpop.permute.xlu0 %7770
        %7772 = vrot.lane.b32.xlu0 %v7569, 96
        %v7773 = vpop.permute.xlu0 %7772
        %7774 = vrot.lane.b32.xlu0 %v7681, 96
        %v7775 = vpop.permute.xlu0 %7774
        %7784 = vrot.lane.b32.xlu0 %v7347, 112
        %v7785 = vpop.permute.xlu0 %7784
        %7786 = vrot.lane.b32.xlu0 %v7459, 112
        %v7787 = vpop.permute.xlu0 %7786
        %7788 = vrot.lane.b32.xlu0 %v7571, 112
        %v7789 = vpop.permute.xlu0 %7788
        %7790 = vrot.lane.b32.xlu0 %v7683, 112
        %v7791 = vpop.permute.xlu0 %7790
        %v7796 = vsel %vm465, %v7333, %v7689
        %v7797 = vsel %vm465, %v7445, %v7691
        %v7798 = vsel %vm465, %v7557, %v7693
        %v7799 = vsel %vm465, %v7669, %v7695
        %v7800 = vsel %vm467, %v7796, %v7705
        %v7801 = vsel %vm467, %v7797, %v7707
        %v7802 = vsel %vm467, %v7798, %v7709
        %v7803 = vsel %vm467, %v7799, %v7711
        %v7804 = vsel %vm469, %v7800, %v7721
        %v7805 = vsel %vm469, %v7801, %v7723
        %v7806 = vsel %vm469, %v7802, %v7725
        %v7807 = vsel %vm469, %v7803, %v7727
        %v7808 = vsel %vm471, %v7804, %v7737
        %v7809 = vsel %vm471, %v7805, %v7739
        %v7810 = vsel %vm471, %v7806, %v7741
        %v7811 = vsel %vm471, %v7807, %v7743
        %v7812 = vsel %vm473, %v7808, %v7753
        %v7813 = vsel %vm473, %v7809, %v7755
        %v7814 = vsel %vm473, %v7810, %v7757
        %v7815 = vsel %vm473, %v7811, %v7759
        %v7816 = vsel %vm475, %v7812, %v7769
        %v7817 = vsel %vm475, %v7813, %v7771
        %v7818 = vsel %vm475, %v7814, %v7773
        %v7819 = vsel %vm475, %v7815, %v7775
        %v7820 = vsel %vm477, %v7816, %v7785
        %v7821 = vsel %vm477, %v7817, %v7787
        %v7822 = vsel %vm477, %v7818, %v7789
        %v7823 = vsel %vm477, %v7819, %v7791
        %7824 = vst [vmem:[#allocation5 + $0xc0] sm:$0xff] %v7820
        %7825 = vst [vmem:[#allocation5 + $0xc8] sm:$0xff] %v7821
        %7826 = vst [vmem:[#allocation5 + $0xd0] sm:$0xff] %v7822
        %7827 = vst [vmem:[#allocation5 + $0xd8] sm:$0xff] %v7823
        %v7828 = vld [vmem:[#allocation3 + $0x2] sm:$0xff]
        %v7829 = vld [vmem:[#allocation3 + $0x12] sm:$0xff]
        %v7830 = vld [vmem:[#allocation3 + $0x22] sm:$0xff]
        %v7831 = vld [vmem:[#allocation3 + $0x32] sm:$0xff]
        %v7832 = vld [vmem:[#allocation3 + $0x42] sm:$0xff]
        %v7833 = vld [vmem:[#allocation3 + $0x52] sm:$0xff]
        %v7834 = vld [vmem:[#allocation3 + $0x62] sm:$0xff]
        %v7835 = vld [vmem:[#allocation3 + $0x72] sm:$0xff]
        %v7836 = vld [vmem:[#allocation3 + $0x82] sm:$0xff]
        %v7837 = vld [vmem:[#allocation3 + $0x92] sm:$0xff]
        %v7838 = vld [vmem:[#allocation3 + $0xa2] sm:$0xff]
        %v7839 = vld [vmem:[#allocation3 + $0xb2] sm:$0xff]
        %v7840 = vld [vmem:[#allocation3 + $0xc2] sm:$0xff]
        %v7841 = vld [vmem:[#allocation3 + $0xd2] sm:$0xff]
        %v7842 = vld [vmem:[#allocation3 + $0xe2] sm:$0xff]
        %v7843 = vld [vmem:[#allocation3 + $0xf2] sm:$0xff]
        %v7844 = vld [vmem:[#allocation3 + $0x102] sm:$0xff]
        %v7845 = vld [vmem:[#allocation3 + $0x112] sm:$0xff]
        %v7846 = vld [vmem:[#allocation3 + $0x122] sm:$0xff]
        %v7847 = vld [vmem:[#allocation3 + $0x132] sm:$0xff]
        %v7848 = vld [vmem:[#allocation3 + $0x142] sm:$0xff]
        %v7849 = vld [vmem:[#allocation3 + $0x152] sm:$0xff]
        %v7850 = vld [vmem:[#allocation3 + $0x162] sm:$0xff]
        %v7851 = vld [vmem:[#allocation3 + $0x172] sm:$0xff]
        %v7852 = vld [vmem:[#allocation3 + $0x182] sm:$0xff]
        %v7853 = vld [vmem:[#allocation3 + $0x192] sm:$0xff]
        %v7854 = vld [vmem:[#allocation3 + $0x1a2] sm:$0xff]
        %v7855 = vld [vmem:[#allocation3 + $0x1b2] sm:$0xff]
        %v7856 = vld [vmem:[#allocation3 + $0x1c2] sm:$0xff]
        %v7857 = vld [vmem:[#allocation3 + $0x1d2] sm:$0xff]
        %v7858 = vld [vmem:[#allocation3 + $0x1e2] sm:$0xff]
        %v7859 = vld [vmem:[#allocation3 + $0x1f2] sm:$0xff]
        %7892 = vrot.lane.b32.xlu0 %v7828, 127
        %v7893 = vpop.permute.xlu0 %7892
        %7894 = vrot.lane.b32.xlu0 %v7829, 127
        %v7895 = vpop.permute.xlu0 %7894
        %7896 = vrot.lane.b32.xlu0 %v7830, 127
        %v7897 = vpop.permute.xlu0 %7896
        %7898 = vrot.lane.b32.xlu0 %v7831, 127
        %v7899 = vpop.permute.xlu0 %7898
        %7900 = vrot.lane.b32.xlu0 %v7832, 127
        %v7901 = vpop.permute.xlu0 %7900
        %7902 = vrot.lane.b32.xlu0 %v7833, 127
        %v7903 = vpop.permute.xlu0 %7902
        %7904 = vrot.lane.b32.xlu0 %v7834, 127
        %v7905 = vpop.permute.xlu0 %7904
        %7906 = vrot.lane.b32.xlu0 %v7835, 127
        %v7907 = vpop.permute.xlu0 %7906
        %7908 = vrot.lane.b32.xlu0 %v7836, 127
        %v7909 = vpop.permute.xlu0 %7908
        %7910 = vrot.lane.b32.xlu0 %v7837, 127
        %v7911 = vpop.permute.xlu0 %7910
        %7912 = vrot.lane.b32.xlu0 %v7838, 127
        %v7913 = vpop.permute.xlu0 %7912
        %7914 = vrot.lane.b32.xlu0 %v7839, 127
        %v7915 = vpop.permute.xlu0 %7914
        %7916 = vrot.lane.b32.xlu0 %v7840, 127
        %v7917 = vpop.permute.xlu0 %7916
        %7918 = vrot.lane.b32.xlu0 %v7841, 127
        %v7919 = vpop.permute.xlu0 %7918
        %7920 = vrot.lane.b32.xlu0 %v7842, 127
        %v7921 = vpop.permute.xlu0 %7920
        %7922 = vrot.lane.b32.xlu0 %v7843, 127
        %v7923 = vpop.permute.xlu0 %7922
        %7924 = vrot.lane.b32.xlu0 %v7844, 127
        %v7925 = vpop.permute.xlu0 %7924
        %7926 = vrot.lane.b32.xlu0 %v7845, 127
        %v7927 = vpop.permute.xlu0 %7926
        %7928 = vrot.lane.b32.xlu0 %v7846, 127
        %v7929 = vpop.permute.xlu0 %7928
        %7930 = vrot.lane.b32.xlu0 %v7847, 127
        %v7931 = vpop.permute.xlu0 %7930
        %7932 = vrot.lane.b32.xlu0 %v7848, 127
        %v7933 = vpop.permute.xlu0 %7932
        %7934 = vrot.lane.b32.xlu0 %v7849, 127
        %v7935 = vpop.permute.xlu0 %7934
        %7936 = vrot.lane.b32.xlu0 %v7850, 127
        %v7937 = vpop.permute.xlu0 %7936
        %7938 = vrot.lane.b32.xlu0 %v7851, 127
        %v7939 = vpop.permute.xlu0 %7938
        %7940 = vrot.lane.b32.xlu0 %v7852, 127
        %v7941 = vpop.permute.xlu0 %7940
        %7942 = vrot.lane.b32.xlu0 %v7853, 127
        %v7943 = vpop.permute.xlu0 %7942
        %7944 = vrot.lane.b32.xlu0 %v7854, 127
        %v7945 = vpop.permute.xlu0 %7944
        %7946 = vrot.lane.b32.xlu0 %v7855, 127
        %v7947 = vpop.permute.xlu0 %7946
        %7948 = vrot.lane.b32.xlu0 %v7856, 127
        %v7949 = vpop.permute.xlu0 %7948
        %7950 = vrot.lane.b32.xlu0 %v7857, 127
        %v7951 = vpop.permute.xlu0 %7950
        %7952 = vrot.lane.b32.xlu0 %v7858, 127
        %v7953 = vpop.permute.xlu0 %7952
        %7954 = vrot.lane.b32.xlu0 %v7859, 127
        %v7955 = vpop.permute.xlu0 %7954
        %v7988 = vrot.slane %v7897, 4
        %v7989 = vsel %vm364, %v7988, %v7893
        %v7990 = vrot.slane %v7893, 4
        %v7991 = vsel %vm364, %v7897, %v7990
        %v7993 = vunpack.c.l.s4 1983009808
        %v7994 = vunpack.c.0.s8 %v7993
        %v7995 = vperm.slane %v7989, %v7994
        %v7997 = vunpack.c.l.s4 1983009808
        %v7998 = vunpack.c.0.s8 %v7997
        %v7999 = vperm.slane %v7991, %v7998
        %v8000 = vrot.slane %v7899, 4
        %v8001 = vsel %vm364, %v8000, %v7895
        %v8002 = vrot.slane %v7895, 4
        %v8003 = vsel %vm364, %v7899, %v8002
        %v8005 = vunpack.c.l.s4 1983009808
        %v8006 = vunpack.c.0.s8 %v8005
        %v8007 = vperm.slane %v8001, %v8006
        %v8009 = vunpack.c.l.s4 1983009808
        %v8010 = vunpack.c.0.s8 %v8009
        %v8011 = vperm.slane %v8003, %v8010
        %v8012 = vrot.slane %v7905, 4
        %v8013 = vsel %vm364, %v8012, %v7901
        %v8014 = vrot.slane %v7901, 4
        %v8015 = vsel %vm364, %v7905, %v8014
        %v8017 = vunpack.c.l.s4 1983009808
        %v8018 = vunpack.c.0.s8 %v8017
        %v8019 = vperm.slane %v8013, %v8018
        %v8021 = vunpack.c.l.s4 1983009808
        %v8022 = vunpack.c.0.s8 %v8021
        %v8023 = vperm.slane %v8015, %v8022
        %v8024 = vrot.slane %v7907, 4
        %v8025 = vsel %vm364, %v8024, %v7903
        %v8026 = vrot.slane %v7903, 4
        %v8027 = vsel %vm364, %v7907, %v8026
        %v8029 = vunpack.c.l.s4 1983009808
        %v8030 = vunpack.c.0.s8 %v8029
        %v8031 = vperm.slane %v8025, %v8030
        %v8033 = vunpack.c.l.s4 1983009808
        %v8034 = vunpack.c.0.s8 %v8033
        %v8035 = vperm.slane %v8027, %v8034
        %v8036 = vrot.slane %v8007, 4
        %v8037 = vsel %vm364, %v8036, %v7995
        %v8038 = vrot.slane %v7995, 4
        %v8039 = vsel %vm364, %v8007, %v8038
        %v8041 = vunpack.c.l.s4 1934713408
        %v8042 = vunpack.c.0.s8 %v8041
        %v8043 = vperm.slane %v8037, %v8042
        %v8045 = vunpack.c.l.s4 1934713408
        %v8046 = vunpack.c.0.s8 %v8045
        %v8047 = vperm.slane %v8039, %v8046
        %v8048 = vrot.slane %v8011, 4
        %v8049 = vsel %vm364, %v8048, %v7999
        %v8050 = vrot.slane %v7999, 4
        %v8051 = vsel %vm364, %v8011, %v8050
        %v8053 = vunpack.c.l.s4 1934713408
        %v8054 = vunpack.c.0.s8 %v8053
        %v8055 = vperm.slane %v8049, %v8054
        %v8057 = vunpack.c.l.s4 1934713408
        %v8058 = vunpack.c.0.s8 %v8057
        %v8059 = vperm.slane %v8051, %v8058
        %v8060 = vrot.slane %v8031, 4
        %v8061 = vsel %vm364, %v8060, %v8019
        %v8062 = vrot.slane %v8019, 4
        %v8063 = vsel %vm364, %v8031, %v8062
        %v8065 = vunpack.c.l.s4 1934713408
        %v8066 = vunpack.c.0.s8 %v8065
        %v8067 = vperm.slane %v8061, %v8066
        %v8069 = vunpack.c.l.s4 1934713408
        %v8070 = vunpack.c.0.s8 %v8069
        %v8071 = vperm.slane %v8063, %v8070
        %v8072 = vrot.slane %v8035, 4
        %v8073 = vsel %vm364, %v8072, %v8023
        %v8074 = vrot.slane %v8023, 4
        %v8075 = vsel %vm364, %v8035, %v8074
        %v8077 = vunpack.c.l.s4 1934713408
        %v8078 = vunpack.c.0.s8 %v8077
        %v8079 = vperm.slane %v8073, %v8078
        %v8081 = vunpack.c.l.s4 1934713408
        %v8082 = vunpack.c.0.s8 %v8081
        %v8083 = vperm.slane %v8075, %v8082
        %v8084 = vrot.slane %v8067, 4
        %v8085 = vsel %vm364, %v8084, %v8043
        %v8086 = vrot.slane %v8043, 4
        %v8087 = vsel %vm364, %v8067, %v8086
        %v8088 = vrot.slane %v8071, 4
        %v8089 = vsel %vm364, %v8088, %v8047
        %v8090 = vrot.slane %v8047, 4
        %v8091 = vsel %vm364, %v8071, %v8090
        %v8092 = vrot.slane %v8079, 4
        %v8093 = vsel %vm364, %v8092, %v8055
        %v8094 = vrot.slane %v8055, 4
        %v8095 = vsel %vm364, %v8079, %v8094
        %v8096 = vrot.slane %v8083, 4
        %v8097 = vsel %vm364, %v8096, %v8059
        %v8098 = vrot.slane %v8059, 4
        %v8099 = vsel %vm364, %v8083, %v8098
        %v8100 = vrot.slane %v7913, 4
        %v8101 = vsel %vm364, %v8100, %v7909
        %v8102 = vrot.slane %v7909, 4
        %v8103 = vsel %vm364, %v7913, %v8102
        %v8105 = vunpack.c.l.s4 1983009808
        %v8106 = vunpack.c.0.s8 %v8105
        %v8107 = vperm.slane %v8101, %v8106
        %v8109 = vunpack.c.l.s4 1983009808
        %v8110 = vunpack.c.0.s8 %v8109
        %v8111 = vperm.slane %v8103, %v8110
        %v8112 = vrot.slane %v7915, 4
        %v8113 = vsel %vm364, %v8112, %v7911
        %v8114 = vrot.slane %v7911, 4
        %v8115 = vsel %vm364, %v7915, %v8114
        %v8117 = vunpack.c.l.s4 1983009808
        %v8118 = vunpack.c.0.s8 %v8117
        %v8119 = vperm.slane %v8113, %v8118
        %v8121 = vunpack.c.l.s4 1983009808
        %v8122 = vunpack.c.0.s8 %v8121
        %v8123 = vperm.slane %v8115, %v8122
        %v8124 = vrot.slane %v7921, 4
        %v8125 = vsel %vm364, %v8124, %v7917
        %v8126 = vrot.slane %v7917, 4
        %v8127 = vsel %vm364, %v7921, %v8126
        %v8129 = vunpack.c.l.s4 1983009808
        %v8130 = vunpack.c.0.s8 %v8129
        %v8131 = vperm.slane %v8125, %v8130
        %v8133 = vunpack.c.l.s4 1983009808
        %v8134 = vunpack.c.0.s8 %v8133
        %v8135 = vperm.slane %v8127, %v8134
        %v8136 = vrot.slane %v7923, 4
        %v8137 = vsel %vm364, %v8136, %v7919
        %v8138 = vrot.slane %v7919, 4
        %v8139 = vsel %vm364, %v7923, %v8138
        %v8141 = vunpack.c.l.s4 1983009808
        %v8142 = vunpack.c.0.s8 %v8141
        %v8143 = vperm.slane %v8137, %v8142
        %v8145 = vunpack.c.l.s4 1983009808
        %v8146 = vunpack.c.0.s8 %v8145
        %v8147 = vperm.slane %v8139, %v8146
        %v8148 = vrot.slane %v8119, 4
        %v8149 = vsel %vm364, %v8148, %v8107
        %v8150 = vrot.slane %v8107, 4
        %v8151 = vsel %vm364, %v8119, %v8150
        %v8153 = vunpack.c.l.s4 1934713408
        %v8154 = vunpack.c.0.s8 %v8153
        %v8155 = vperm.slane %v8149, %v8154
        %v8157 = vunpack.c.l.s4 1934713408
        %v8158 = vunpack.c.0.s8 %v8157
        %v8159 = vperm.slane %v8151, %v8158
        %v8160 = vrot.slane %v8123, 4
        %v8161 = vsel %vm364, %v8160, %v8111
        %v8162 = vrot.slane %v8111, 4
        %v8163 = vsel %vm364, %v8123, %v8162
        %v8165 = vunpack.c.l.s4 1934713408
        %v8166 = vunpack.c.0.s8 %v8165
        %v8167 = vperm.slane %v8161, %v8166
        %v8169 = vunpack.c.l.s4 1934713408
        %v8170 = vunpack.c.0.s8 %v8169
        %v8171 = vperm.slane %v8163, %v8170
        %v8172 = vrot.slane %v8143, 4
        %v8173 = vsel %vm364, %v8172, %v8131
        %v8174 = vrot.slane %v8131, 4
        %v8175 = vsel %vm364, %v8143, %v8174
        %v8177 = vunpack.c.l.s4 1934713408
        %v8178 = vunpack.c.0.s8 %v8177
        %v8179 = vperm.slane %v8173, %v8178
        %v8181 = vunpack.c.l.s4 1934713408
        %v8182 = vunpack.c.0.s8 %v8181
        %v8183 = vperm.slane %v8175, %v8182
        %v8184 = vrot.slane %v8147, 4
        %v8185 = vsel %vm364, %v8184, %v8135
        %v8186 = vrot.slane %v8135, 4
        %v8187 = vsel %vm364, %v8147, %v8186
        %v8189 = vunpack.c.l.s4 1934713408
        %v8190 = vunpack.c.0.s8 %v8189
        %v8191 = vperm.slane %v8185, %v8190
        %v8193 = vunpack.c.l.s4 1934713408
        %v8194 = vunpack.c.0.s8 %v8193
        %v8195 = vperm.slane %v8187, %v8194
        %v8196 = vrot.slane %v8179, 4
        %v8197 = vsel %vm364, %v8196, %v8155
        %v8198 = vrot.slane %v8155, 4
        %v8199 = vsel %vm364, %v8179, %v8198
        %v8200 = vrot.slane %v8183, 4
        %v8201 = vsel %vm364, %v8200, %v8159
        %v8202 = vrot.slane %v8159, 4
        %v8203 = vsel %vm364, %v8183, %v8202
        %v8204 = vrot.slane %v8191, 4
        %v8205 = vsel %vm364, %v8204, %v8167
        %v8206 = vrot.slane %v8167, 4
        %v8207 = vsel %vm364, %v8191, %v8206
        %v8208 = vrot.slane %v8195, 4
        %v8209 = vsel %vm364, %v8208, %v8171
        %v8210 = vrot.slane %v8171, 4
        %v8211 = vsel %vm364, %v8195, %v8210
        %v8212 = vrot.slane %v7929, 4
        %v8213 = vsel %vm364, %v8212, %v7925
        %v8214 = vrot.slane %v7925, 4
        %v8215 = vsel %vm364, %v7929, %v8214
        %v8217 = vunpack.c.l.s4 1983009808
        %v8218 = vunpack.c.0.s8 %v8217
        %v8219 = vperm.slane %v8213, %v8218
        %v8221 = vunpack.c.l.s4 1983009808
        %v8222 = vunpack.c.0.s8 %v8221
        %v8223 = vperm.slane %v8215, %v8222
        %v8224 = vrot.slane %v7931, 4
        %v8225 = vsel %vm364, %v8224, %v7927
        %v8226 = vrot.slane %v7927, 4
        %v8227 = vsel %vm364, %v7931, %v8226
        %v8229 = vunpack.c.l.s4 1983009808
        %v8230 = vunpack.c.0.s8 %v8229
        %v8231 = vperm.slane %v8225, %v8230
        %v8233 = vunpack.c.l.s4 1983009808
        %v8234 = vunpack.c.0.s8 %v8233
        %v8235 = vperm.slane %v8227, %v8234
        %v8236 = vrot.slane %v7937, 4
        %v8237 = vsel %vm364, %v8236, %v7933
        %v8238 = vrot.slane %v7933, 4
        %v8239 = vsel %vm364, %v7937, %v8238
        %v8241 = vunpack.c.l.s4 1983009808
        %v8242 = vunpack.c.0.s8 %v8241
        %v8243 = vperm.slane %v8237, %v8242
        %v8245 = vunpack.c.l.s4 1983009808
        %v8246 = vunpack.c.0.s8 %v8245
        %v8247 = vperm.slane %v8239, %v8246
        %v8248 = vrot.slane %v7939, 4
        %v8249 = vsel %vm364, %v8248, %v7935
        %v8250 = vrot.slane %v7935, 4
        %v8251 = vsel %vm364, %v7939, %v8250
        %v8253 = vunpack.c.l.s4 1983009808
        %v8254 = vunpack.c.0.s8 %v8253
        %v8255 = vperm.slane %v8249, %v8254
        %v8257 = vunpack.c.l.s4 1983009808
        %v8258 = vunpack.c.0.s8 %v8257
        %v8259 = vperm.slane %v8251, %v8258
        %v8260 = vrot.slane %v8231, 4
        %v8261 = vsel %vm364, %v8260, %v8219
        %v8262 = vrot.slane %v8219, 4
        %v8263 = vsel %vm364, %v8231, %v8262
        %v8265 = vunpack.c.l.s4 1934713408
        %v8266 = vunpack.c.0.s8 %v8265
        %v8267 = vperm.slane %v8261, %v8266
        %v8269 = vunpack.c.l.s4 1934713408
        %v8270 = vunpack.c.0.s8 %v8269
        %v8271 = vperm.slane %v8263, %v8270
        %v8272 = vrot.slane %v8235, 4
        %v8273 = vsel %vm364, %v8272, %v8223
        %v8274 = vrot.slane %v8223, 4
        %v8275 = vsel %vm364, %v8235, %v8274
        %v8277 = vunpack.c.l.s4 1934713408
        %v8278 = vunpack.c.0.s8 %v8277
        %v8279 = vperm.slane %v8273, %v8278
        %v8281 = vunpack.c.l.s4 1934713408
        %v8282 = vunpack.c.0.s8 %v8281
        %v8283 = vperm.slane %v8275, %v8282
        %v8284 = vrot.slane %v8255, 4
        %v8285 = vsel %vm364, %v8284, %v8243
        %v8286 = vrot.slane %v8243, 4
        %v8287 = vsel %vm364, %v8255, %v8286
        %v8289 = vunpack.c.l.s4 1934713408
        %v8290 = vunpack.c.0.s8 %v8289
        %v8291 = vperm.slane %v8285, %v8290
        %v8293 = vunpack.c.l.s4 1934713408
        %v8294 = vunpack.c.0.s8 %v8293
        %v8295 = vperm.slane %v8287, %v8294
        %v8296 = vrot.slane %v8259, 4
        %v8297 = vsel %vm364, %v8296, %v8247
        %v8298 = vrot.slane %v8247, 4
        %v8299 = vsel %vm364, %v8259, %v8298
        %v8301 = vunpack.c.l.s4 1934713408
        %v8302 = vunpack.c.0.s8 %v8301
        %v8303 = vperm.slane %v8297, %v8302
        %v8305 = vunpack.c.l.s4 1934713408
        %v8306 = vunpack.c.0.s8 %v8305
        %v8307 = vperm.slane %v8299, %v8306
        %v8308 = vrot.slane %v8291, 4
        %v8309 = vsel %vm364, %v8308, %v8267
        %v8310 = vrot.slane %v8267, 4
        %v8311 = vsel %vm364, %v8291, %v8310
        %v8312 = vrot.slane %v8295, 4
        %v8313 = vsel %vm364, %v8312, %v8271
        %v8314 = vrot.slane %v8271, 4
        %v8315 = vsel %vm364, %v8295, %v8314
        %v8316 = vrot.slane %v8303, 4
        %v8317 = vsel %vm364, %v8316, %v8279
        %v8318 = vrot.slane %v8279, 4
        %v8319 = vsel %vm364, %v8303, %v8318
        %v8320 = vrot.slane %v8307, 4
        %v8321 = vsel %vm364, %v8320, %v8283
        %v8322 = vrot.slane %v8283, 4
        %v8323 = vsel %vm364, %v8307, %v8322
        %v8324 = vrot.slane %v7945, 4
        %v8325 = vsel %vm364, %v8324, %v7941
        %v8326 = vrot.slane %v7941, 4
        %v8327 = vsel %vm364, %v7945, %v8326
        %v8329 = vunpack.c.l.s4 1983009808
        %v8330 = vunpack.c.0.s8 %v8329
        %v8331 = vperm.slane %v8325, %v8330
        %v8333 = vunpack.c.l.s4 1983009808
        %v8334 = vunpack.c.0.s8 %v8333
        %v8335 = vperm.slane %v8327, %v8334
        %v8336 = vrot.slane %v7947, 4
        %v8337 = vsel %vm364, %v8336, %v7943
        %v8338 = vrot.slane %v7943, 4
        %v8339 = vsel %vm364, %v7947, %v8338
        %v8341 = vunpack.c.l.s4 1983009808
        %v8342 = vunpack.c.0.s8 %v8341
        %v8343 = vperm.slane %v8337, %v8342
        %v8345 = vunpack.c.l.s4 1983009808
        %v8346 = vunpack.c.0.s8 %v8345
        %v8347 = vperm.slane %v8339, %v8346
        %v8348 = vrot.slane %v7953, 4
        %v8349 = vsel %vm364, %v8348, %v7949
        %v8350 = vrot.slane %v7949, 4
        %v8351 = vsel %vm364, %v7953, %v8350
        %v8353 = vunpack.c.l.s4 1983009808
        %v8354 = vunpack.c.0.s8 %v8353
        %v8355 = vperm.slane %v8349, %v8354
        %v8357 = vunpack.c.l.s4 1983009808
        %v8358 = vunpack.c.0.s8 %v8357
        %v8359 = vperm.slane %v8351, %v8358
        %v8360 = vrot.slane %v7955, 4
        %v8361 = vsel %vm364, %v8360, %v7951
        %v8362 = vrot.slane %v7951, 4
        %v8363 = vsel %vm364, %v7955, %v8362
        %v8365 = vunpack.c.l.s4 1983009808
        %v8366 = vunpack.c.0.s8 %v8365
        %v8367 = vperm.slane %v8361, %v8366
        %v8369 = vunpack.c.l.s4 1983009808
        %v8370 = vunpack.c.0.s8 %v8369
        %v8371 = vperm.slane %v8363, %v8370
        %v8372 = vrot.slane %v8343, 4
        %v8373 = vsel %vm364, %v8372, %v8331
        %v8374 = vrot.slane %v8331, 4
        %v8375 = vsel %vm364, %v8343, %v8374
        %v8377 = vunpack.c.l.s4 1934713408
        %v8378 = vunpack.c.0.s8 %v8377
        %v8379 = vperm.slane %v8373, %v8378
        %v8381 = vunpack.c.l.s4 1934713408
        %v8382 = vunpack.c.0.s8 %v8381
        %v8383 = vperm.slane %v8375, %v8382
        %v8384 = vrot.slane %v8347, 4
        %v8385 = vsel %vm364, %v8384, %v8335
        %v8386 = vrot.slane %v8335, 4
        %v8387 = vsel %vm364, %v8347, %v8386
        %v8389 = vunpack.c.l.s4 1934713408
        %v8390 = vunpack.c.0.s8 %v8389
        %v8391 = vperm.slane %v8385, %v8390
        %v8393 = vunpack.c.l.s4 1934713408
        %v8394 = vunpack.c.0.s8 %v8393
        %v8395 = vperm.slane %v8387, %v8394
        %v8396 = vrot.slane %v8367, 4
        %v8397 = vsel %vm364, %v8396, %v8355
        %v8398 = vrot.slane %v8355, 4
        %v8399 = vsel %vm364, %v8367, %v8398
        %v8401 = vunpack.c.l.s4 1934713408
        %v8402 = vunpack.c.0.s8 %v8401
        %v8403 = vperm.slane %v8397, %v8402
        %v8405 = vunpack.c.l.s4 1934713408
        %v8406 = vunpack.c.0.s8 %v8405
        %v8407 = vperm.slane %v8399, %v8406
        %v8408 = vrot.slane %v8371, 4
        %v8409 = vsel %vm364, %v8408, %v8359
        %v8410 = vrot.slane %v8359, 4
        %v8411 = vsel %vm364, %v8371, %v8410
        %v8413 = vunpack.c.l.s4 1934713408
        %v8414 = vunpack.c.0.s8 %v8413
        %v8415 = vperm.slane %v8409, %v8414
        %v8417 = vunpack.c.l.s4 1934713408
        %v8418 = vunpack.c.0.s8 %v8417
        %v8419 = vperm.slane %v8411, %v8418
        %v8420 = vrot.slane %v8403, 4
        %v8421 = vsel %vm364, %v8420, %v8379
        %v8422 = vrot.slane %v8379, 4
        %v8423 = vsel %vm364, %v8403, %v8422
        %v8424 = vrot.slane %v8407, 4
        %v8425 = vsel %vm364, %v8424, %v8383
        %v8426 = vrot.slane %v8383, 4
        %v8427 = vsel %vm364, %v8407, %v8426
        %v8428 = vrot.slane %v8415, 4
        %v8429 = vsel %vm364, %v8428, %v8391
        %v8430 = vrot.slane %v8391, 4
        %v8431 = vsel %vm364, %v8415, %v8430
        %v8432 = vrot.slane %v8419, 4
        %v8433 = vsel %vm364, %v8432, %v8395
        %v8434 = vrot.slane %v8395, 4
        %v8435 = vsel %vm364, %v8419, %v8434
        %8440 = vrot.lane.b32.xlu0 %v8087, 16
        %v8441 = vpop.permute.xlu0 %8440
        %8442 = vrot.lane.b32.xlu0 %v8199, 16
        %v8443 = vpop.permute.xlu0 %8442
        %8444 = vrot.lane.b32.xlu0 %v8311, 16
        %v8445 = vpop.permute.xlu0 %8444
        %8446 = vrot.lane.b32.xlu0 %v8423, 16
        %v8447 = vpop.permute.xlu0 %8446
        %8456 = vrot.lane.b32.xlu0 %v8089, 32
        %v8457 = vpop.permute.xlu0 %8456
        %8458 = vrot.lane.b32.xlu0 %v8201, 32
        %v8459 = vpop.permute.xlu0 %8458
        %8460 = vrot.lane.b32.xlu0 %v8313, 32
        %v8461 = vpop.permute.xlu0 %8460
        %8462 = vrot.lane.b32.xlu0 %v8425, 32
        %v8463 = vpop.permute.xlu0 %8462
        %8472 = vrot.lane.b32.xlu0 %v8091, 48
        %v8473 = vpop.permute.xlu0 %8472
        %8474 = vrot.lane.b32.xlu0 %v8203, 48
        %v8475 = vpop.permute.xlu0 %8474
        %8476 = vrot.lane.b32.xlu0 %v8315, 48
        %v8477 = vpop.permute.xlu0 %8476
        %8478 = vrot.lane.b32.xlu0 %v8427, 48
        %v8479 = vpop.permute.xlu0 %8478
        %8488 = vrot.lane.b32.xlu0 %v8093, 64
        %v8489 = vpop.permute.xlu0 %8488
        %8490 = vrot.lane.b32.xlu0 %v8205, 64
        %v8491 = vpop.permute.xlu0 %8490
        %8492 = vrot.lane.b32.xlu0 %v8317, 64
        %v8493 = vpop.permute.xlu0 %8492
        %8494 = vrot.lane.b32.xlu0 %v8429, 64
        %v8495 = vpop.permute.xlu0 %8494
        %8504 = vrot.lane.b32.xlu0 %v8095, 80
        %v8505 = vpop.permute.xlu0 %8504
        %8506 = vrot.lane.b32.xlu0 %v8207, 80
        %v8507 = vpop.permute.xlu0 %8506
        %8508 = vrot.lane.b32.xlu0 %v8319, 80
        %v8509 = vpop.permute.xlu0 %8508
        %8510 = vrot.lane.b32.xlu0 %v8431, 80
        %v8511 = vpop.permute.xlu0 %8510
        %8520 = vrot.lane.b32.xlu0 %v8097, 96
        %v8521 = vpop.permute.xlu0 %8520
        %8522 = vrot.lane.b32.xlu0 %v8209, 96
        %v8523 = vpop.permute.xlu0 %8522
        %8524 = vrot.lane.b32.xlu0 %v8321, 96
        %v8525 = vpop.permute.xlu0 %8524
        %8526 = vrot.lane.b32.xlu0 %v8433, 96
        %v8527 = vpop.permute.xlu0 %8526
        %8536 = vrot.lane.b32.xlu0 %v8099, 112
        %v8537 = vpop.permute.xlu0 %8536
        %8538 = vrot.lane.b32.xlu0 %v8211, 112
        %v8539 = vpop.permute.xlu0 %8538
        %8540 = vrot.lane.b32.xlu0 %v8323, 112
        %v8541 = vpop.permute.xlu0 %8540
        %8542 = vrot.lane.b32.xlu0 %v8435, 112
        %v8543 = vpop.permute.xlu0 %8542
        %v8548 = vsel %vm465, %v8085, %v8441
        %v8549 = vsel %vm465, %v8197, %v8443
        %v8550 = vsel %vm465, %v8309, %v8445
        %v8551 = vsel %vm465, %v8421, %v8447
        %v8552 = vsel %vm467, %v8548, %v8457
        %v8553 = vsel %vm467, %v8549, %v8459
        %v8554 = vsel %vm467, %v8550, %v8461
        %v8555 = vsel %vm467, %v8551, %v8463
        %v8556 = vsel %vm469, %v8552, %v8473
        %v8557 = vsel %vm469, %v8553, %v8475
        %v8558 = vsel %vm469, %v8554, %v8477
        %v8559 = vsel %vm469, %v8555, %v8479
        %v8560 = vsel %vm471, %v8556, %v8489
        %v8561 = vsel %vm471, %v8557, %v8491
        %v8562 = vsel %vm471, %v8558, %v8493
        %v8563 = vsel %vm471, %v8559, %v8495
        %v8564 = vsel %vm473, %v8560, %v8505
        %v8565 = vsel %vm473, %v8561, %v8507
        %v8566 = vsel %vm473, %v8562, %v8509
        %v8567 = vsel %vm473, %v8563, %v8511
        %v8568 = vsel %vm475, %v8564, %v8521
        %v8569 = vsel %vm475, %v8565, %v8523
        %v8570 = vsel %vm475, %v8566, %v8525
        %v8571 = vsel %vm475, %v8567, %v8527
        %v8572 = vsel %vm477, %v8568, %v8537
        %v8573 = vsel %vm477, %v8569, %v8539
        %v8574 = vsel %vm477, %v8570, %v8541
        %v8575 = vsel %vm477, %v8571, %v8543
        %8576 = vst [vmem:[#allocation5 + $0xe0] sm:$0xff] %v8572
        %8577 = vst [vmem:[#allocation5 + $0xe8] sm:$0xff] %v8573
        %8578 = vst [vmem:[#allocation5 + $0xf0] sm:$0xff] %v8574
        %8579 = vst [vmem:[#allocation5 + $0xf8] sm:$0xff] %v8575
        %v8580 = vld [vmem:[#allocation3 + $0x2] sm:$0xff]
        %v8581 = vld [vmem:[#allocation3 + $0x12] sm:$0xff]
        %v8582 = vld [vmem:[#allocation3 + $0x22] sm:$0xff]
        %v8583 = vld [vmem:[#allocation3 + $0x32] sm:$0xff]
        %v8584 = vld [vmem:[#allocation3 + $0x42] sm:$0xff]
        %v8585 = vld [vmem:[#allocation3 + $0x52] sm:$0xff]
        %v8586 = vld [vmem:[#allocation3 + $0x62] sm:$0xff]
        %v8587 = vld [vmem:[#allocation3 + $0x72] sm:$0xff]
        %v8588 = vld [vmem:[#allocation3 + $0x82] sm:$0xff]
        %v8589 = vld [vmem:[#allocation3 + $0x92] sm:$0xff]
        %v8590 = vld [vmem:[#allocation3 + $0xa2] sm:$0xff]
        %v8591 = vld [vmem:[#allocation3 + $0xb2] sm:$0xff]
        %v8592 = vld [vmem:[#allocation3 + $0xc2] sm:$0xff]
        %v8593 = vld [vmem:[#allocation3 + $0xd2] sm:$0xff]
        %v8594 = vld [vmem:[#allocation3 + $0xe2] sm:$0xff]
        %v8595 = vld [vmem:[#allocation3 + $0xf2] sm:$0xff]
        %v8596 = vld [vmem:[#allocation3 + $0x102] sm:$0xff]
        %v8597 = vld [vmem:[#allocation3 + $0x112] sm:$0xff]
        %v8598 = vld [vmem:[#allocation3 + $0x122] sm:$0xff]
        %v8599 = vld [vmem:[#allocation3 + $0x132] sm:$0xff]
        %v8600 = vld [vmem:[#allocation3 + $0x142] sm:$0xff]
        %v8601 = vld [vmem:[#allocation3 + $0x152] sm:$0xff]
        %v8602 = vld [vmem:[#allocation3 + $0x162] sm:$0xff]
        %v8603 = vld [vmem:[#allocation3 + $0x172] sm:$0xff]
        %v8604 = vld [vmem:[#allocation3 + $0x182] sm:$0xff]
        %v8605 = vld [vmem:[#allocation3 + $0x192] sm:$0xff]
        %v8606 = vld [vmem:[#allocation3 + $0x1a2] sm:$0xff]
        %v8607 = vld [vmem:[#allocation3 + $0x1b2] sm:$0xff]
        %v8608 = vld [vmem:[#allocation3 + $0x1c2] sm:$0xff]
        %v8609 = vld [vmem:[#allocation3 + $0x1d2] sm:$0xff]
        %v8610 = vld [vmem:[#allocation3 + $0x1e2] sm:$0xff]
        %v8611 = vld [vmem:[#allocation3 + $0x1f2] sm:$0xff]
        %8644 = vrot.lane.b32.xlu0 %v8580, 126
        %v8645 = vpop.permute.xlu0 %8644
        %8646 = vrot.lane.b32.xlu0 %v8581, 126
        %v8647 = vpop.permute.xlu0 %8646
        %8648 = vrot.lane.b32.xlu0 %v8582, 126
        %v8649 = vpop.permute.xlu0 %8648
        %8650 = vrot.lane.b32.xlu0 %v8583, 126
        %v8651 = vpop.permute.xlu0 %8650
        %8652 = vrot.lane.b32.xlu0 %v8584, 126
        %v8653 = vpop.permute.xlu0 %8652
        %8654 = vrot.lane.b32.xlu0 %v8585, 126
        %v8655 = vpop.permute.xlu0 %8654
        %8656 = vrot.lane.b32.xlu0 %v8586, 126
        %v8657 = vpop.permute.xlu0 %8656
        %8658 = vrot.lane.b32.xlu0 %v8587, 126
        %v8659 = vpop.permute.xlu0 %8658
        %8660 = vrot.lane.b32.xlu0 %v8588, 126
        %v8661 = vpop.permute.xlu0 %8660
        %8662 = vrot.lane.b32.xlu0 %v8589, 126
        %v8663 = vpop.permute.xlu0 %8662
        %8664 = vrot.lane.b32.xlu0 %v8590, 126
        %v8665 = vpop.permute.xlu0 %8664
        %8666 = vrot.lane.b32.xlu0 %v8591, 126
        %v8667 = vpop.permute.xlu0 %8666
        %8668 = vrot.lane.b32.xlu0 %v8592, 126
        %v8669 = vpop.permute.xlu0 %8668
        %8670 = vrot.lane.b32.xlu0 %v8593, 126
        %v8671 = vpop.permute.xlu0 %8670
        %8672 = vrot.lane.b32.xlu0 %v8594, 126
        %v8673 = vpop.permute.xlu0 %8672
        %8674 = vrot.lane.b32.xlu0 %v8595, 126
        %v8675 = vpop.permute.xlu0 %8674
        %8676 = vrot.lane.b32.xlu0 %v8596, 126
        %v8677 = vpop.permute.xlu0 %8676
        %8678 = vrot.lane.b32.xlu0 %v8597, 126
        %v8679 = vpop.permute.xlu0 %8678
        %8680 = vrot.lane.b32.xlu0 %v8598, 126
        %v8681 = vpop.permute.xlu0 %8680
        %8682 = vrot.lane.b32.xlu0 %v8599, 126
        %v8683 = vpop.permute.xlu0 %8682
        %8684 = vrot.lane.b32.xlu0 %v8600, 126
        %v8685 = vpop.permute.xlu0 %8684
        %8686 = vrot.lane.b32.xlu0 %v8601, 126
        %v8687 = vpop.permute.xlu0 %8686
        %8688 = vrot.lane.b32.xlu0 %v8602, 126
        %v8689 = vpop.permute.xlu0 %8688
        %8690 = vrot.lane.b32.xlu0 %v8603, 126
        %v8691 = vpop.permute.xlu0 %8690
        %8692 = vrot.lane.b32.xlu0 %v8604, 126
        %v8693 = vpop.permute.xlu0 %8692
        %8694 = vrot.lane.b32.xlu0 %v8605, 126
        %v8695 = vpop.permute.xlu0 %8694
        %8696 = vrot.lane.b32.xlu0 %v8606, 126
        %v8697 = vpop.permute.xlu0 %8696
        %8698 = vrot.lane.b32.xlu0 %v8607, 126
        %v8699 = vpop.permute.xlu0 %8698
        %8700 = vrot.lane.b32.xlu0 %v8608, 126
        %v8701 = vpop.permute.xlu0 %8700
        %8702 = vrot.lane.b32.xlu0 %v8609, 126
        %v8703 = vpop.permute.xlu0 %8702
        %8704 = vrot.lane.b32.xlu0 %v8610, 126
        %v8705 = vpop.permute.xlu0 %8704
        %8706 = vrot.lane.b32.xlu0 %v8611, 126
        %v8707 = vpop.permute.xlu0 %8706
        %v8740 = vrot.slane %v8649, 4
        %v8741 = vsel %vm364, %v8740, %v8645
        %v8742 = vrot.slane %v8645, 4
        %v8743 = vsel %vm364, %v8649, %v8742
        %v8745 = vunpack.c.l.s4 1983009808
        %v8746 = vunpack.c.0.s8 %v8745
        %v8747 = vperm.slane %v8741, %v8746
        %v8749 = vunpack.c.l.s4 1983009808
        %v8750 = vunpack.c.0.s8 %v8749
        %v8751 = vperm.slane %v8743, %v8750
        %v8752 = vrot.slane %v8651, 4
        %v8753 = vsel %vm364, %v8752, %v8647
        %v8754 = vrot.slane %v8647, 4
        %v8755 = vsel %vm364, %v8651, %v8754
        %v8757 = vunpack.c.l.s4 1983009808
        %v8758 = vunpack.c.0.s8 %v8757
        %v8759 = vperm.slane %v8753, %v8758
        %v8761 = vunpack.c.l.s4 1983009808
        %v8762 = vunpack.c.0.s8 %v8761
        %v8763 = vperm.slane %v8755, %v8762
        %v8764 = vrot.slane %v8657, 4
        %v8765 = vsel %vm364, %v8764, %v8653
        %v8766 = vrot.slane %v8653, 4
        %v8767 = vsel %vm364, %v8657, %v8766
        %v8769 = vunpack.c.l.s4 1983009808
        %v8770 = vunpack.c.0.s8 %v8769
        %v8771 = vperm.slane %v8765, %v8770
        %v8773 = vunpack.c.l.s4 1983009808
        %v8774 = vunpack.c.0.s8 %v8773
        %v8775 = vperm.slane %v8767, %v8774
        %v8776 = vrot.slane %v8659, 4
        %v8777 = vsel %vm364, %v8776, %v8655
        %v8778 = vrot.slane %v8655, 4
        %v8779 = vsel %vm364, %v8659, %v8778
        %v8781 = vunpack.c.l.s4 1983009808
        %v8782 = vunpack.c.0.s8 %v8781
        %v8783 = vperm.slane %v8777, %v8782
        %v8785 = vunpack.c.l.s4 1983009808
        %v8786 = vunpack.c.0.s8 %v8785
        %v8787 = vperm.slane %v8779, %v8786
        %v8788 = vrot.slane %v8759, 4
        %v8789 = vsel %vm364, %v8788, %v8747
        %v8790 = vrot.slane %v8747, 4
        %v8791 = vsel %vm364, %v8759, %v8790
        %v8793 = vunpack.c.l.s4 1934713408
        %v8794 = vunpack.c.0.s8 %v8793
        %v8795 = vperm.slane %v8789, %v8794
        %v8797 = vunpack.c.l.s4 1934713408
        %v8798 = vunpack.c.0.s8 %v8797
        %v8799 = vperm.slane %v8791, %v8798
        %v8800 = vrot.slane %v8763, 4
        %v8801 = vsel %vm364, %v8800, %v8751
        %v8802 = vrot.slane %v8751, 4
        %v8803 = vsel %vm364, %v8763, %v8802
        %v8805 = vunpack.c.l.s4 1934713408
        %v8806 = vunpack.c.0.s8 %v8805
        %v8807 = vperm.slane %v8801, %v8806
        %v8809 = vunpack.c.l.s4 1934713408
        %v8810 = vunpack.c.0.s8 %v8809
        %v8811 = vperm.slane %v8803, %v8810
        %v8812 = vrot.slane %v8783, 4
        %v8813 = vsel %vm364, %v8812, %v8771
        %v8814 = vrot.slane %v8771, 4
        %v8815 = vsel %vm364, %v8783, %v8814
        %v8817 = vunpack.c.l.s4 1934713408
        %v8818 = vunpack.c.0.s8 %v8817
        %v8819 = vperm.slane %v8813, %v8818
        %v8821 = vunpack.c.l.s4 1934713408
        %v8822 = vunpack.c.0.s8 %v8821
        %v8823 = vperm.slane %v8815, %v8822
        %v8824 = vrot.slane %v8787, 4
        %v8825 = vsel %vm364, %v8824, %v8775
        %v8826 = vrot.slane %v8775, 4
        %v8827 = vsel %vm364, %v8787, %v8826
        %v8829 = vunpack.c.l.s4 1934713408
        %v8830 = vunpack.c.0.s8 %v8829
        %v8831 = vperm.slane %v8825, %v8830
        %v8833 = vunpack.c.l.s4 1934713408
        %v8834 = vunpack.c.0.s8 %v8833
        %v8835 = vperm.slane %v8827, %v8834
        %v8836 = vrot.slane %v8819, 4
        %v8837 = vsel %vm364, %v8836, %v8795
        %v8838 = vrot.slane %v8795, 4
        %v8839 = vsel %vm364, %v8819, %v8838
        %v8840 = vrot.slane %v8823, 4
        %v8841 = vsel %vm364, %v8840, %v8799
        %v8842 = vrot.slane %v8799, 4
        %v8843 = vsel %vm364, %v8823, %v8842
        %v8844 = vrot.slane %v8831, 4
        %v8845 = vsel %vm364, %v8844, %v8807
        %v8846 = vrot.slane %v8807, 4
        %v8847 = vsel %vm364, %v8831, %v8846
        %v8848 = vrot.slane %v8835, 4
        %v8849 = vsel %vm364, %v8848, %v8811
        %v8850 = vrot.slane %v8811, 4
        %v8851 = vsel %vm364, %v8835, %v8850
        %v8852 = vrot.slane %v8665, 4
        %v8853 = vsel %vm364, %v8852, %v8661
        %v8854 = vrot.slane %v8661, 4
        %v8855 = vsel %vm364, %v8665, %v8854
        %v8857 = vunpack.c.l.s4 1983009808
        %v8858 = vunpack.c.0.s8 %v8857
        %v8859 = vperm.slane %v8853, %v8858
        %v8861 = vunpack.c.l.s4 1983009808
        %v8862 = vunpack.c.0.s8 %v8861
        %v8863 = vperm.slane %v8855, %v8862
        %v8864 = vrot.slane %v8667, 4
        %v8865 = vsel %vm364, %v8864, %v8663
        %v8866 = vrot.slane %v8663, 4
        %v8867 = vsel %vm364, %v8667, %v8866
        %v8869 = vunpack.c.l.s4 1983009808
        %v8870 = vunpack.c.0.s8 %v8869
        %v8871 = vperm.slane %v8865, %v8870
        %v8873 = vunpack.c.l.s4 1983009808
        %v8874 = vunpack.c.0.s8 %v8873
        %v8875 = vperm.slane %v8867, %v8874
        %v8876 = vrot.slane %v8673, 4
        %v8877 = vsel %vm364, %v8876, %v8669
        %v8878 = vrot.slane %v8669, 4
        %v8879 = vsel %vm364, %v8673, %v8878
        %v8881 = vunpack.c.l.s4 1983009808
        %v8882 = vunpack.c.0.s8 %v8881
        %v8883 = vperm.slane %v8877, %v8882
        %v8885 = vunpack.c.l.s4 1983009808
        %v8886 = vunpack.c.0.s8 %v8885
        %v8887 = vperm.slane %v8879, %v8886
        %v8888 = vrot.slane %v8675, 4
        %v8889 = vsel %vm364, %v8888, %v8671
        %v8890 = vrot.slane %v8671, 4
        %v8891 = vsel %vm364, %v8675, %v8890
        %v8893 = vunpack.c.l.s4 1983009808
        %v8894 = vunpack.c.0.s8 %v8893
        %v8895 = vperm.slane %v8889, %v8894
        %v8897 = vunpack.c.l.s4 1983009808
        %v8898 = vunpack.c.0.s8 %v8897
        %v8899 = vperm.slane %v8891, %v8898
        %v8900 = vrot.slane %v8871, 4
        %v8901 = vsel %vm364, %v8900, %v8859
        %v8902 = vrot.slane %v8859, 4
        %v8903 = vsel %vm364, %v8871, %v8902
        %v8905 = vunpack.c.l.s4 1934713408
        %v8906 = vunpack.c.0.s8 %v8905
        %v8907 = vperm.slane %v8901, %v8906
        %v8909 = vunpack.c.l.s4 1934713408
        %v8910 = vunpack.c.0.s8 %v8909
        %v8911 = vperm.slane %v8903, %v8910
        %v8912 = vrot.slane %v8875, 4
        %v8913 = vsel %vm364, %v8912, %v8863
        %v8914 = vrot.slane %v8863, 4
        %v8915 = vsel %vm364, %v8875, %v8914
        %v8917 = vunpack.c.l.s4 1934713408
        %v8918 = vunpack.c.0.s8 %v8917
        %v8919 = vperm.slane %v8913, %v8918
        %v8921 = vunpack.c.l.s4 1934713408
        %v8922 = vunpack.c.0.s8 %v8921
        %v8923 = vperm.slane %v8915, %v8922
        %v8924 = vrot.slane %v8895, 4
        %v8925 = vsel %vm364, %v8924, %v8883
        %v8926 = vrot.slane %v8883, 4
        %v8927 = vsel %vm364, %v8895, %v8926
        %v8929 = vunpack.c.l.s4 1934713408
        %v8930 = vunpack.c.0.s8 %v8929
        %v8931 = vperm.slane %v8925, %v8930
        %v8933 = vunpack.c.l.s4 1934713408
        %v8934 = vunpack.c.0.s8 %v8933
        %v8935 = vperm.slane %v8927, %v8934
        %v8936 = vrot.slane %v8899, 4
        %v8937 = vsel %vm364, %v8936, %v8887
        %v8938 = vrot.slane %v8887, 4
        %v8939 = vsel %vm364, %v8899, %v8938
        %v8941 = vunpack.c.l.s4 1934713408
        %v8942 = vunpack.c.0.s8 %v8941
        %v8943 = vperm.slane %v8937, %v8942
        %v8945 = vunpack.c.l.s4 1934713408
        %v8946 = vunpack.c.0.s8 %v8945
        %v8947 = vperm.slane %v8939, %v8946
        %v8948 = vrot.slane %v8931, 4
        %v8949 = vsel %vm364, %v8948, %v8907
        %v8950 = vrot.slane %v8907, 4
        %v8951 = vsel %vm364, %v8931, %v8950
        %v8952 = vrot.slane %v8935, 4
        %v8953 = vsel %vm364, %v8952, %v8911
        %v8954 = vrot.slane %v8911, 4
        %v8955 = vsel %vm364, %v8935, %v8954
        %v8956 = vrot.slane %v8943, 4
        %v8957 = vsel %vm364, %v8956, %v8919
        %v8958 = vrot.slane %v8919, 4
        %v8959 = vsel %vm364, %v8943, %v8958
        %v8960 = vrot.slane %v8947, 4
        %v8961 = vsel %vm364, %v8960, %v8923
        %v8962 = vrot.slane %v8923, 4
        %v8963 = vsel %vm364, %v8947, %v8962
        %v8964 = vrot.slane %v8681, 4
        %v8965 = vsel %vm364, %v8964, %v8677
        %v8966 = vrot.slane %v8677, 4
        %v8967 = vsel %vm364, %v8681, %v8966
        %v8969 = vunpack.c.l.s4 1983009808
        %v8970 = vunpack.c.0.s8 %v8969
        %v8971 = vperm.slane %v8965, %v8970
        %v8973 = vunpack.c.l.s4 1983009808
        %v8974 = vunpack.c.0.s8 %v8973
        %v8975 = vperm.slane %v8967, %v8974
        %v8976 = vrot.slane %v8683, 4
        %v8977 = vsel %vm364, %v8976, %v8679
        %v8978 = vrot.slane %v8679, 4
        %v8979 = vsel %vm364, %v8683, %v8978
        %v8981 = vunpack.c.l.s4 1983009808
        %v8982 = vunpack.c.0.s8 %v8981
        %v8983 = vperm.slane %v8977, %v8982
        %v8985 = vunpack.c.l.s4 1983009808
        %v8986 = vunpack.c.0.s8 %v8985
        %v8987 = vperm.slane %v8979, %v8986
        %v8988 = vrot.slane %v8689, 4
        %v8989 = vsel %vm364, %v8988, %v8685
        %v8990 = vrot.slane %v8685, 4
        %v8991 = vsel %vm364, %v8689, %v8990
        %v8993 = vunpack.c.l.s4 1983009808
        %v8994 = vunpack.c.0.s8 %v8993
        %v8995 = vperm.slane %v8989, %v8994
        %v8997 = vunpack.c.l.s4 1983009808
        %v8998 = vunpack.c.0.s8 %v8997
        %v8999 = vperm.slane %v8991, %v8998
        %v9000 = vrot.slane %v8691, 4
        %v9001 = vsel %vm364, %v9000, %v8687
        %v9002 = vrot.slane %v8687, 4
        %v9003 = vsel %vm364, %v8691, %v9002
        %v9005 = vunpack.c.l.s4 1983009808
        %v9006 = vunpack.c.0.s8 %v9005
        %v9007 = vperm.slane %v9001, %v9006
        %v9009 = vunpack.c.l.s4 1983009808
        %v9010 = vunpack.c.0.s8 %v9009
        %v9011 = vperm.slane %v9003, %v9010
        %v9012 = vrot.slane %v8983, 4
        %v9013 = vsel %vm364, %v9012, %v8971
        %v9014 = vrot.slane %v8971, 4
        %v9015 = vsel %vm364, %v8983, %v9014
        %v9017 = vunpack.c.l.s4 1934713408
        %v9018 = vunpack.c.0.s8 %v9017
        %v9019 = vperm.slane %v9013, %v9018
        %v9021 = vunpack.c.l.s4 1934713408
        %v9022 = vunpack.c.0.s8 %v9021
        %v9023 = vperm.slane %v9015, %v9022
        %v9024 = vrot.slane %v8987, 4
        %v9025 = vsel %vm364, %v9024, %v8975
        %v9026 = vrot.slane %v8975, 4
        %v9027 = vsel %vm364, %v8987, %v9026
        %v9029 = vunpack.c.l.s4 1934713408
        %v9030 = vunpack.c.0.s8 %v9029
        %v9031 = vperm.slane %v9025, %v9030
        %v9033 = vunpack.c.l.s4 1934713408
        %v9034 = vunpack.c.0.s8 %v9033
        %v9035 = vperm.slane %v9027, %v9034
        %v9036 = vrot.slane %v9007, 4
        %v9037 = vsel %vm364, %v9036, %v8995
        %v9038 = vrot.slane %v8995, 4
        %v9039 = vsel %vm364, %v9007, %v9038
        %v9041 = vunpack.c.l.s4 1934713408
        %v9042 = vunpack.c.0.s8 %v9041
        %v9043 = vperm.slane %v9037, %v9042
        %v9045 = vunpack.c.l.s4 1934713408
        %v9046 = vunpack.c.0.s8 %v9045
        %v9047 = vperm.slane %v9039, %v9046
        %v9048 = vrot.slane %v9011, 4
        %v9049 = vsel %vm364, %v9048, %v8999
        %v9050 = vrot.slane %v8999, 4
        %v9051 = vsel %vm364, %v9011, %v9050
        %v9053 = vunpack.c.l.s4 1934713408
        %v9054 = vunpack.c.0.s8 %v9053
        %v9055 = vperm.slane %v9049, %v9054
        %v9057 = vunpack.c.l.s4 1934713408
        %v9058 = vunpack.c.0.s8 %v9057
        %v9059 = vperm.slane %v9051, %v9058
        %v9060 = vrot.slane %v9043, 4
        %v9061 = vsel %vm364, %v9060, %v9019
        %v9062 = vrot.slane %v9019, 4
        %v9063 = vsel %vm364, %v9043, %v9062
        %v9064 = vrot.slane %v9047, 4
        %v9065 = vsel %vm364, %v9064, %v9023
        %v9066 = vrot.slane %v9023, 4
        %v9067 = vsel %vm364, %v9047, %v9066
        %v9068 = vrot.slane %v9055, 4
        %v9069 = vsel %vm364, %v9068, %v9031
        %v9070 = vrot.slane %v9031, 4
        %v9071 = vsel %vm364, %v9055, %v9070
        %v9072 = vrot.slane %v9059, 4
        %v9073 = vsel %vm364, %v9072, %v9035
        %v9074 = vrot.slane %v9035, 4
        %v9075 = vsel %vm364, %v9059, %v9074
        %v9076 = vrot.slane %v8697, 4
        %v9077 = vsel %vm364, %v9076, %v8693
        %v9078 = vrot.slane %v8693, 4
        %v9079 = vsel %vm364, %v8697, %v9078
        %v9081 = vunpack.c.l.s4 1983009808
        %v9082 = vunpack.c.0.s8 %v9081
        %v9083 = vperm.slane %v9077, %v9082
        %v9085 = vunpack.c.l.s4 1983009808
        %v9086 = vunpack.c.0.s8 %v9085
        %v9087 = vperm.slane %v9079, %v9086
        %v9088 = vrot.slane %v8699, 4
        %v9089 = vsel %vm364, %v9088, %v8695
        %v9090 = vrot.slane %v8695, 4
        %v9091 = vsel %vm364, %v8699, %v9090
        %v9093 = vunpack.c.l.s4 1983009808
        %v9094 = vunpack.c.0.s8 %v9093
        %v9095 = vperm.slane %v9089, %v9094
        %v9097 = vunpack.c.l.s4 1983009808
        %v9098 = vunpack.c.0.s8 %v9097
        %v9099 = vperm.slane %v9091, %v9098
        %v9100 = vrot.slane %v8705, 4
        %v9101 = vsel %vm364, %v9100, %v8701
        %v9102 = vrot.slane %v8701, 4
        %v9103 = vsel %vm364, %v8705, %v9102
        %v9105 = vunpack.c.l.s4 1983009808
        %v9106 = vunpack.c.0.s8 %v9105
        %v9107 = vperm.slane %v9101, %v9106
        %v9109 = vunpack.c.l.s4 1983009808
        %v9110 = vunpack.c.0.s8 %v9109
        %v9111 = vperm.slane %v9103, %v9110
        %v9112 = vrot.slane %v8707, 4
        %v9113 = vsel %vm364, %v9112, %v8703
        %v9114 = vrot.slane %v8703, 4
        %v9115 = vsel %vm364, %v8707, %v9114
        %v9117 = vunpack.c.l.s4 1983009808
        %v9118 = vunpack.c.0.s8 %v9117
        %v9119 = vperm.slane %v9113, %v9118
        %v9121 = vunpack.c.l.s4 1983009808
        %v9122 = vunpack.c.0.s8 %v9121
        %v9123 = vperm.slane %v9115, %v9122
        %v9124 = vrot.slane %v9095, 4
        %v9125 = vsel %vm364, %v9124, %v9083
        %v9126 = vrot.slane %v9083, 4
        %v9127 = vsel %vm364, %v9095, %v9126
        %v9129 = vunpack.c.l.s4 1934713408
        %v9130 = vunpack.c.0.s8 %v9129
        %v9131 = vperm.slane %v9125, %v9130
        %v9133 = vunpack.c.l.s4 1934713408
        %v9134 = vunpack.c.0.s8 %v9133
        %v9135 = vperm.slane %v9127, %v9134
        %v9136 = vrot.slane %v9099, 4
        %v9137 = vsel %vm364, %v9136, %v9087
        %v9138 = vrot.slane %v9087, 4
        %v9139 = vsel %vm364, %v9099, %v9138
        %v9141 = vunpack.c.l.s4 1934713408
        %v9142 = vunpack.c.0.s8 %v9141
        %v9143 = vperm.slane %v9137, %v9142
        %v9145 = vunpack.c.l.s4 1934713408
        %v9146 = vunpack.c.0.s8 %v9145
        %v9147 = vperm.slane %v9139, %v9146
        %v9148 = vrot.slane %v9119, 4
        %v9149 = vsel %vm364, %v9148, %v9107
        %v9150 = vrot.slane %v9107, 4
        %v9151 = vsel %vm364, %v9119, %v9150
        %v9153 = vunpack.c.l.s4 1934713408
        %v9154 = vunpack.c.0.s8 %v9153
        %v9155 = vperm.slane %v9149, %v9154
        %v9157 = vunpack.c.l.s4 1934713408
        %v9158 = vunpack.c.0.s8 %v9157
        %v9159 = vperm.slane %v9151, %v9158
        %v9160 = vrot.slane %v9123, 4
        %v9161 = vsel %vm364, %v9160, %v9111
        %v9162 = vrot.slane %v9111, 4
        %v9163 = vsel %vm364, %v9123, %v9162
        %v9165 = vunpack.c.l.s4 1934713408
        %v9166 = vunpack.c.0.s8 %v9165
        %v9167 = vperm.slane %v9161, %v9166
        %v9169 = vunpack.c.l.s4 1934713408
        %v9170 = vunpack.c.0.s8 %v9169
        %v9171 = vperm.slane %v9163, %v9170
        %v9172 = vrot.slane %v9155, 4
        %v9173 = vsel %vm364, %v9172, %v9131
        %v9174 = vrot.slane %v9131, 4
        %v9175 = vsel %vm364, %v9155, %v9174
        %v9176 = vrot.slane %v9159, 4
        %v9177 = vsel %vm364, %v9176, %v9135
        %v9178 = vrot.slane %v9135, 4
        %v9179 = vsel %vm364, %v9159, %v9178
        %v9180 = vrot.slane %v9167, 4
        %v9181 = vsel %vm364, %v9180, %v9143
        %v9182 = vrot.slane %v9143, 4
        %v9183 = vsel %vm364, %v9167, %v9182
        %v9184 = vrot.slane %v9171, 4
        %v9185 = vsel %vm364, %v9184, %v9147
        %v9186 = vrot.slane %v9147, 4
        %v9187 = vsel %vm364, %v9171, %v9186
        %9192 = vrot.lane.b32.xlu0 %v8839, 16
        %v9193 = vpop.permute.xlu0 %9192
        %9194 = vrot.lane.b32.xlu0 %v8951, 16
        %v9195 = vpop.permute.xlu0 %9194
        %9196 = vrot.lane.b32.xlu0 %v9063, 16
        %v9197 = vpop.permute.xlu0 %9196
        %9198 = vrot.lane.b32.xlu0 %v9175, 16
        %v9199 = vpop.permute.xlu0 %9198
        %9208 = vrot.lane.b32.xlu0 %v8841, 32
        %v9209 = vpop.permute.xlu0 %9208
        %9210 = vrot.lane.b32.xlu0 %v8953, 32
        %v9211 = vpop.permute.xlu0 %9210
        %9212 = vrot.lane.b32.xlu0 %v9065, 32
        %v9213 = vpop.permute.xlu0 %9212
        %9214 = vrot.lane.b32.xlu0 %v9177, 32
        %v9215 = vpop.permute.xlu0 %9214
        %9224 = vrot.lane.b32.xlu0 %v8843, 48
        %v9225 = vpop.permute.xlu0 %9224
        %9226 = vrot.lane.b32.xlu0 %v8955, 48
        %v9227 = vpop.permute.xlu0 %9226
        %9228 = vrot.lane.b32.xlu0 %v9067, 48
        %v9229 = vpop.permute.xlu0 %9228
        %9230 = vrot.lane.b32.xlu0 %v9179, 48
        %v9231 = vpop.permute.xlu0 %9230
        %9240 = vrot.lane.b32.xlu0 %v8845, 64
        %v9241 = vpop.permute.xlu0 %9240
        %9242 = vrot.lane.b32.xlu0 %v8957, 64
        %v9243 = vpop.permute.xlu0 %9242
        %9244 = vrot.lane.b32.xlu0 %v9069, 64
        %v9245 = vpop.permute.xlu0 %9244
        %9246 = vrot.lane.b32.xlu0 %v9181, 64
        %v9247 = vpop.permute.xlu0 %9246
        %9256 = vrot.lane.b32.xlu0 %v8847, 80
        %v9257 = vpop.permute.xlu0 %9256
        %9258 = vrot.lane.b32.xlu0 %v8959, 80
        %v9259 = vpop.permute.xlu0 %9258
        %9260 = vrot.lane.b32.xlu0 %v9071, 80
        %v9261 = vpop.permute.xlu0 %9260
        %9262 = vrot.lane.b32.xlu0 %v9183, 80
        %v9263 = vpop.permute.xlu0 %9262
        %9272 = vrot.lane.b32.xlu0 %v8849, 96
        %v9273 = vpop.permute.xlu0 %9272
        %9274 = vrot.lane.b32.xlu0 %v8961, 96
        %v9275 = vpop.permute.xlu0 %9274
        %9276 = vrot.lane.b32.xlu0 %v9073, 96
        %v9277 = vpop.permute.xlu0 %9276
        %9278 = vrot.lane.b32.xlu0 %v9185, 96
        %v9279 = vpop.permute.xlu0 %9278
        %9288 = vrot.lane.b32.xlu0 %v8851, 112
        %v9289 = vpop.permute.xlu0 %9288
        %9290 = vrot.lane.b32.xlu0 %v8963, 112
        %v9291 = vpop.permute.xlu0 %9290
        %9292 = vrot.lane.b32.xlu0 %v9075, 112
        %v9293 = vpop.permute.xlu0 %9292
        %9294 = vrot.lane.b32.xlu0 %v9187, 112
        %v9295 = vpop.permute.xlu0 %9294
        %v9300 = vsel %vm465, %v8837, %v9193
        %v9301 = vsel %vm465, %v8949, %v9195
        %v9302 = vsel %vm465, %v9061, %v9197
        %v9303 = vsel %vm465, %v9173, %v9199
        %v9304 = vsel %vm467, %v9300, %v9209
        %v9305 = vsel %vm467, %v9301, %v9211
        %v9306 = vsel %vm467, %v9302, %v9213
        %v9307 = vsel %vm467, %v9303, %v9215
        %v9308 = vsel %vm469, %v9304, %v9225
        %v9309 = vsel %vm469, %v9305, %v9227
        %v9310 = vsel %vm469, %v9306, %v9229
        %v9311 = vsel %vm469, %v9307, %v9231
        %v9312 = vsel %vm471, %v9308, %v9241
        %v9313 = vsel %vm471, %v9309, %v9243
        %v9314 = vsel %vm471, %v9310, %v9245
        %v9315 = vsel %vm471, %v9311, %v9247
        %v9316 = vsel %vm473, %v9312, %v9257
        %v9317 = vsel %vm473, %v9313, %v9259
        %v9318 = vsel %vm473, %v9314, %v9261
        %v9319 = vsel %vm473, %v9315, %v9263
        %v9320 = vsel %vm475, %v9316, %v9273
        %v9321 = vsel %vm475, %v9317, %v9275
        %v9322 = vsel %vm475, %v9318, %v9277
        %v9323 = vsel %vm475, %v9319, %v9279
        %v9324 = vsel %vm477, %v9320, %v9289
        %v9325 = vsel %vm477, %v9321, %v9291
        %v9326 = vsel %vm477, %v9322, %v9293
        %v9327 = vsel %vm477, %v9323, %v9295
        %9328 = vst [vmem:[#allocation5 + $0x100] sm:$0xff] %v9324
        %9329 = vst [vmem:[#allocation5 + $0x108] sm:$0xff] %v9325
        %9330 = vst [vmem:[#allocation5 + $0x110] sm:$0xff] %v9326
        %9331 = vst [vmem:[#allocation5 + $0x118] sm:$0xff] %v9327
        %v9332 = vld [vmem:[%s3] sm:$0xff]
        %v9333 = vld [vmem:[%s3 + $0x8] sm:$0xf]
        %v9334 = vld [vmem:[%s3 + $0xc] sm:$0xff]
        %v9335 = vld [vmem:[%s3 + $0x14] sm:$0xf]
        %v9336 = vld [vmem:[%s3 + $0x18] sm:$0xff]
        %v9337 = vld [vmem:[%s3 + $0x20] sm:$0xf]
        %v9338 = vld [vmem:[%s3 + $0x24] sm:$0xff]
        %v9339 = vld [vmem:[%s3 + $0x2c] sm:$0xf]
        %v9340 = vld [vmem:[#allocation5] sm:$0xff]
        %v9341 = vld [vmem:[#allocation5 + $0x8] sm:$0xff]
        %v9342 = vld [vmem:[#allocation5 + $0x10] sm:$0xff]
        %v9343 = vld [vmem:[#allocation5 + $0x18] sm:$0xff]
        %v9344 = vld [vmem:[#allocation5 + $0x20] sm:$0xff]
        %v9345 = vld [vmem:[#allocation5 + $0x28] sm:$0xff]
        %v9346 = vld [vmem:[#allocation5 + $0x30] sm:$0xff]
        %v9347 = vld [vmem:[#allocation5 + $0x38] sm:$0xff]
        %v9348 = vld [vmem:[#allocation5 + $0x40] sm:$0xff]
        %v9349 = vld [vmem:[#allocation5 + $0x48] sm:$0xff]
        %v9350 = vld [vmem:[#allocation5 + $0x50] sm:$0xff]
        %v9351 = vld [vmem:[#allocation5 + $0x58] sm:$0xff]
        %v9352 = vld [vmem:[#allocation5 + $0x60] sm:$0xff]
        %v9353 = vld [vmem:[#allocation5 + $0x68] sm:$0xff]
        %v9354 = vld [vmem:[#allocation5 + $0x70] sm:$0xff]
        %v9355 = vld [vmem:[#allocation5 + $0x78] sm:$0xff]
        %v9356 = vld [vmem:[#allocation5 + $0x80] sm:$0xff]
        %v9357 = vld [vmem:[#allocation5 + $0x88] sm:$0xff]
        %v9358 = vld [vmem:[#allocation5 + $0x90] sm:$0xff]
        %v9359 = vld [vmem:[#allocation5 + $0x98] sm:$0xff]
        %v9360 = vld [vmem:[#allocation5 + $0xa0] sm:$0xff]
        %v9361 = vld [vmem:[#allocation5 + $0xa8] sm:$0xff]
        %v9362 = vld [vmem:[#allocation5 + $0xb0] sm:$0xff]
        %v9363 = vld [vmem:[#allocation5 + $0xb8] sm:$0xff]
        %v9364 = vld [vmem:[#allocation5 + $0xc0] sm:$0xff]
        %v9365 = vld [vmem:[#allocation5 + $0xc8] sm:$0xff]
        %v9366 = vld [vmem:[#allocation5 + $0xd0] sm:$0xff]
        %v9367 = vld [vmem:[#allocation5 + $0xd8] sm:$0xff]
        %v9368 = vld [vmem:[#allocation5 + $0xe0] sm:$0xff]
        %v9369 = vld [vmem:[#allocation5 + $0xe8] sm:$0xff]
        %v9370 = vld [vmem:[#allocation5 + $0xf0] sm:$0xff]
        %v9371 = vld [vmem:[#allocation5 + $0xf8] sm:$0xff]
        %v9372 = vld [vmem:[#allocation5 + $0x100] sm:$0xff]
        %v9373 = vld [vmem:[#allocation5 + $0x108] sm:$0xff]
        %v9374 = vld [vmem:[#allocation5 + $0x110] sm:$0xff]
        %v9375 = vld [vmem:[#allocation5 + $0x118] sm:$0xff]
        %v9376 = vpack.c.bf16 %v9341, %v9340
        %v9377 = vpack.c.bf16 %v9343, %v9342
        %v9378 = vpack.c.bf16 %v9345, %v9344
        %v9379 = vpack.c.bf16 %v9347, %v9346
        %v9380 = vpack.c.bf16 %v9349, %v9348
        %v9381 = vpack.c.bf16 %v9351, %v9350
        %v9382 = vpack.c.bf16 %v9353, %v9352
        %v9383 = vpack.c.bf16 %v9355, %v9354
        %v9384 = vpack.c.bf16 %v9357, %v9356
        %v9385 = vpack.c.bf16 %v9359, %v9358
        %v9386 = vpack.c.bf16 %v9361, %v9360
        %v9387 = vpack.c.bf16 %v9363, %v9362
        %v9388 = vpack.c.bf16 %v9365, %v9364
        %v9389 = vpack.c.bf16 %v9367, %v9366
        %v9390 = vpack.c.bf16 %v9369, %v9368
        %v9391 = vpack.c.bf16 %v9371, %v9370
        %v9392 = vpack.c.bf16 %v9373, %v9372
        %v9393 = vpack.c.bf16 %v9375, %v9374
        %v9394 = vld [vmem:[%s4] sm:$0xff]
        %v9395 = vld [vmem:[%s4 + $0x8] sm:$0xff]
        %v9396 = vld [vmem:[%s4 + $0x10] sm:$0xff]
        %v9397 = vld [vmem:[%s4 + $0x18] sm:$0xff]
        %9399 = vset.pattern.permute.xlu0 0
        %9400 = vperm.xlu0 %9399, %v9394
        %v9401 = vpop.permute.xlu0 %9400
        %9404 = vset.pattern.permute.xlu0 0
        %9405 = vperm.xlu0 %9404, %v9395
        %v9406 = vpop.permute.xlu0 %9405
        %9409 = vset.pattern.permute.xlu0 0
        %9410 = vperm.xlu0 %9409, %v9396
        %v9411 = vpop.permute.xlu0 %9410
        %9414 = vset.pattern.permute.xlu0 0
        %9415 = vperm.xlu0 %9414, %v9397
        %v9416 = vpop.permute.xlu0 %9415
        %v9426 = vunpack.c.l.b16 %v9332
        %v9427 = vunpack.c.h.b16 %v9332
        %v9428 = vunpack.c.l.b16 %v9333
        %v9429 = vunpack.c.l.b16 %v9334
        %v9430 = vunpack.c.h.b16 %v9334
        %v9431 = vunpack.c.l.b16 %v9335
        %v9432 = vunpack.c.l.b16 %v9336
        %v9433 = vunpack.c.h.b16 %v9336
        %v9434 = vunpack.c.l.b16 %v9337
        %v9435 = vunpack.c.l.b16 %v9338
        %v9436 = vunpack.c.h.b16 %v9338
        %v9437 = vunpack.c.l.b16 %v9339
        %v9438 = vpack.c.b16 %v9429, %v9426
        %v9439 = vpack.c.b16 %v9430, %v9427
        %v9440 = vpack.c.b16 %v9431, %v9428
        %v9441 = vpack.c.b16 %v9435, %v9432
        %v9442 = vpack.c.b16 %v9436, %v9433
        %v9443 = vpack.c.b16 %v9437, %v9434
        %v9449 = vsel %vm467, %v9440, 0
        %v9452 = vsel %vm467, %v9443, 0
        %9454 = vmatpush.bf16.msra.mxu0 %v9383
        %9455 = vmatpush.bf16.msra.mxu0 %v9382
        %9456 = vmatpush.bf16.msra.mxu0 %v9381
        %9457 = vmatpush.bf16.msra.mxu0 %v9380
        %9458 = vmatpush.bf16.msra.mxu0 %v9379
        %9459 = vmatpush.bf16.msra.mxu0 %v9378
        %9460 = vmatpush.bf16.msra.mxu0 %v9377
        %9461 = vmatpush.bf16.msra.mxu0 %v9376
        %9462 = vmatmul.bf16.gmra.mxu0 %v9438
        %v9463 = vpop.f32.mrf.mxu0
        %v9464 = vadd.f32 %v9401, %v9463
        %v9465 = vpop.f32.mrf.mxu0
        %v9466 = vadd.f32 %v9406, %v9465
        %9467 = vmatmul.bf16.gmra.mxu0 %v9441
        %v9468 = vpop.f32.mrf.mxu0
        %v9469 = vadd.f32 %v9411, %v9468
        %v9470 = vpop.f32.mrf.mxu0
        %v9471 = vadd.f32 %v9416, %v9470
        %9472 = vdwg.mxu0
        %9473 = vmatpush.bf16.msra.mxu0 %v9391
        %9474 = vmatpush.bf16.msra.mxu0 %v9390
        %9475 = vmatpush.bf16.msra.mxu0 %v9389
        %9476 = vmatpush.bf16.msra.mxu0 %v9388
        %9477 = vmatpush.bf16.msra.mxu0 %v9387
        %9478 = vmatpush.bf16.msra.mxu0 %v9386
        %9479 = vmatpush.bf16.msra.mxu0 %v9385
        %9480 = vmatpush.bf16.msra.mxu0 %v9384
        %9481 = vmatmul.bf16.gmra.mxu0 %v9439
        %v9482 = vpop.f32.mrf.mxu0
        %v9483 = vadd.f32 %v9464, %v9482
        %v9484 = vpop.f32.mrf.mxu0
        %v9485 = vadd.f32 %v9466, %v9484
        %9486 = vmatmul.bf16.gmra.mxu0 %v9442
        %v9487 = vpop.f32.mrf.mxu0
        %v9488 = vadd.f32 %v9469, %v9487
        %v9489 = vpop.f32.mrf.mxu0
        %v9490 = vadd.f32 %v9471, %v9489
        %9491 = vdwg.mxu0
        %9492 = vmatpush.bf16.msra.mxu0 0
        %9493 = vmatpush.bf16.msra.mxu0 0
        %9494 = vmatpush.bf16.msra.mxu0 0
        %9495 = vmatpush.bf16.msra.mxu0 0
        %9496 = vmatpush.bf16.msra.mxu0 0
        %9497 = vmatpush.bf16.msra.mxu0 0
        %9498 = vmatpush.bf16.msra.mxu0 %v9393
        %9499 = vmatpush.bf16.msra.mxu0 %v9392
        %9500 = vmatmul.bf16.gmra.mxu0 %v9449
        %v9501 = vpop.f32.mrf.mxu0
        %v9502 = vadd.f32 %v9483, %v9501
        %v9503 = vpop.f32.mrf.mxu0
        %v9504 = vadd.f32 %v9485, %v9503
        %9505 = vmatmul.bf16.gmra.mxu0 %v9452
        %v9506 = vpop.f32.mrf.mxu0
        %v9507 = vadd.f32 %v9488, %v9506
        %v9508 = vpop.f32.mrf.mxu0
        %v9509 = vadd.f32 %v9490, %v9508
        %9510 = vdwg.mxu0
        %v9511 = vmax.f32 %v9502, 0.0
        %v9512 = vmax.f32 %v9504, 0.0
        %v9513 = vmax.f32 %v9507, 0.0
        %v9514 = vmax.f32 %v9509, 0.0
        %9515 = vst [vmem:[%s281] sm:$0xff] %v9511
        %9516 = vst [vmem:[%s281 + $0x8] sm:$0xff] %v9512
        %9517 = vst [vmem:[%s281 + $0x10] sm:$0xff] %v9513
        %9518 = vst [vmem:[%s281 + $0x18] sm:$0xff] %v9514
        %s9519 = sand.u32 %s173, 1
        %s9520 = sand.u32 %s173, 1
        %s9521 = smul.addr %s9520, 32
        %s9522 = scalar_lea.vmem [#allocation8], %s9521
        // Predicated region
        $region61: #{backbone_forward.1} parent=43 // pred_check
          %p9523 = pneg %p183
        $region62: #{backbone_forward.1} parent=43 // pred_check_branch
          %9525 = sbr.rel (%p9523) target = $region64
        $region63: #{backbone_forward.1} parent=43 // pred_region
          %s9526 = smul.addr %s24, 8
          %s9527 = sadd.s32 %s25, %s9526
          %s9528 = smul.addr %s9527, 8
          %s9529 = scalar_lea.vmem %s6, %s9528
          // Predicated region
          $region65: #{backbone_forward.1} parent=63 // pred_check
            _
          $region66: #{backbone_forward.1} parent=63 // pred_check_branch
            %9531 = sbr.rel (0) target = $region68
          $region67: #{backbone_forward.1} parent=63 // pred_region
            // Predicated region
            $region69: #{backbone_forward.1} parent=67 // pred_check
              _
            $region70: #{backbone_forward.1} parent=67 // pred_check_branch
              %9533 = sbr.rel (0) target = $region72
            $region71: #{backbone_forward.1} parent=67 // pred_region
              // Predicated region
              $region84: #{backbone_forward.1} parent=71 // pred_check
                _
              $region85: #{backbone_forward.1} parent=71 // pred_check_branch
                %9555 = sbr.rel (0) target = $region87
              $region86: #{backbone_forward.1} parent=71 // pred_region
                loop: start=0, step=1, limit=1
                $region88: #{backbone_forward.1} parent=86 // loop_pre_header
                  _
                $region89: #{backbone_forward.1} parent=86 // loop_header
                  %s9557 = sphi 0, %s9561
                  %p9558 = scmp.ge.s32.totalorder %s9557, 1
                  %s9562 = sphi %s9522, %s9522
                  %s9563 = sphi %s9529, %s9529
                $region90: #{backbone_forward.1} parent=86 // loop_header_branch
                  %9560 = sbr.rel (%p9558) target = $region94
                $region91: #{backbone_forward.1} parent=86 // loop_body
                  %v9564 = vld [vmem:[%s9562] sm:$0xff]
                  %9565 = vst [vmem:[%s9563] sm:$0xff] %v9564
                  %v9566 = vld [vmem:[%s9562 + $0x8] sm:$0xff]
                  %9567 = vst [vmem:[%s9563 + $0x10] sm:$0xff] %v9566
                  %v9568 = vld [vmem:[%s9562 + $0x10] sm:$0xff]
                  %9569 = vst [vmem:[%s9563 + $0x20] sm:$0xff] %v9568
                  %v9570 = vld [vmem:[%s9562 + $0x18] sm:$0xff]
                  %9571 = vst [vmem:[%s9563 + $0x30] sm:$0xff] %v9570
                $region92: #{backbone_forward.1} parent=86 // loop_footer
                  %s9561 = sadd.s32 1, %s9557
                $region93: #{backbone_forward.1} parent=86 // loop_footer_branch
                  %9556 = sbr.rel target = $region89
                $region94: #{backbone_forward.1} parent=86 // loop_exit
                  _
              $region87: #{backbone_forward.1} parent=71 // pred_fallthru
                _
              // Predicated region
              $region95: #{backbone_forward.1} parent=71 // pred_check
                _
              $region96: #{backbone_forward.1} parent=71 // pred_check_branch
                %9573 = sbr.rel target = $region98
              $region97: #{backbone_forward.1} parent=71 // pred_region
                _
              $region98: #{backbone_forward.1} parent=71 // pred_fallthru
                _
            $region72: #{backbone_forward.1} parent=67 // pred_fallthru
              _
            // Predicated region
            $region73: #{backbone_forward.1} parent=67 // pred_check
              _
            $region74: #{backbone_forward.1} parent=67 // pred_check_branch
              %9535 = sbr.rel target = $region76
            $region75: #{backbone_forward.1} parent=67 // pred_region
              %s9537 = ssub.s32 256, 1
              loop: start=0, step=1, limit=1
              $region77: #{backbone_forward.1} parent=75 // loop_pre_header
                _
              $region78: #{backbone_forward.1} parent=75 // loop_header
                %s9539 = sphi 0, %s9543
                %p9540 = scmp.ge.s32.totalorder %s9539, 1
                %s9544 = sphi %s9522, %s9522
                %s9545 = sphi %s9529, %s9529
              $region79: #{backbone_forward.1} parent=75 // loop_header_branch
                %9542 = sbr.rel (%p9540) target = $region83
              $region80: #{backbone_forward.1} parent=75 // loop_body
                %v9546 = vld [vmem:[%s9544] sm:%s9537]
                %9547 = vst [vmem:[%s9545] sm:%s9537] %v9546
                %v9548 = vld [vmem:[%s9544 + $0x8] sm:%s9537]
                %9549 = vst [vmem:[%s9545 + $0x10] sm:%s9537] %v9548
                %v9550 = vld [vmem:[%s9544 + $0x10] sm:%s9537]
                %9551 = vst [vmem:[%s9545 + $0x20] sm:%s9537] %v9550
                %v9552 = vld [vmem:[%s9544 + $0x18] sm:%s9537]
                %9553 = vst [vmem:[%s9545 + $0x30] sm:%s9537] %v9552
              $region81: #{backbone_forward.1} parent=75 // loop_footer
                %s9543 = sadd.s32 1, %s9539
              $region82: #{backbone_forward.1} parent=75 // loop_footer_branch
                %9538 = sbr.rel target = $region78
              $region83: #{backbone_forward.1} parent=75 // loop_exit
                _
            $region76: #{backbone_forward.1} parent=67 // pred_fallthru
              _
          $region68: #{backbone_forward.1} parent=63 // pred_fallthru
            _
          %9574 = vnop
        $region64: #{backbone_forward.1} parent=43 // pred_fallthru
          _
      $region44: #{backbone_forward.1} parent=5 // pred_fallthru
        _
      %p9575 = scmp.le.s32.totalorder 2, %s15
      // Predicated region
      $region99: #{backbone_forward.1} parent=5 // pred_check
        %p9576 = pneg %p9575
      $region100: #{backbone_forward.1} parent=5 // pred_check_branch
        %9578 = sbr.rel (%p9576) target = $region102
      $region101: #{backbone_forward.1} parent=5 // pred_region
        %s9579 = ssub.s32 %s15, 2
        // Predicated region
        $region103: #{backbone_forward.1} parent=101 // pred_check
          %p9580 = pneg %p189
        $region104: #{backbone_forward.1} parent=101 // pred_check_branch
          %9582 = sbr.rel (%p9580) target = $region106
        $region105: #{backbone_forward.1} parent=101 // pred_region
          %s9583 = sand.u32 %s174, 1
          %s9584 = sand.u32 %s174, 1
          %s9585 = smul.addr %s9584, 32
          %s9586 = scalar_lea.vmem [#allocation8], %s9585
        $region106: #{backbone_forward.1} parent=101 // pred_fallthru
          _
      $region102: #{backbone_forward.1} parent=5 // pred_fallthru
        _
    $region6: #{backbone_forward.1} parent=1 // loop_footer
      %s19 = sadd.s32 1, %s15
    $region7: #{backbone_forward.1} parent=1 // loop_footer_branch
      %14 = sbr.rel target = $region3
    $region8: #{backbone_forward.1} parent=1 // loop_exit
      _
    %9587 = vsyncpa [#allocation7], 1
    %s9588 = scalar_lea.sflag [#allocation7], 1
    %9589 = vsyncpa %s9588, 1

</llo_original>
